<compile_context>
chip_gen: v6e
topology: v6e:2x2x1
jax: 0.10.0
libtpu: 0.0.40
codegen_flags: <defaults>
</compile_context>

<pallas_src>
import functools
import math

import jax
import jax.numpy as jnp
from jax.experimental import pallas as pl
from jax.experimental.pallas import tpu as pltpu

F32 = jnp.float32
BF16 = jnp.bfloat16


# ---------------------------------------------------------------------------
# Fused DownBlock kernel (one grid step == one image)
# ---------------------------------------------------------------------------
def _down_block_kernel(x_ref, mask_ref, sel_ref,
                       wr_ref, br_ref,
                       w1_ref, b1_ref,
                       w2_ref, b2_ref,
                       wd_ref, bd_ref,
                       out_x_ref, out_u_ref,
                       a1_ref,
                       *, H, W, slope, use_down):
    Wp = W + 2                       # padded width
    L = (H - 1) * Wp + W             # number of stride-1 "interior" rows computed
    base = Wp + 1                    # flat offset of image pixel (0, 0) in padded grid

    def conv3x3(src_ref, w_ref, b_ref):
        # 3x3 / pad=1 / stride=1 conv as 9 shifted (L, C) @ (C, Fp) MXU matmuls,
        # bf16 operands, f32 accumulation.
        acc = jnp.zeros((L, b_ref.shape[-1]), F32)
        for k in range(9):
            i, j = divmod(k, 3)
            d = (i - 1) * Wp + (j - 1)
            lhs = src_ref[pl.ds(base + d, L), :].astype(BF16)
            acc = acc + jnp.dot(lhs, w_ref[k], preferred_element_type=F32)
        return acc + b_ref[...]

    def lrelu(v):
        return jnp.maximum(v, slope * v)

    mask = mask_ref[...]             # (L, 1)  zeros at width-padding columns
    sel = sel_ref[...]               # (S2, L) one-hot rows of strided output grid

    # Residual path: gather the strided input taps (exact one-hot matmul), then
    # the 1x1 conv as a tiny matmul.
    x_int = x_ref[pl.ds(base, L), :]                                  # (L, Cin)
    res_in = jnp.dot(sel, x_int, preferred_element_type=F32)          # (S2, Cin)
    res = jnp.dot(res_in.astype(BF16), wr_ref[...],
                  preferred_element_type=F32) + br_ref[...]           # (S2, Fp)

    # net = conv1 -> LeakyReLU -> conv2 -> LeakyReLU, all resident in VMEM.
    a1_ref[...] = jnp.zeros_like(a1_ref)
    v1 = lrelu(conv3x3(x_ref, w1_ref, b1_ref)) * mask
    a1_ref[pl.ds(base, L), :] = v1.astype(a1_ref.dtype)

    out_u_ref[...] = jnp.zeros_like(out_u_ref)
    v2 = lrelu(conv3x3(a1_ref, w2_ref, b2_ref)) * mask                # unet_res
    out_u_ref[pl.ds(base, L), :] = v2

    if use_down:
        vd = conv3x3(out_u_ref, wd_ref, bd_ref)                       # stride-1 grid
        x_out = jnp.dot(sel, vd, preferred_element_type=F32)          # stride-2 gather
    else:
        x_out = jnp.dot(sel, v2, preferred_element_type=F32)
    out_x_ref[...] = x_out + res


# ---------------------------------------------------------------------------
# Weight packing helpers (torch layout -> kernel layout, channels padded)
# ---------------------------------------------------------------------------
def _pack_w3x3(w, cin_pad, cout_pad):
    cout, cin = int(w.shape[0]), int(w.shape[1])
    wm = jnp.transpose(w, (2, 3, 1, 0)).reshape(9, cin, cout)   # (kh*kw, cin, cout)
    wm = jnp.pad(wm, ((0, 0), (0, cin_pad - cin), (0, cout_pad - cout)))
    return wm.astype(BF16)


def _pack_w1x1(w, cout_pad):
    cout, cin = int(w.shape[0]), int(w.shape[1])
    wm = jnp.transpose(w.reshape(cout, cin), (1, 0))            # (cin, cout)
    wm = jnp.pad(wm, ((0, 0), (0, cout_pad - cout)))
    return wm.astype(BF16)


def _pack_bias(b, cout_pad):
    return jnp.pad(b, (0, cout_pad - int(b.shape[0]))).reshape(1, cout_pad).astype(F32)


# ---------------------------------------------------------------------------
# Wrapper: layout plumbing + pallas_call
# ---------------------------------------------------------------------------
def down_block_forward(x_nchw, params, *, downsample=True, slope=0.2):
    N, Cin, H, W = x_nchw.shape
    Hp, Wp = H + 2, W + 2
    P = Hp * Wp
    P_pad = ((P + 7) // 8) * 8
    L = (H - 1) * Wp + W
    base = Wp + 1

    w1, b1 = params["conv1"]
    w2, b2 = params["conv2"]
    wr, br = params["conv_res"]
    F = int(w1.shape[0])
    Fp = ((F + 127) // 128) * 128            # lane-dense channel dimension

    if downsample:
        wd, bd = params["down"]
        Ho, Wo = (H - 1) // 2 + 1, (W - 1) // 2 + 1
    else:
        wd = jnp.zeros((F, F, 3, 3), F32)
        bd = jnp.zeros((F,), F32)
        Ho, Wo = H, W
    S2 = Ho * Wo

    # Input: NCHW -> zero-padded flattened NHWC, one P_pad-row slab per image.
    xh = jnp.transpose(x_nchw, (0, 2, 3, 1))
    xh = jnp.pad(xh, ((0, 0), (1, 1), (1, 1), (0, 0)))
    xh = xh.reshape(N, P, Cin)
    xh = jnp.pad(xh, ((0, 0), (0, P_pad - P), (0, 0)))
    xflat = xh.reshape(N * P_pad, Cin)

    # Interior-row validity mask (zero at width-padding columns of the grid).
    r = jnp.arange(L, dtype=jnp.int32)
    rw = (r + base) % Wp
    mask = ((rw >= 1) & (rw <= W)).astype(F32).reshape(L, 1)

    # One-hot selection of the strided output rows.
    k = jnp.arange(S2, dtype=jnp.int32)
    if downsample:
        rows = 2 * (k // Wo) * Wp + 2 * (k % Wo)
    else:
        rows = (k // Wo) * Wp + (k % Wo)
    sel = jax.nn.one_hot(rows, L, dtype=F32)

    inputs = (
        xflat, mask, sel,
        _pack_w1x1(wr, Fp), _pack_bias(br, Fp),
        _pack_w3x3(w1, Cin, Fp), _pack_bias(b1, Fp),
        _pack_w3x3(w2, Fp, Fp), _pack_bias(b2, Fp),
        _pack_w3x3(wd, Fp, Fp), _pack_bias(bd, Fp),
    )

    c2 = lambda n: (0, 0)
    c3 = lambda n: (0, 0, 0)
    in_specs = [
        pl.BlockSpec((P_pad, Cin), lambda n: (n, 0)),     # per-image input slab
        pl.BlockSpec((L, 1), c2),
        pl.BlockSpec((S2, L), c2),
        pl.BlockSpec((Cin, Fp), c2), pl.BlockSpec((1, Fp), c2),
        pl.BlockSpec((9, Cin, Fp), c3), pl.BlockSpec((1, Fp), c2),
        pl.BlockSpec((9, Fp, Fp), c3), pl.BlockSpec((1, Fp), c2),
        pl.BlockSpec((9, Fp, Fp), c3), pl.BlockSpec((1, Fp), c2),
    ]
    out_specs = (
        pl.BlockSpec((S2, Fp), lambda n: (n, 0)),
        pl.BlockSpec((P_pad, Fp), lambda n: (n, 0)),
    )
    out_shape = (
        jax.ShapeDtypeStruct((N * S2, Fp), F32),
        jax.ShapeDtypeStruct((N * P_pad, Fp), F32),
    )

    kern = functools.partial(_down_block_kernel, H=H, W=W, slope=slope,
                             use_down=downsample)
    out_x_flat, out_u_flat = pl.pallas_call(
        kern,
        grid=(N,),
        in_specs=in_specs,
        out_specs=out_specs,
        out_shape=out_shape,
        scratch_shapes=[pltpu.VMEM((P_pad, Fp), BF16)],
        compiler_params=pltpu.CompilerParams(
            dimension_semantics=("parallel",)),
    )(*inputs)

    x_out = out_x_flat.reshape(N, Ho, Wo, Fp)[..., :F]
    x_out = jnp.transpose(x_out, (0, 3, 1, 2))                       # -> NCHW
    u = out_u_flat.reshape(N, P_pad, Fp)[:, :P, :F].reshape(N, Hp, Wp, F)
    unet_res = jnp.transpose(u[:, 1:H + 1, 1:W + 1, :], (0, 3, 1, 2))
    return x_out, unet_res


# ---------------------------------------------------------------------------
# Deterministic synthetic params + pure-JAX reference (for correctness check)
# ---------------------------------------------------------------------------
def init_down_block(key, input_channels, filters, downsample=True):
    def conv_init(k, cout, cin, ks):
        k1, k2 = jax.random.split(k)
        bound = 1.0 / math.sqrt(cin * ks * ks)
        w = jax.random.uniform(k1, (cout, cin, ks, ks), F32, -bound, bound)
        b = jax.random.uniform(k2, (cout,), F32, -bound, bound)
        return w, b

    k1, k2, k3, k4 = jax.random.split(key, 4)
    params = {
        "conv_res": conv_init(k1, filters, input_channels, 1),
        "conv1": conv_init(k2, filters, input_channels, 3),
        "conv2": conv_init(k3, filters, filters, 3),
    }
    if downsample:
        params["down"] = conv_init(k4, filters, filters, 3)
    return params


def _conv2d_ref(x, w, b, stride, pad):
    out = jax.lax.conv_general_dilated(
        x, w, window_strides=(stride, stride),
        padding=((pad, pad), (pad, pad)),
        dimension_numbers=("NCHW", "OIHW", "NCHW"),
        precision=jax.lax.Precision.HIGHEST)
    return out + b[None, :, None, None]


def down_block_ref(x, params, *, downsample=True, slope=0.2):
    wr, br = params["conv_res"]
    w1, b1 = params["conv1"]
    w2, b2 = params["conv2"]
    res = _conv2d_ref(x, wr, br, 2 if downsample else 1, 0)
    h = _conv2d_ref(x, w1, b1, 1, 1)
    h = jnp.maximum(h, slope * h)
    h = _conv2d_ref(h, w2, b2, 1, 1)
    h = jnp.maximum(h, slope * h)
    unet_res = h
    if downsample:
        wd, bd = params["down"]
        h = _conv2d_ref(h, wd, bd, 2, 1)
    return h + res, unet_res


if __name__ == "__main__":
    key = jax.random.PRNGKey(0)
    k_x, k_p = jax.random.split(key)

    N, Cin, H, W = 2, 4, 16, 16
    filters = 32
    x = jax.random.normal(k_x, (N, Cin, H, W), F32)

    # --- downsample=True (module default) ---
    params = init_down_block(k_p, Cin, filters, downsample=True)
    fwd = jax.jit(functools.partial(down_block_forward, downsample=True))
    out, unet_res = fwd(x, params)
    jax.block_until_ready(out)
    jax.block_until_ready(unet_res)
    assert out.shape == (N, filters, H // 2, W // 2), out.shape
    assert unet_res.shape == (N, filters, H, W), unet_res.shape

    ref_out, ref_u = down_block_ref(x, params, downsample=True)
    assert bool(jnp.allclose(out, ref_out, rtol=3e-2, atol=3e-2)), \
        float(jnp.max(jnp.abs(out - ref_out)))
    assert bool(jnp.allclose(unet_res, ref_u, rtol=3e-2, atol=3e-2)), \
        float(jnp.max(jnp.abs(unet_res - ref_u)))

    # --- downsample=False variant of the same block ---
    params_nd = init_down_block(k_p, Cin, filters, downsample=False)
    fwd_nd = jax.jit(functools.partial(down_block_forward, downsample=False))
    out_nd, unet_nd = fwd_nd(x, params_nd)
    jax.block_until_ready(out_nd)
    jax.block_until_ready(unet_nd)
    assert out_nd.shape == (N, filters, H, W)
    assert unet_nd.shape == (N, filters, H, W)
    ref_out_nd, ref_u_nd = down_block_ref(x, params_nd, downsample=False)
    assert bool(jnp.allclose(out_nd, ref_out_nd, rtol=3e-2, atol=3e-2))
    assert bool(jnp.allclose(unet_nd, ref_u_nd, rtol=3e-2, atol=3e-2))

    print("KERNEL_OK")
</pallas_src>

<mosaic_0001>
module attributes {stable_mosaic.version = 11 : i64} {
  func.func @_down_block_kernel(%arg0: i32, %arg1: memref<328x4xf32, #tpu.memory_space<vmem>>, %arg2: memref<286x1xf32, #tpu.memory_space<vmem>>, %arg3: memref<64x286xf32, #tpu.memory_space<vmem>>, %arg4: memref<4x128xbf16, #tpu.memory_space<vmem>>, %arg5: memref<1x128xf32, #tpu.memory_space<vmem>>, %arg6: memref<9x4x128xbf16, #tpu.memory_space<vmem>>, %arg7: memref<1x128xf32, #tpu.memory_space<vmem>>, %arg8: memref<9x128x128xbf16, #tpu.memory_space<vmem>>, %arg9: memref<1x128xf32, #tpu.memory_space<vmem>>, %arg10: memref<9x128x128xbf16, #tpu.memory_space<vmem>>, %arg11: memref<1x128xf32, #tpu.memory_space<vmem>>, %arg12: memref<64x128xf32, #tpu.memory_space<vmem>>, %arg13: memref<328x128xf32, #tpu.memory_space<vmem>>, %arg14: memref<328x128xbf16, #tpu.memory_space<vmem>>) attributes {dimension_semantics = [#tpu.dimension_semantics<parallel>], iteration_bounds = array<i64: 2>, scalar_prefetch = 0 : i64, scratch_operands = 1 : i64, tpu.core_type = #tpu.core_type<tc>, window_params = [{transform_indices = @transform_0, window_bounds = array<i64: 328, 4>}, {pipeline_mode = #tpu.pipeline_mode<synchronous>, transform_indices = @transform_1, window_bounds = array<i64: 286, 1>}, {pipeline_mode = #tpu.pipeline_mode<synchronous>, transform_indices = @transform_2, window_bounds = array<i64: 64, 286>}, {pipeline_mode = #tpu.pipeline_mode<synchronous>, transform_indices = @transform_3, window_bounds = array<i64: 4, 128>}, {pipeline_mode = #tpu.pipeline_mode<synchronous>, transform_indices = @transform_4, window_bounds = array<i64: 1, 128>}, {pipeline_mode = #tpu.pipeline_mode<synchronous>, transform_indices = @transform_5, window_bounds = array<i64: 9, 4, 128>}, {pipeline_mode = #tpu.pipeline_mode<synchronous>, transform_indices = @transform_6, window_bounds = array<i64: 1, 128>}, {pipeline_mode = #tpu.pipeline_mode<synchronous>, transform_indices = @transform_7, window_bounds = array<i64: 9, 128, 128>}, {pipeline_mode = #tpu.pipeline_mode<synchronous>, transform_indices = @transform_8, window_bounds = array<i64: 1, 128>}, {pipeline_mode = #tpu.pipeline_mode<synchronous>, transform_indices = @transform_9, window_bounds = array<i64: 9, 128, 128>}, {pipeline_mode = #tpu.pipeline_mode<synchronous>, transform_indices = @transform_10, window_bounds = array<i64: 1, 128>}, {transform_indices = @transform_11, window_bounds = array<i64: 64, 128>}, {transform_indices = @transform_12, window_bounds = array<i64: 328, 128>}]} {
    %c0 = arith.constant 0 : index
    %c0_0 = arith.constant 0 : index
    %0 = vector.load %arg2[%c0, %c0_0] : memref<286x1xf32, #tpu.memory_space<vmem>>, vector<286x1xf32>
    %c0_1 = arith.constant 0 : index
    %c0_2 = arith.constant 0 : index
    %1 = vector.load %arg3[%c0_1, %c0_2] : memref<64x286xf32, #tpu.memory_space<vmem>>, vector<64x286xf32>
    %c19 = arith.constant 19 : index
    %c0_3 = arith.constant 0 : index
    %2 = vector.load %arg1[%c19, %c0_3] : memref<328x4xf32, #tpu.memory_space<vmem>>, vector<286x4xf32>
    %cst = arith.constant dense<0.000000e+00> : vector<64x4xf32>
    %3 = tpu.matmul %1, %2, %cst {dimension_numbers = #tpu.dot_dimension_numbers<[1], [0], [0], [1], [0, 0, 1, 1], [], []>} : vector<64x286xf32>, vector<286x4xf32>, vector<64x4xf32> -> vector<64x4xf32>
    %4 = arith.truncf %3 : vector<64x4xf32> to vector<64x4xbf16>
    %c0_4 = arith.constant 0 : index
    %c0_5 = arith.constant 0 : index
    %5 = vector.load %arg4[%c0_4, %c0_5] : memref<4x128xbf16, #tpu.memory_space<vmem>>, vector<4x128xbf16>
    %cst_6 = arith.constant dense<0.000000e+00> : vector<64x128xf32>
    %6 = tpu.matmul %4, %5, %cst_6 {dimension_numbers = #tpu.dot_dimension_numbers<[1], [0], [0], [1], [0, 0, 1, 1], [], []>} : vector<64x4xbf16>, vector<4x128xbf16>, vector<64x128xf32> -> vector<64x128xf32>
    %c0_7 = arith.constant 0 : index
    %c0_8 = arith.constant 0 : index
    %7 = vector.load %arg5[%c0_7, %c0_8] : memref<1x128xf32, #tpu.memory_space<vmem>>, vector<1x128xf32>
    %8 = vector.broadcast %7 : vector<1x128xf32> to vector<64x128xf32>
    %9 = arith.addf %6, %8 : vector<64x128xf32>
    %cst_9 = arith.constant 0.000000e+00 : bf16
    %10 = vector.broadcast %cst_9 : bf16 to vector<328x128xbf16>
    %c0_10 = arith.constant 0 : index
    %c0_11 = arith.constant 0 : index
    %11 = vector.load %arg14[%c0_10, %c0_11] : memref<328x128xbf16, #tpu.memory_space<vmem>>, vector<328x128xbf16>
    tpu.vector_store %arg14[%c0_10, %c0_11], %10 {strides = array<i32>} : memref<328x128xbf16, #tpu.memory_space<vmem>>, vector<328x128xbf16>,
    %cst_12 = arith.constant 0.000000e+00 : f32
    %12 = vector.broadcast %cst_12 : f32 to vector<286x128xf32>
    %c0_13 = arith.constant 0 : index
    %c0_14 = arith.constant 0 : index
    %13 = vector.load %arg1[%c0_13, %c0_14] : memref<328x4xf32, #tpu.memory_space<vmem>>, vector<286x4xf32>
    %14 = arith.truncf %13 : vector<286x4xf32> to vector<286x4xbf16>
    %c0_15 = arith.constant 0 : index
    %c0_16 = arith.constant 0 : index
    %c0_17 = arith.constant 0 : index
    %15 = vector.load %arg6[%c0_15, %c0_16, %c0_17] : memref<9x4x128xbf16, #tpu.memory_space<vmem>>, vector<1x4x128xbf16>
    %16 = vector.shape_cast %15 : vector<1x4x128xbf16> to vector<4x128xbf16>
    %cst_18 = arith.constant dense<0.000000e+00> : vector<286x128xf32>
    %17 = tpu.matmul %14, %16, %cst_18 {dimension_numbers = #tpu.dot_dimension_numbers<[1], [0], [0], [1], [0, 0, 1, 1], [], []>} : vector<286x4xbf16>, vector<4x128xbf16>, vector<286x128xf32> -> vector<286x128xf32>
    %18 = arith.addf %12, %17 : vector<286x128xf32>
    %c1 = arith.constant 1 : index
    %c0_19 = arith.constant 0 : index
    %19 = vector.load %arg1[%c1, %c0_19] : memref<328x4xf32, #tpu.memory_space<vmem>>, vector<286x4xf32>
    %20 = arith.truncf %19 : vector<286x4xf32> to vector<286x4xbf16>
    %c1_20 = arith.constant 1 : index
    %c0_21 = arith.constant 0 : index
    %c0_22 = arith.constant 0 : index
    %21 = vector.load %arg6[%c1_20, %c0_21, %c0_22] : memref<9x4x128xbf16, #tpu.memory_space<vmem>>, vector<1x4x128xbf16>
    %22 = vector.shape_cast %21 : vector<1x4x128xbf16> to vector<4x128xbf16>
    %cst_23 = arith.constant dense<0.000000e+00> : vector<286x128xf32>
    %23 = tpu.matmul %20, %22, %cst_23 {dimension_numbers = #tpu.dot_dimension_numbers<[1], [0], [0], [1], [0, 0, 1, 1], [], []>} : vector<286x4xbf16>, vector<4x128xbf16>, vector<286x128xf32> -> vector<286x128xf32>
    %24 = arith.addf %18, %23 : vector<286x128xf32>
    %c2 = arith.constant 2 : index
    %c0_24 = arith.constant 0 : index
    %25 = vector.load %arg1[%c2, %c0_24] : memref<328x4xf32, #tpu.memory_space<vmem>>, vector<286x4xf32>
    %26 = arith.truncf %25 : vector<286x4xf32> to vector<286x4xbf16>
    %c2_25 = arith.constant 2 : index
    %c0_26 = arith.constant 0 : index
    %c0_27 = arith.constant 0 : index
    %27 = vector.load %arg6[%c2_25, %c0_26, %c0_27] : memref<9x4x128xbf16, #tpu.memory_space<vmem>>, vector<1x4x128xbf16>
    %28 = vector.shape_cast %27 : vector<1x4x128xbf16> to vector<4x128xbf16>
    %cst_28 = arith.constant dense<0.000000e+00> : vector<286x128xf32>
    %29 = tpu.matmul %26, %28, %cst_28 {dimension_numbers = #tpu.dot_dimension_numbers<[1], [0], [0], [1], [0, 0, 1, 1], [], []>} : vector<286x4xbf16>, vector<4x128xbf16>, vector<286x128xf32> -> vector<286x128xf32>
    %30 = arith.addf %24, %29 : vector<286x128xf32>
    %c18 = arith.constant 18 : index
    %c0_29 = arith.constant 0 : index
    %31 = vector.load %arg1[%c18, %c0_29] : memref<328x4xf32, #tpu.memory_space<vmem>>, vector<286x4xf32>
    %32 = arith.truncf %31 : vector<286x4xf32> to vector<286x4xbf16>
    %c3 = arith.constant 3 : index
    %c0_30 = arith.constant 0 : index
    %c0_31 = arith.constant 0 : index
    %33 = vector.load %arg6[%c3, %c0_30, %c0_31] : memref<9x4x128xbf16, #tpu.memory_space<vmem>>, vector<1x4x128xbf16>
    %34 = vector.shape_cast %33 : vector<1x4x128xbf16> to vector<4x128xbf16>
    %cst_32 = arith.constant dense<0.000000e+00> : vector<286x128xf32>
    %35 = tpu.matmul %32, %34, %cst_32 {dimension_numbers = #tpu.dot_dimension_numbers<[1], [0], [0], [1], [0, 0, 1, 1], [], []>} : vector<286x4xbf16>, vector<4x128xbf16>, vector<286x128xf32> -> vector<286x128xf32>
    %36 = arith.addf %30, %35 : vector<286x128xf32>
    %c19_33 = arith.constant 19 : index
    %c0_34 = arith.constant 0 : index
    %37 = vector.load %arg1[%c19_33, %c0_34] : memref<328x4xf32, #tpu.memory_space<vmem>>, vector<286x4xf32>
    %38 = arith.truncf %37 : vector<286x4xf32> to vector<286x4xbf16>
    %c4 = arith.constant 4 : index
    %c0_35 = arith.constant 0 : index
    %c0_36 = arith.constant 0 : index
    %39 = vector.load %arg6[%c4, %c0_35, %c0_36] : memref<9x4x128xbf16, #tpu.memory_space<vmem>>, vector<1x4x128xbf16>
    %40 = vector.shape_cast %39 : vector<1x4x128xbf16> to vector<4x128xbf16>
    %cst_37 = arith.constant dense<0.000000e+00> : vector<286x128xf32>
    %41 = tpu.matmul %38, %40, %cst_37 {dimension_numbers = #tpu.dot_dimension_numbers<[1], [0], [0], [1], [0, 0, 1, 1], [], []>} : vector<286x4xbf16>, vector<4x128xbf16>, vector<286x128xf32> -> vector<286x128xf32>
    %42 = arith.addf %36, %41 : vector<286x128xf32>
    %c20 = arith.constant 20 : index
    %c0_38 = arith.constant 0 : index
    %43 = vector.load %arg1[%c20, %c0_38] : memref<328x4xf32, #tpu.memory_space<vmem>>, vector<286x4xf32>
    %44 = arith.truncf %43 : vector<286x4xf32> to vector<286x4xbf16>
    %c5 = arith.constant 5 : index
    %c0_39 = arith.constant 0 : index
    %c0_40 = arith.constant 0 : index
    %45 = vector.load %arg6[%c5, %c0_39, %c0_40] : memref<9x4x128xbf16, #tpu.memory_space<vmem>>, vector<1x4x128xbf16>
    %46 = vector.shape_cast %45 : vector<1x4x128xbf16> to vector<4x128xbf16>
    %cst_41 = arith.constant dense<0.000000e+00> : vector<286x128xf32>
    %47 = tpu.matmul %44, %46, %cst_41 {dimension_numbers = #tpu.dot_dimension_numbers<[1], [0], [0], [1], [0, 0, 1, 1], [], []>} : vector<286x4xbf16>, vector<4x128xbf16>, vector<286x128xf32> -> vector<286x128xf32>
    %48 = arith.addf %42, %47 : vector<286x128xf32>
    %c36 = arith.constant 36 : index
    %c0_42 = arith.constant 0 : index
    %49 = vector.load %arg1[%c36, %c0_42] : memref<328x4xf32, #tpu.memory_space<vmem>>, vector<286x4xf32>
    %50 = arith.truncf %49 : vector<286x4xf32> to vector<286x4xbf16>
    %c6 = arith.constant 6 : index
    %c0_43 = arith.constant 0 : index
    %c0_44 = arith.constant 0 : index
    %51 = vector.load %arg6[%c6, %c0_43, %c0_44] : memref<9x4x128xbf16, #tpu.memory_space<vmem>>, vector<1x4x128xbf16>
    %52 = vector.shape_cast %51 : vector<1x4x128xbf16> to vector<4x128xbf16>
    %cst_45 = arith.constant dense<0.000000e+00> : vector<286x128xf32>
    %53 = tpu.matmul %50, %52, %cst_45 {dimension_numbers = #tpu.dot_dimension_numbers<[1], [0], [0], [1], [0, 0, 1, 1], [], []>} : vector<286x4xbf16>, vector<4x128xbf16>, vector<286x128xf32> -> vector<286x128xf32>
    %54 = arith.addf %48, %53 : vector<286x128xf32>
    %c37 = arith.constant 37 : index
    %c0_46 = arith.constant 0 : index
    %55 = vector.load %arg1[%c37, %c0_46] : memref<328x4xf32, #tpu.memory_space<vmem>>, vector<286x4xf32>
    %56 = arith.truncf %55 : vector<286x4xf32> to vector<286x4xbf16>
    %c7 = arith.constant 7 : index
    %c0_47 = arith.constant 0 : index
    %c0_48 = arith.constant 0 : index
    %57 = vector.load %arg6[%c7, %c0_47, %c0_48] : memref<9x4x128xbf16, #tpu.memory_space<vmem>>, vector<1x4x128xbf16>
    %58 = vector.shape_cast %57 : vector<1x4x128xbf16> to vector<4x128xbf16>
    %cst_49 = arith.constant dense<0.000000e+00> : vector<286x128xf32>
    %59 = tpu.matmul %56, %58, %cst_49 {dimension_numbers = #tpu.dot_dimension_numbers<[1], [0], [0], [1], [0, 0, 1, 1], [], []>} : vector<286x4xbf16>, vector<4x128xbf16>, vector<286x128xf32> -> vector<286x128xf32>
    %60 = arith.addf %54, %59 : vector<286x128xf32>
    %c38 = arith.constant 38 : index
    %c0_50 = arith.constant 0 : index
    %61 = vector.load %arg1[%c38, %c0_50] : memref<328x4xf32, #tpu.memory_space<vmem>>, vector<286x4xf32>
    %62 = arith.truncf %61 : vector<286x4xf32> to vector<286x4xbf16>
    %c8 = arith.constant 8 : index
    %c0_51 = arith.constant 0 : index
    %c0_52 = arith.constant 0 : index
    %63 = vector.load %arg6[%c8, %c0_51, %c0_52] : memref<9x4x128xbf16, #tpu.memory_space<vmem>>, vector<1x4x128xbf16>
    %64 = vector.shape_cast %63 : vector<1x4x128xbf16> to vector<4x128xbf16>
    %cst_53 = arith.constant dense<0.000000e+00> : vector<286x128xf32>
    %65 = tpu.matmul %62, %64, %cst_53 {dimension_numbers = #tpu.dot_dimension_numbers<[1], [0], [0], [1], [0, 0, 1, 1], [], []>} : vector<286x4xbf16>, vector<4x128xbf16>, vector<286x128xf32> -> vector<286x128xf32>
    %66 = arith.addf %60, %65 : vector<286x128xf32>
    %c0_54 = arith.constant 0 : index
    %c0_55 = arith.constant 0 : index
    %67 = vector.load %arg7[%c0_54, %c0_55] : memref<1x128xf32, #tpu.memory_space<vmem>>, vector<1x128xf32>
    %68 = vector.broadcast %67 : vector<1x128xf32> to vector<286x128xf32>
    %69 = arith.addf %66, %68 : vector<286x128xf32>
    %cst_56 = arith.constant 2.000000e-01 : f32
    %70 = vector.broadcast %cst_56 : f32 to vector<286x128xf32>
    %71 = arith.mulf %70, %69 : vector<286x128xf32>
    %72 = arith.maximumf %69, %71 : vector<286x128xf32>
    %73 = vector.broadcast %0 : vector<286x1xf32> to vector<286x128xf32>
    %74 = arith.mulf %72, %73 : vector<286x128xf32>
    %75 = arith.truncf %74 : vector<286x128xf32> to vector<286x128xbf16>
    %c19_57 = arith.constant 19 : index
    %c0_58 = arith.constant 0 : index
    %76 = vector.load %arg14[%c19_57, %c0_58] : memref<328x128xbf16, #tpu.memory_space<vmem>>, vector<286x128xbf16>
    tpu.vector_store %arg14[%c19_57, %c0_58], %75 {strides = array<i32>} : memref<328x128xbf16, #tpu.memory_space<vmem>>, vector<286x128xbf16>,
    %cst_59 = arith.constant 0.000000e+00 : f32
    %77 = vector.broadcast %cst_59 : f32 to vector<328x128xf32>
    %c0_60 = arith.constant 0 : index
    %c0_61 = arith.constant 0 : index
    %78 = vector.load %arg13[%c0_60, %c0_61] : memref<328x128xf32, #tpu.memory_space<vmem>>, vector<328x128xf32>
    tpu.vector_store %arg13[%c0_60, %c0_61], %77 {strides = array<i32>} : memref<328x128xf32, #tpu.memory_space<vmem>>, vector<328x128xf32>,
    %cst_62 = arith.constant 0.000000e+00 : f32
    %79 = vector.broadcast %cst_62 : f32 to vector<286x128xf32>
    %c0_63 = arith.constant 0 : index
    %c0_64 = arith.constant 0 : index
    %80 = vector.load %arg14[%c0_63, %c0_64] : memref<328x128xbf16, #tpu.memory_space<vmem>>, vector<286x128xbf16>
    %c0_65 = arith.constant 0 : index
    %c0_66 = arith.constant 0 : index
    %c0_67 = arith.constant 0 : index
    %81 = vector.load %arg8[%c0_65, %c0_66, %c0_67] : memref<9x128x128xbf16, #tpu.memory_space<vmem>>, vector<1x128x128xbf16>
    %82 = vector.shape_cast %81 : vector<1x128x128xbf16> to vector<128x128xbf16>
    %cst_68 = arith.constant dense<0.000000e+00> : vector<286x128xf32>
    %83 = tpu.matmul %80, %82, %cst_68 {dimension_numbers = #tpu.dot_dimension_numbers<[1], [0], [0], [1], [0, 0, 1, 1], [], []>} : vector<286x128xbf16>, vector<128x128xbf16>, vector<286x128xf32> -> vector<286x128xf32>
    %84 = arith.addf %79, %83 : vector<286x128xf32>
    %c1_69 = arith.constant 1 : index
    %c0_70 = arith.constant 0 : index
    %85 = vector.load %arg14[%c1_69, %c0_70] : memref<328x128xbf16, #tpu.memory_space<vmem>>, vector<286x128xbf16>
    %c1_71 = arith.constant 1 : index
    %c0_72 = arith.constant 0 : index
    %c0_73 = arith.constant 0 : index
    %86 = vector.load %arg8[%c1_71, %c0_72, %c0_73] : memref<9x128x128xbf16, #tpu.memory_space<vmem>>, vector<1x128x128xbf16>
    %87 = vector.shape_cast %86 : vector<1x128x128xbf16> to vector<128x128xbf16>
    %cst_74 = arith.constant dense<0.000000e+00> : vector<286x128xf32>
    %88 = tpu.matmul %85, %87, %cst_74 {dimension_numbers = #tpu.dot_dimension_numbers<[1], [0], [0], [1], [0, 0, 1, 1], [], []>} : vector<286x128xbf16>, vector<128x128xbf16>, vector<286x128xf32> -> vector<286x128xf32>
    %89 = arith.addf %84, %88 : vector<286x128xf32>
    %c2_75 = arith.constant 2 : index
    %c0_76 = arith.constant 0 : index
    %90 = vector.load %arg14[%c2_75, %c0_76] : memref<328x128xbf16, #tpu.memory_space<vmem>>, vector<286x128xbf16>
    %c2_77 = arith.constant 2 : index
    %c0_78 = arith.constant 0 : index
    %c0_79 = arith.constant 0 : index
    %91 = vector.load %arg8[%c2_77, %c0_78, %c0_79] : memref<9x128x128xbf16, #tpu.memory_space<vmem>>, vector<1x128x128xbf16>
    %92 = vector.shape_cast %91 : vector<1x128x128xbf16> to vector<128x128xbf16>
    %cst_80 = arith.constant dense<0.000000e+00> : vector<286x128xf32>
    %93 = tpu.matmul %90, %92, %cst_80 {dimension_numbers = #tpu.dot_dimension_numbers<[1], [0], [0], [1], [0, 0, 1, 1], [], []>} : vector<286x128xbf16>, vector<128x128xbf16>, vector<286x128xf32> -> vector<286x128xf32>
    %94 = arith.addf %89, %93 : vector<286x128xf32>
    %c18_81 = arith.constant 18 : index
    %c0_82 = arith.constant 0 : index
    %95 = vector.load %arg14[%c18_81, %c0_82] : memref<328x128xbf16, #tpu.memory_space<vmem>>, vector<286x128xbf16>
    %c3_83 = arith.constant 3 : index
    %c0_84 = arith.constant 0 : index
    %c0_85 = arith.constant 0 : index
    %96 = vector.load %arg8[%c3_83, %c0_84, %c0_85] : memref<9x128x128xbf16, #tpu.memory_space<vmem>>, vector<1x128x128xbf16>
    %97 = vector.shape_cast %96 : vector<1x128x128xbf16> to vector<128x128xbf16>
    %cst_86 = arith.constant dense<0.000000e+00> : vector<286x128xf32>
    %98 = tpu.matmul %95, %97, %cst_86 {dimension_numbers = #tpu.dot_dimension_numbers<[1], [0], [0], [1], [0, 0, 1, 1], [], []>} : vector<286x128xbf16>, vector<128x128xbf16>, vector<286x128xf32> -> vector<286x128xf32>
    %99 = arith.addf %94, %98 : vector<286x128xf32>
    %c19_87 = arith.constant 19 : index
    %c0_88 = arith.constant 0 : index
    %100 = vector.load %arg14[%c19_87, %c0_88] : memref<328x128xbf16, #tpu.memory_space<vmem>>, vector<286x128xbf16>
    %c4_89 = arith.constant 4 : index
    %c0_90 = arith.constant 0 : index
    %c0_91 = arith.constant 0 : index
    %101 = vector.load %arg8[%c4_89, %c0_90, %c0_91] : memref<9x128x128xbf16, #tpu.memory_space<vmem>>, vector<1x128x128xbf16>
    %102 = vector.shape_cast %101 : vector<1x128x128xbf16> to vector<128x128xbf16>
    %cst_92 = arith.constant dense<0.000000e+00> : vector<286x128xf32>
    %103 = tpu.matmul %100, %102, %cst_92 {dimension_numbers = #tpu.dot_dimension_numbers<[1], [0], [0], [1], [0, 0, 1, 1], [], []>} : vector<286x128xbf16>, vector<128x128xbf16>, vector<286x128xf32> -> vector<286x128xf32>
    %104 = arith.addf %99, %103 : vector<286x128xf32>
    %c20_93 = arith.constant 20 : index
    %c0_94 = arith.constant 0 : index
    %105 = vector.load %arg14[%c20_93, %c0_94] : memref<328x128xbf16, #tpu.memory_space<vmem>>, vector<286x128xbf16>
    %c5_95 = arith.constant 5 : index
    %c0_96 = arith.constant 0 : index
    %c0_97 = arith.constant 0 : index
    %106 = vector.load %arg8[%c5_95, %c0_96, %c0_97] : memref<9x128x128xbf16, #tpu.memory_space<vmem>>, vector<1x128x128xbf16>
    %107 = vector.shape_cast %106 : vector<1x128x128xbf16> to vector<128x128xbf16>
    %cst_98 = arith.constant dense<0.000000e+00> : vector<286x128xf32>
    %108 = tpu.matmul %105, %107, %cst_98 {dimension_numbers = #tpu.dot_dimension_numbers<[1], [0], [0], [1], [0, 0, 1, 1], [], []>} : vector<286x128xbf16>, vector<128x128xbf16>, vector<286x128xf32> -> vector<286x128xf32>
    %109 = arith.addf %104, %108 : vector<286x128xf32>
    %c36_99 = arith.constant 36 : index
    %c0_100 = arith.constant 0 : index
    %110 = vector.load %arg14[%c36_99, %c0_100] : memref<328x128xbf16, #tpu.memory_space<vmem>>, vector<286x128xbf16>
    %c6_101 = arith.constant 6 : index
    %c0_102 = arith.constant 0 : index
    %c0_103 = arith.constant 0 : index
    %111 = vector.load %arg8[%c6_101, %c0_102, %c0_103] : memref<9x128x128xbf16, #tpu.memory_space<vmem>>, vector<1x128x128xbf16>
    %112 = vector.shape_cast %111 : vector<1x128x128xbf16> to vector<128x128xbf16>
    %cst_104 = arith.constant dense<0.000000e+00> : vector<286x128xf32>
    %113 = tpu.matmul %110, %112, %cst_104 {dimension_numbers = #tpu.dot_dimension_numbers<[1], [0], [0], [1], [0, 0, 1, 1], [], []>} : vector<286x128xbf16>, vector<128x128xbf16>, vector<286x128xf32> -> vector<286x128xf32>
    %114 = arith.addf %109, %113 : vector<286x128xf32>
    %c37_105 = arith.constant 37 : index
    %c0_106 = arith.constant 0 : index
    %115 = vector.load %arg14[%c37_105, %c0_106] : memref<328x128xbf16, #tpu.memory_space<vmem>>, vector<286x128xbf16>
    %c7_107 = arith.constant 7 : index
    %c0_108 = arith.constant 0 : index
    %c0_109 = arith.constant 0 : index
    %116 = vector.load %arg8[%c7_107, %c0_108, %c0_109] : memref<9x128x128xbf16, #tpu.memory_space<vmem>>, vector<1x128x128xbf16>
    %117 = vector.shape_cast %116 : vector<1x128x128xbf16> to vector<128x128xbf16>
    %cst_110 = arith.constant dense<0.000000e+00> : vector<286x128xf32>
    %118 = tpu.matmul %115, %117, %cst_110 {dimension_numbers = #tpu.dot_dimension_numbers<[1], [0], [0], [1], [0, 0, 1, 1], [], []>} : vector<286x128xbf16>, vector<128x128xbf16>, vector<286x128xf32> -> vector<286x128xf32>
    %119 = arith.addf %114, %118 : vector<286x128xf32>
    %c38_111 = arith.constant 38 : index
    %c0_112 = arith.constant 0 : index
    %120 = vector.load %arg14[%c38_111, %c0_112] : memref<328x128xbf16, #tpu.memory_space<vmem>>, vector<286x128xbf16>
    %c8_113 = arith.constant 8 : index
    %c0_114 = arith.constant 0 : index
    %c0_115 = arith.constant 0 : index
    %121 = vector.load %arg8[%c8_113, %c0_114, %c0_115] : memref<9x128x128xbf16, #tpu.memory_space<vmem>>, vector<1x128x128xbf16>
    %122 = vector.shape_cast %121 : vector<1x128x128xbf16> to vector<128x128xbf16>
    %cst_116 = arith.constant dense<0.000000e+00> : vector<286x128xf32>
    %123 = tpu.matmul %120, %122, %cst_116 {dimension_numbers = #tpu.dot_dimension_numbers<[1], [0], [0], [1], [0, 0, 1, 1], [], []>} : vector<286x128xbf16>, vector<128x128xbf16>, vector<286x128xf32> -> vector<286x128xf32>
    %124 = arith.addf %119, %123 : vector<286x128xf32>
    %c0_117 = arith.constant 0 : index
    %c0_118 = arith.constant 0 : index
    %125 = vector.load %arg9[%c0_117, %c0_118] : memref<1x128xf32, #tpu.memory_space<vmem>>, vector<1x128xf32>
    %126 = vector.broadcast %125 : vector<1x128xf32> to vector<286x128xf32>
    %127 = arith.addf %124, %126 : vector<286x128xf32>
    %cst_119 = arith.constant 2.000000e-01 : f32
    %128 = vector.broadcast %cst_119 : f32 to vector<286x128xf32>
    %129 = arith.mulf %128, %127 : vector<286x128xf32>
    %130 = arith.maximumf %127, %129 : vector<286x128xf32>
    %131 = vector.broadcast %0 : vector<286x1xf32> to vector<286x128xf32>
    %132 = arith.mulf %130, %131 : vector<286x128xf32>
    %c19_120 = arith.constant 19 : index
    %c0_121 = arith.constant 0 : index
    %133 = vector.load %arg13[%c19_120, %c0_121] : memref<328x128xf32, #tpu.memory_space<vmem>>, vector<286x128xf32>
    tpu.vector_store %arg13[%c19_120, %c0_121], %132 {strides = array<i32>} : memref<328x128xf32, #tpu.memory_space<vmem>>, vector<286x128xf32>,
    %cst_122 = arith.constant 0.000000e+00 : f32
    %134 = vector.broadcast %cst_122 : f32 to vector<286x128xf32>
    %c0_123 = arith.constant 0 : index
    %c0_124 = arith.constant 0 : index
    %135 = vector.load %arg13[%c0_123, %c0_124] : memref<328x128xf32, #tpu.memory_space<vmem>>, vector<286x128xf32>
    %136 = arith.truncf %135 : vector<286x128xf32> to vector<286x128xbf16>
    %c0_125 = arith.constant 0 : index
    %c0_126 = arith.constant 0 : index
    %c0_127 = arith.constant 0 : index
    %137 = vector.load %arg10[%c0_125, %c0_126, %c0_127] : memref<9x128x128xbf16, #tpu.memory_space<vmem>>, vector<1x128x128xbf16>
    %138 = vector.shape_cast %137 : vector<1x128x128xbf16> to vector<128x128xbf16>
    %cst_128 = arith.constant dense<0.000000e+00> : vector<286x128xf32>
    %139 = tpu.matmul %136, %138, %cst_128 {dimension_numbers = #tpu.dot_dimension_numbers<[1], [0], [0], [1], [0, 0, 1, 1], [], []>} : vector<286x128xbf16>, vector<128x128xbf16>, vector<286x128xf32> -> vector<286x128xf32>
    %140 = arith.addf %134, %139 : vector<286x128xf32>
    %c1_129 = arith.constant 1 : index
    %c0_130 = arith.constant 0 : index
    %141 = vector.load %arg13[%c1_129, %c0_130] : memref<328x128xf32, #tpu.memory_space<vmem>>, vector<286x128xf32>
    %142 = arith.truncf %141 : vector<286x128xf32> to vector<286x128xbf16>
    %c1_131 = arith.constant 1 : index
    %c0_132 = arith.constant 0 : index
    %c0_133 = arith.constant 0 : index
    %143 = vector.load %arg10[%c1_131, %c0_132, %c0_133] : memref<9x128x128xbf16, #tpu.memory_space<vmem>>, vector<1x128x128xbf16>
    %144 = vector.shape_cast %143 : vector<1x128x128xbf16> to vector<128x128xbf16>
    %cst_134 = arith.constant dense<0.000000e+00> : vector<286x128xf32>
    %145 = tpu.matmul %142, %144, %cst_134 {dimension_numbers = #tpu.dot_dimension_numbers<[1], [0], [0], [1], [0, 0, 1, 1], [], []>} : vector<286x128xbf16>, vector<128x128xbf16>, vector<286x128xf32> -> vector<286x128xf32>
    %146 = arith.addf %140, %145 : vector<286x128xf32>
    %c2_135 = arith.constant 2 : index
    %c0_136 = arith.constant 0 : index
    %147 = vector.load %arg13[%c2_135, %c0_136] : memref<328x128xf32, #tpu.memory_space<vmem>>, vector<286x128xf32>
    %148 = arith.truncf %147 : vector<286x128xf32> to vector<286x128xbf16>
    %c2_137 = arith.constant 2 : index
    %c0_138 = arith.constant 0 : index
    %c0_139 = arith.constant 0 : index
    %149 = vector.load %arg10[%c2_137, %c0_138, %c0_139] : memref<9x128x128xbf16, #tpu.memory_space<vmem>>, vector<1x128x128xbf16>
    %150 = vector.shape_cast %149 : vector<1x128x128xbf16> to vector<128x128xbf16>
    %cst_140 = arith.constant dense<0.000000e+00> : vector<286x128xf32>
    %151 = tpu.matmul %148, %150, %cst_140 {dimension_numbers = #tpu.dot_dimension_numbers<[1], [0], [0], [1], [0, 0, 1, 1], [], []>} : vector<286x128xbf16>, vector<128x128xbf16>, vector<286x128xf32> -> vector<286x128xf32>
    %152 = arith.addf %146, %151 : vector<286x128xf32>
    %c18_141 = arith.constant 18 : index
    %c0_142 = arith.constant 0 : index
    %153 = vector.load %arg13[%c18_141, %c0_142] : memref<328x128xf32, #tpu.memory_space<vmem>>, vector<286x128xf32>
    %154 = arith.truncf %153 : vector<286x128xf32> to vector<286x128xbf16>
    %c3_143 = arith.constant 3 : index
    %c0_144 = arith.constant 0 : index
    %c0_145 = arith.constant 0 : index
    %155 = vector.load %arg10[%c3_143, %c0_144, %c0_145] : memref<9x128x128xbf16, #tpu.memory_space<vmem>>, vector<1x128x128xbf16>
    %156 = vector.shape_cast %155 : vector<1x128x128xbf16> to vector<128x128xbf16>
    %cst_146 = arith.constant dense<0.000000e+00> : vector<286x128xf32>
    %157 = tpu.matmul %154, %156, %cst_146 {dimension_numbers = #tpu.dot_dimension_numbers<[1], [0], [0], [1], [0, 0, 1, 1], [], []>} : vector<286x128xbf16>, vector<128x128xbf16>, vector<286x128xf32> -> vector<286x128xf32>
    %158 = arith.addf %152, %157 : vector<286x128xf32>
    %c19_147 = arith.constant 19 : index
    %c0_148 = arith.constant 0 : index
    %159 = vector.load %arg13[%c19_147, %c0_148] : memref<328x128xf32, #tpu.memory_space<vmem>>, vector<286x128xf32>
    %160 = arith.truncf %159 : vector<286x128xf32> to vector<286x128xbf16>
    %c4_149 = arith.constant 4 : index
    %c0_150 = arith.constant 0 : index
    %c0_151 = arith.constant 0 : index
    %161 = vector.load %arg10[%c4_149, %c0_150, %c0_151] : memref<9x128x128xbf16, #tpu.memory_space<vmem>>, vector<1x128x128xbf16>
    %162 = vector.shape_cast %161 : vector<1x128x128xbf16> to vector<128x128xbf16>
    %cst_152 = arith.constant dense<0.000000e+00> : vector<286x128xf32>
    %163 = tpu.matmul %160, %162, %cst_152 {dimension_numbers = #tpu.dot_dimension_numbers<[1], [0], [0], [1], [0, 0, 1, 1], [], []>} : vector<286x128xbf16>, vector<128x128xbf16>, vector<286x128xf32> -> vector<286x128xf32>
    %164 = arith.addf %158, %163 : vector<286x128xf32>
    %c20_153 = arith.constant 20 : index
    %c0_154 = arith.constant 0 : index
    %165 = vector.load %arg13[%c20_153, %c0_154] : memref<328x128xf32, #tpu.memory_space<vmem>>, vector<286x128xf32>
    %166 = arith.truncf %165 : vector<286x128xf32> to vector<286x128xbf16>
    %c5_155 = arith.constant 5 : index
    %c0_156 = arith.constant 0 : index
    %c0_157 = arith.constant 0 : index
    %167 = vector.load %arg10[%c5_155, %c0_156, %c0_157] : memref<9x128x128xbf16, #tpu.memory_space<vmem>>, vector<1x128x128xbf16>
    %168 = vector.shape_cast %167 : vector<1x128x128xbf16> to vector<128x128xbf16>
    %cst_158 = arith.constant dense<0.000000e+00> : vector<286x128xf32>
    %169 = tpu.matmul %166, %168, %cst_158 {dimension_numbers = #tpu.dot_dimension_numbers<[1], [0], [0], [1], [0, 0, 1, 1], [], []>} : vector<286x128xbf16>, vector<128x128xbf16>, vector<286x128xf32> -> vector<286x128xf32>
    %170 = arith.addf %164, %169 : vector<286x128xf32>
    %c36_159 = arith.constant 36 : index
    %c0_160 = arith.constant 0 : index
    %171 = vector.load %arg13[%c36_159, %c0_160] : memref<328x128xf32, #tpu.memory_space<vmem>>, vector<286x128xf32>
    %172 = arith.truncf %171 : vector<286x128xf32> to vector<286x128xbf16>
    %c6_161 = arith.constant 6 : index
    %c0_162 = arith.constant 0 : index
    %c0_163 = arith.constant 0 : index
    %173 = vector.load %arg10[%c6_161, %c0_162, %c0_163] : memref<9x128x128xbf16, #tpu.memory_space<vmem>>, vector<1x128x128xbf16>
    %174 = vector.shape_cast %173 : vector<1x128x128xbf16> to vector<128x128xbf16>
    %cst_164 = arith.constant dense<0.000000e+00> : vector<286x128xf32>
    %175 = tpu.matmul %172, %174, %cst_164 {dimension_numbers = #tpu.dot_dimension_numbers<[1], [0], [0], [1], [0, 0, 1, 1], [], []>} : vector<286x128xbf16>, vector<128x128xbf16>, vector<286x128xf32> -> vector<286x128xf32>
    %176 = arith.addf %170, %175 : vector<286x128xf32>
    %c37_165 = arith.constant 37 : index
    %c0_166 = arith.constant 0 : index
    %177 = vector.load %arg13[%c37_165, %c0_166] : memref<328x128xf32, #tpu.memory_space<vmem>>, vector<286x128xf32>
    %178 = arith.truncf %177 : vector<286x128xf32> to vector<286x128xbf16>
    %c7_167 = arith.constant 7 : index
    %c0_168 = arith.constant 0 : index
    %c0_169 = arith.constant 0 : index
    %179 = vector.load %arg10[%c7_167, %c0_168, %c0_169] : memref<9x128x128xbf16, #tpu.memory_space<vmem>>, vector<1x128x128xbf16>
    %180 = vector.shape_cast %179 : vector<1x128x128xbf16> to vector<128x128xbf16>
    %cst_170 = arith.constant dense<0.000000e+00> : vector<286x128xf32>
    %181 = tpu.matmul %178, %180, %cst_170 {dimension_numbers = #tpu.dot_dimension_numbers<[1], [0], [0], [1], [0, 0, 1, 1], [], []>} : vector<286x128xbf16>, vector<128x128xbf16>, vector<286x128xf32> -> vector<286x128xf32>
    %182 = arith.addf %176, %181 : vector<286x128xf32>
    %c38_171 = arith.constant 38 : index
    %c0_172 = arith.constant 0 : index
    %183 = vector.load %arg13[%c38_171, %c0_172] : memref<328x128xf32, #tpu.memory_space<vmem>>, vector<286x128xf32>
    %184 = arith.truncf %183 : vector<286x128xf32> to vector<286x128xbf16>
    %c8_173 = arith.constant 8 : index
    %c0_174 = arith.constant 0 : index
    %c0_175 = arith.constant 0 : index
    %185 = vector.load %arg10[%c8_173, %c0_174, %c0_175] : memref<9x128x128xbf16, #tpu.memory_space<vmem>>, vector<1x128x128xbf16>
    %186 = vector.shape_cast %185 : vector<1x128x128xbf16> to vector<128x128xbf16>
    %cst_176 = arith.constant dense<0.000000e+00> : vector<286x128xf32>
    %187 = tpu.matmul %184, %186, %cst_176 {dimension_numbers = #tpu.dot_dimension_numbers<[1], [0], [0], [1], [0, 0, 1, 1], [], []>} : vector<286x128xbf16>, vector<128x128xbf16>, vector<286x128xf32> -> vector<286x128xf32>
    %188 = arith.addf %182, %187 : vector<286x128xf32>
    %c0_177 = arith.constant 0 : index
    %c0_178 = arith.constant 0 : index
    %189 = vector.load %arg11[%c0_177, %c0_178] : memref<1x128xf32, #tpu.memory_space<vmem>>, vector<1x128xf32>
    %190 = vector.broadcast %189 : vector<1x128xf32> to vector<286x128xf32>
    %191 = arith.addf %188, %190 : vector<286x128xf32>
    %cst_179 = arith.constant dense<0.000000e+00> : vector<64x128xf32>
    %192 = tpu.matmul %1, %191, %cst_179 {dimension_numbers = #tpu.dot_dimension_numbers<[1], [0], [0], [1], [0, 0, 1, 1], [], []>} : vector<64x286xf32>, vector<286x128xf32>, vector<64x128xf32> -> vector<64x128xf32>
    %193 = arith.addf %192, %9 : vector<64x128xf32>
    %c0_180 = arith.constant 0 : index
    %c0_181 = arith.constant 0 : index
    %194 = vector.load %arg12[%c0_180, %c0_181] : memref<64x128xf32, #tpu.memory_space<vmem>>, vector<64x128xf32>
    tpu.vector_store %arg12[%c0_180, %c0_181], %193 {strides = array<i32>} : memref<64x128xf32, #tpu.memory_space<vmem>>, vector<64x128xf32>,
    return
  }
  func.func @transform_0(%arg0: i32) -> (i32, i32) {
    %c0_i32 = arith.constant 0 : i32
    %c0_i32_0 = arith.constant 0 : i32
    return %arg0, %c0_i32 : i32, i32
  }
  func.func @transform_1(%arg0: i32) -> (i32, i32) {
    %c0_i32 = arith.constant 0 : i32
    %c0_i32_0 = arith.constant 0 : i32
    %c0_i32_1 = arith.constant 0 : i32
    return %c0_i32, %c0_i32_0 : i32, i32
  }
  func.func @transform_2(%arg0: i32) -> (i32, i32) {
    %c0_i32 = arith.constant 0 : i32
    %c0_i32_0 = arith.constant 0 : i32
    %c0_i32_1 = arith.constant 0 : i32
    return %c0_i32, %c0_i32_0 : i32, i32
  }
  func.func @transform_3(%arg0: i32) -> (i32, i32) {
    %c0_i32 = arith.constant 0 : i32
    %c0_i32_0 = arith.constant 0 : i32
    %c0_i32_1 = arith.constant 0 : i32
    return %c0_i32, %c0_i32_0 : i32, i32
  }
  func.func @transform_4(%arg0: i32) -> (i32, i32) {
    %c0_i32 = arith.constant 0 : i32
    %c0_i32_0 = arith.constant 0 : i32
    %c0_i32_1 = arith.constant 0 : i32
    return %c0_i32, %c0_i32_0 : i32, i32
  }
  func.func @transform_5(%arg0: i32) -> (i32, i32, i32) {
    %c0_i32 = arith.constant 0 : i32
    %c0_i32_0 = arith.constant 0 : i32
    %c0_i32_1 = arith.constant 0 : i32
    %c0_i32_2 = arith.constant 0 : i32
    return %c0_i32, %c0_i32_0, %c0_i32_1 : i32, i32, i32
  }
  func.func @transform_6(%arg0: i32) -> (i32, i32) {
    %c0_i32 = arith.constant 0 : i32
    %c0_i32_0 = arith.constant 0 : i32
    %c0_i32_1 = arith.constant 0 : i32
    return %c0_i32, %c0_i32_0 : i32, i32
  }
  func.func @transform_7(%arg0: i32) -> (i32, i32, i32) {
    %c0_i32 = arith.constant 0 : i32
    %c0_i32_0 = arith.constant 0 : i32
    %c0_i32_1 = arith.constant 0 : i32
    %c0_i32_2 = arith.constant 0 : i32
    return %c0_i32, %c0_i32_0, %c0_i32_1 : i32, i32, i32
  }
  func.func @transform_8(%arg0: i32) -> (i32, i32) {
    %c0_i32 = arith.constant 0 : i32
    %c0_i32_0 = arith.constant 0 : i32
    %c0_i32_1 = arith.constant 0 : i32
    return %c0_i32, %c0_i32_0 : i32, i32
  }
  func.func @transform_9(%arg0: i32) -> (i32, i32, i32) {
    %c0_i32 = arith.constant 0 : i32
    %c0_i32_0 = arith.constant 0 : i32
    %c0_i32_1 = arith.constant 0 : i32
    %c0_i32_2 = arith.constant 0 : i32
    return %c0_i32, %c0_i32_0, %c0_i32_1 : i32, i32, i32
  }
  func.func @transform_10(%arg0: i32) -> (i32, i32) {
    %c0_i32 = arith.constant 0 : i32
    %c0_i32_0 = arith.constant 0 : i32
    %c0_i32_1 = arith.constant 0 : i32
    return %c0_i32, %c0_i32_0 : i32, i32
  }
  func.func @transform_11(%arg0: i32) -> (i32, i32) {
    %c0_i32 = arith.constant 0 : i32
    %c0_i32_0 = arith.constant 0 : i32
    return %arg0, %c0_i32 : i32, i32
  }
  func.func @transform_12(%arg0: i32) -> (i32, i32) {
    %c0_i32 = arith.constant 0 : i32
    %c0_i32_0 = arith.constant 0 : i32
    return %arg0, %c0_i32 : i32, i32
  }
}

</mosaic_0001>

<llo_original>
// kernel: down_block_forward.1
$region0: #{down_block_forward.1}
  #allocation0 [shape = 'u32[]', space=smem, size = 0x4, offset = 0x4, fixed_abs, tag = 'smem constant byte address 0x4 - core index']
  #allocation1 [shape = 'u32[144,128]{1,0:T(1,128)}', space=vmem, size = 0x12000, scoped, tag = 'internal scratch']
  #allocation2 [shape = 'bf16[328,128]{1,0:T(8,128)(2,1)}', space=vmem, size = 0x14800, scoped, tag = 'scratch operand']
  %s0 = inlined_call_operand.vmem [shape: f32[656,4], index: 0, kind: input, shape index: {}]
  %s1 = inlined_call_operand.vmem [shape: f32[286,1], index: 1, kind: input, shape index: {}]
  %s2 = inlined_call_operand.vmem [shape: f32[64,286], index: 2, kind: input, shape index: {}]
  %s3 = inlined_call_operand.vmem [shape: bf16[4,128], index: 3, kind: input, shape index: {}]
  %s4 = inlined_call_operand.vmem [shape: f32[1,128], index: 4, kind: input, shape index: {}]
  %s5 = inlined_call_operand.vmem [shape: bf16[9,4,128], index: 5, kind: input, shape index: {}]
  %s6 = inlined_call_operand.vmem [shape: f32[1,128], index: 6, kind: input, shape index: {}]
  %s7 = inlined_call_operand.vmem [shape: bf16[9,128,128], index: 7, kind: input, shape index: {}]
  %s8 = inlined_call_operand.vmem [shape: f32[1,128], index: 8, kind: input, shape index: {}]
  %s9 = inlined_call_operand.vmem [shape: bf16[9,128,128], index: 9, kind: input, shape index: {}]
  %s10 = inlined_call_operand.vmem [shape: f32[1,128], index: 10, kind: input, shape index: {}]
  %s11 = inlined_call_operand.vmem [shape: f32[128,128], index: 11, kind: output, shape index: {0}]
  %s12 = inlined_call_operand.vmem [shape: f32[656,128], index: 12, kind: output, shape index: {1}]
  %13 = xla_tuple %s11, %s12
  %s14 = sld [smem:[#allocation0]]
  $region85: #{down_block_forward.1} parent=0
    _
  %s16 = ssub.s32 1, %s14
  %s17 = scalar_select 0, %s16, %s14
  loop: start=0, step=1, limit=4
  $region2: #{down_block_forward.1} parent=0 // loop_pre_header
    _
  $region3: #{down_block_forward.1} parent=0 // loop_header
    %s19 = sphi 0, %s23
    %p20 = scmp.ge.s32.totalorder %s19, 4
    %s29 = sphi 0, %s31
    %s32 = sphi 0, %s29
    %s33 = sphi 0, %s32
    %s49 = sphi 0, %s33
    %s53 = sphi 0, %s53
    %s55 = sphi 0, %s53
    %s56 = sphi 0, %s55
    %s70 = sphi 0, %s56
    %s74 = sphi 0, %s74
    %s76 = sphi 0, %s74
    %s77 = sphi 0, %s76
    %s91 = sphi 0, %s77
    %s95 = sphi 0, %s95
    %s97 = sphi 0, %s95
    %s98 = sphi 0, %s97
    %s112 = sphi 0, %s98
    %s116 = sphi 0, %s116
    %s118 = sphi 0, %s116
    %s119 = sphi 0, %s118
    %s133 = sphi 0, %s119
    %s137 = sphi 0, %s137
    %s139 = sphi 0, %s137
    %s140 = sphi 0, %s139
    %s154 = sphi 0, %s140
    %s158 = sphi 0, %s158
    %s160 = sphi 0, %s158
    %s161 = sphi 0, %s160
    %s175 = sphi 0, %s161
    %s179 = sphi 0, %s179
    %s181 = sphi 0, %s179
    %s182 = sphi 0, %s181
    %s196 = sphi 0, %s182
    %s200 = sphi 0, %s200
    %s202 = sphi 0, %s200
    %s203 = sphi 0, %s202
    %s217 = sphi 0, %s203
    %s221 = sphi 0, %s221
    %s223 = sphi 0, %s221
    %s224 = sphi 0, %s223
    %s238 = sphi 0, %s224
    %s242 = sphi 0, %s242
    %s244 = sphi 0, %s242
    %s245 = sphi 0, %s244
    %s259 = sphi 0, %s245
    %s265 = sphi 0, %s267
    %s268 = sphi 0, %s265
    %s269 = sphi 0, %s268
    %s285 = sphi 0, %s269
    %s291 = sphi 0, %s293
    %s294 = sphi 0, %s291
    %s295 = sphi 0, %s294
    %s311 = sphi 0, %s295
  $region4: #{down_block_forward.1} parent=0 // loop_header_branch
    %22 = sbr.rel (%p20) target = $region8
  $region5: #{down_block_forward.1} parent=0 // loop_body
    %s24 = ssub.s32 %s19, 1
    %s25 = ssub.s32 %s19, 2
    %s26 = sadd.s32 %s19, 1
    %s27 = ssub.s32 %s19, %s26
    %p28 = scmp.eq.s32.totalorder %s27, 0
    %s30 = sadd.s32 %s29, 1
    %s31 = scalar_select %p28, %s29, %s30
    %p34 = pneg %p28
    %p35 = scmp.eq.s32.totalorder %s19, 1
    %p36 = por %p34, %p35
    %p37 = scmp.ne.s32.totalorder %s29, %s32
    %p38 = scmp.eq.s32.totalorder %s19, 0
    %p39 = por %p37, %p38
    %p40 = scmp.ne.s32.totalorder %s29, %s32
    %p41 = scmp.eq.s32.totalorder %s24, 1
    %p42 = por %p40, %p41
    %p43 = scmp.ne.s32.totalorder %s32, %s33
    %p44 = scmp.eq.s32.totalorder %s24, 0
    %p45 = por %p43, %p44
    %p46 = scmp.ne.s32.totalorder %s32, %s33
    %p47 = scmp.eq.s32.totalorder %s25, 1
    %p48 = por %p46, %p47
    %p50 = scmp.ne.s32.totalorder %s33, %s49
    %p51 = scmp.eq.s32.totalorder %s25, 0
    %p52 = por %p50, %p51
    %s54 = sadd.s32 %s53, 1
    %p57 = scmp.eq.s32.totalorder %s19, 1
    %p58 = scmp.ne.s32.totalorder %s53, %s55
    %p59 = scmp.eq.s32.totalorder %s19, 0
    %p60 = por %p58, %p59
    %p61 = scmp.ne.s32.totalorder %s53, %s55
    %p62 = scmp.eq.s32.totalorder %s24, 1
    %p63 = por %p61, %p62
    %p64 = scmp.ne.s32.totalorder %s55, %s56
    %p65 = scmp.eq.s32.totalorder %s24, 0
    %p66 = por %p64, %p65
    %p67 = scmp.ne.s32.totalorder %s55, %s56
    %p68 = scmp.eq.s32.totalorder %s25, 1
    %p69 = por %p67, %p68
    %p71 = scmp.ne.s32.totalorder %s56, %s70
    %p72 = scmp.eq.s32.totalorder %s25, 0
    %p73 = por %p71, %p72
    %s75 = sadd.s32 %s74, 1
    %p78 = scmp.eq.s32.totalorder %s19, 1
    %p79 = scmp.ne.s32.totalorder %s74, %s76
    %p80 = scmp.eq.s32.totalorder %s19, 0
    %p81 = por %p79, %p80
    %p82 = scmp.ne.s32.totalorder %s74, %s76
    %p83 = scmp.eq.s32.totalorder %s24, 1
    %p84 = por %p82, %p83
    %p85 = scmp.ne.s32.totalorder %s76, %s77
    %p86 = scmp.eq.s32.totalorder %s24, 0
    %p87 = por %p85, %p86
    %p88 = scmp.ne.s32.totalorder %s76, %s77
    %p89 = scmp.eq.s32.totalorder %s25, 1
    %p90 = por %p88, %p89
    %p92 = scmp.ne.s32.totalorder %s77, %s91
    %p93 = scmp.eq.s32.totalorder %s25, 0
    %p94 = por %p92, %p93
    %s96 = sadd.s32 %s95, 1
    %p99 = scmp.eq.s32.totalorder %s19, 1
    %p100 = scmp.ne.s32.totalorder %s95, %s97
    %p101 = scmp.eq.s32.totalorder %s19, 0
    %p102 = por %p100, %p101
    %p103 = scmp.ne.s32.totalorder %s95, %s97
    %p104 = scmp.eq.s32.totalorder %s24, 1
    %p105 = por %p103, %p104
    %p106 = scmp.ne.s32.totalorder %s97, %s98
    %p107 = scmp.eq.s32.totalorder %s24, 0
    %p108 = por %p106, %p107
    %p109 = scmp.ne.s32.totalorder %s97, %s98
    %p110 = scmp.eq.s32.totalorder %s25, 1
    %p111 = por %p109, %p110
    %p113 = scmp.ne.s32.totalorder %s98, %s112
    %p114 = scmp.eq.s32.totalorder %s25, 0
    %p115 = por %p113, %p114
    %s117 = sadd.s32 %s116, 1
    %p120 = scmp.eq.s32.totalorder %s19, 1
    %p121 = scmp.ne.s32.totalorder %s116, %s118
    %p122 = scmp.eq.s32.totalorder %s19, 0
    %p123 = por %p121, %p122
    %p124 = scmp.ne.s32.totalorder %s116, %s118
    %p125 = scmp.eq.s32.totalorder %s24, 1
    %p126 = por %p124, %p125
    %p127 = scmp.ne.s32.totalorder %s118, %s119
    %p128 = scmp.eq.s32.totalorder %s24, 0
    %p129 = por %p127, %p128
    %p130 = scmp.ne.s32.totalorder %s118, %s119
    %p131 = scmp.eq.s32.totalorder %s25, 1
    %p132 = por %p130, %p131
    %p134 = scmp.ne.s32.totalorder %s119, %s133
    %p135 = scmp.eq.s32.totalorder %s25, 0
    %p136 = por %p134, %p135
    %s138 = sadd.s32 %s137, 1
    %p141 = scmp.eq.s32.totalorder %s19, 1
    %p142 = scmp.ne.s32.totalorder %s137, %s139
    %p143 = scmp.eq.s32.totalorder %s19, 0
    %p144 = por %p142, %p143
    %p145 = scmp.ne.s32.totalorder %s137, %s139
    %p146 = scmp.eq.s32.totalorder %s24, 1
    %p147 = por %p145, %p146
    %p148 = scmp.ne.s32.totalorder %s139, %s140
    %p149 = scmp.eq.s32.totalorder %s24, 0
    %p150 = por %p148, %p149
    %p151 = scmp.ne.s32.totalorder %s139, %s140
    %p152 = scmp.eq.s32.totalorder %s25, 1
    %p153 = por %p151, %p152
    %p155 = scmp.ne.s32.totalorder %s140, %s154
    %p156 = scmp.eq.s32.totalorder %s25, 0
    %p157 = por %p155, %p156
    %s159 = sadd.s32 %s158, 1
    %p162 = scmp.eq.s32.totalorder %s19, 1
    %p163 = scmp.ne.s32.totalorder %s158, %s160
    %p164 = scmp.eq.s32.totalorder %s19, 0
    %p165 = por %p163, %p164
    %p166 = scmp.ne.s32.totalorder %s158, %s160
    %p167 = scmp.eq.s32.totalorder %s24, 1
    %p168 = por %p166, %p167
    %p169 = scmp.ne.s32.totalorder %s160, %s161
    %p170 = scmp.eq.s32.totalorder %s24, 0
    %p171 = por %p169, %p170
    %p172 = scmp.ne.s32.totalorder %s160, %s161
    %p173 = scmp.eq.s32.totalorder %s25, 1
    %p174 = por %p172, %p173
    %p176 = scmp.ne.s32.totalorder %s161, %s175
    %p177 = scmp.eq.s32.totalorder %s25, 0
    %p178 = por %p176, %p177
    %s180 = sadd.s32 %s179, 1
    %p183 = scmp.eq.s32.totalorder %s19, 1
    %p184 = scmp.ne.s32.totalorder %s179, %s181
    %p185 = scmp.eq.s32.totalorder %s19, 0
    %p186 = por %p184, %p185
    %p187 = scmp.ne.s32.totalorder %s179, %s181
    %p188 = scmp.eq.s32.totalorder %s24, 1
    %p189 = por %p187, %p188
    %p190 = scmp.ne.s32.totalorder %s181, %s182
    %p191 = scmp.eq.s32.totalorder %s24, 0
    %p192 = por %p190, %p191
    %p193 = scmp.ne.s32.totalorder %s181, %s182
    %p194 = scmp.eq.s32.totalorder %s25, 1
    %p195 = por %p193, %p194
    %p197 = scmp.ne.s32.totalorder %s182, %s196
    %p198 = scmp.eq.s32.totalorder %s25, 0
    %p199 = por %p197, %p198
    %s201 = sadd.s32 %s200, 1
    %p204 = scmp.eq.s32.totalorder %s19, 1
    %p205 = scmp.ne.s32.totalorder %s200, %s202
    %p206 = scmp.eq.s32.totalorder %s19, 0
    %p207 = por %p205, %p206
    %p208 = scmp.ne.s32.totalorder %s200, %s202
    %p209 = scmp.eq.s32.totalorder %s24, 1
    %p210 = por %p208, %p209
    %p211 = scmp.ne.s32.totalorder %s202, %s203
    %p212 = scmp.eq.s32.totalorder %s24, 0
    %p213 = por %p211, %p212
    %p214 = scmp.ne.s32.totalorder %s202, %s203
    %p215 = scmp.eq.s32.totalorder %s25, 1
    %p216 = por %p214, %p215
    %p218 = scmp.ne.s32.totalorder %s203, %s217
    %p219 = scmp.eq.s32.totalorder %s25, 0
    %p220 = por %p218, %p219
    %s222 = sadd.s32 %s221, 1
    %p225 = scmp.eq.s32.totalorder %s19, 1
    %p226 = scmp.ne.s32.totalorder %s221, %s223
    %p227 = scmp.eq.s32.totalorder %s19, 0
    %p228 = por %p226, %p227
    %p229 = scmp.ne.s32.totalorder %s221, %s223
    %p230 = scmp.eq.s32.totalorder %s24, 1
    %p231 = por %p229, %p230
    %p232 = scmp.ne.s32.totalorder %s223, %s224
    %p233 = scmp.eq.s32.totalorder %s24, 0
    %p234 = por %p232, %p233
    %p235 = scmp.ne.s32.totalorder %s223, %s224
    %p236 = scmp.eq.s32.totalorder %s25, 1
    %p237 = por %p235, %p236
    %p239 = scmp.ne.s32.totalorder %s224, %s238
    %p240 = scmp.eq.s32.totalorder %s25, 0
    %p241 = por %p239, %p240
    %s243 = sadd.s32 %s242, 1
    %p246 = scmp.eq.s32.totalorder %s19, 1
    %p247 = scmp.ne.s32.totalorder %s242, %s244
    %p248 = scmp.eq.s32.totalorder %s19, 0
    %p249 = por %p247, %p248
    %p250 = scmp.ne.s32.totalorder %s242, %s244
    %p251 = scmp.eq.s32.totalorder %s24, 1
    %p252 = por %p250, %p251
    %p253 = scmp.ne.s32.totalorder %s244, %s245
    %p254 = scmp.eq.s32.totalorder %s24, 0
    %p255 = por %p253, %p254
    %p256 = scmp.ne.s32.totalorder %s244, %s245
    %p257 = scmp.eq.s32.totalorder %s25, 1
    %p258 = por %p256, %p257
    %p260 = scmp.ne.s32.totalorder %s245, %s259
    %p261 = scmp.eq.s32.totalorder %s25, 0
    %p262 = por %p260, %p261
    %s263 = ssub.s32 %s19, %s26
    %p264 = scmp.eq.s32.totalorder %s263, 0
    %s266 = sadd.s32 %s265, 1
    %s267 = scalar_select %p264, %s265, %s266
    %p270 = pneg %p264
    %p271 = scmp.eq.s32.totalorder %s19, 1
    %p272 = por %p270, %p271
    %p273 = scmp.ne.s32.totalorder %s265, %s268
    %p274 = scmp.eq.s32.totalorder %s19, 0
    %p275 = por %p273, %p274
    %p276 = scmp.ne.s32.totalorder %s265, %s268
    %p277 = scmp.eq.s32.totalorder %s24, 1
    %p278 = por %p276, %p277
    %p279 = scmp.ne.s32.totalorder %s268, %s269
    %p280 = scmp.eq.s32.totalorder %s24, 0
    %p281 = por %p279, %p280
    %p282 = scmp.ne.s32.totalorder %s268, %s269
    %p283 = scmp.eq.s32.totalorder %s25, 1
    %p284 = por %p282, %p283
    %p286 = scmp.ne.s32.totalorder %s269, %s285
    %p287 = scmp.eq.s32.totalorder %s25, 0
    %p288 = por %p286, %p287
    %s289 = ssub.s32 %s19, %s26
    %p290 = scmp.eq.s32.totalorder %s289, 0
    %s292 = sadd.s32 %s291, 1
    %s293 = scalar_select %p290, %s291, %s292
    %p296 = pneg %p290
    %p297 = scmp.eq.s32.totalorder %s19, 1
    %p298 = por %p296, %p297
    %p299 = scmp.ne.s32.totalorder %s291, %s294
    %p300 = scmp.eq.s32.totalorder %s19, 0
    %p301 = por %p299, %p300
    %p302 = scmp.ne.s32.totalorder %s291, %s294
    %p303 = scmp.eq.s32.totalorder %s24, 1
    %p304 = por %p302, %p303
    %p305 = scmp.ne.s32.totalorder %s294, %s295
    %p306 = scmp.eq.s32.totalorder %s24, 0
    %p307 = por %p305, %p306
    %p308 = scmp.ne.s32.totalorder %s294, %s295
    %p309 = scmp.eq.s32.totalorder %s25, 1
    %p310 = por %p308, %p309
    %p312 = scmp.ne.s32.totalorder %s295, %s311
    %p313 = scmp.eq.s32.totalorder %s25, 0
    %p314 = por %p312, %p313
    %p315 = scmp.le.s32.totalorder 1, %s19
    %p316 = scmp.lt.s32.totalorder %s19, 3
    %p317 = pnand %p315, %p316
    %p318 = pneg %p317
    // Predicated region
    $region9: #{down_block_forward.1} parent=5 // pred_check
      _
    $region10: #{down_block_forward.1} parent=5 // pred_check_branch
      %320 = sbr.rel (%p317) target = $region12
    $region11: #{down_block_forward.1} parent=5 // pred_region
      %s321 = ssub.s32 %s19, 1
      // Predicated region
      $region13: #{down_block_forward.1} parent=11 // pred_check
        %p322 = pneg %p66
      $region14: #{down_block_forward.1} parent=11 // pred_check_branch
        %324 = sbr.rel (%p322) target = $region16
      $region15: #{down_block_forward.1} parent=11 // pred_region
        _
      $region16: #{down_block_forward.1} parent=11 // pred_fallthru
        _
      // Predicated region
      $region17: #{down_block_forward.1} parent=11 // pred_check
        %p325 = pneg %p87
      $region18: #{down_block_forward.1} parent=11 // pred_check_branch
        %327 = sbr.rel (%p325) target = $region20
      $region19: #{down_block_forward.1} parent=11 // pred_region
        _
      $region20: #{down_block_forward.1} parent=11 // pred_fallthru
        _
      // Predicated region
      $region21: #{down_block_forward.1} parent=11 // pred_check
        %p328 = pneg %p108
      $region22: #{down_block_forward.1} parent=11 // pred_check_branch
        %330 = sbr.rel (%p328) target = $region24
      $region23: #{down_block_forward.1} parent=11 // pred_region
        _
      $region24: #{down_block_forward.1} parent=11 // pred_fallthru
        _
      // Predicated region
      $region25: #{down_block_forward.1} parent=11 // pred_check
        %p331 = pneg %p129
      $region26: #{down_block_forward.1} parent=11 // pred_check_branch
        %333 = sbr.rel (%p331) target = $region28
      $region27: #{down_block_forward.1} parent=11 // pred_region
        _
      $region28: #{down_block_forward.1} parent=11 // pred_fallthru
        _
      // Predicated region
      $region29: #{down_block_forward.1} parent=11 // pred_check
        %p334 = pneg %p150
      $region30: #{down_block_forward.1} parent=11 // pred_check_branch
        %336 = sbr.rel (%p334) target = $region32
      $region31: #{down_block_forward.1} parent=11 // pred_region
        _
      $region32: #{down_block_forward.1} parent=11 // pred_fallthru
        _
      // Predicated region
      $region33: #{down_block_forward.1} parent=11 // pred_check
        %p337 = pneg %p171
      $region34: #{down_block_forward.1} parent=11 // pred_check_branch
        %339 = sbr.rel (%p337) target = $region36
      $region35: #{down_block_forward.1} parent=11 // pred_region
        _
      $region36: #{down_block_forward.1} parent=11 // pred_fallthru
        _
      // Predicated region
      $region37: #{down_block_forward.1} parent=11 // pred_check
        %p340 = pneg %p192
      $region38: #{down_block_forward.1} parent=11 // pred_check_branch
        %342 = sbr.rel (%p340) target = $region40
      $region39: #{down_block_forward.1} parent=11 // pred_region
        _
      $region40: #{down_block_forward.1} parent=11 // pred_fallthru
        _
      // Predicated region
      $region41: #{down_block_forward.1} parent=11 // pred_check
        %p343 = pneg %p213
      $region42: #{down_block_forward.1} parent=11 // pred_check_branch
        %345 = sbr.rel (%p343) target = $region44
      $region43: #{down_block_forward.1} parent=11 // pred_region
        _
      $region44: #{down_block_forward.1} parent=11 // pred_fallthru
        _
      // Predicated region
      $region45: #{down_block_forward.1} parent=11 // pred_check
        %p346 = pneg %p234
      $region46: #{down_block_forward.1} parent=11 // pred_check_branch
        %348 = sbr.rel (%p346) target = $region48
      $region47: #{down_block_forward.1} parent=11 // pred_region
        _
      $region48: #{down_block_forward.1} parent=11 // pred_fallthru
        _
      // Predicated region
      $region49: #{down_block_forward.1} parent=11 // pred_check
        %p349 = pneg %p255
      $region50: #{down_block_forward.1} parent=11 // pred_check_branch
        %351 = sbr.rel (%p349) target = $region52
      $region51: #{down_block_forward.1} parent=11 // pred_region
        _
      $region52: #{down_block_forward.1} parent=11 // pred_fallthru
        _
    $region12: #{down_block_forward.1} parent=5 // pred_fallthru
      _
    %p352 = scmp.lt.s32.totalorder %s19, 2
    // Predicated region
    $region53: #{down_block_forward.1} parent=5 // pred_check
      %p353 = pneg %p352
    $region54: #{down_block_forward.1} parent=5 // pred_check_branch
      %355 = sbr.rel (%p353) target = $region56
    $region55: #{down_block_forward.1} parent=5 // pred_region
      // Predicated region
      $region57: #{down_block_forward.1} parent=55 // pred_check
        %p356 = pneg %p39
      $region58: #{down_block_forward.1} parent=55 // pred_check_branch
        %358 = sbr.rel (%p356) target = $region60
      $region59: #{down_block_forward.1} parent=55 // pred_region
        %s359 = smul.u32 41, %s19
        %p360 = scmp.lt.s32.totalorder %s359, 81
        %s361 = scalar_select %p360, %s359, 81
        %s362 = smul.addr %s361, 8
        %s363 = scalar_lea.vmem %s0, %s362
        %s364 = smul.u32 41, %s19
      $region60: #{down_block_forward.1} parent=55 // pred_fallthru
        _
    $region56: #{down_block_forward.1} parent=5 // pred_fallthru
      _
    %p365 = scmp.le.s32.totalorder 1, %s19
    %p366 = scmp.lt.s32.totalorder %s19, 3
    %p367 = pnand %p365, %p366
    %p368 = pneg %p367
    // Predicated region
    $region61: #{down_block_forward.1} parent=5 // pred_check
      _
    $region62: #{down_block_forward.1} parent=5 // pred_check_branch
      %370 = sbr.rel (%p367) target = $region64
    $region63: #{down_block_forward.1} parent=5 // pred_region
      %s371 = ssub.s32 %s19, 1
      %s372 = smul.u32 41, %s24
      %p373 = scmp.lt.s32.totalorder %s372, 81
      %s374 = scalar_select %p373, %s372, 81
      %s375 = smul.addr %s374, 8
      %s376 = scalar_lea.vmem %s0, %s375
      %p377 = pneg %p45
      %p378 = pneg %p42
      %p379 = pneg %p66
      %p380 = pneg %p63
      %p381 = pneg %p87
      %p382 = pneg %p84
      %p383 = pneg %p108
      %p384 = pneg %p105
      %p385 = pneg %p129
      %p386 = pneg %p126
      %p387 = pneg %p150
      %p388 = pneg %p147
      %p389 = pneg %p171
      %p390 = pneg %p168
      %p391 = pneg %p192
      %p392 = pneg %p189
      %p393 = pneg %p213
      %p394 = pneg %p210
      %p395 = pneg %p234
      %p396 = pneg %p231
      %p397 = pneg %p255
      %p398 = pneg %p252
      %p399 = pneg %p281
      %p400 = pneg %p278
      %s401 = smul.u32 8, %s24
      %p402 = scmp.lt.s32.totalorder %s401, 15
      %s403 = scalar_select %p402, %s401, 15
      %s404 = smul.addr %s403, 8
      %s405 = scalar_lea.vmem %s11, %s404
      %p406 = pneg %p307
      %p407 = pneg %p304
      %s408 = smul.u32 41, %s24
      %p409 = scmp.lt.s32.totalorder %s408, 81
      %s410 = scalar_select %p409, %s408, 81
      %s411 = smul.addr %s410, 8
      %s412 = scalar_lea.vmem %s12, %s411
      %s413 = smul.u32 41, %s24
      %p414 = scmp.lt.s32.totalorder %s413, 81
      %s415 = scalar_select %p414, %s413, 81
      %s416 = smul.addr %s415, 8
      %s417 = scalar_lea.vmem %s0, %s416
      %s418 = smul.u32 41, %s24
      %s419 = smul.u32 8, %s24
      %p420 = scmp.lt.s32.totalorder %s419, 15
      %s421 = scalar_select %p420, %s419, 15
      %s422 = smul.addr %s421, 8
      %s423 = scalar_lea.vmem %s11, %s422
      %s424 = smul.u32 8, %s24
      %s425 = smul.u32 41, %s24
      %p426 = scmp.lt.s32.totalorder %s425, 81
      %s427 = scalar_select %p426, %s425, 81
      %s428 = smul.addr %s427, 8
      %s429 = scalar_lea.vmem %s12, %s428
      %s430 = smul.u32 41, %s24
      %v432 = vld [vmem:[%s1] sm:$0xff]
      %v433 = vld [vmem:[%s1 + $0x8] sm:$0xff]
      %v434 = vld [vmem:[%s1 + $0x10] sm:$0xff]
      %v435 = vld [vmem:[%s1 + $0x18] sm:$0xff]
      %v436 = vld [vmem:[%s1 + $0x20] sm:$0xff]
      %v437 = vld [vmem:[%s1 + $0x28] sm:$0xff]
      %v438 = vld [vmem:[%s1 + $0x30] sm:$0xff]
      %v439 = vld [vmem:[%s1 + $0x38] sm:$0xff]
      %v440 = vld [vmem:[%s1 + $0x40] sm:$0xff]
      %v441 = vld [vmem:[%s1 + $0x48] sm:$0xff]
      %v442 = vld [vmem:[%s1 + $0x50] sm:$0xff]
      %v443 = vld [vmem:[%s1 + $0x58] sm:$0xff]
      %v444 = vld [vmem:[%s1 + $0x60] sm:$0xff]
      %v445 = vld [vmem:[%s1 + $0x68] sm:$0xff]
      %v446 = vld [vmem:[%s1 + $0x70] sm:$0xff]
      %v447 = vld [vmem:[%s1 + $0x78] sm:$0xff]
      %v448 = vld [vmem:[%s1 + $0x80] sm:$0xff]
      %v449 = vld [vmem:[%s1 + $0x88] sm:$0xff]
      %v450 = vld [vmem:[%s1 + $0x90] sm:$0xff]
      %v451 = vld [vmem:[%s1 + $0x98] sm:$0xff]
      %v452 = vld [vmem:[%s1 + $0xa0] sm:$0xff]
      %v453 = vld [vmem:[%s1 + $0xa8] sm:$0xff]
      %v454 = vld [vmem:[%s1 + $0xb0] sm:$0xff]
      %v455 = vld [vmem:[%s1 + $0xb8] sm:$0xff]
      %v456 = vld [vmem:[%s1 + $0xc0] sm:$0xff]
      %v457 = vld [vmem:[%s1 + $0xc8] sm:$0xff]
      %v458 = vld [vmem:[%s1 + $0xd0] sm:$0xff]
      %v459 = vld [vmem:[%s1 + $0xd8] sm:$0xff]
      %v460 = vld [vmem:[%s1 + $0xe0] sm:$0xff]
      %v461 = vld [vmem:[%s1 + $0xe8] sm:$0xff]
      %v462 = vld [vmem:[%s1 + $0xf0] sm:$0xff]
      %v463 = vld [vmem:[%s1 + $0xf8] sm:$0xff]
      %v464 = vld [vmem:[%s1 + $0x100] sm:$0xff]
      %v465 = vld [vmem:[%s1 + $0x108] sm:$0xff]
      %v466 = vld [vmem:[%s1 + $0x110] sm:$0xff]
      %v467 = vld [vmem:[%s1 + $0x118] sm:$0x3f]
      %v468 = vld [vmem:[%s2] sm:$0xff]
      %v469 = vld [vmem:[%s2 + $0x8] sm:$0xff]
      %v470 = vld [vmem:[%s2 + $0x10] sm:$0xff]
      %v471 = vld [vmem:[%s2 + $0x18] sm:$0xff]
      %v472 = vld [vmem:[%s2 + $0x20] sm:$0xff]
      %v473 = vld [vmem:[%s2 + $0x28] sm:$0xff]
      %v474 = vld [vmem:[%s2 + $0x30] sm:$0xff]
      %v475 = vld [vmem:[%s2 + $0x38] sm:$0xff]
      %v476 = vld [vmem:[%s2 + $0x40] sm:$0xff]
      %v477 = vld [vmem:[%s2 + $0x48] sm:$0xff]
      %v478 = vld [vmem:[%s2 + $0x50] sm:$0xff]
      %v479 = vld [vmem:[%s2 + $0x58] sm:$0xff]
      %v480 = vld [vmem:[%s2 + $0x60] sm:$0xff]
      %v481 = vld [vmem:[%s2 + $0x68] sm:$0xff]
      %v482 = vld [vmem:[%s2 + $0x70] sm:$0xff]
      %v483 = vld [vmem:[%s2 + $0x78] sm:$0xff]
      %v484 = vld [vmem:[%s2 + $0x80] sm:$0xff]
      %v485 = vld [vmem:[%s2 + $0x88] sm:$0xff]
      %v486 = vld [vmem:[%s2 + $0x90] sm:$0xff]
      %v487 = vld [vmem:[%s2 + $0x98] sm:$0xff]
      %v488 = vld [vmem:[%s2 + $0xa0] sm:$0xff]
      %v489 = vld [vmem:[%s2 + $0xa8] sm:$0xff]
      %v490 = vld [vmem:[%s2 + $0xb0] sm:$0xff]
      %v491 = vld [vmem:[%s2 + $0xb8] sm:$0xff]
      %v492 = vld [vmem:[%s417 + $0x13] sm:$0xff]
      %v493 = vld [vmem:[%s417 + $0x1b] sm:$0xff]
      %v494 = vld [vmem:[%s417 + $0x23] sm:$0xff]
      %v495 = vld [vmem:[%s417 + $0x2b] sm:$0xff]
      %v496 = vld [vmem:[%s417 + $0x33] sm:$0xff]
      %v497 = vld [vmem:[%s417 + $0x3b] sm:$0xff]
      %v498 = vld [vmem:[%s417 + $0x43] sm:$0xff]
      %v499 = vld [vmem:[%s417 + $0x4b] sm:$0xff]
      %v500 = vld [vmem:[%s417 + $0x53] sm:$0xff]
      %v501 = vld [vmem:[%s417 + $0x5b] sm:$0xff]
      %v502 = vld [vmem:[%s417 + $0x63] sm:$0xff]
      %v503 = vld [vmem:[%s417 + $0x6b] sm:$0xff]
      %v504 = vld [vmem:[%s417 + $0x73] sm:$0xff]
      %v505 = vld [vmem:[%s417 + $0x7b] sm:$0xff]
      %v506 = vld [vmem:[%s417 + $0x83] sm:$0xff]
      %v507 = vld [vmem:[%s417 + $0x8b] sm:$0xff]
      %v508 = vld [vmem:[%s417 + $0x93] sm:$0xff]
      %v509 = vld [vmem:[%s417 + $0x9b] sm:$0xff]
      %v510 = vld [vmem:[%s417 + $0xa3] sm:$0xff]
      %v511 = vld [vmem:[%s417 + $0xab] sm:$0xff]
      %v512 = vld [vmem:[%s417 + $0xb3] sm:$0xff]
      %v513 = vld [vmem:[%s417 + $0xbb] sm:$0xff]
      %v514 = vld [vmem:[%s417 + $0xc3] sm:$0xff]
      %v515 = vld [vmem:[%s417 + $0xcb] sm:$0xff]
      %v516 = vld [vmem:[%s417 + $0xd3] sm:$0xff]
      %v517 = vld [vmem:[%s417 + $0xdb] sm:$0xff]
      %v518 = vld [vmem:[%s417 + $0xe3] sm:$0xff]
      %v519 = vld [vmem:[%s417 + $0xeb] sm:$0xff]
      %v520 = vld [vmem:[%s417 + $0xf3] sm:$0xff]
      %v521 = vld [vmem:[%s417 + $0xfb] sm:$0xff]
      %v522 = vld [vmem:[%s417 + $0x103] sm:$0xff]
      %v523 = vld [vmem:[%s417 + $0x10b] sm:$0xff]
      %v524 = vld [vmem:[%s417 + $0x113] sm:$0xff]
      %v525 = vld [vmem:[%s417 + $0x11b] sm:$0xff]
      %v526 = vld [vmem:[%s417 + $0x123] sm:$0xff]
      %v527 = vld [vmem:[%s417 + $0x12b] sm:$0x3f]
      %vm528 = vcmask 244736
      %v530 = vsel %vm528, %v470, 0
      %v533 = vsel %vm528, %v473, 0
      %v536 = vsel %vm528, %v476, 0
      %v539 = vsel %vm528, %v479, 0
      %v542 = vsel %vm528, %v482, 0
      %v545 = vsel %vm528, %v485, 0
      %v548 = vsel %vm528, %v488, 0
      %v551 = vsel %vm528, %v491, 0
      %vm553 = vcmask 1045504
      %v555 = vsel %vm553, %v527, 0
      %557 = vmatprep.subr.mxu0 0.0
      %558 = vmatpush1.msra.mxu0 %v507
      %559 = vmatprep.subr.mxu0 0.0
      %560 = vmatpush1.msra.mxu0 %v506
      %561 = vmatprep.subr.mxu0 0.0
      %562 = vmatpush1.msra.mxu0 %v505
      %563 = vmatprep.subr.mxu0 0.0
      %564 = vmatpush1.msra.mxu0 %v504
      %565 = vmatprep.subr.mxu0 0.0
      %566 = vmatpush1.msra.mxu0 %v503
      %567 = vmatprep.subr.mxu0 0.0
      %568 = vmatpush1.msra.mxu0 %v502
      %569 = vmatprep.subr.mxu0 0.0
      %570 = vmatpush1.msra.mxu0 %v501
      %571 = vmatprep.subr.mxu0 0.0
      %572 = vmatpush1.msra.mxu0 %v500
      %573 = vmatprep.subr.mxu0 0.0
      %574 = vmatpush1.msra.mxu0 %v499
      %575 = vmatprep.subr.mxu0 0.0
      %576 = vmatpush1.msra.mxu0 %v498
      %577 = vmatprep.subr.mxu0 0.0
      %578 = vmatpush1.msra.mxu0 %v497
      %579 = vmatprep.subr.mxu0 0.0
      %580 = vmatpush1.msra.mxu0 %v496
      %581 = vmatprep.subr.mxu0 0.0
      %582 = vmatpush1.msra.mxu0 %v495
      %583 = vmatprep.subr.mxu0 0.0
      %584 = vmatpush1.msra.mxu0 %v494
      %585 = vmatprep.subr.mxu0 0.0
      %586 = vmatpush1.msra.mxu0 %v493
      %587 = vmatprep.subr.mxu0 0.0
      %588 = vmatpush1.msra.mxu0 %v492
      %589 = vmatprep.subr.mxu0 0.0
      %590 = vmatpush2.msra.mxu0 %v523
      %591 = vmatprep.subr.mxu0 0.0
      %592 = vmatpush2.msra.mxu0 %v522
      %593 = vmatprep.subr.mxu0 0.0
      %594 = vmatpush2.msra.mxu0 %v521
      %595 = vmatprep.subr.mxu0 0.0
      %596 = vmatpush2.msra.mxu0 %v520
      %597 = vmatprep.subr.mxu0 0.0
      %598 = vmatpush2.msra.mxu0 %v519
      %599 = vmatprep.subr.mxu0 0.0
      %600 = vmatpush2.msra.mxu0 %v518
      %601 = vmatprep.subr.mxu0 0.0
      %602 = vmatpush2.msra.mxu0 %v517
      %603 = vmatprep.subr.mxu0 0.0
      %604 = vmatpush2.msra.mxu0 %v516
      %605 = vmatprep.subr.mxu0 0.0
      %606 = vmatpush2.msra.mxu0 %v515
      %607 = vmatprep.subr.mxu0 0.0
      %608 = vmatpush2.msra.mxu0 %v514
      %609 = vmatprep.subr.mxu0 0.0
      %610 = vmatpush2.msra.mxu0 %v513
      %611 = vmatprep.subr.mxu0 0.0
      %612 = vmatpush2.msra.mxu0 %v512
      %613 = vmatprep.subr.mxu0 0.0
      %614 = vmatpush2.msra.mxu0 %v511
      %615 = vmatprep.subr.mxu0 0.0
      %616 = vmatpush2.msra.mxu0 %v510
      %617 = vmatprep.subr.mxu0 0.0
      %618 = vmatpush2.msra.mxu0 %v509
      %619 = vmatprep.subr.mxu0 0.0
      %620 = vmatpush2.msra.mxu0 %v508
      %621 = vmatprep.mubr.f32.mxu0 %v469
      %622 = vmatmul.mubr.f32.gmra.mxu0 %v468
      %v623 = vpop.f32.mrf.mxu0
      %v624 = vadd.f32 0.0, %v623
      %v625 = vpop.f32.mrf.mxu0
      %626 = vmatprep.mubr.f32.mxu0 %v472
      %627 = vmatmul.mubr.f32.gmra.mxu0 %v471
      %v628 = vpop.f32.mrf.mxu0
      %v629 = vadd.f32 0.0, %v628
      %v630 = vpop.f32.mrf.mxu0
      %631 = vmatprep.mubr.f32.mxu0 %v475
      %632 = vmatmul.mubr.f32.gmra.mxu0 %v474
      %v633 = vpop.f32.mrf.mxu0
      %v634 = vadd.f32 0.0, %v633
      %v635 = vpop.f32.mrf.mxu0
      %636 = vmatprep.mubr.f32.mxu0 %v478
      %637 = vmatmul.mubr.f32.gmra.mxu0 %v477
      %v638 = vpop.f32.mrf.mxu0
      %v639 = vadd.f32 0.0, %v638
      %v640 = vpop.f32.mrf.mxu0
      %641 = vmatprep.mubr.f32.mxu0 %v481
      %642 = vmatmul.mubr.f32.gmra.mxu0 %v480
      %v643 = vpop.f32.mrf.mxu0
      %v644 = vadd.f32 0.0, %v643
      %v645 = vpop.f32.mrf.mxu0
      %646 = vmatprep.mubr.f32.mxu0 %v484
      %647 = vmatmul.mubr.f32.gmra.mxu0 %v483
      %v648 = vpop.f32.mrf.mxu0
      %v649 = vadd.f32 0.0, %v648
      %v650 = vpop.f32.mrf.mxu0
      %651 = vmatprep.mubr.f32.mxu0 %v487
      %652 = vmatmul.mubr.f32.gmra.mxu0 %v486
      %v653 = vpop.f32.mrf.mxu0
      %v654 = vadd.f32 0.0, %v653
      %v655 = vpop.f32.mrf.mxu0
      %656 = vmatprep.mubr.f32.mxu0 %v490
      %657 = vmatmul.mubr.f32.gmra.mxu0 %v489
      %v658 = vpop.f32.mrf.mxu0
      %v659 = vadd.f32 0.0, %v658
      %v660 = vpop.f32.mrf.mxu0
      %661 = vdwg.mxu0
      %662 = vmatprep.subr.mxu0 0.0
      %663 = vmatpush1.msra.mxu0 0.0
      %664 = vmatprep.subr.mxu0 0.0
      %665 = vmatpush1.msra.mxu0 0.0
      %666 = vmatprep.subr.mxu0 0.0
      %667 = vmatpush1.msra.mxu0 0.0
      %668 = vmatprep.subr.mxu0 0.0
      %669 = vmatpush1.msra.mxu0 0.0
      %670 = vmatprep.subr.mxu0 0.0
      %671 = vmatpush1.msra.mxu0 0.0
      %672 = vmatprep.subr.mxu0 0.0
      %673 = vmatpush1.msra.mxu0 0.0
      %674 = vmatprep.subr.mxu0 0.0
      %675 = vmatpush1.msra.mxu0 0.0
      %676 = vmatprep.subr.mxu0 0.0
      %677 = vmatpush1.msra.mxu0 0.0
      %678 = vmatprep.subr.mxu0 0.0
      %679 = vmatpush1.msra.mxu0 0.0
      %680 = vmatprep.subr.mxu0 0.0
      %681 = vmatpush1.msra.mxu0 0.0
      %682 = vmatprep.subr.mxu0 0.0
      %683 = vmatpush1.msra.mxu0 0.0
      %684 = vmatprep.subr.mxu0 0.0
      %685 = vmatpush1.msra.mxu0 0.0
      %686 = vmatprep.subr.mxu0 0.0
      %687 = vmatpush1.msra.mxu0 %v555
      %688 = vmatprep.subr.mxu0 0.0
      %689 = vmatpush1.msra.mxu0 %v526
      %690 = vmatprep.subr.mxu0 0.0
      %691 = vmatpush1.msra.mxu0 %v525
      %692 = vmatprep.subr.mxu0 0.0
      %693 = vmatpush1.msra.mxu0 %v524
      %694 = vmatprep.subr.mxu0 0.0
      %695 = vmatpush2.msra.mxu0 0.0
      %696 = vmatprep.subr.mxu0 0.0
      %697 = vmatpush2.msra.mxu0 0.0
      %698 = vmatprep.subr.mxu0 0.0
      %699 = vmatpush2.msra.mxu0 0.0
      %700 = vmatprep.subr.mxu0 0.0
      %701 = vmatpush2.msra.mxu0 0.0
      %702 = vmatprep.subr.mxu0 0.0
      %703 = vmatpush2.msra.mxu0 0.0
      %704 = vmatprep.subr.mxu0 0.0
      %705 = vmatpush2.msra.mxu0 0.0
      %706 = vmatprep.subr.mxu0 0.0
      %707 = vmatpush2.msra.mxu0 0.0
      %708 = vmatprep.subr.mxu0 0.0
      %709 = vmatpush2.msra.mxu0 0.0
      %710 = vmatprep.subr.mxu0 0.0
      %711 = vmatpush2.msra.mxu0 0.0
      %712 = vmatprep.subr.mxu0 0.0
      %713 = vmatpush2.msra.mxu0 0.0
      %714 = vmatprep.subr.mxu0 0.0
      %715 = vmatpush2.msra.mxu0 0.0
      %716 = vmatprep.subr.mxu0 0.0
      %717 = vmatpush2.msra.mxu0 0.0
      %718 = vmatprep.subr.mxu0 0.0
      %719 = vmatpush2.msra.mxu0 0.0
      %720 = vmatprep.subr.mxu0 0.0
      %721 = vmatpush2.msra.mxu0 0.0
      %722 = vmatprep.subr.mxu0 0.0
      %723 = vmatpush2.msra.mxu0 0.0
      %724 = vmatprep.subr.mxu0 0.0
      %725 = vmatpush2.msra.mxu0 0.0
      %726 = vmatprep.mubr.f32.mxu0 0.0
      %727 = vmatmul.mubr.f32.gmra.mxu0 %v530
      %v728 = vpop.f32.mrf.mxu0
      %v729 = vadd.f32 %v624, %v728
      %v730 = vpop.f32.mrf.mxu0
      %731 = vmatprep.mubr.f32.mxu0 0.0
      %732 = vmatmul.mubr.f32.gmra.mxu0 %v533
      %v733 = vpop.f32.mrf.mxu0
      %v734 = vadd.f32 %v629, %v733
      %v735 = vpop.f32.mrf.mxu0
      %736 = vmatprep.mubr.f32.mxu0 0.0
      %737 = vmatmul.mubr.f32.gmra.mxu0 %v536
      %v738 = vpop.f32.mrf.mxu0
      %v739 = vadd.f32 %v634, %v738
      %v740 = vpop.f32.mrf.mxu0
      %741 = vmatprep.mubr.f32.mxu0 0.0
      %742 = vmatmul.mubr.f32.gmra.mxu0 %v539
      %v743 = vpop.f32.mrf.mxu0
      %v744 = vadd.f32 %v639, %v743
      %v745 = vpop.f32.mrf.mxu0
      %746 = vmatprep.mubr.f32.mxu0 0.0
      %747 = vmatmul.mubr.f32.gmra.mxu0 %v542
      %v748 = vpop.f32.mrf.mxu0
      %v749 = vadd.f32 %v644, %v748
      %v750 = vpop.f32.mrf.mxu0
      %751 = vmatprep.mubr.f32.mxu0 0.0
      %752 = vmatmul.mubr.f32.gmra.mxu0 %v545
      %v753 = vpop.f32.mrf.mxu0
      %v754 = vadd.f32 %v649, %v753
      %v755 = vpop.f32.mrf.mxu0
      %756 = vmatprep.mubr.f32.mxu0 0.0
      %757 = vmatmul.mubr.f32.gmra.mxu0 %v548
      %v758 = vpop.f32.mrf.mxu0
      %v759 = vadd.f32 %v654, %v758
      %v760 = vpop.f32.mrf.mxu0
      %761 = vmatprep.mubr.f32.mxu0 0.0
      %762 = vmatmul.mubr.f32.gmra.mxu0 %v551
      %v763 = vpop.f32.mrf.mxu0
      %v764 = vadd.f32 %v659, %v763
      %v765 = vpop.f32.mrf.mxu0
      %766 = vdwg.mxu0
      %v767 = vpack.c.bf16 %v734, %v729
      %v768 = vpack.c.bf16 %v744, %v739
      %v769 = vpack.c.bf16 %v754, %v749
      %v770 = vpack.c.bf16 %v764, %v759
      %v771 = vld [vmem:[%s3] sm:$0x3]
      %v772 = vld [vmem:[%s4] sm:$0x1]
      %v774 = vlaneseq
      %v775 = vshrl.u32 %v774, 7
      %v776 = vsub.s32 0, %v775
      %v777 = vrot.slane %v772, %v776
      %vm779 = vcmask 31744
      %v781 = vsel %vm779, %v767, 0
      %v784 = vsel %vm779, %v768, 0
      %v787 = vsel %vm779, %v769, 0
      %v790 = vsel %vm779, %v770, 0
      %vm792 = vcmask 1041408
      %v794 = vsel %vm792, %v771, 0
      %796 = vmatprep.subr.bf16.mxu0 0
      %797 = vmatpush1.bf16.msra.mxu0 0
      %798 = vmatprep.subr.bf16.mxu0 0
      %799 = vmatpush1.bf16.msra.mxu0 0
      %800 = vmatprep.subr.bf16.mxu0 0
      %801 = vmatpush1.bf16.msra.mxu0 0
      %802 = vmatprep.subr.bf16.mxu0 0
      %803 = vmatpush1.bf16.msra.mxu0 0
      %804 = vmatprep.subr.bf16.mxu0 0
      %805 = vmatpush1.bf16.msra.mxu0 0
      %806 = vmatprep.subr.bf16.mxu0 0
      %807 = vmatpush1.bf16.msra.mxu0 0
      %808 = vmatprep.subr.bf16.mxu0 0
      %809 = vmatpush1.bf16.msra.mxu0 0
      %810 = vmatprep.subr.bf16.mxu0 0
      %811 = vmatpush1.bf16.msra.mxu0 %v794
      %812 = vmatprep.subr.bf16.mxu0 0
      %813 = vmatpush2.bf16.msra.mxu0 0
      %814 = vmatprep.subr.bf16.mxu0 0
      %815 = vmatpush2.bf16.msra.mxu0 0
      %816 = vmatprep.subr.bf16.mxu0 0
      %817 = vmatpush2.bf16.msra.mxu0 0
      %818 = vmatprep.subr.bf16.mxu0 0
      %819 = vmatpush2.bf16.msra.mxu0 0
      %820 = vmatprep.subr.bf16.mxu0 0
      %821 = vmatpush2.bf16.msra.mxu0 0
      %822 = vmatprep.subr.bf16.mxu0 0
      %823 = vmatpush2.bf16.msra.mxu0 0
      %824 = vmatprep.subr.bf16.mxu0 0
      %825 = vmatpush2.bf16.msra.mxu0 0
      %826 = vmatprep.subr.bf16.mxu0 0
      %827 = vmatpush2.bf16.msra.mxu0 0
      %828 = vmatprep.mubr.bf16.mxu0 0
      %829 = vmatmul.mubr.bf16.gmra.mxu0 %v781
      %v830 = vpop.f32.mrf.mxu0
      %v831 = vadd.f32 %v777, %v830
      %v832 = vpop.f32.mrf.mxu0
      %v833 = vpop.f32.mrf.mxu0
      %v834 = vadd.f32 %v777, %v833
      %v835 = vpop.f32.mrf.mxu0
      %836 = vmatprep.mubr.bf16.mxu0 0
      %837 = vmatmul.mubr.bf16.gmra.mxu0 %v784
      %v838 = vpop.f32.mrf.mxu0
      %v839 = vadd.f32 %v777, %v838
      %v840 = vpop.f32.mrf.mxu0
      %v841 = vpop.f32.mrf.mxu0
      %v842 = vadd.f32 %v777, %v841
      %v843 = vpop.f32.mrf.mxu0
      %844 = vmatprep.mubr.bf16.mxu0 0
      %845 = vmatmul.mubr.bf16.gmra.mxu0 %v787
      %v846 = vpop.f32.mrf.mxu0
      %v847 = vadd.f32 %v777, %v846
      %v848 = vpop.f32.mrf.mxu0
      %v849 = vpop.f32.mrf.mxu0
      %v850 = vadd.f32 %v777, %v849
      %v851 = vpop.f32.mrf.mxu0
      %852 = vmatprep.mubr.bf16.mxu0 0
      %853 = vmatmul.mubr.bf16.gmra.mxu0 %v790
      %v854 = vpop.f32.mrf.mxu0
      %v855 = vadd.f32 %v777, %v854
      %v856 = vpop.f32.mrf.mxu0
      %v857 = vpop.f32.mrf.mxu0
      %v858 = vadd.f32 %v777, %v857
      %v859 = vpop.f32.mrf.mxu0
      %860 = vdwg.mxu0
      %861 = vst [vmem:[#allocation2] sm:$0xf] 0
      %862 = vst [vmem:[#allocation2 + $0x4] sm:$0xf] 0
      %863 = vst [vmem:[#allocation2 + $0x8] sm:$0xf] 0
      %864 = vst [vmem:[#allocation2 + $0xc] sm:$0xf] 0
      %865 = vst [vmem:[#allocation2 + $0x10] sm:$0xf] 0
      %866 = vst [vmem:[#allocation2 + $0x14] sm:$0xf] 0
      %867 = vst [vmem:[#allocation2 + $0x18] sm:$0xf] 0
      %868 = vst [vmem:[#allocation2 + $0x1c] sm:$0xf] 0
      %869 = vst [vmem:[#allocation2 + $0x20] sm:$0xf] 0
      %870 = vst [vmem:[#allocation2 + $0x24] sm:$0xf] 0
      %871 = vst [vmem:[#allocation2 + $0x28] sm:$0xf] 0
      %872 = vst [vmem:[#allocation2 + $0x2c] sm:$0xf] 0
      %873 = vst [vmem:[#allocation2 + $0x30] sm:$0xf] 0
      %874 = vst [vmem:[#allocation2 + $0x34] sm:$0xf] 0
      %875 = vst [vmem:[#allocation2 + $0x38] sm:$0xf] 0
      %876 = vst [vmem:[#allocation2 + $0x3c] sm:$0xf] 0
      %877 = vst [vmem:[#allocation2 + $0x40] sm:$0xf] 0
      %878 = vst [vmem:[#allocation2 + $0x44] sm:$0xf] 0
      %879 = vst [vmem:[#allocation2 + $0x48] sm:$0xf] 0
      %880 = vst [vmem:[#allocation2 + $0x4c] sm:$0xf] 0
      %881 = vst [vmem:[#allocation2 + $0x50] sm:$0xf] 0
      %882 = vst [vmem:[#allocation2 + $0x54] sm:$0xf] 0
      %883 = vst [vmem:[#allocation2 + $0x58] sm:$0xf] 0
      %884 = vst [vmem:[#allocation2 + $0x5c] sm:$0xf] 0
      %885 = vst [vmem:[#allocation2 + $0x60] sm:$0xf] 0
      %886 = vst [vmem:[#allocation2 + $0x64] sm:$0xf] 0
      %887 = vst [vmem:[#allocation2 + $0x68] sm:$0xf] 0
      %888 = vst [vmem:[#allocation2 + $0x6c] sm:$0xf] 0
      %889 = vst [vmem:[#allocation2 + $0x70] sm:$0xf] 0
      %890 = vst [vmem:[#allocation2 + $0x74] sm:$0xf] 0
      %891 = vst [vmem:[#allocation2 + $0x78] sm:$0xf] 0
      %892 = vst [vmem:[#allocation2 + $0x7c] sm:$0xf] 0
      %893 = vst [vmem:[#allocation2 + $0x80] sm:$0xf] 0
      %894 = vst [vmem:[#allocation2 + $0x84] sm:$0xf] 0
      %895 = vst [vmem:[#allocation2 + $0x88] sm:$0xf] 0
      %896 = vst [vmem:[#allocation2 + $0x8c] sm:$0xf] 0
      %897 = vst [vmem:[#allocation2 + $0x90] sm:$0xf] 0
      %898 = vst [vmem:[#allocation2 + $0x94] sm:$0xf] 0
      %899 = vst [vmem:[#allocation2 + $0x98] sm:$0xf] 0
      %900 = vst [vmem:[#allocation2 + $0x9c] sm:$0xf] 0
      %901 = vst [vmem:[#allocation2 + $0xa0] sm:$0xf] 0
      %v902 = vld [vmem:[%s417] sm:$0xff]
      %v903 = vld [vmem:[%s417 + $0x8] sm:$0xff]
      %v904 = vld [vmem:[%s417 + $0x10] sm:$0xff]
      %v905 = vld [vmem:[%s417 + $0x18] sm:$0xff]
      %v906 = vld [vmem:[%s417 + $0x20] sm:$0xff]
      %v907 = vld [vmem:[%s417 + $0x28] sm:$0xff]
      %v908 = vld [vmem:[%s417 + $0x30] sm:$0xff]
      %v909 = vld [vmem:[%s417 + $0x38] sm:$0xff]
      %v910 = vld [vmem:[%s417 + $0x40] sm:$0xff]
      %v911 = vld [vmem:[%s417 + $0x48] sm:$0xff]
      %v912 = vld [vmem:[%s417 + $0x50] sm:$0xff]
      %v913 = vld [vmem:[%s417 + $0x58] sm:$0xff]
      %v914 = vld [vmem:[%s417 + $0x60] sm:$0xff]
      %v915 = vld [vmem:[%s417 + $0x68] sm:$0xff]
      %v916 = vld [vmem:[%s417 + $0x70] sm:$0xff]
      %v917 = vld [vmem:[%s417 + $0x78] sm:$0xff]
      %v918 = vld [vmem:[%s417 + $0x80] sm:$0xff]
      %v919 = vld [vmem:[%s417 + $0x88] sm:$0xff]
      %v920 = vld [vmem:[%s417 + $0x90] sm:$0xff]
      %v921 = vld [vmem:[%s417 + $0x98] sm:$0xff]
      %v922 = vld [vmem:[%s417 + $0xa0] sm:$0xff]
      %v923 = vld [vmem:[%s417 + $0xa8] sm:$0xff]
      %v924 = vld [vmem:[%s417 + $0xb0] sm:$0xff]
      %v925 = vld [vmem:[%s417 + $0xb8] sm:$0xff]
      %v926 = vld [vmem:[%s417 + $0xc0] sm:$0xff]
      %v927 = vld [vmem:[%s417 + $0xc8] sm:$0xff]
      %v928 = vld [vmem:[%s417 + $0xd0] sm:$0xff]
      %v929 = vld [vmem:[%s417 + $0xd8] sm:$0xff]
      %v930 = vld [vmem:[%s417 + $0xe0] sm:$0xff]
      %v931 = vld [vmem:[%s417 + $0xe8] sm:$0xff]
      %v932 = vld [vmem:[%s417 + $0xf0] sm:$0xff]
      %v933 = vld [vmem:[%s417 + $0xf8] sm:$0xff]
      %v934 = vld [vmem:[%s417 + $0x100] sm:$0xff]
      %v935 = vld [vmem:[%s417 + $0x108] sm:$0xff]
      %v936 = vld [vmem:[%s417 + $0x110] sm:$0xff]
      %v937 = vld [vmem:[%s417 + $0x118] sm:$0x3f]
      %v938 = vpack.c.bf16 %v903, %v902
      %v939 = vpack.c.bf16 %v905, %v904
      %v940 = vpack.c.bf16 %v907, %v906
      %v941 = vpack.c.bf16 %v909, %v908
      %v942 = vpack.c.bf16 %v911, %v910
      %v943 = vpack.c.bf16 %v913, %v912
      %v944 = vpack.c.bf16 %v915, %v914
      %v945 = vpack.c.bf16 %v917, %v916
      %v946 = vpack.c.bf16 %v919, %v918
      %v947 = vpack.c.bf16 %v921, %v920
      %v948 = vpack.c.bf16 %v923, %v922
      %v949 = vpack.c.bf16 %v925, %v924
      %v950 = vpack.c.bf16 %v927, %v926
      %v951 = vpack.c.bf16 %v929, %v928
      %v952 = vpack.c.bf16 %v931, %v930
      %v953 = vpack.c.bf16 %v933, %v932
      %v954 = vpack.c.bf16 %v935, %v934
      %v955 = vpack.c.bf16 %v937, %v936
      %v956 = vld [vmem:[%s5] sm:$0x3]
      %v957 = vld [vmem:[%s417 + $0x1] sm:$0xff]
      %v958 = vld [vmem:[%s417 + $0x9] sm:$0xff]
      %v959 = vld [vmem:[%s417 + $0x11] sm:$0xff]
      %v960 = vld [vmem:[%s417 + $0x19] sm:$0xff]
      %v961 = vld [vmem:[%s417 + $0x21] sm:$0xff]
      %v962 = vld [vmem:[%s417 + $0x29] sm:$0xff]
      %v963 = vld [vmem:[%s417 + $0x31] sm:$0xff]
      %v964 = vld [vmem:[%s417 + $0x39] sm:$0xff]
      %v965 = vld [vmem:[%s417 + $0x41] sm:$0xff]
      %v966 = vld [vmem:[%s417 + $0x49] sm:$0xff]
      %v967 = vld [vmem:[%s417 + $0x51] sm:$0xff]
      %v968 = vld [vmem:[%s417 + $0x59] sm:$0xff]
      %v969 = vld [vmem:[%s417 + $0x61] sm:$0xff]
      %v970 = vld [vmem:[%s417 + $0x69] sm:$0xff]
      %v971 = vld [vmem:[%s417 + $0x71] sm:$0xff]
      %v972 = vld [vmem:[%s417 + $0x79] sm:$0xff]
      %v973 = vld [vmem:[%s417 + $0x81] sm:$0xff]
      %v974 = vld [vmem:[%s417 + $0x89] sm:$0xff]
      %v975 = vld [vmem:[%s417 + $0x91] sm:$0xff]
      %v976 = vld [vmem:[%s417 + $0x99] sm:$0xff]
      %v977 = vld [vmem:[%s417 + $0xa1] sm:$0xff]
      %v978 = vld [vmem:[%s417 + $0xa9] sm:$0xff]
      %v979 = vld [vmem:[%s417 + $0xb1] sm:$0xff]
      %v980 = vld [vmem:[%s417 + $0xb9] sm:$0xff]
      %v981 = vld [vmem:[%s417 + $0xc1] sm:$0xff]
      %v982 = vld [vmem:[%s417 + $0xc9] sm:$0xff]
      %v983 = vld [vmem:[%s417 + $0xd1] sm:$0xff]
      %v984 = vld [vmem:[%s417 + $0xd9] sm:$0xff]
      %v985 = vld [vmem:[%s417 + $0xe1] sm:$0xff]
      %v986 = vld [vmem:[%s417 + $0xe9] sm:$0xff]
      %v987 = vld [vmem:[%s417 + $0xf1] sm:$0xff]
      %v988 = vld [vmem:[%s417 + $0xf9] sm:$0xff]
      %v989 = vld [vmem:[%s417 + $0x101] sm:$0xff]
      %v990 = vld [vmem:[%s417 + $0x109] sm:$0xff]
      %v991 = vld [vmem:[%s417 + $0x111] sm:$0xff]
      %v992 = vld [vmem:[%s417 + $0x119] sm:$0x3f]
      %v993 = vpack.c.bf16 %v958, %v957
      %v994 = vpack.c.bf16 %v960, %v959
      %v995 = vpack.c.bf16 %v962, %v961
      %v996 = vpack.c.bf16 %v964, %v963
      %v997 = vpack.c.bf16 %v966, %v965
      %v998 = vpack.c.bf16 %v968, %v967
      %v999 = vpack.c.bf16 %v970, %v969
      %v1000 = vpack.c.bf16 %v972, %v971
      %v1001 = vpack.c.bf16 %v974, %v973
      %v1002 = vpack.c.bf16 %v976, %v975
      %v1003 = vpack.c.bf16 %v978, %v977
      %v1004 = vpack.c.bf16 %v980, %v979
      %v1005 = vpack.c.bf16 %v982, %v981
      %v1006 = vpack.c.bf16 %v984, %v983
      %v1007 = vpack.c.bf16 %v986, %v985
      %v1008 = vpack.c.bf16 %v988, %v987
      %v1009 = vpack.c.bf16 %v990, %v989
      %v1010 = vpack.c.bf16 %v992, %v991
      %s1011 = scalar_lea.vmem %s5, 2
      %v1012 = vld [vmem:[%s1011] sm:$0x3]
      %v1014 = vsel %vm779, %v993, 0
      %v1017 = vsel %vm779, %v994, 0
      %v1020 = vsel %vm779, %v995, 0
      %v1023 = vsel %vm779, %v996, 0
      %v1026 = vsel %vm779, %v997, 0
      %v1029 = vsel %vm779, %v998, 0
      %v1032 = vsel %vm779, %v999, 0
      %v1035 = vsel %vm779, %v1000, 0
      %v1038 = vsel %vm779, %v1001, 0
      %v1041 = vsel %vm779, %v1002, 0
      %v1044 = vsel %vm779, %v1003, 0
      %v1047 = vsel %vm779, %v1004, 0
      %v1050 = vsel %vm779, %v1005, 0
      %v1053 = vsel %vm779, %v1006, 0
      %v1056 = vsel %vm779, %v1007, 0
      %v1059 = vsel %vm779, %v1008, 0
      %v1062 = vsel %vm779, %v1009, 0
      %v1065 = vsel %vm779, %v1010, 0
      %v1068 = vsel %vm792, %v1012, 0
      %1070 = vmatprep.subr.bf16.mxu0 0
      %1071 = vmatpush1.bf16.msra.mxu0 0
      %1072 = vmatprep.subr.bf16.mxu0 0
      %1073 = vmatpush1.bf16.msra.mxu0 0
      %1074 = vmatprep.subr.bf16.mxu0 0
      %1075 = vmatpush1.bf16.msra.mxu0 0
      %1076 = vmatprep.subr.bf16.mxu0 0
      %1077 = vmatpush1.bf16.msra.mxu0 0
      %1078 = vmatprep.subr.bf16.mxu0 0
      %1079 = vmatpush1.bf16.msra.mxu0 0
      %1080 = vmatprep.subr.bf16.mxu0 0
      %1081 = vmatpush1.bf16.msra.mxu0 0
      %1082 = vmatprep.subr.bf16.mxu0 0
      %1083 = vmatpush1.bf16.msra.mxu0 0
      %1084 = vmatprep.subr.bf16.mxu0 0
      %1085 = vmatpush1.bf16.msra.mxu0 %v1068
      %1086 = vmatprep.subr.bf16.mxu0 0
      %1087 = vmatpush2.bf16.msra.mxu0 0
      %1088 = vmatprep.subr.bf16.mxu0 0
      %1089 = vmatpush2.bf16.msra.mxu0 0
      %1090 = vmatprep.subr.bf16.mxu0 0
      %1091 = vmatpush2.bf16.msra.mxu0 0
      %1092 = vmatprep.subr.bf16.mxu0 0
      %1093 = vmatpush2.bf16.msra.mxu0 0
      %1094 = vmatprep.subr.bf16.mxu0 0
      %1095 = vmatpush2.bf16.msra.mxu0 0
      %1096 = vmatprep.subr.bf16.mxu0 0
      %1097 = vmatpush2.bf16.msra.mxu0 0
      %1098 = vmatprep.subr.bf16.mxu0 0
      %1099 = vmatpush2.bf16.msra.mxu0 0
      %1100 = vmatprep.subr.bf16.mxu0 0
      %1101 = vmatpush2.bf16.msra.mxu0 0
      %1102 = vmatprep.mubr.bf16.mxu0 0
      %1103 = vmatmul.mubr.bf16.gmra.mxu0 %v1014
      %v1104 = vpop.f32.mrf.mxu0
      %v1105 = vadd.f32 0.0, %v1104
      %v1106 = vpop.f32.mrf.mxu0
      %v1107 = vpop.f32.mrf.mxu0
      %v1108 = vadd.f32 0.0, %v1107
      %v1109 = vpop.f32.mrf.mxu0
      %1110 = vmatprep.mubr.bf16.mxu0 0
      %1111 = vmatmul.mubr.bf16.gmra.mxu0 %v1017
      %v1112 = vpop.f32.mrf.mxu0
      %v1113 = vadd.f32 0.0, %v1112
      %v1114 = vpop.f32.mrf.mxu0
      %v1115 = vpop.f32.mrf.mxu0
      %v1116 = vadd.f32 0.0, %v1115
      %v1117 = vpop.f32.mrf.mxu0
      %1118 = vmatprep.mubr.bf16.mxu0 0
      %1119 = vmatmul.mubr.bf16.gmra.mxu0 %v1020
      %v1120 = vpop.f32.mrf.mxu0
      %v1121 = vadd.f32 0.0, %v1120
      %v1122 = vpop.f32.mrf.mxu0
      %v1123 = vpop.f32.mrf.mxu0
      %v1124 = vadd.f32 0.0, %v1123
      %v1125 = vpop.f32.mrf.mxu0
      %1126 = vmatprep.mubr.bf16.mxu0 0
      %1127 = vmatmul.mubr.bf16.gmra.mxu0 %v1023
      %v1128 = vpop.f32.mrf.mxu0
      %v1129 = vadd.f32 0.0, %v1128
      %v1130 = vpop.f32.mrf.mxu0
      %v1131 = vpop.f32.mrf.mxu0
      %v1132 = vadd.f32 0.0, %v1131
      %v1133 = vpop.f32.mrf.mxu0
      %1134 = vmatprep.mubr.bf16.mxu0 0
      %1135 = vmatmul.mubr.bf16.gmra.mxu0 %v1026
      %v1136 = vpop.f32.mrf.mxu0
      %v1137 = vadd.f32 0.0, %v1136
      %v1138 = vpop.f32.mrf.mxu0
      %v1139 = vpop.f32.mrf.mxu0
      %v1140 = vadd.f32 0.0, %v1139
      %v1141 = vpop.f32.mrf.mxu0
      %1142 = vmatprep.mubr.bf16.mxu0 0
      %1143 = vmatmul.mubr.bf16.gmra.mxu0 %v1029
      %v1144 = vpop.f32.mrf.mxu0
      %v1145 = vadd.f32 0.0, %v1144
      %v1146 = vpop.f32.mrf.mxu0
      %v1147 = vpop.f32.mrf.mxu0
      %v1148 = vadd.f32 0.0, %v1147
      %v1149 = vpop.f32.mrf.mxu0
      %1150 = vmatprep.mubr.bf16.mxu0 0
      %1151 = vmatmul.mubr.bf16.gmra.mxu0 %v1032
      %v1152 = vpop.f32.mrf.mxu0
      %v1153 = vadd.f32 0.0, %v1152
      %v1154 = vpop.f32.mrf.mxu0
      %v1155 = vpop.f32.mrf.mxu0
      %v1156 = vadd.f32 0.0, %v1155
      %v1157 = vpop.f32.mrf.mxu0
      %1158 = vmatprep.mubr.bf16.mxu0 0
      %1159 = vmatmul.mubr.bf16.gmra.mxu0 %v1035
      %v1160 = vpop.f32.mrf.mxu0
      %v1161 = vadd.f32 0.0, %v1160
      %v1162 = vpop.f32.mrf.mxu0
      %v1163 = vpop.f32.mrf.mxu0
      %v1164 = vadd.f32 0.0, %v1163
      %v1165 = vpop.f32.mrf.mxu0
      %1166 = vmatprep.mubr.bf16.mxu0 0
      %1167 = vmatmul.mubr.bf16.gmra.mxu0 %v1038
      %v1168 = vpop.f32.mrf.mxu0
      %v1169 = vadd.f32 0.0, %v1168
      %v1170 = vpop.f32.mrf.mxu0
      %v1171 = vpop.f32.mrf.mxu0
      %v1172 = vadd.f32 0.0, %v1171
      %v1173 = vpop.f32.mrf.mxu0
      %1174 = vmatprep.mubr.bf16.mxu0 0
      %1175 = vmatmul.mubr.bf16.gmra.mxu0 %v1041
      %v1176 = vpop.f32.mrf.mxu0
      %v1177 = vadd.f32 0.0, %v1176
      %v1178 = vpop.f32.mrf.mxu0
      %v1179 = vpop.f32.mrf.mxu0
      %v1180 = vadd.f32 0.0, %v1179
      %v1181 = vpop.f32.mrf.mxu0
      %1182 = vmatprep.mubr.bf16.mxu0 0
      %1183 = vmatmul.mubr.bf16.gmra.mxu0 %v1044
      %v1184 = vpop.f32.mrf.mxu0
      %v1185 = vadd.f32 0.0, %v1184
      %v1186 = vpop.f32.mrf.mxu0
      %v1187 = vpop.f32.mrf.mxu0
      %v1188 = vadd.f32 0.0, %v1187
      %v1189 = vpop.f32.mrf.mxu0
      %1190 = vmatprep.mubr.bf16.mxu0 0
      %1191 = vmatmul.mubr.bf16.gmra.mxu0 %v1047
      %v1192 = vpop.f32.mrf.mxu0
      %v1193 = vadd.f32 0.0, %v1192
      %v1194 = vpop.f32.mrf.mxu0
      %v1195 = vpop.f32.mrf.mxu0
      %v1196 = vadd.f32 0.0, %v1195
      %v1197 = vpop.f32.mrf.mxu0
      %1198 = vmatprep.mubr.bf16.mxu0 0
      %1199 = vmatmul.mubr.bf16.gmra.mxu0 %v1050
      %v1200 = vpop.f32.mrf.mxu0
      %v1201 = vadd.f32 0.0, %v1200
      %v1202 = vpop.f32.mrf.mxu0
      %v1203 = vpop.f32.mrf.mxu0
      %v1204 = vadd.f32 0.0, %v1203
      %v1205 = vpop.f32.mrf.mxu0
      %1206 = vmatprep.mubr.bf16.mxu0 0
      %1207 = vmatmul.mubr.bf16.gmra.mxu0 %v1053
      %v1208 = vpop.f32.mrf.mxu0
      %v1209 = vadd.f32 0.0, %v1208
      %v1210 = vpop.f32.mrf.mxu0
      %v1211 = vpop.f32.mrf.mxu0
      %v1212 = vadd.f32 0.0, %v1211
      %v1213 = vpop.f32.mrf.mxu0
      %1214 = vmatprep.mubr.bf16.mxu0 0
      %1215 = vmatmul.mubr.bf16.gmra.mxu0 %v1056
      %v1216 = vpop.f32.mrf.mxu0
      %v1217 = vadd.f32 0.0, %v1216
      %v1218 = vpop.f32.mrf.mxu0
      %v1219 = vpop.f32.mrf.mxu0
      %v1220 = vadd.f32 0.0, %v1219
      %v1221 = vpop.f32.mrf.mxu0
      %1222 = vmatprep.mubr.bf16.mxu0 0
      %1223 = vmatmul.mubr.bf16.gmra.mxu0 %v1059
      %v1224 = vpop.f32.mrf.mxu0
      %v1225 = vadd.f32 0.0, %v1224
      %v1226 = vpop.f32.mrf.mxu0
      %v1227 = vpop.f32.mrf.mxu0
      %v1228 = vadd.f32 0.0, %v1227
      %v1229 = vpop.f32.mrf.mxu0
      %1230 = vmatprep.mubr.bf16.mxu0 0
      %1231 = vmatmul.mubr.bf16.gmra.mxu0 %v1062
      %v1232 = vpop.f32.mrf.mxu0
      %v1233 = vadd.f32 0.0, %v1232
      %v1234 = vpop.f32.mrf.mxu0
      %v1235 = vpop.f32.mrf.mxu0
      %v1236 = vadd.f32 0.0, %v1235
      %v1237 = vpop.f32.mrf.mxu0
      %1238 = vmatprep.mubr.bf16.mxu0 0
      %1239 = vmatmul.mubr.bf16.gmra.mxu0 %v1065
      %v1240 = vpop.f32.mrf.mxu0
      %v1241 = vadd.f32 0.0, %v1240
      %v1242 = vpop.f32.mrf.mxu0
      %v1243 = vpop.f32.mrf.mxu0
      %v1244 = vadd.f32 0.0, %v1243
      %v1245 = vpop.f32.mrf.mxu0
      %1246 = vdwg.mxu0
      %v1248 = vsel %vm779, %v938, 0
      %v1251 = vsel %vm779, %v939, 0
      %v1254 = vsel %vm779, %v940, 0
      %v1257 = vsel %vm779, %v941, 0
      %v1260 = vsel %vm779, %v942, 0
      %v1263 = vsel %vm779, %v943, 0
      %v1266 = vsel %vm779, %v944, 0
      %v1269 = vsel %vm779, %v945, 0
      %v1272 = vsel %vm779, %v946, 0
      %v1275 = vsel %vm779, %v947, 0
      %v1278 = vsel %vm779, %v948, 0
      %v1281 = vsel %vm779, %v949, 0
      %v1284 = vsel %vm779, %v950, 0
      %v1287 = vsel %vm779, %v951, 0
      %v1290 = vsel %vm779, %v952, 0
      %v1293 = vsel %vm779, %v953, 0
      %v1296 = vsel %vm779, %v954, 0
      %v1299 = vsel %vm779, %v955, 0
      %v1302 = vsel %vm792, %v956, 0
      %1304 = vmatprep.subr.bf16.mxu0 0
      %1305 = vmatpush1.bf16.msra.mxu0 0
      %1306 = vmatprep.subr.bf16.mxu0 0
      %1307 = vmatpush1.bf16.msra.mxu0 0
      %1308 = vmatprep.subr.bf16.mxu0 0
      %1309 = vmatpush1.bf16.msra.mxu0 0
      %1310 = vmatprep.subr.bf16.mxu0 0
      %1311 = vmatpush1.bf16.msra.mxu0 0
      %1312 = vmatprep.subr.bf16.mxu0 0
      %1313 = vmatpush1.bf16.msra.mxu0 0
      %1314 = vmatprep.subr.bf16.mxu0 0
      %1315 = vmatpush1.bf16.msra.mxu0 0
      %1316 = vmatprep.subr.bf16.mxu0 0
      %1317 = vmatpush1.bf16.msra.mxu0 0
      %1318 = vmatprep.subr.bf16.mxu0 0
      %1319 = vmatpush1.bf16.msra.mxu0 %v1302
      %1320 = vmatprep.subr.bf16.mxu0 0
      %1321 = vmatpush2.bf16.msra.mxu0 0
      %1322 = vmatprep.subr.bf16.mxu0 0
      %1323 = vmatpush2.bf16.msra.mxu0 0
      %1324 = vmatprep.subr.bf16.mxu0 0
      %1325 = vmatpush2.bf16.msra.mxu0 0
      %1326 = vmatprep.subr.bf16.mxu0 0
      %1327 = vmatpush2.bf16.msra.mxu0 0
      %1328 = vmatprep.subr.bf16.mxu0 0
      %1329 = vmatpush2.bf16.msra.mxu0 0
      %1330 = vmatprep.subr.bf16.mxu0 0
      %1331 = vmatpush2.bf16.msra.mxu0 0
      %1332 = vmatprep.subr.bf16.mxu0 0
      %1333 = vmatpush2.bf16.msra.mxu0 0
      %1334 = vmatprep.subr.bf16.mxu0 0
      %1335 = vmatpush2.bf16.msra.mxu0 0
      %1336 = vmatprep.mubr.bf16.mxu0 0
      %1337 = vmatmul.mubr.bf16.gmra.mxu0 %v1248
      %v1338 = vpop.f32.mrf.mxu0
      %v1339 = vadd.f32 %v1105, %v1338
      %v1340 = vpop.f32.mrf.mxu0
      %v1341 = vpop.f32.mrf.mxu0
      %v1342 = vadd.f32 %v1108, %v1341
      %v1343 = vpop.f32.mrf.mxu0
      %1344 = vmatprep.mubr.bf16.mxu0 0
      %1345 = vmatmul.mubr.bf16.gmra.mxu0 %v1251
      %v1346 = vpop.f32.mrf.mxu0
      %v1347 = vadd.f32 %v1113, %v1346
      %v1348 = vpop.f32.mrf.mxu0
      %v1349 = vpop.f32.mrf.mxu0
      %v1350 = vadd.f32 %v1116, %v1349
      %v1351 = vpop.f32.mrf.mxu0
      %1352 = vmatprep.mubr.bf16.mxu0 0
      %1353 = vmatmul.mubr.bf16.gmra.mxu0 %v1254
      %v1354 = vpop.f32.mrf.mxu0
      %v1355 = vadd.f32 %v1121, %v1354
      %v1356 = vpop.f32.mrf.mxu0
      %v1357 = vpop.f32.mrf.mxu0
      %v1358 = vadd.f32 %v1124, %v1357
      %v1359 = vpop.f32.mrf.mxu0
      %1360 = vmatprep.mubr.bf16.mxu0 0
      %1361 = vmatmul.mubr.bf16.gmra.mxu0 %v1257
      %v1362 = vpop.f32.mrf.mxu0
      %v1363 = vadd.f32 %v1129, %v1362
      %v1364 = vpop.f32.mrf.mxu0
      %v1365 = vpop.f32.mrf.mxu0
      %v1366 = vadd.f32 %v1132, %v1365
      %v1367 = vpop.f32.mrf.mxu0
      %1368 = vmatprep.mubr.bf16.mxu0 0
      %1369 = vmatmul.mubr.bf16.gmra.mxu0 %v1260
      %v1370 = vpop.f32.mrf.mxu0
      %v1371 = vadd.f32 %v1137, %v1370
      %v1372 = vpop.f32.mrf.mxu0
      %v1373 = vpop.f32.mrf.mxu0
      %v1374 = vadd.f32 %v1140, %v1373
      %v1375 = vpop.f32.mrf.mxu0
      %1376 = vmatprep.mubr.bf16.mxu0 0
      %1377 = vmatmul.mubr.bf16.gmra.mxu0 %v1263
      %v1378 = vpop.f32.mrf.mxu0
      %v1379 = vadd.f32 %v1145, %v1378
      %v1380 = vpop.f32.mrf.mxu0
      %v1381 = vpop.f32.mrf.mxu0
      %v1382 = vadd.f32 %v1148, %v1381
      %v1383 = vpop.f32.mrf.mxu0
      %1384 = vmatprep.mubr.bf16.mxu0 0
      %1385 = vmatmul.mubr.bf16.gmra.mxu0 %v1266
      %v1386 = vpop.f32.mrf.mxu0
      %v1387 = vadd.f32 %v1153, %v1386
      %v1388 = vpop.f32.mrf.mxu0
      %v1389 = vpop.f32.mrf.mxu0
      %v1390 = vadd.f32 %v1156, %v1389
      %v1391 = vpop.f32.mrf.mxu0
      %1392 = vmatprep.mubr.bf16.mxu0 0
      %1393 = vmatmul.mubr.bf16.gmra.mxu0 %v1269
      %v1394 = vpop.f32.mrf.mxu0
      %v1395 = vadd.f32 %v1161, %v1394
      %v1396 = vpop.f32.mrf.mxu0
      %v1397 = vpop.f32.mrf.mxu0
      %v1398 = vadd.f32 %v1164, %v1397
      %v1399 = vpop.f32.mrf.mxu0
      %1400 = vmatprep.mubr.bf16.mxu0 0
      %1401 = vmatmul.mubr.bf16.gmra.mxu0 %v1272
      %v1402 = vpop.f32.mrf.mxu0
      %v1403 = vadd.f32 %v1169, %v1402
      %v1404 = vpop.f32.mrf.mxu0
      %v1405 = vpop.f32.mrf.mxu0
      %v1406 = vadd.f32 %v1172, %v1405
      %v1407 = vpop.f32.mrf.mxu0
      %1408 = vmatprep.mubr.bf16.mxu0 0
      %1409 = vmatmul.mubr.bf16.gmra.mxu0 %v1275
      %v1410 = vpop.f32.mrf.mxu0
      %v1411 = vadd.f32 %v1177, %v1410
      %v1412 = vpop.f32.mrf.mxu0
      %v1413 = vpop.f32.mrf.mxu0
      %v1414 = vadd.f32 %v1180, %v1413
      %v1415 = vpop.f32.mrf.mxu0
      %1416 = vmatprep.mubr.bf16.mxu0 0
      %1417 = vmatmul.mubr.bf16.gmra.mxu0 %v1278
      %v1418 = vpop.f32.mrf.mxu0
      %v1419 = vadd.f32 %v1185, %v1418
      %v1420 = vpop.f32.mrf.mxu0
      %v1421 = vpop.f32.mrf.mxu0
      %v1422 = vadd.f32 %v1188, %v1421
      %v1423 = vpop.f32.mrf.mxu0
      %1424 = vmatprep.mubr.bf16.mxu0 0
      %1425 = vmatmul.mubr.bf16.gmra.mxu0 %v1281
      %v1426 = vpop.f32.mrf.mxu0
      %v1427 = vadd.f32 %v1193, %v1426
      %v1428 = vpop.f32.mrf.mxu0
      %v1429 = vpop.f32.mrf.mxu0
      %v1430 = vadd.f32 %v1196, %v1429
      %v1431 = vpop.f32.mrf.mxu0
      %1432 = vmatprep.mubr.bf16.mxu0 0
      %1433 = vmatmul.mubr.bf16.gmra.mxu0 %v1284
      %v1434 = vpop.f32.mrf.mxu0
      %v1435 = vadd.f32 %v1201, %v1434
      %v1436 = vpop.f32.mrf.mxu0
      %v1437 = vpop.f32.mrf.mxu0
      %v1438 = vadd.f32 %v1204, %v1437
      %v1439 = vpop.f32.mrf.mxu0
      %1440 = vmatprep.mubr.bf16.mxu0 0
      %1441 = vmatmul.mubr.bf16.gmra.mxu0 %v1287
      %v1442 = vpop.f32.mrf.mxu0
      %v1443 = vadd.f32 %v1209, %v1442
      %v1444 = vpop.f32.mrf.mxu0
      %v1445 = vpop.f32.mrf.mxu0
      %v1446 = vadd.f32 %v1212, %v1445
      %v1447 = vpop.f32.mrf.mxu0
      %1448 = vmatprep.mubr.bf16.mxu0 0
      %1449 = vmatmul.mubr.bf16.gmra.mxu0 %v1290
      %v1450 = vpop.f32.mrf.mxu0
      %v1451 = vadd.f32 %v1217, %v1450
      %v1452 = vpop.f32.mrf.mxu0
      %v1453 = vpop.f32.mrf.mxu0
      %v1454 = vadd.f32 %v1220, %v1453
      %v1455 = vpop.f32.mrf.mxu0
      %1456 = vmatprep.mubr.bf16.mxu0 0
      %1457 = vmatmul.mubr.bf16.gmra.mxu0 %v1293
      %v1458 = vpop.f32.mrf.mxu0
      %v1459 = vadd.f32 %v1225, %v1458
      %v1460 = vpop.f32.mrf.mxu0
      %v1461 = vpop.f32.mrf.mxu0
      %v1462 = vadd.f32 %v1228, %v1461
      %v1463 = vpop.f32.mrf.mxu0
      %1464 = vmatprep.mubr.bf16.mxu0 0
      %1465 = vmatmul.mubr.bf16.gmra.mxu0 %v1296
      %v1466 = vpop.f32.mrf.mxu0
      %v1467 = vadd.f32 %v1233, %v1466
      %v1468 = vpop.f32.mrf.mxu0
      %v1469 = vpop.f32.mrf.mxu0
      %v1470 = vadd.f32 %v1236, %v1469
      %v1471 = vpop.f32.mrf.mxu0
      %1472 = vmatprep.mubr.bf16.mxu0 0
      %1473 = vmatmul.mubr.bf16.gmra.mxu0 %v1299
      %v1474 = vpop.f32.mrf.mxu0
      %v1475 = vadd.f32 %v1241, %v1474
      %v1476 = vpop.f32.mrf.mxu0
      %v1477 = vpop.f32.mrf.mxu0
      %v1478 = vadd.f32 %v1244, %v1477
      %v1479 = vpop.f32.mrf.mxu0
      %1480 = vdwg.mxu0
      %v1481 = vld [vmem:[%s417 + $0x2] sm:$0xff]
      %v1482 = vld [vmem:[%s417 + $0xa] sm:$0xff]
      %v1483 = vld [vmem:[%s417 + $0x12] sm:$0xff]
      %v1484 = vld [vmem:[%s417 + $0x1a] sm:$0xff]
      %v1485 = vld [vmem:[%s417 + $0x22] sm:$0xff]
      %v1486 = vld [vmem:[%s417 + $0x2a] sm:$0xff]
      %v1487 = vld [vmem:[%s417 + $0x32] sm:$0xff]
      %v1488 = vld [vmem:[%s417 + $0x3a] sm:$0xff]
      %v1489 = vld [vmem:[%s417 + $0x42] sm:$0xff]
      %v1490 = vld [vmem:[%s417 + $0x4a] sm:$0xff]
      %v1491 = vld [vmem:[%s417 + $0x52] sm:$0xff]
      %v1492 = vld [vmem:[%s417 + $0x5a] sm:$0xff]
      %v1493 = vld [vmem:[%s417 + $0x62] sm:$0xff]
      %v1494 = vld [vmem:[%s417 + $0x6a] sm:$0xff]
      %v1495 = vld [vmem:[%s417 + $0x72] sm:$0xff]
      %v1496 = vld [vmem:[%s417 + $0x7a] sm:$0xff]
      %v1497 = vld [vmem:[%s417 + $0x82] sm:$0xff]
      %v1498 = vld [vmem:[%s417 + $0x8a] sm:$0xff]
      %v1499 = vld [vmem:[%s417 + $0x92] sm:$0xff]
      %v1500 = vld [vmem:[%s417 + $0x9a] sm:$0xff]
      %v1501 = vld [vmem:[%s417 + $0xa2] sm:$0xff]
      %v1502 = vld [vmem:[%s417 + $0xaa] sm:$0xff]
      %v1503 = vld [vmem:[%s417 + $0xb2] sm:$0xff]
      %v1504 = vld [vmem:[%s417 + $0xba] sm:$0xff]
      %v1505 = vld [vmem:[%s417 + $0xc2] sm:$0xff]
      %v1506 = vld [vmem:[%s417 + $0xca] sm:$0xff]
      %v1507 = vld [vmem:[%s417 + $0xd2] sm:$0xff]
      %v1508 = vld [vmem:[%s417 + $0xda] sm:$0xff]
      %v1509 = vld [vmem:[%s417 + $0xe2] sm:$0xff]
      %v1510 = vld [vmem:[%s417 + $0xea] sm:$0xff]
      %v1511 = vld [vmem:[%s417 + $0xf2] sm:$0xff]
      %v1512 = vld [vmem:[%s417 + $0xfa] sm:$0xff]
      %v1513 = vld [vmem:[%s417 + $0x102] sm:$0xff]
      %v1514 = vld [vmem:[%s417 + $0x10a] sm:$0xff]
      %v1515 = vld [vmem:[%s417 + $0x112] sm:$0xff]
      %v1516 = vld [vmem:[%s417 + $0x11a] sm:$0x3f]
      %v1517 = vpack.c.bf16 %v1482, %v1481
      %v1518 = vpack.c.bf16 %v1484, %v1483
      %v1519 = vpack.c.bf16 %v1486, %v1485
      %v1520 = vpack.c.bf16 %v1488, %v1487
      %v1521 = vpack.c.bf16 %v1490, %v1489
      %v1522 = vpack.c.bf16 %v1492, %v1491
      %v1523 = vpack.c.bf16 %v1494, %v1493
      %v1524 = vpack.c.bf16 %v1496, %v1495
      %v1525 = vpack.c.bf16 %v1498, %v1497
      %v1526 = vpack.c.bf16 %v1500, %v1499
      %v1527 = vpack.c.bf16 %v1502, %v1501
      %v1528 = vpack.c.bf16 %v1504, %v1503
      %v1529 = vpack.c.bf16 %v1506, %v1505
      %v1530 = vpack.c.bf16 %v1508, %v1507
      %v1531 = vpack.c.bf16 %v1510, %v1509
      %v1532 = vpack.c.bf16 %v1512, %v1511
      %v1533 = vpack.c.bf16 %v1514, %v1513
      %v1534 = vpack.c.bf16 %v1516, %v1515
      %s1535 = scalar_lea.vmem %s5, 4
      %v1536 = vld [vmem:[%s1535] sm:$0x3]
      %v1538 = vsel %vm779, %v1517, 0
      %v1541 = vsel %vm779, %v1518, 0
      %v1544 = vsel %vm779, %v1519, 0
      %v1547 = vsel %vm779, %v1520, 0
      %v1550 = vsel %vm779, %v1521, 0
      %v1553 = vsel %vm779, %v1522, 0
      %v1556 = vsel %vm779, %v1523, 0
      %v1559 = vsel %vm779, %v1524, 0
      %v1562 = vsel %vm779, %v1525, 0
      %v1565 = vsel %vm779, %v1526, 0
      %v1568 = vsel %vm779, %v1527, 0
      %v1571 = vsel %vm779, %v1528, 0
      %v1574 = vsel %vm779, %v1529, 0
      %v1577 = vsel %vm779, %v1530, 0
      %v1580 = vsel %vm779, %v1531, 0
      %v1583 = vsel %vm779, %v1532, 0
      %v1586 = vsel %vm779, %v1533, 0
      %v1589 = vsel %vm779, %v1534, 0
      %v1592 = vsel %vm792, %v1536, 0
      %1594 = vmatprep.subr.bf16.mxu0 0
      %1595 = vmatpush1.bf16.msra.mxu0 0
      %1596 = vmatprep.subr.bf16.mxu0 0
      %1597 = vmatpush1.bf16.msra.mxu0 0
      %1598 = vmatprep.subr.bf16.mxu0 0
      %1599 = vmatpush1.bf16.msra.mxu0 0
      %1600 = vmatprep.subr.bf16.mxu0 0
      %1601 = vmatpush1.bf16.msra.mxu0 0
      %1602 = vmatprep.subr.bf16.mxu0 0
      %1603 = vmatpush1.bf16.msra.mxu0 0
      %1604 = vmatprep.subr.bf16.mxu0 0
      %1605 = vmatpush1.bf16.msra.mxu0 0
      %1606 = vmatprep.subr.bf16.mxu0 0
      %1607 = vmatpush1.bf16.msra.mxu0 0
      %1608 = vmatprep.subr.bf16.mxu0 0
      %1609 = vmatpush1.bf16.msra.mxu0 %v1592
      %1610 = vmatprep.subr.bf16.mxu0 0
      %1611 = vmatpush2.bf16.msra.mxu0 0
      %1612 = vmatprep.subr.bf16.mxu0 0
      %1613 = vmatpush2.bf16.msra.mxu0 0
      %1614 = vmatprep.subr.bf16.mxu0 0
      %1615 = vmatpush2.bf16.msra.mxu0 0
      %1616 = vmatprep.subr.bf16.mxu0 0
      %1617 = vmatpush2.bf16.msra.mxu0 0
      %1618 = vmatprep.subr.bf16.mxu0 0
      %1619 = vmatpush2.bf16.msra.mxu0 0
      %1620 = vmatprep.subr.bf16.mxu0 0
      %1621 = vmatpush2.bf16.msra.mxu0 0
      %1622 = vmatprep.subr.bf16.mxu0 0
      %1623 = vmatpush2.bf16.msra.mxu0 0
      %1624 = vmatprep.subr.bf16.mxu0 0
      %1625 = vmatpush2.bf16.msra.mxu0 0
      %1626 = vmatprep.mubr.bf16.mxu0 0
      %1627 = vmatmul.mubr.bf16.gmra.mxu0 %v1538
      %v1628 = vpop.f32.mrf.mxu0
      %v1629 = vadd.f32 0.0, %v1628
      %v1630 = vpop.f32.mrf.mxu0
      %v1631 = vpop.f32.mrf.mxu0
      %v1632 = vadd.f32 0.0, %v1631
      %v1633 = vpop.f32.mrf.mxu0
      %1634 = vmatprep.mubr.bf16.mxu0 0
      %1635 = vmatmul.mubr.bf16.gmra.mxu0 %v1541
      %v1636 = vpop.f32.mrf.mxu0
      %v1637 = vadd.f32 0.0, %v1636
      %v1638 = vpop.f32.mrf.mxu0
      %v1639 = vpop.f32.mrf.mxu0
      %v1640 = vadd.f32 0.0, %v1639
      %v1641 = vpop.f32.mrf.mxu0
      %1642 = vmatprep.mubr.bf16.mxu0 0
      %1643 = vmatmul.mubr.bf16.gmra.mxu0 %v1544
      %v1644 = vpop.f32.mrf.mxu0
      %v1645 = vadd.f32 0.0, %v1644
      %v1646 = vpop.f32.mrf.mxu0
      %v1647 = vpop.f32.mrf.mxu0
      %v1648 = vadd.f32 0.0, %v1647
      %v1649 = vpop.f32.mrf.mxu0
      %1650 = vmatprep.mubr.bf16.mxu0 0
      %1651 = vmatmul.mubr.bf16.gmra.mxu0 %v1547
      %v1652 = vpop.f32.mrf.mxu0
      %v1653 = vadd.f32 0.0, %v1652
      %v1654 = vpop.f32.mrf.mxu0
      %v1655 = vpop.f32.mrf.mxu0
      %v1656 = vadd.f32 0.0, %v1655
      %v1657 = vpop.f32.mrf.mxu0
      %1658 = vmatprep.mubr.bf16.mxu0 0
      %1659 = vmatmul.mubr.bf16.gmra.mxu0 %v1550
      %v1660 = vpop.f32.mrf.mxu0
      %v1661 = vadd.f32 0.0, %v1660
      %v1662 = vpop.f32.mrf.mxu0
      %v1663 = vpop.f32.mrf.mxu0
      %v1664 = vadd.f32 0.0, %v1663
      %v1665 = vpop.f32.mrf.mxu0
      %1666 = vmatprep.mubr.bf16.mxu0 0
      %1667 = vmatmul.mubr.bf16.gmra.mxu0 %v1553
      %v1668 = vpop.f32.mrf.mxu0
      %v1669 = vadd.f32 0.0, %v1668
      %v1670 = vpop.f32.mrf.mxu0
      %v1671 = vpop.f32.mrf.mxu0
      %v1672 = vadd.f32 0.0, %v1671
      %v1673 = vpop.f32.mrf.mxu0
      %1674 = vmatprep.mubr.bf16.mxu0 0
      %1675 = vmatmul.mubr.bf16.gmra.mxu0 %v1556
      %v1676 = vpop.f32.mrf.mxu0
      %v1677 = vadd.f32 0.0, %v1676
      %v1678 = vpop.f32.mrf.mxu0
      %v1679 = vpop.f32.mrf.mxu0
      %v1680 = vadd.f32 0.0, %v1679
      %v1681 = vpop.f32.mrf.mxu0
      %1682 = vmatprep.mubr.bf16.mxu0 0
      %1683 = vmatmul.mubr.bf16.gmra.mxu0 %v1559
      %v1684 = vpop.f32.mrf.mxu0
      %v1685 = vadd.f32 0.0, %v1684
      %v1686 = vpop.f32.mrf.mxu0
      %v1687 = vpop.f32.mrf.mxu0
      %v1688 = vadd.f32 0.0, %v1687
      %v1689 = vpop.f32.mrf.mxu0
      %1690 = vmatprep.mubr.bf16.mxu0 0
      %1691 = vmatmul.mubr.bf16.gmra.mxu0 %v1562
      %v1692 = vpop.f32.mrf.mxu0
      %v1693 = vadd.f32 0.0, %v1692
      %v1694 = vpop.f32.mrf.mxu0
      %v1695 = vpop.f32.mrf.mxu0
      %v1696 = vadd.f32 0.0, %v1695
      %v1697 = vpop.f32.mrf.mxu0
      %1698 = vmatprep.mubr.bf16.mxu0 0
      %1699 = vmatmul.mubr.bf16.gmra.mxu0 %v1565
      %v1700 = vpop.f32.mrf.mxu0
      %v1701 = vadd.f32 0.0, %v1700
      %v1702 = vpop.f32.mrf.mxu0
      %v1703 = vpop.f32.mrf.mxu0
      %v1704 = vadd.f32 0.0, %v1703
      %v1705 = vpop.f32.mrf.mxu0
      %1706 = vmatprep.mubr.bf16.mxu0 0
      %1707 = vmatmul.mubr.bf16.gmra.mxu0 %v1568
      %v1708 = vpop.f32.mrf.mxu0
      %v1709 = vadd.f32 0.0, %v1708
      %v1710 = vpop.f32.mrf.mxu0
      %v1711 = vpop.f32.mrf.mxu0
      %v1712 = vadd.f32 0.0, %v1711
      %v1713 = vpop.f32.mrf.mxu0
      %1714 = vmatprep.mubr.bf16.mxu0 0
      %1715 = vmatmul.mubr.bf16.gmra.mxu0 %v1571
      %v1716 = vpop.f32.mrf.mxu0
      %v1717 = vadd.f32 0.0, %v1716
      %v1718 = vpop.f32.mrf.mxu0
      %v1719 = vpop.f32.mrf.mxu0
      %v1720 = vadd.f32 0.0, %v1719
      %v1721 = vpop.f32.mrf.mxu0
      %1722 = vmatprep.mubr.bf16.mxu0 0
      %1723 = vmatmul.mubr.bf16.gmra.mxu0 %v1574
      %v1724 = vpop.f32.mrf.mxu0
      %v1725 = vadd.f32 0.0, %v1724
      %v1726 = vpop.f32.mrf.mxu0
      %v1727 = vpop.f32.mrf.mxu0
      %v1728 = vadd.f32 0.0, %v1727
      %v1729 = vpop.f32.mrf.mxu0
      %1730 = vmatprep.mubr.bf16.mxu0 0
      %1731 = vmatmul.mubr.bf16.gmra.mxu0 %v1577
      %v1732 = vpop.f32.mrf.mxu0
      %v1733 = vadd.f32 0.0, %v1732
      %v1734 = vpop.f32.mrf.mxu0
      %v1735 = vpop.f32.mrf.mxu0
      %v1736 = vadd.f32 0.0, %v1735
      %v1737 = vpop.f32.mrf.mxu0
      %1738 = vmatprep.mubr.bf16.mxu0 0
      %1739 = vmatmul.mubr.bf16.gmra.mxu0 %v1580
      %v1740 = vpop.f32.mrf.mxu0
      %v1741 = vadd.f32 0.0, %v1740
      %v1742 = vpop.f32.mrf.mxu0
      %v1743 = vpop.f32.mrf.mxu0
      %v1744 = vadd.f32 0.0, %v1743
      %v1745 = vpop.f32.mrf.mxu0
      %1746 = vmatprep.mubr.bf16.mxu0 0
      %1747 = vmatmul.mubr.bf16.gmra.mxu0 %v1583
      %v1748 = vpop.f32.mrf.mxu0
      %v1749 = vadd.f32 0.0, %v1748
      %v1750 = vpop.f32.mrf.mxu0
      %v1751 = vpop.f32.mrf.mxu0
      %v1752 = vadd.f32 0.0, %v1751
      %v1753 = vpop.f32.mrf.mxu0
      %1754 = vmatprep.mubr.bf16.mxu0 0
      %1755 = vmatmul.mubr.bf16.gmra.mxu0 %v1586
      %v1756 = vpop.f32.mrf.mxu0
      %v1757 = vadd.f32 0.0, %v1756
      %v1758 = vpop.f32.mrf.mxu0
      %v1759 = vpop.f32.mrf.mxu0
      %v1760 = vadd.f32 0.0, %v1759
      %v1761 = vpop.f32.mrf.mxu0
      %1762 = vmatprep.mubr.bf16.mxu0 0
      %1763 = vmatmul.mubr.bf16.gmra.mxu0 %v1589
      %v1764 = vpop.f32.mrf.mxu0
      %v1765 = vadd.f32 0.0, %v1764
      %v1766 = vpop.f32.mrf.mxu0
      %v1767 = vpop.f32.mrf.mxu0
      %v1768 = vadd.f32 0.0, %v1767
      %v1769 = vpop.f32.mrf.mxu0
      %1770 = vdwg.mxu0
      %v1771 = vadd.f32 %v1339, %v1629
      %v1772 = vadd.f32 %v1342, %v1632
      %v1773 = vadd.f32 %v1347, %v1637
      %v1774 = vadd.f32 %v1350, %v1640
      %v1775 = vadd.f32 %v1355, %v1645
      %v1776 = vadd.f32 %v1358, %v1648
      %v1777 = vadd.f32 %v1363, %v1653
      %v1778 = vadd.f32 %v1366, %v1656
      %v1779 = vadd.f32 %v1371, %v1661
      %v1780 = vadd.f32 %v1374, %v1664
      %v1781 = vadd.f32 %v1379, %v1669
      %v1782 = vadd.f32 %v1382, %v1672
      %v1783 = vadd.f32 %v1387, %v1677
      %v1784 = vadd.f32 %v1390, %v1680
      %v1785 = vadd.f32 %v1395, %v1685
      %v1786 = vadd.f32 %v1398, %v1688
      %v1787 = vadd.f32 %v1403, %v1693
      %v1788 = vadd.f32 %v1406, %v1696
      %v1789 = vadd.f32 %v1411, %v1701
      %v1790 = vadd.f32 %v1414, %v1704
      %v1791 = vadd.f32 %v1419, %v1709
      %v1792 = vadd.f32 %v1422, %v1712
      %v1793 = vadd.f32 %v1427, %v1717
      %v1794 = vadd.f32 %v1430, %v1720
      %v1795 = vadd.f32 %v1435, %v1725
      %v1796 = vadd.f32 %v1438, %v1728
      %v1797 = vadd.f32 %v1443, %v1733
      %v1798 = vadd.f32 %v1446, %v1736
      %v1799 = vadd.f32 %v1451, %v1741
      %v1800 = vadd.f32 %v1454, %v1744
      %v1801 = vadd.f32 %v1459, %v1749
      %v1802 = vadd.f32 %v1462, %v1752
      %v1803 = vadd.f32 %v1467, %v1757
      %v1804 = vadd.f32 %v1470, %v1760
      %v1805 = vadd.f32 %v1475, %v1765
      %v1806 = vadd.f32 %v1478, %v1768
      %v1807 = vld [vmem:[%s417 + $0x12] sm:$0xff]
      %v1808 = vld [vmem:[%s417 + $0x1a] sm:$0xff]
      %v1809 = vld [vmem:[%s417 + $0x22] sm:$0xff]
      %v1810 = vld [vmem:[%s417 + $0x2a] sm:$0xff]
      %v1811 = vld [vmem:[%s417 + $0x32] sm:$0xff]
      %v1812 = vld [vmem:[%s417 + $0x3a] sm:$0xff]
      %v1813 = vld [vmem:[%s417 + $0x42] sm:$0xff]
      %v1814 = vld [vmem:[%s417 + $0x4a] sm:$0xff]
      %v1815 = vld [vmem:[%s417 + $0x52] sm:$0xff]
      %v1816 = vld [vmem:[%s417 + $0x5a] sm:$0xff]
      %v1817 = vld [vmem:[%s417 + $0x62] sm:$0xff]
      %v1818 = vld [vmem:[%s417 + $0x6a] sm:$0xff]
      %v1819 = vld [vmem:[%s417 + $0x72] sm:$0xff]
      %v1820 = vld [vmem:[%s417 + $0x7a] sm:$0xff]
      %v1821 = vld [vmem:[%s417 + $0x82] sm:$0xff]
      %v1822 = vld [vmem:[%s417 + $0x8a] sm:$0xff]
      %v1823 = vld [vmem:[%s417 + $0x92] sm:$0xff]
      %v1824 = vld [vmem:[%s417 + $0x9a] sm:$0xff]
      %v1825 = vld [vmem:[%s417 + $0xa2] sm:$0xff]
      %v1826 = vld [vmem:[%s417 + $0xaa] sm:$0xff]
      %v1827 = vld [vmem:[%s417 + $0xb2] sm:$0xff]
      %v1828 = vld [vmem:[%s417 + $0xba] sm:$0xff]
      %v1829 = vld [vmem:[%s417 + $0xc2] sm:$0xff]
      %v1830 = vld [vmem:[%s417 + $0xca] sm:$0xff]
      %v1831 = vld [vmem:[%s417 + $0xd2] sm:$0xff]
      %v1832 = vld [vmem:[%s417 + $0xda] sm:$0xff]
      %v1833 = vld [vmem:[%s417 + $0xe2] sm:$0xff]
      %v1834 = vld [vmem:[%s417 + $0xea] sm:$0xff]
      %v1835 = vld [vmem:[%s417 + $0xf2] sm:$0xff]
      %v1836 = vld [vmem:[%s417 + $0xfa] sm:$0xff]
      %v1837 = vld [vmem:[%s417 + $0x102] sm:$0xff]
      %v1838 = vld [vmem:[%s417 + $0x10a] sm:$0xff]
      %v1839 = vld [vmem:[%s417 + $0x112] sm:$0xff]
      %v1840 = vld [vmem:[%s417 + $0x11a] sm:$0xff]
      %v1841 = vld [vmem:[%s417 + $0x122] sm:$0xff]
      %v1842 = vld [vmem:[%s417 + $0x12a] sm:$0x3f]
      %v1843 = vpack.c.bf16 %v1808, %v1807
      %v1844 = vpack.c.bf16 %v1810, %v1809
      %v1845 = vpack.c.bf16 %v1812, %v1811
      %v1846 = vpack.c.bf16 %v1814, %v1813
      %v1847 = vpack.c.bf16 %v1816, %v1815
      %v1848 = vpack.c.bf16 %v1818, %v1817
      %v1849 = vpack.c.bf16 %v1820, %v1819
      %v1850 = vpack.c.bf16 %v1822, %v1821
      %v1851 = vpack.c.bf16 %v1824, %v1823
      %v1852 = vpack.c.bf16 %v1826, %v1825
      %v1853 = vpack.c.bf16 %v1828, %v1827
      %v1854 = vpack.c.bf16 %v1830, %v1829
      %v1855 = vpack.c.bf16 %v1832, %v1831
      %v1856 = vpack.c.bf16 %v1834, %v1833
      %v1857 = vpack.c.bf16 %v1836, %v1835
      %v1858 = vpack.c.bf16 %v1838, %v1837
      %v1859 = vpack.c.bf16 %v1840, %v1839
      %v1860 = vpack.c.bf16 %v1842, %v1841
      %s1861 = scalar_lea.vmem %s5, 6
      %v1862 = vld [vmem:[%s1861] sm:$0x3]
      %v1864 = vsel %vm779, %v1843, 0
      %v1867 = vsel %vm779, %v1844, 0
      %v1870 = vsel %vm779, %v1845, 0
      %v1873 = vsel %vm779, %v1846, 0
      %v1876 = vsel %vm779, %v1847, 0
      %v1879 = vsel %vm779, %v1848, 0
      %v1882 = vsel %vm779, %v1849, 0
      %v1885 = vsel %vm779, %v1850, 0
      %v1888 = vsel %vm779, %v1851, 0
      %v1891 = vsel %vm779, %v1852, 0
      %v1894 = vsel %vm779, %v1853, 0
      %v1897 = vsel %vm779, %v1854, 0
      %v1900 = vsel %vm779, %v1855, 0
      %v1903 = vsel %vm779, %v1856, 0
      %v1906 = vsel %vm779, %v1857, 0
      %v1909 = vsel %vm779, %v1858, 0
      %v1912 = vsel %vm779, %v1859, 0
      %v1915 = vsel %vm779, %v1860, 0
      %v1918 = vsel %vm792, %v1862, 0
      %1920 = vmatprep.subr.bf16.mxu0 0
      %1921 = vmatpush1.bf16.msra.mxu0 0
      %1922 = vmatprep.subr.bf16.mxu0 0
      %1923 = vmatpush1.bf16.msra.mxu0 0
      %1924 = vmatprep.subr.bf16.mxu0 0
      %1925 = vmatpush1.bf16.msra.mxu0 0
      %1926 = vmatprep.subr.bf16.mxu0 0
      %1927 = vmatpush1.bf16.msra.mxu0 0
      %1928 = vmatprep.subr.bf16.mxu0 0
      %1929 = vmatpush1.bf16.msra.mxu0 0
      %1930 = vmatprep.subr.bf16.mxu0 0
      %1931 = vmatpush1.bf16.msra.mxu0 0
      %1932 = vmatprep.subr.bf16.mxu0 0
      %1933 = vmatpush1.bf16.msra.mxu0 0
      %1934 = vmatprep.subr.bf16.mxu0 0
      %1935 = vmatpush1.bf16.msra.mxu0 %v1918
      %1936 = vmatprep.subr.bf16.mxu0 0
      %1937 = vmatpush2.bf16.msra.mxu0 0
      %1938 = vmatprep.subr.bf16.mxu0 0
      %1939 = vmatpush2.bf16.msra.mxu0 0
      %1940 = vmatprep.subr.bf16.mxu0 0
      %1941 = vmatpush2.bf16.msra.mxu0 0
      %1942 = vmatprep.subr.bf16.mxu0 0
      %1943 = vmatpush2.bf16.msra.mxu0 0
      %1944 = vmatprep.subr.bf16.mxu0 0
      %1945 = vmatpush2.bf16.msra.mxu0 0
      %1946 = vmatprep.subr.bf16.mxu0 0
      %1947 = vmatpush2.bf16.msra.mxu0 0
      %1948 = vmatprep.subr.bf16.mxu0 0
      %1949 = vmatpush2.bf16.msra.mxu0 0
      %1950 = vmatprep.subr.bf16.mxu0 0
      %1951 = vmatpush2.bf16.msra.mxu0 0
      %1952 = vmatprep.mubr.bf16.mxu0 0
      %1953 = vmatmul.mubr.bf16.gmra.mxu0 %v1864
      %v1954 = vpop.f32.mrf.mxu0
      %v1955 = vadd.f32 0.0, %v1954
      %v1956 = vpop.f32.mrf.mxu0
      %v1957 = vpop.f32.mrf.mxu0
      %v1958 = vadd.f32 0.0, %v1957
      %v1959 = vpop.f32.mrf.mxu0
      %1960 = vmatprep.mubr.bf16.mxu0 0
      %1961 = vmatmul.mubr.bf16.gmra.mxu0 %v1867
      %v1962 = vpop.f32.mrf.mxu0
      %v1963 = vadd.f32 0.0, %v1962
      %v1964 = vpop.f32.mrf.mxu0
      %v1965 = vpop.f32.mrf.mxu0
      %v1966 = vadd.f32 0.0, %v1965
      %v1967 = vpop.f32.mrf.mxu0
      %1968 = vmatprep.mubr.bf16.mxu0 0
      %1969 = vmatmul.mubr.bf16.gmra.mxu0 %v1870
      %v1970 = vpop.f32.mrf.mxu0
      %v1971 = vadd.f32 0.0, %v1970
      %v1972 = vpop.f32.mrf.mxu0
      %v1973 = vpop.f32.mrf.mxu0
      %v1974 = vadd.f32 0.0, %v1973
      %v1975 = vpop.f32.mrf.mxu0
      %1976 = vmatprep.mubr.bf16.mxu0 0
      %1977 = vmatmul.mubr.bf16.gmra.mxu0 %v1873
      %v1978 = vpop.f32.mrf.mxu0
      %v1979 = vadd.f32 0.0, %v1978
      %v1980 = vpop.f32.mrf.mxu0
      %v1981 = vpop.f32.mrf.mxu0
      %v1982 = vadd.f32 0.0, %v1981
      %v1983 = vpop.f32.mrf.mxu0
      %1984 = vmatprep.mubr.bf16.mxu0 0
      %1985 = vmatmul.mubr.bf16.gmra.mxu0 %v1876
      %v1986 = vpop.f32.mrf.mxu0
      %v1987 = vadd.f32 0.0, %v1986
      %v1988 = vpop.f32.mrf.mxu0
      %v1989 = vpop.f32.mrf.mxu0
      %v1990 = vadd.f32 0.0, %v1989
      %v1991 = vpop.f32.mrf.mxu0
      %1992 = vmatprep.mubr.bf16.mxu0 0
      %1993 = vmatmul.mubr.bf16.gmra.mxu0 %v1879
      %v1994 = vpop.f32.mrf.mxu0
      %v1995 = vadd.f32 0.0, %v1994
      %v1996 = vpop.f32.mrf.mxu0
      %v1997 = vpop.f32.mrf.mxu0
      %v1998 = vadd.f32 0.0, %v1997
      %v1999 = vpop.f32.mrf.mxu0
      %2000 = vmatprep.mubr.bf16.mxu0 0
      %2001 = vmatmul.mubr.bf16.gmra.mxu0 %v1882
      %v2002 = vpop.f32.mrf.mxu0
      %v2003 = vadd.f32 0.0, %v2002
      %v2004 = vpop.f32.mrf.mxu0
      %v2005 = vpop.f32.mrf.mxu0
      %v2006 = vadd.f32 0.0, %v2005
      %v2007 = vpop.f32.mrf.mxu0
      %2008 = vmatprep.mubr.bf16.mxu0 0
      %2009 = vmatmul.mubr.bf16.gmra.mxu0 %v1885
      %v2010 = vpop.f32.mrf.mxu0
      %v2011 = vadd.f32 0.0, %v2010
      %v2012 = vpop.f32.mrf.mxu0
      %v2013 = vpop.f32.mrf.mxu0
      %v2014 = vadd.f32 0.0, %v2013
      %v2015 = vpop.f32.mrf.mxu0
      %2016 = vmatprep.mubr.bf16.mxu0 0
      %2017 = vmatmul.mubr.bf16.gmra.mxu0 %v1888
      %v2018 = vpop.f32.mrf.mxu0
      %v2019 = vadd.f32 0.0, %v2018
      %v2020 = vpop.f32.mrf.mxu0
      %v2021 = vpop.f32.mrf.mxu0
      %v2022 = vadd.f32 0.0, %v2021
      %v2023 = vpop.f32.mrf.mxu0
      %2024 = vmatprep.mubr.bf16.mxu0 0
      %2025 = vmatmul.mubr.bf16.gmra.mxu0 %v1891
      %v2026 = vpop.f32.mrf.mxu0
      %v2027 = vadd.f32 0.0, %v2026
      %v2028 = vpop.f32.mrf.mxu0
      %v2029 = vpop.f32.mrf.mxu0
      %v2030 = vadd.f32 0.0, %v2029
      %v2031 = vpop.f32.mrf.mxu0
      %2032 = vmatprep.mubr.bf16.mxu0 0
      %2033 = vmatmul.mubr.bf16.gmra.mxu0 %v1894
      %v2034 = vpop.f32.mrf.mxu0
      %v2035 = vadd.f32 0.0, %v2034
      %v2036 = vpop.f32.mrf.mxu0
      %v2037 = vpop.f32.mrf.mxu0
      %v2038 = vadd.f32 0.0, %v2037
      %v2039 = vpop.f32.mrf.mxu0
      %2040 = vmatprep.mubr.bf16.mxu0 0
      %2041 = vmatmul.mubr.bf16.gmra.mxu0 %v1897
      %v2042 = vpop.f32.mrf.mxu0
      %v2043 = vadd.f32 0.0, %v2042
      %v2044 = vpop.f32.mrf.mxu0
      %v2045 = vpop.f32.mrf.mxu0
      %v2046 = vadd.f32 0.0, %v2045
      %v2047 = vpop.f32.mrf.mxu0
      %2048 = vmatprep.mubr.bf16.mxu0 0
      %2049 = vmatmul.mubr.bf16.gmra.mxu0 %v1900
      %v2050 = vpop.f32.mrf.mxu0
      %v2051 = vadd.f32 0.0, %v2050
      %v2052 = vpop.f32.mrf.mxu0
      %v2053 = vpop.f32.mrf.mxu0
      %v2054 = vadd.f32 0.0, %v2053
      %v2055 = vpop.f32.mrf.mxu0
      %2056 = vmatprep.mubr.bf16.mxu0 0
      %2057 = vmatmul.mubr.bf16.gmra.mxu0 %v1903
      %v2058 = vpop.f32.mrf.mxu0
      %v2059 = vadd.f32 0.0, %v2058
      %v2060 = vpop.f32.mrf.mxu0
      %v2061 = vpop.f32.mrf.mxu0
      %v2062 = vadd.f32 0.0, %v2061
      %v2063 = vpop.f32.mrf.mxu0
      %2064 = vmatprep.mubr.bf16.mxu0 0
      %2065 = vmatmul.mubr.bf16.gmra.mxu0 %v1906
      %v2066 = vpop.f32.mrf.mxu0
      %v2067 = vadd.f32 0.0, %v2066
      %v2068 = vpop.f32.mrf.mxu0
      %v2069 = vpop.f32.mrf.mxu0
      %v2070 = vadd.f32 0.0, %v2069
      %v2071 = vpop.f32.mrf.mxu0
      %2072 = vmatprep.mubr.bf16.mxu0 0
      %2073 = vmatmul.mubr.bf16.gmra.mxu0 %v1909
      %v2074 = vpop.f32.mrf.mxu0
      %v2075 = vadd.f32 0.0, %v2074
      %v2076 = vpop.f32.mrf.mxu0
      %v2077 = vpop.f32.mrf.mxu0
      %v2078 = vadd.f32 0.0, %v2077
      %v2079 = vpop.f32.mrf.mxu0
      %2080 = vmatprep.mubr.bf16.mxu0 0
      %2081 = vmatmul.mubr.bf16.gmra.mxu0 %v1912
      %v2082 = vpop.f32.mrf.mxu0
      %v2083 = vadd.f32 0.0, %v2082
      %v2084 = vpop.f32.mrf.mxu0
      %v2085 = vpop.f32.mrf.mxu0
      %v2086 = vadd.f32 0.0, %v2085
      %v2087 = vpop.f32.mrf.mxu0
      %2088 = vmatprep.mubr.bf16.mxu0 0
      %2089 = vmatmul.mubr.bf16.gmra.mxu0 %v1915
      %v2090 = vpop.f32.mrf.mxu0
      %v2091 = vadd.f32 0.0, %v2090
      %v2092 = vpop.f32.mrf.mxu0
      %v2093 = vpop.f32.mrf.mxu0
      %v2094 = vadd.f32 0.0, %v2093
      %v2095 = vpop.f32.mrf.mxu0
      %2096 = vdwg.mxu0
      %v2097 = vadd.f32 %v1771, %v1955
      %v2098 = vadd.f32 %v1772, %v1958
      %v2099 = vadd.f32 %v1773, %v1963
      %v2100 = vadd.f32 %v1774, %v1966
      %v2101 = vadd.f32 %v1775, %v1971
      %v2102 = vadd.f32 %v1776, %v1974
      %v2103 = vadd.f32 %v1777, %v1979
      %v2104 = vadd.f32 %v1778, %v1982
      %v2105 = vadd.f32 %v1779, %v1987
      %v2106 = vadd.f32 %v1780, %v1990
      %v2107 = vadd.f32 %v1781, %v1995
      %v2108 = vadd.f32 %v1782, %v1998
      %v2109 = vadd.f32 %v1783, %v2003
      %v2110 = vadd.f32 %v1784, %v2006
      %v2111 = vadd.f32 %v1785, %v2011
      %v2112 = vadd.f32 %v1786, %v2014
      %v2113 = vadd.f32 %v1787, %v2019
      %v2114 = vadd.f32 %v1788, %v2022
      %v2115 = vadd.f32 %v1789, %v2027
      %v2116 = vadd.f32 %v1790, %v2030
      %v2117 = vadd.f32 %v1791, %v2035
      %v2118 = vadd.f32 %v1792, %v2038
      %v2119 = vadd.f32 %v1793, %v2043
      %v2120 = vadd.f32 %v1794, %v2046
      %v2121 = vadd.f32 %v1795, %v2051
      %v2122 = vadd.f32 %v1796, %v2054
      %v2123 = vadd.f32 %v1797, %v2059
      %v2124 = vadd.f32 %v1798, %v2062
      %v2125 = vadd.f32 %v1799, %v2067
      %v2126 = vadd.f32 %v1800, %v2070
      %v2127 = vadd.f32 %v1801, %v2075
      %v2128 = vadd.f32 %v1802, %v2078
      %v2129 = vadd.f32 %v1803, %v2083
      %v2130 = vadd.f32 %v1804, %v2086
      %v2131 = vadd.f32 %v1805, %v2091
      %v2132 = vadd.f32 %v1806, %v2094
      %v2133 = vld [vmem:[%s417 + $0x13] sm:$0xff]
      %v2134 = vld [vmem:[%s417 + $0x1b] sm:$0xff]
      %v2135 = vld [vmem:[%s417 + $0x23] sm:$0xff]
      %v2136 = vld [vmem:[%s417 + $0x2b] sm:$0xff]
      %v2137 = vld [vmem:[%s417 + $0x33] sm:$0xff]
      %v2138 = vld [vmem:[%s417 + $0x3b] sm:$0xff]
      %v2139 = vld [vmem:[%s417 + $0x43] sm:$0xff]
      %v2140 = vld [vmem:[%s417 + $0x4b] sm:$0xff]
      %v2141 = vld [vmem:[%s417 + $0x53] sm:$0xff]
      %v2142 = vld [vmem:[%s417 + $0x5b] sm:$0xff]
      %v2143 = vld [vmem:[%s417 + $0x63] sm:$0xff]
      %v2144 = vld [vmem:[%s417 + $0x6b] sm:$0xff]
      %v2145 = vld [vmem:[%s417 + $0x73] sm:$0xff]
      %v2146 = vld [vmem:[%s417 + $0x7b] sm:$0xff]
      %v2147 = vld [vmem:[%s417 + $0x83] sm:$0xff]
      %v2148 = vld [vmem:[%s417 + $0x8b] sm:$0xff]
      %v2149 = vld [vmem:[%s417 + $0x93] sm:$0xff]
      %v2150 = vld [vmem:[%s417 + $0x9b] sm:$0xff]
      %v2151 = vld [vmem:[%s417 + $0xa3] sm:$0xff]
      %v2152 = vld [vmem:[%s417 + $0xab] sm:$0xff]
      %v2153 = vld [vmem:[%s417 + $0xb3] sm:$0xff]
      %v2154 = vld [vmem:[%s417 + $0xbb] sm:$0xff]
      %v2155 = vld [vmem:[%s417 + $0xc3] sm:$0xff]
      %v2156 = vld [vmem:[%s417 + $0xcb] sm:$0xff]
      %v2157 = vld [vmem:[%s417 + $0xd3] sm:$0xff]
      %v2158 = vld [vmem:[%s417 + $0xdb] sm:$0xff]
      %v2159 = vld [vmem:[%s417 + $0xe3] sm:$0xff]
      %v2160 = vld [vmem:[%s417 + $0xeb] sm:$0xff]
      %v2161 = vld [vmem:[%s417 + $0xf3] sm:$0xff]
      %v2162 = vld [vmem:[%s417 + $0xfb] sm:$0xff]
      %v2163 = vld [vmem:[%s417 + $0x103] sm:$0xff]
      %v2164 = vld [vmem:[%s417 + $0x10b] sm:$0xff]
      %v2165 = vld [vmem:[%s417 + $0x113] sm:$0xff]
      %v2166 = vld [vmem:[%s417 + $0x11b] sm:$0xff]
      %v2167 = vld [vmem:[%s417 + $0x123] sm:$0xff]
      %v2168 = vld [vmem:[%s417 + $0x12b] sm:$0x3f]
      %v2169 = vpack.c.bf16 %v2134, %v2133
      %v2170 = vpack.c.bf16 %v2136, %v2135
      %v2171 = vpack.c.bf16 %v2138, %v2137
      %v2172 = vpack.c.bf16 %v2140, %v2139
      %v2173 = vpack.c.bf16 %v2142, %v2141
      %v2174 = vpack.c.bf16 %v2144, %v2143
      %v2175 = vpack.c.bf16 %v2146, %v2145
      %v2176 = vpack.c.bf16 %v2148, %v2147
      %v2177 = vpack.c.bf16 %v2150, %v2149
      %v2178 = vpack.c.bf16 %v2152, %v2151
      %v2179 = vpack.c.bf16 %v2154, %v2153
      %v2180 = vpack.c.bf16 %v2156, %v2155
      %v2181 = vpack.c.bf16 %v2158, %v2157
      %v2182 = vpack.c.bf16 %v2160, %v2159
      %v2183 = vpack.c.bf16 %v2162, %v2161
      %v2184 = vpack.c.bf16 %v2164, %v2163
      %v2185 = vpack.c.bf16 %v2166, %v2165
      %v2186 = vpack.c.bf16 %v2168, %v2167
      %s2187 = scalar_lea.vmem %s5, 8
      %v2188 = vld [vmem:[%s2187] sm:$0x3]
      %v2190 = vsel %vm779, %v2169, 0
      %v2193 = vsel %vm779, %v2170, 0
      %v2196 = vsel %vm779, %v2171, 0
      %v2199 = vsel %vm779, %v2172, 0
      %v2202 = vsel %vm779, %v2173, 0
      %v2205 = vsel %vm779, %v2174, 0
      %v2208 = vsel %vm779, %v2175, 0
      %v2211 = vsel %vm779, %v2176, 0
      %v2214 = vsel %vm779, %v2177, 0
      %v2217 = vsel %vm779, %v2178, 0
      %v2220 = vsel %vm779, %v2179, 0
      %v2223 = vsel %vm779, %v2180, 0
      %v2226 = vsel %vm779, %v2181, 0
      %v2229 = vsel %vm779, %v2182, 0
      %v2232 = vsel %vm779, %v2183, 0
      %v2235 = vsel %vm779, %v2184, 0
      %v2238 = vsel %vm779, %v2185, 0
      %v2241 = vsel %vm779, %v2186, 0
      %v2244 = vsel %vm792, %v2188, 0
      %2246 = vmatprep.subr.bf16.mxu0 0
      %2247 = vmatpush1.bf16.msra.mxu0 0
      %2248 = vmatprep.subr.bf16.mxu0 0
      %2249 = vmatpush1.bf16.msra.mxu0 0
      %2250 = vmatprep.subr.bf16.mxu0 0
      %2251 = vmatpush1.bf16.msra.mxu0 0
      %2252 = vmatprep.subr.bf16.mxu0 0
      %2253 = vmatpush1.bf16.msra.mxu0 0
      %2254 = vmatprep.subr.bf16.mxu0 0
      %2255 = vmatpush1.bf16.msra.mxu0 0
      %2256 = vmatprep.subr.bf16.mxu0 0
      %2257 = vmatpush1.bf16.msra.mxu0 0
      %2258 = vmatprep.subr.bf16.mxu0 0
      %2259 = vmatpush1.bf16.msra.mxu0 0
      %2260 = vmatprep.subr.bf16.mxu0 0
      %2261 = vmatpush1.bf16.msra.mxu0 %v2244
      %2262 = vmatprep.subr.bf16.mxu0 0
      %2263 = vmatpush2.bf16.msra.mxu0 0
      %2264 = vmatprep.subr.bf16.mxu0 0
      %2265 = vmatpush2.bf16.msra.mxu0 0
      %2266 = vmatprep.subr.bf16.mxu0 0
      %2267 = vmatpush2.bf16.msra.mxu0 0
      %2268 = vmatprep.subr.bf16.mxu0 0
      %2269 = vmatpush2.bf16.msra.mxu0 0
      %2270 = vmatprep.subr.bf16.mxu0 0
      %2271 = vmatpush2.bf16.msra.mxu0 0
      %2272 = vmatprep.subr.bf16.mxu0 0
      %2273 = vmatpush2.bf16.msra.mxu0 0
      %2274 = vmatprep.subr.bf16.mxu0 0
      %2275 = vmatpush2.bf16.msra.mxu0 0
      %2276 = vmatprep.subr.bf16.mxu0 0
      %2277 = vmatpush2.bf16.msra.mxu0 0
      %2278 = vmatprep.mubr.bf16.mxu0 0
      %2279 = vmatmul.mubr.bf16.gmra.mxu0 %v2190
      %v2280 = vpop.f32.mrf.mxu0
      %v2281 = vadd.f32 0.0, %v2280
      %v2282 = vpop.f32.mrf.mxu0
      %v2283 = vpop.f32.mrf.mxu0
      %v2284 = vadd.f32 0.0, %v2283
      %v2285 = vpop.f32.mrf.mxu0
      %2286 = vmatprep.mubr.bf16.mxu0 0
      %2287 = vmatmul.mubr.bf16.gmra.mxu0 %v2193
      %v2288 = vpop.f32.mrf.mxu0
      %v2289 = vadd.f32 0.0, %v2288
      %v2290 = vpop.f32.mrf.mxu0
      %v2291 = vpop.f32.mrf.mxu0
      %v2292 = vadd.f32 0.0, %v2291
      %v2293 = vpop.f32.mrf.mxu0
      %2294 = vmatprep.mubr.bf16.mxu0 0
      %2295 = vmatmul.mubr.bf16.gmra.mxu0 %v2196
      %v2296 = vpop.f32.mrf.mxu0
      %v2297 = vadd.f32 0.0, %v2296
      %v2298 = vpop.f32.mrf.mxu0
      %v2299 = vpop.f32.mrf.mxu0
      %v2300 = vadd.f32 0.0, %v2299
      %v2301 = vpop.f32.mrf.mxu0
      %2302 = vmatprep.mubr.bf16.mxu0 0
      %2303 = vmatmul.mubr.bf16.gmra.mxu0 %v2199
      %v2304 = vpop.f32.mrf.mxu0
      %v2305 = vadd.f32 0.0, %v2304
      %v2306 = vpop.f32.mrf.mxu0
      %v2307 = vpop.f32.mrf.mxu0
      %v2308 = vadd.f32 0.0, %v2307
      %v2309 = vpop.f32.mrf.mxu0
      %2310 = vmatprep.mubr.bf16.mxu0 0
      %2311 = vmatmul.mubr.bf16.gmra.mxu0 %v2202
      %v2312 = vpop.f32.mrf.mxu0
      %v2313 = vadd.f32 0.0, %v2312
      %v2314 = vpop.f32.mrf.mxu0
      %v2315 = vpop.f32.mrf.mxu0
      %v2316 = vadd.f32 0.0, %v2315
      %v2317 = vpop.f32.mrf.mxu0
      %2318 = vmatprep.mubr.bf16.mxu0 0
      %2319 = vmatmul.mubr.bf16.gmra.mxu0 %v2205
      %v2320 = vpop.f32.mrf.mxu0
      %v2321 = vadd.f32 0.0, %v2320
      %v2322 = vpop.f32.mrf.mxu0
      %v2323 = vpop.f32.mrf.mxu0
      %v2324 = vadd.f32 0.0, %v2323
      %v2325 = vpop.f32.mrf.mxu0
      %2326 = vmatprep.mubr.bf16.mxu0 0
      %2327 = vmatmul.mubr.bf16.gmra.mxu0 %v2208
      %v2328 = vpop.f32.mrf.mxu0
      %v2329 = vadd.f32 0.0, %v2328
      %v2330 = vpop.f32.mrf.mxu0
      %v2331 = vpop.f32.mrf.mxu0
      %v2332 = vadd.f32 0.0, %v2331
      %v2333 = vpop.f32.mrf.mxu0
      %2334 = vmatprep.mubr.bf16.mxu0 0
      %2335 = vmatmul.mubr.bf16.gmra.mxu0 %v2211
      %v2336 = vpop.f32.mrf.mxu0
      %v2337 = vadd.f32 0.0, %v2336
      %v2338 = vpop.f32.mrf.mxu0
      %v2339 = vpop.f32.mrf.mxu0
      %v2340 = vadd.f32 0.0, %v2339
      %v2341 = vpop.f32.mrf.mxu0
      %2342 = vmatprep.mubr.bf16.mxu0 0
      %2343 = vmatmul.mubr.bf16.gmra.mxu0 %v2214
      %v2344 = vpop.f32.mrf.mxu0
      %v2345 = vadd.f32 0.0, %v2344
      %v2346 = vpop.f32.mrf.mxu0
      %v2347 = vpop.f32.mrf.mxu0
      %v2348 = vadd.f32 0.0, %v2347
      %v2349 = vpop.f32.mrf.mxu0
      %2350 = vmatprep.mubr.bf16.mxu0 0
      %2351 = vmatmul.mubr.bf16.gmra.mxu0 %v2217
      %v2352 = vpop.f32.mrf.mxu0
      %v2353 = vadd.f32 0.0, %v2352
      %v2354 = vpop.f32.mrf.mxu0
      %v2355 = vpop.f32.mrf.mxu0
      %v2356 = vadd.f32 0.0, %v2355
      %v2357 = vpop.f32.mrf.mxu0
      %2358 = vmatprep.mubr.bf16.mxu0 0
      %2359 = vmatmul.mubr.bf16.gmra.mxu0 %v2220
      %v2360 = vpop.f32.mrf.mxu0
      %v2361 = vadd.f32 0.0, %v2360
      %v2362 = vpop.f32.mrf.mxu0
      %v2363 = vpop.f32.mrf.mxu0
      %v2364 = vadd.f32 0.0, %v2363
      %v2365 = vpop.f32.mrf.mxu0
      %2366 = vmatprep.mubr.bf16.mxu0 0
      %2367 = vmatmul.mubr.bf16.gmra.mxu0 %v2223
      %v2368 = vpop.f32.mrf.mxu0
      %v2369 = vadd.f32 0.0, %v2368
      %v2370 = vpop.f32.mrf.mxu0
      %v2371 = vpop.f32.mrf.mxu0
      %v2372 = vadd.f32 0.0, %v2371
      %v2373 = vpop.f32.mrf.mxu0
      %2374 = vmatprep.mubr.bf16.mxu0 0
      %2375 = vmatmul.mubr.bf16.gmra.mxu0 %v2226
      %v2376 = vpop.f32.mrf.mxu0
      %v2377 = vadd.f32 0.0, %v2376
      %v2378 = vpop.f32.mrf.mxu0
      %v2379 = vpop.f32.mrf.mxu0
      %v2380 = vadd.f32 0.0, %v2379
      %v2381 = vpop.f32.mrf.mxu0
      %2382 = vmatprep.mubr.bf16.mxu0 0
      %2383 = vmatmul.mubr.bf16.gmra.mxu0 %v2229
      %v2384 = vpop.f32.mrf.mxu0
      %v2385 = vadd.f32 0.0, %v2384
      %v2386 = vpop.f32.mrf.mxu0
      %v2387 = vpop.f32.mrf.mxu0
      %v2388 = vadd.f32 0.0, %v2387
      %v2389 = vpop.f32.mrf.mxu0
      %2390 = vmatprep.mubr.bf16.mxu0 0
      %2391 = vmatmul.mubr.bf16.gmra.mxu0 %v2232
      %v2392 = vpop.f32.mrf.mxu0
      %v2393 = vadd.f32 0.0, %v2392
      %v2394 = vpop.f32.mrf.mxu0
      %v2395 = vpop.f32.mrf.mxu0
      %v2396 = vadd.f32 0.0, %v2395
      %v2397 = vpop.f32.mrf.mxu0
      %2398 = vmatprep.mubr.bf16.mxu0 0
      %2399 = vmatmul.mubr.bf16.gmra.mxu0 %v2235
      %v2400 = vpop.f32.mrf.mxu0
      %v2401 = vadd.f32 0.0, %v2400
      %v2402 = vpop.f32.mrf.mxu0
      %v2403 = vpop.f32.mrf.mxu0
      %v2404 = vadd.f32 0.0, %v2403
      %v2405 = vpop.f32.mrf.mxu0
      %2406 = vmatprep.mubr.bf16.mxu0 0
      %2407 = vmatmul.mubr.bf16.gmra.mxu0 %v2238
      %v2408 = vpop.f32.mrf.mxu0
      %v2409 = vadd.f32 0.0, %v2408
      %v2410 = vpop.f32.mrf.mxu0
      %v2411 = vpop.f32.mrf.mxu0
      %v2412 = vadd.f32 0.0, %v2411
      %v2413 = vpop.f32.mrf.mxu0
      %2414 = vmatprep.mubr.bf16.mxu0 0
      %2415 = vmatmul.mubr.bf16.gmra.mxu0 %v2241
      %v2416 = vpop.f32.mrf.mxu0
      %v2417 = vadd.f32 0.0, %v2416
      %v2418 = vpop.f32.mrf.mxu0
      %v2419 = vpop.f32.mrf.mxu0
      %v2420 = vadd.f32 0.0, %v2419
      %v2421 = vpop.f32.mrf.mxu0
      %2422 = vdwg.mxu0
      %v2423 = vadd.f32 %v2097, %v2281
      %v2424 = vadd.f32 %v2098, %v2284
      %v2425 = vadd.f32 %v2099, %v2289
      %v2426 = vadd.f32 %v2100, %v2292
      %v2427 = vadd.f32 %v2101, %v2297
      %v2428 = vadd.f32 %v2102, %v2300
      %v2429 = vadd.f32 %v2103, %v2305
      %v2430 = vadd.f32 %v2104, %v2308
      %v2431 = vadd.f32 %v2105, %v2313
      %v2432 = vadd.f32 %v2106, %v2316
      %v2433 = vadd.f32 %v2107, %v2321
      %v2434 = vadd.f32 %v2108, %v2324
      %v2435 = vadd.f32 %v2109, %v2329
      %v2436 = vadd.f32 %v2110, %v2332
      %v2437 = vadd.f32 %v2111, %v2337
      %v2438 = vadd.f32 %v2112, %v2340
      %v2439 = vadd.f32 %v2113, %v2345
      %v2440 = vadd.f32 %v2114, %v2348
      %v2441 = vadd.f32 %v2115, %v2353
      %v2442 = vadd.f32 %v2116, %v2356
      %v2443 = vadd.f32 %v2117, %v2361
      %v2444 = vadd.f32 %v2118, %v2364
      %v2445 = vadd.f32 %v2119, %v2369
      %v2446 = vadd.f32 %v2120, %v2372
      %v2447 = vadd.f32 %v2121, %v2377
      %v2448 = vadd.f32 %v2122, %v2380
      %v2449 = vadd.f32 %v2123, %v2385
      %v2450 = vadd.f32 %v2124, %v2388
      %v2451 = vadd.f32 %v2125, %v2393
      %v2452 = vadd.f32 %v2126, %v2396
      %v2453 = vadd.f32 %v2127, %v2401
      %v2454 = vadd.f32 %v2128, %v2404
      %v2455 = vadd.f32 %v2129, %v2409
      %v2456 = vadd.f32 %v2130, %v2412
      %v2457 = vadd.f32 %v2131, %v2417
      %v2458 = vadd.f32 %v2132, %v2420
      %v2459 = vld [vmem:[%s417 + $0x14] sm:$0xff]
      %v2460 = vld [vmem:[%s417 + $0x1c] sm:$0xff]
      %v2461 = vld [vmem:[%s417 + $0x24] sm:$0xff]
      %v2462 = vld [vmem:[%s417 + $0x2c] sm:$0xff]
      %v2463 = vld [vmem:[%s417 + $0x34] sm:$0xff]
      %v2464 = vld [vmem:[%s417 + $0x3c] sm:$0xff]
      %v2465 = vld [vmem:[%s417 + $0x44] sm:$0xff]
      %v2466 = vld [vmem:[%s417 + $0x4c] sm:$0xff]
      %v2467 = vld [vmem:[%s417 + $0x54] sm:$0xff]
      %v2468 = vld [vmem:[%s417 + $0x5c] sm:$0xff]
      %v2469 = vld [vmem:[%s417 + $0x64] sm:$0xff]
      %v2470 = vld [vmem:[%s417 + $0x6c] sm:$0xff]
      %v2471 = vld [vmem:[%s417 + $0x74] sm:$0xff]
      %v2472 = vld [vmem:[%s417 + $0x7c] sm:$0xff]
      %v2473 = vld [vmem:[%s417 + $0x84] sm:$0xff]
      %v2474 = vld [vmem:[%s417 + $0x8c] sm:$0xff]
      %v2475 = vld [vmem:[%s417 + $0x94] sm:$0xff]
      %v2476 = vld [vmem:[%s417 + $0x9c] sm:$0xff]
      %v2477 = vld [vmem:[%s417 + $0xa4] sm:$0xff]
      %v2478 = vld [vmem:[%s417 + $0xac] sm:$0xff]
      %v2479 = vld [vmem:[%s417 + $0xb4] sm:$0xff]
      %v2480 = vld [vmem:[%s417 + $0xbc] sm:$0xff]
      %v2481 = vld [vmem:[%s417 + $0xc4] sm:$0xff]
      %v2482 = vld [vmem:[%s417 + $0xcc] sm:$0xff]
      %v2483 = vld [vmem:[%s417 + $0xd4] sm:$0xff]
      %v2484 = vld [vmem:[%s417 + $0xdc] sm:$0xff]
      %v2485 = vld [vmem:[%s417 + $0xe4] sm:$0xff]
      %v2486 = vld [vmem:[%s417 + $0xec] sm:$0xff]
      %v2487 = vld [vmem:[%s417 + $0xf4] sm:$0xff]
      %v2488 = vld [vmem:[%s417 + $0xfc] sm:$0xff]
      %v2489 = vld [vmem:[%s417 + $0x104] sm:$0xff]
      %v2490 = vld [vmem:[%s417 + $0x10c] sm:$0xff]
      %v2491 = vld [vmem:[%s417 + $0x114] sm:$0xff]
      %v2492 = vld [vmem:[%s417 + $0x11c] sm:$0xff]
      %v2493 = vld [vmem:[%s417 + $0x124] sm:$0xff]
      %v2494 = vld [vmem:[%s417 + $0x12c] sm:$0x3f]
      %v2495 = vpack.c.bf16 %v2460, %v2459
      %v2496 = vpack.c.bf16 %v2462, %v2461
      %v2497 = vpack.c.bf16 %v2464, %v2463
      %v2498 = vpack.c.bf16 %v2466, %v2465
      %v2499 = vpack.c.bf16 %v2468, %v2467
      %v2500 = vpack.c.bf16 %v2470, %v2469
      %v2501 = vpack.c.bf16 %v2472, %v2471
      %v2502 = vpack.c.bf16 %v2474, %v2473
      %v2503 = vpack.c.bf16 %v2476, %v2475
      %v2504 = vpack.c.bf16 %v2478, %v2477
      %v2505 = vpack.c.bf16 %v2480, %v2479
      %v2506 = vpack.c.bf16 %v2482, %v2481
      %v2507 = vpack.c.bf16 %v2484, %v2483
      %v2508 = vpack.c.bf16 %v2486, %v2485
      %v2509 = vpack.c.bf16 %v2488, %v2487
      %v2510 = vpack.c.bf16 %v2490, %v2489
      %v2511 = vpack.c.bf16 %v2492, %v2491
      %v2512 = vpack.c.bf16 %v2494, %v2493
      %s2513 = scalar_lea.vmem %s5, 10
      %v2514 = vld [vmem:[%s2513] sm:$0x3]
      %v2516 = vsel %vm779, %v2495, 0
      %v2519 = vsel %vm779, %v2496, 0
      %v2522 = vsel %vm779, %v2497, 0
      %v2525 = vsel %vm779, %v2498, 0
      %v2528 = vsel %vm779, %v2499, 0
      %v2531 = vsel %vm779, %v2500, 0
      %v2534 = vsel %vm779, %v2501, 0
      %v2537 = vsel %vm779, %v2502, 0
      %v2540 = vsel %vm779, %v2503, 0
      %v2543 = vsel %vm779, %v2504, 0
      %v2546 = vsel %vm779, %v2505, 0
      %v2549 = vsel %vm779, %v2506, 0
      %v2552 = vsel %vm779, %v2507, 0
      %v2555 = vsel %vm779, %v2508, 0
      %v2558 = vsel %vm779, %v2509, 0
      %v2561 = vsel %vm779, %v2510, 0
      %v2564 = vsel %vm779, %v2511, 0
      %v2567 = vsel %vm779, %v2512, 0
      %v2570 = vsel %vm792, %v2514, 0
      %2572 = vmatprep.subr.bf16.mxu0 0
      %2573 = vmatpush1.bf16.msra.mxu0 0
      %2574 = vmatprep.subr.bf16.mxu0 0
      %2575 = vmatpush1.bf16.msra.mxu0 0
      %2576 = vmatprep.subr.bf16.mxu0 0
      %2577 = vmatpush1.bf16.msra.mxu0 0
      %2578 = vmatprep.subr.bf16.mxu0 0
      %2579 = vmatpush1.bf16.msra.mxu0 0
      %2580 = vmatprep.subr.bf16.mxu0 0
      %2581 = vmatpush1.bf16.msra.mxu0 0
      %2582 = vmatprep.subr.bf16.mxu0 0
      %2583 = vmatpush1.bf16.msra.mxu0 0
      %2584 = vmatprep.subr.bf16.mxu0 0
      %2585 = vmatpush1.bf16.msra.mxu0 0
      %2586 = vmatprep.subr.bf16.mxu0 0
      %2587 = vmatpush1.bf16.msra.mxu0 %v2570
      %2588 = vmatprep.subr.bf16.mxu0 0
      %2589 = vmatpush2.bf16.msra.mxu0 0
      %2590 = vmatprep.subr.bf16.mxu0 0
      %2591 = vmatpush2.bf16.msra.mxu0 0
      %2592 = vmatprep.subr.bf16.mxu0 0
      %2593 = vmatpush2.bf16.msra.mxu0 0
      %2594 = vmatprep.subr.bf16.mxu0 0
      %2595 = vmatpush2.bf16.msra.mxu0 0
      %2596 = vmatprep.subr.bf16.mxu0 0
      %2597 = vmatpush2.bf16.msra.mxu0 0
      %2598 = vmatprep.subr.bf16.mxu0 0
      %2599 = vmatpush2.bf16.msra.mxu0 0
      %2600 = vmatprep.subr.bf16.mxu0 0
      %2601 = vmatpush2.bf16.msra.mxu0 0
      %2602 = vmatprep.subr.bf16.mxu0 0
      %2603 = vmatpush2.bf16.msra.mxu0 0
      %2604 = vmatprep.mubr.bf16.mxu0 0
      %2605 = vmatmul.mubr.bf16.gmra.mxu0 %v2516
      %v2606 = vpop.f32.mrf.mxu0
      %v2607 = vadd.f32 0.0, %v2606
      %v2608 = vpop.f32.mrf.mxu0
      %v2609 = vpop.f32.mrf.mxu0
      %v2610 = vadd.f32 0.0, %v2609
      %v2611 = vpop.f32.mrf.mxu0
      %2612 = vmatprep.mubr.bf16.mxu0 0
      %2613 = vmatmul.mubr.bf16.gmra.mxu0 %v2519
      %v2614 = vpop.f32.mrf.mxu0
      %v2615 = vadd.f32 0.0, %v2614
      %v2616 = vpop.f32.mrf.mxu0
      %v2617 = vpop.f32.mrf.mxu0
      %v2618 = vadd.f32 0.0, %v2617
      %v2619 = vpop.f32.mrf.mxu0
      %2620 = vmatprep.mubr.bf16.mxu0 0
      %2621 = vmatmul.mubr.bf16.gmra.mxu0 %v2522
      %v2622 = vpop.f32.mrf.mxu0
      %v2623 = vadd.f32 0.0, %v2622
      %v2624 = vpop.f32.mrf.mxu0
      %v2625 = vpop.f32.mrf.mxu0
      %v2626 = vadd.f32 0.0, %v2625
      %v2627 = vpop.f32.mrf.mxu0
      %2628 = vmatprep.mubr.bf16.mxu0 0
      %2629 = vmatmul.mubr.bf16.gmra.mxu0 %v2525
      %v2630 = vpop.f32.mrf.mxu0
      %v2631 = vadd.f32 0.0, %v2630
      %v2632 = vpop.f32.mrf.mxu0
      %v2633 = vpop.f32.mrf.mxu0
      %v2634 = vadd.f32 0.0, %v2633
      %v2635 = vpop.f32.mrf.mxu0
      %2636 = vmatprep.mubr.bf16.mxu0 0
      %2637 = vmatmul.mubr.bf16.gmra.mxu0 %v2528
      %v2638 = vpop.f32.mrf.mxu0
      %v2639 = vadd.f32 0.0, %v2638
      %v2640 = vpop.f32.mrf.mxu0
      %v2641 = vpop.f32.mrf.mxu0
      %v2642 = vadd.f32 0.0, %v2641
      %v2643 = vpop.f32.mrf.mxu0
      %2644 = vmatprep.mubr.bf16.mxu0 0
      %2645 = vmatmul.mubr.bf16.gmra.mxu0 %v2531
      %v2646 = vpop.f32.mrf.mxu0
      %v2647 = vadd.f32 0.0, %v2646
      %v2648 = vpop.f32.mrf.mxu0
      %v2649 = vpop.f32.mrf.mxu0
      %v2650 = vadd.f32 0.0, %v2649
      %v2651 = vpop.f32.mrf.mxu0
      %2652 = vmatprep.mubr.bf16.mxu0 0
      %2653 = vmatmul.mubr.bf16.gmra.mxu0 %v2534
      %v2654 = vpop.f32.mrf.mxu0
      %v2655 = vadd.f32 0.0, %v2654
      %v2656 = vpop.f32.mrf.mxu0
      %v2657 = vpop.f32.mrf.mxu0
      %v2658 = vadd.f32 0.0, %v2657
      %v2659 = vpop.f32.mrf.mxu0
      %2660 = vmatprep.mubr.bf16.mxu0 0
      %2661 = vmatmul.mubr.bf16.gmra.mxu0 %v2537
      %v2662 = vpop.f32.mrf.mxu0
      %v2663 = vadd.f32 0.0, %v2662
      %v2664 = vpop.f32.mrf.mxu0
      %v2665 = vpop.f32.mrf.mxu0
      %v2666 = vadd.f32 0.0, %v2665
      %v2667 = vpop.f32.mrf.mxu0
      %2668 = vmatprep.mubr.bf16.mxu0 0
      %2669 = vmatmul.mubr.bf16.gmra.mxu0 %v2540
      %v2670 = vpop.f32.mrf.mxu0
      %v2671 = vadd.f32 0.0, %v2670
      %v2672 = vpop.f32.mrf.mxu0
      %v2673 = vpop.f32.mrf.mxu0
      %v2674 = vadd.f32 0.0, %v2673
      %v2675 = vpop.f32.mrf.mxu0
      %2676 = vmatprep.mubr.bf16.mxu0 0
      %2677 = vmatmul.mubr.bf16.gmra.mxu0 %v2543
      %v2678 = vpop.f32.mrf.mxu0
      %v2679 = vadd.f32 0.0, %v2678
      %v2680 = vpop.f32.mrf.mxu0
      %v2681 = vpop.f32.mrf.mxu0
      %v2682 = vadd.f32 0.0, %v2681
      %v2683 = vpop.f32.mrf.mxu0
      %2684 = vmatprep.mubr.bf16.mxu0 0
      %2685 = vmatmul.mubr.bf16.gmra.mxu0 %v2546
      %v2686 = vpop.f32.mrf.mxu0
      %v2687 = vadd.f32 0.0, %v2686
      %v2688 = vpop.f32.mrf.mxu0
      %v2689 = vpop.f32.mrf.mxu0
      %v2690 = vadd.f32 0.0, %v2689
      %v2691 = vpop.f32.mrf.mxu0
      %2692 = vmatprep.mubr.bf16.mxu0 0
      %2693 = vmatmul.mubr.bf16.gmra.mxu0 %v2549
      %v2694 = vpop.f32.mrf.mxu0
      %v2695 = vadd.f32 0.0, %v2694
      %v2696 = vpop.f32.mrf.mxu0
      %v2697 = vpop.f32.mrf.mxu0
      %v2698 = vadd.f32 0.0, %v2697
      %v2699 = vpop.f32.mrf.mxu0
      %2700 = vmatprep.mubr.bf16.mxu0 0
      %2701 = vmatmul.mubr.bf16.gmra.mxu0 %v2552
      %v2702 = vpop.f32.mrf.mxu0
      %v2703 = vadd.f32 0.0, %v2702
      %v2704 = vpop.f32.mrf.mxu0
      %v2705 = vpop.f32.mrf.mxu0
      %v2706 = vadd.f32 0.0, %v2705
      %v2707 = vpop.f32.mrf.mxu0
      %2708 = vmatprep.mubr.bf16.mxu0 0
      %2709 = vmatmul.mubr.bf16.gmra.mxu0 %v2555
      %v2710 = vpop.f32.mrf.mxu0
      %v2711 = vadd.f32 0.0, %v2710
      %v2712 = vpop.f32.mrf.mxu0
      %v2713 = vpop.f32.mrf.mxu0
      %v2714 = vadd.f32 0.0, %v2713
      %v2715 = vpop.f32.mrf.mxu0
      %2716 = vmatprep.mubr.bf16.mxu0 0
      %2717 = vmatmul.mubr.bf16.gmra.mxu0 %v2558
      %v2718 = vpop.f32.mrf.mxu0
      %v2719 = vadd.f32 0.0, %v2718
      %v2720 = vpop.f32.mrf.mxu0
      %v2721 = vpop.f32.mrf.mxu0
      %v2722 = vadd.f32 0.0, %v2721
      %v2723 = vpop.f32.mrf.mxu0
      %2724 = vmatprep.mubr.bf16.mxu0 0
      %2725 = vmatmul.mubr.bf16.gmra.mxu0 %v2561
      %v2726 = vpop.f32.mrf.mxu0
      %v2727 = vadd.f32 0.0, %v2726
      %v2728 = vpop.f32.mrf.mxu0
      %v2729 = vpop.f32.mrf.mxu0
      %v2730 = vadd.f32 0.0, %v2729
      %v2731 = vpop.f32.mrf.mxu0
      %2732 = vmatprep.mubr.bf16.mxu0 0
      %2733 = vmatmul.mubr.bf16.gmra.mxu0 %v2564
      %v2734 = vpop.f32.mrf.mxu0
      %v2735 = vadd.f32 0.0, %v2734
      %v2736 = vpop.f32.mrf.mxu0
      %v2737 = vpop.f32.mrf.mxu0
      %v2738 = vadd.f32 0.0, %v2737
      %v2739 = vpop.f32.mrf.mxu0
      %2740 = vmatprep.mubr.bf16.mxu0 0
      %2741 = vmatmul.mubr.bf16.gmra.mxu0 %v2567
      %v2742 = vpop.f32.mrf.mxu0
      %v2743 = vadd.f32 0.0, %v2742
      %v2744 = vpop.f32.mrf.mxu0
      %v2745 = vpop.f32.mrf.mxu0
      %v2746 = vadd.f32 0.0, %v2745
      %v2747 = vpop.f32.mrf.mxu0
      %2748 = vdwg.mxu0
      %v2749 = vadd.f32 %v2423, %v2607
      %v2750 = vadd.f32 %v2424, %v2610
      %v2751 = vadd.f32 %v2425, %v2615
      %v2752 = vadd.f32 %v2426, %v2618
      %v2753 = vadd.f32 %v2427, %v2623
      %v2754 = vadd.f32 %v2428, %v2626
      %v2755 = vadd.f32 %v2429, %v2631
      %v2756 = vadd.f32 %v2430, %v2634
      %v2757 = vadd.f32 %v2431, %v2639
      %v2758 = vadd.f32 %v2432, %v2642
      %v2759 = vadd.f32 %v2433, %v2647
      %v2760 = vadd.f32 %v2434, %v2650
      %v2761 = vadd.f32 %v2435, %v2655
      %v2762 = vadd.f32 %v2436, %v2658
      %v2763 = vadd.f32 %v2437, %v2663
      %v2764 = vadd.f32 %v2438, %v2666
      %v2765 = vadd.f32 %v2439, %v2671
      %v2766 = vadd.f32 %v2440, %v2674
      %v2767 = vadd.f32 %v2441, %v2679
      %v2768 = vadd.f32 %v2442, %v2682
      %v2769 = vadd.f32 %v2443, %v2687
      %v2770 = vadd.f32 %v2444, %v2690
      %v2771 = vadd.f32 %v2445, %v2695
      %v2772 = vadd.f32 %v2446, %v2698
      %v2773 = vadd.f32 %v2447, %v2703
      %v2774 = vadd.f32 %v2448, %v2706
      %v2775 = vadd.f32 %v2449, %v2711
      %v2776 = vadd.f32 %v2450, %v2714
      %v2777 = vadd.f32 %v2451, %v2719
      %v2778 = vadd.f32 %v2452, %v2722
      %v2779 = vadd.f32 %v2453, %v2727
      %v2780 = vadd.f32 %v2454, %v2730
      %v2781 = vadd.f32 %v2455, %v2735
      %v2782 = vadd.f32 %v2456, %v2738
      %v2783 = vadd.f32 %v2457, %v2743
      %v2784 = vadd.f32 %v2458, %v2746
      %v2785 = vld [vmem:[%s417 + $0x24] sm:$0xff]
      %v2786 = vld [vmem:[%s417 + $0x2c] sm:$0xff]
      %v2787 = vld [vmem:[%s417 + $0x34] sm:$0xff]
      %v2788 = vld [vmem:[%s417 + $0x3c] sm:$0xff]
      %v2789 = vld [vmem:[%s417 + $0x44] sm:$0xff]
      %v2790 = vld [vmem:[%s417 + $0x4c] sm:$0xff]
      %v2791 = vld [vmem:[%s417 + $0x54] sm:$0xff]
      %v2792 = vld [vmem:[%s417 + $0x5c] sm:$0xff]
      %v2793 = vld [vmem:[%s417 + $0x64] sm:$0xff]
      %v2794 = vld [vmem:[%s417 + $0x6c] sm:$0xff]
      %v2795 = vld [vmem:[%s417 + $0x74] sm:$0xff]
      %v2796 = vld [vmem:[%s417 + $0x7c] sm:$0xff]
      %v2797 = vld [vmem:[%s417 + $0x84] sm:$0xff]
      %v2798 = vld [vmem:[%s417 + $0x8c] sm:$0xff]
      %v2799 = vld [vmem:[%s417 + $0x94] sm:$0xff]
      %v2800 = vld [vmem:[%s417 + $0x9c] sm:$0xff]
      %v2801 = vld [vmem:[%s417 + $0xa4] sm:$0xff]
      %v2802 = vld [vmem:[%s417 + $0xac] sm:$0xff]
      %v2803 = vld [vmem:[%s417 + $0xb4] sm:$0xff]
      %v2804 = vld [vmem:[%s417 + $0xbc] sm:$0xff]
      %v2805 = vld [vmem:[%s417 + $0xc4] sm:$0xff]
      %v2806 = vld [vmem:[%s417 + $0xcc] sm:$0xff]
      %v2807 = vld [vmem:[%s417 + $0xd4] sm:$0xff]
      %v2808 = vld [vmem:[%s417 + $0xdc] sm:$0xff]
      %v2809 = vld [vmem:[%s417 + $0xe4] sm:$0xff]
      %v2810 = vld [vmem:[%s417 + $0xec] sm:$0xff]
      %v2811 = vld [vmem:[%s417 + $0xf4] sm:$0xff]
      %v2812 = vld [vmem:[%s417 + $0xfc] sm:$0xff]
      %v2813 = vld [vmem:[%s417 + $0x104] sm:$0xff]
      %v2814 = vld [vmem:[%s417 + $0x10c] sm:$0xff]
      %v2815 = vld [vmem:[%s417 + $0x114] sm:$0xff]
      %v2816 = vld [vmem:[%s417 + $0x11c] sm:$0xff]
      %v2817 = vld [vmem:[%s417 + $0x124] sm:$0xff]
      %v2818 = vld [vmem:[%s417 + $0x12c] sm:$0xff]
      %v2819 = vld [vmem:[%s417 + $0x134] sm:$0xff]
      %v2820 = vld [vmem:[%s417 + $0x13c] sm:$0x3f]
      %v2821 = vpack.c.bf16 %v2786, %v2785
      %v2822 = vpack.c.bf16 %v2788, %v2787
      %v2823 = vpack.c.bf16 %v2790, %v2789
      %v2824 = vpack.c.bf16 %v2792, %v2791
      %v2825 = vpack.c.bf16 %v2794, %v2793
      %v2826 = vpack.c.bf16 %v2796, %v2795
      %v2827 = vpack.c.bf16 %v2798, %v2797
      %v2828 = vpack.c.bf16 %v2800, %v2799
      %v2829 = vpack.c.bf16 %v2802, %v2801
      %v2830 = vpack.c.bf16 %v2804, %v2803
      %v2831 = vpack.c.bf16 %v2806, %v2805
      %v2832 = vpack.c.bf16 %v2808, %v2807
      %v2833 = vpack.c.bf16 %v2810, %v2809
      %v2834 = vpack.c.bf16 %v2812, %v2811
      %v2835 = vpack.c.bf16 %v2814, %v2813
      %v2836 = vpack.c.bf16 %v2816, %v2815
      %v2837 = vpack.c.bf16 %v2818, %v2817
      %v2838 = vpack.c.bf16 %v2820, %v2819
      %s2839 = scalar_lea.vmem %s5, 12
      %v2840 = vld [vmem:[%s2839] sm:$0x3]
      %v2842 = vsel %vm779, %v2821, 0
      %v2845 = vsel %vm779, %v2822, 0
      %v2848 = vsel %vm779, %v2823, 0
      %v2851 = vsel %vm779, %v2824, 0
      %v2854 = vsel %vm779, %v2825, 0
      %v2857 = vsel %vm779, %v2826, 0
      %v2860 = vsel %vm779, %v2827, 0
      %v2863 = vsel %vm779, %v2828, 0
      %v2866 = vsel %vm779, %v2829, 0
      %v2869 = vsel %vm779, %v2830, 0
      %v2872 = vsel %vm779, %v2831, 0
      %v2875 = vsel %vm779, %v2832, 0
      %v2878 = vsel %vm779, %v2833, 0
      %v2881 = vsel %vm779, %v2834, 0
      %v2884 = vsel %vm779, %v2835, 0
      %v2887 = vsel %vm779, %v2836, 0
      %v2890 = vsel %vm779, %v2837, 0
      %v2893 = vsel %vm779, %v2838, 0
      %v2896 = vsel %vm792, %v2840, 0
      %2898 = vmatprep.subr.bf16.mxu0 0
      %2899 = vmatpush1.bf16.msra.mxu0 0
      %2900 = vmatprep.subr.bf16.mxu0 0
      %2901 = vmatpush1.bf16.msra.mxu0 0
      %2902 = vmatprep.subr.bf16.mxu0 0
      %2903 = vmatpush1.bf16.msra.mxu0 0
      %2904 = vmatprep.subr.bf16.mxu0 0
      %2905 = vmatpush1.bf16.msra.mxu0 0
      %2906 = vmatprep.subr.bf16.mxu0 0
      %2907 = vmatpush1.bf16.msra.mxu0 0
      %2908 = vmatprep.subr.bf16.mxu0 0
      %2909 = vmatpush1.bf16.msra.mxu0 0
      %2910 = vmatprep.subr.bf16.mxu0 0
      %2911 = vmatpush1.bf16.msra.mxu0 0
      %2912 = vmatprep.subr.bf16.mxu0 0
      %2913 = vmatpush1.bf16.msra.mxu0 %v2896
      %2914 = vmatprep.subr.bf16.mxu0 0
      %2915 = vmatpush2.bf16.msra.mxu0 0
      %2916 = vmatprep.subr.bf16.mxu0 0
      %2917 = vmatpush2.bf16.msra.mxu0 0
      %2918 = vmatprep.subr.bf16.mxu0 0
      %2919 = vmatpush2.bf16.msra.mxu0 0
      %2920 = vmatprep.subr.bf16.mxu0 0
      %2921 = vmatpush2.bf16.msra.mxu0 0
      %2922 = vmatprep.subr.bf16.mxu0 0
      %2923 = vmatpush2.bf16.msra.mxu0 0
      %2924 = vmatprep.subr.bf16.mxu0 0
      %2925 = vmatpush2.bf16.msra.mxu0 0
      %2926 = vmatprep.subr.bf16.mxu0 0
      %2927 = vmatpush2.bf16.msra.mxu0 0
      %2928 = vmatprep.subr.bf16.mxu0 0
      %2929 = vmatpush2.bf16.msra.mxu0 0
      %2930 = vmatprep.mubr.bf16.mxu0 0
      %2931 = vmatmul.mubr.bf16.gmra.mxu0 %v2842
      %v2932 = vpop.f32.mrf.mxu0
      %v2933 = vadd.f32 0.0, %v2932
      %v2934 = vpop.f32.mrf.mxu0
      %v2935 = vpop.f32.mrf.mxu0
      %v2936 = vadd.f32 0.0, %v2935
      %v2937 = vpop.f32.mrf.mxu0
      %2938 = vmatprep.mubr.bf16.mxu0 0
      %2939 = vmatmul.mubr.bf16.gmra.mxu0 %v2845
      %v2940 = vpop.f32.mrf.mxu0
      %v2941 = vadd.f32 0.0, %v2940
      %v2942 = vpop.f32.mrf.mxu0
      %v2943 = vpop.f32.mrf.mxu0
      %v2944 = vadd.f32 0.0, %v2943
      %v2945 = vpop.f32.mrf.mxu0
      %2946 = vmatprep.mubr.bf16.mxu0 0
      %2947 = vmatmul.mubr.bf16.gmra.mxu0 %v2848
      %v2948 = vpop.f32.mrf.mxu0
      %v2949 = vadd.f32 0.0, %v2948
      %v2950 = vpop.f32.mrf.mxu0
      %v2951 = vpop.f32.mrf.mxu0
      %v2952 = vadd.f32 0.0, %v2951
      %v2953 = vpop.f32.mrf.mxu0
      %2954 = vmatprep.mubr.bf16.mxu0 0
      %2955 = vmatmul.mubr.bf16.gmra.mxu0 %v2851
      %v2956 = vpop.f32.mrf.mxu0
      %v2957 = vadd.f32 0.0, %v2956
      %v2958 = vpop.f32.mrf.mxu0
      %v2959 = vpop.f32.mrf.mxu0
      %v2960 = vadd.f32 0.0, %v2959
      %v2961 = vpop.f32.mrf.mxu0
      %2962 = vmatprep.mubr.bf16.mxu0 0
      %2963 = vmatmul.mubr.bf16.gmra.mxu0 %v2854
      %v2964 = vpop.f32.mrf.mxu0
      %v2965 = vadd.f32 0.0, %v2964
      %v2966 = vpop.f32.mrf.mxu0
      %v2967 = vpop.f32.mrf.mxu0
      %v2968 = vadd.f32 0.0, %v2967
      %v2969 = vpop.f32.mrf.mxu0
      %2970 = vmatprep.mubr.bf16.mxu0 0
      %2971 = vmatmul.mubr.bf16.gmra.mxu0 %v2857
      %v2972 = vpop.f32.mrf.mxu0
      %v2973 = vadd.f32 0.0, %v2972
      %v2974 = vpop.f32.mrf.mxu0
      %v2975 = vpop.f32.mrf.mxu0
      %v2976 = vadd.f32 0.0, %v2975
      %v2977 = vpop.f32.mrf.mxu0
      %2978 = vmatprep.mubr.bf16.mxu0 0
      %2979 = vmatmul.mubr.bf16.gmra.mxu0 %v2860
      %v2980 = vpop.f32.mrf.mxu0
      %v2981 = vadd.f32 0.0, %v2980
      %v2982 = vpop.f32.mrf.mxu0
      %v2983 = vpop.f32.mrf.mxu0
      %v2984 = vadd.f32 0.0, %v2983
      %v2985 = vpop.f32.mrf.mxu0
      %2986 = vmatprep.mubr.bf16.mxu0 0
      %2987 = vmatmul.mubr.bf16.gmra.mxu0 %v2863
      %v2988 = vpop.f32.mrf.mxu0
      %v2989 = vadd.f32 0.0, %v2988
      %v2990 = vpop.f32.mrf.mxu0
      %v2991 = vpop.f32.mrf.mxu0
      %v2992 = vadd.f32 0.0, %v2991
      %v2993 = vpop.f32.mrf.mxu0
      %2994 = vmatprep.mubr.bf16.mxu0 0
      %2995 = vmatmul.mubr.bf16.gmra.mxu0 %v2866
      %v2996 = vpop.f32.mrf.mxu0
      %v2997 = vadd.f32 0.0, %v2996
      %v2998 = vpop.f32.mrf.mxu0
      %v2999 = vpop.f32.mrf.mxu0
      %v3000 = vadd.f32 0.0, %v2999
      %v3001 = vpop.f32.mrf.mxu0
      %3002 = vmatprep.mubr.bf16.mxu0 0
      %3003 = vmatmul.mubr.bf16.gmra.mxu0 %v2869
      %v3004 = vpop.f32.mrf.mxu0
      %v3005 = vadd.f32 0.0, %v3004
      %v3006 = vpop.f32.mrf.mxu0
      %v3007 = vpop.f32.mrf.mxu0
      %v3008 = vadd.f32 0.0, %v3007
      %v3009 = vpop.f32.mrf.mxu0
      %3010 = vmatprep.mubr.bf16.mxu0 0
      %3011 = vmatmul.mubr.bf16.gmra.mxu0 %v2872
      %v3012 = vpop.f32.mrf.mxu0
      %v3013 = vadd.f32 0.0, %v3012
      %v3014 = vpop.f32.mrf.mxu0
      %v3015 = vpop.f32.mrf.mxu0
      %v3016 = vadd.f32 0.0, %v3015
      %v3017 = vpop.f32.mrf.mxu0
      %3018 = vmatprep.mubr.bf16.mxu0 0
      %3019 = vmatmul.mubr.bf16.gmra.mxu0 %v2875
      %v3020 = vpop.f32.mrf.mxu0
      %v3021 = vadd.f32 0.0, %v3020
      %v3022 = vpop.f32.mrf.mxu0
      %v3023 = vpop.f32.mrf.mxu0
      %v3024 = vadd.f32 0.0, %v3023
      %v3025 = vpop.f32.mrf.mxu0
      %3026 = vmatprep.mubr.bf16.mxu0 0
      %3027 = vmatmul.mubr.bf16.gmra.mxu0 %v2878
      %v3028 = vpop.f32.mrf.mxu0
      %v3029 = vadd.f32 0.0, %v3028
      %v3030 = vpop.f32.mrf.mxu0
      %v3031 = vpop.f32.mrf.mxu0
      %v3032 = vadd.f32 0.0, %v3031
      %v3033 = vpop.f32.mrf.mxu0
      %3034 = vmatprep.mubr.bf16.mxu0 0
      %3035 = vmatmul.mubr.bf16.gmra.mxu0 %v2881
      %v3036 = vpop.f32.mrf.mxu0
      %v3037 = vadd.f32 0.0, %v3036
      %v3038 = vpop.f32.mrf.mxu0
      %v3039 = vpop.f32.mrf.mxu0
      %v3040 = vadd.f32 0.0, %v3039
      %v3041 = vpop.f32.mrf.mxu0
      %3042 = vmatprep.mubr.bf16.mxu0 0
      %3043 = vmatmul.mubr.bf16.gmra.mxu0 %v2884
      %v3044 = vpop.f32.mrf.mxu0
      %v3045 = vadd.f32 0.0, %v3044
      %v3046 = vpop.f32.mrf.mxu0
      %v3047 = vpop.f32.mrf.mxu0
      %v3048 = vadd.f32 0.0, %v3047
      %v3049 = vpop.f32.mrf.mxu0
      %3050 = vmatprep.mubr.bf16.mxu0 0
      %3051 = vmatmul.mubr.bf16.gmra.mxu0 %v2887
      %v3052 = vpop.f32.mrf.mxu0
      %v3053 = vadd.f32 0.0, %v3052
      %v3054 = vpop.f32.mrf.mxu0
      %v3055 = vpop.f32.mrf.mxu0
      %v3056 = vadd.f32 0.0, %v3055
      %v3057 = vpop.f32.mrf.mxu0
      %3058 = vmatprep.mubr.bf16.mxu0 0
      %3059 = vmatmul.mubr.bf16.gmra.mxu0 %v2890
      %v3060 = vpop.f32.mrf.mxu0
      %v3061 = vadd.f32 0.0, %v3060
      %v3062 = vpop.f32.mrf.mxu0
      %v3063 = vpop.f32.mrf.mxu0
      %v3064 = vadd.f32 0.0, %v3063
      %v3065 = vpop.f32.mrf.mxu0
      %3066 = vmatprep.mubr.bf16.mxu0 0
      %3067 = vmatmul.mubr.bf16.gmra.mxu0 %v2893
      %v3068 = vpop.f32.mrf.mxu0
      %v3069 = vadd.f32 0.0, %v3068
      %v3070 = vpop.f32.mrf.mxu0
      %v3071 = vpop.f32.mrf.mxu0
      %v3072 = vadd.f32 0.0, %v3071
      %v3073 = vpop.f32.mrf.mxu0
      %3074 = vdwg.mxu0
      %v3075 = vadd.f32 %v2749, %v2933
      %v3076 = vadd.f32 %v2750, %v2936
      %v3077 = vadd.f32 %v2751, %v2941
      %v3078 = vadd.f32 %v2752, %v2944
      %v3079 = vadd.f32 %v2753, %v2949
      %v3080 = vadd.f32 %v2754, %v2952
      %v3081 = vadd.f32 %v2755, %v2957
      %v3082 = vadd.f32 %v2756, %v2960
      %v3083 = vadd.f32 %v2757, %v2965
      %v3084 = vadd.f32 %v2758, %v2968
      %v3085 = vadd.f32 %v2759, %v2973
      %v3086 = vadd.f32 %v2760, %v2976
      %v3087 = vadd.f32 %v2761, %v2981
      %v3088 = vadd.f32 %v2762, %v2984
      %v3089 = vadd.f32 %v2763, %v2989
      %v3090 = vadd.f32 %v2764, %v2992
      %v3091 = vadd.f32 %v2765, %v2997
      %v3092 = vadd.f32 %v2766, %v3000
      %v3093 = vadd.f32 %v2767, %v3005
      %v3094 = vadd.f32 %v2768, %v3008
      %v3095 = vadd.f32 %v2769, %v3013
      %v3096 = vadd.f32 %v2770, %v3016
      %v3097 = vadd.f32 %v2771, %v3021
      %v3098 = vadd.f32 %v2772, %v3024
      %v3099 = vadd.f32 %v2773, %v3029
      %v3100 = vadd.f32 %v2774, %v3032
      %v3101 = vadd.f32 %v2775, %v3037
      %v3102 = vadd.f32 %v2776, %v3040
      %v3103 = vadd.f32 %v2777, %v3045
      %v3104 = vadd.f32 %v2778, %v3048
      %v3105 = vadd.f32 %v2779, %v3053
      %v3106 = vadd.f32 %v2780, %v3056
      %v3107 = vadd.f32 %v2781, %v3061
      %v3108 = vadd.f32 %v2782, %v3064
      %v3109 = vadd.f32 %v2783, %v3069
      %v3110 = vadd.f32 %v2784, %v3072
      %v3111 = vld [vmem:[%s417 + $0x25] sm:$0xff]
      %v3112 = vld [vmem:[%s417 + $0x2d] sm:$0xff]
      %v3113 = vld [vmem:[%s417 + $0x35] sm:$0xff]
      %v3114 = vld [vmem:[%s417 + $0x3d] sm:$0xff]
      %v3115 = vld [vmem:[%s417 + $0x45] sm:$0xff]
      %v3116 = vld [vmem:[%s417 + $0x4d] sm:$0xff]
      %v3117 = vld [vmem:[%s417 + $0x55] sm:$0xff]
      %v3118 = vld [vmem:[%s417 + $0x5d] sm:$0xff]
      %v3119 = vld [vmem:[%s417 + $0x65] sm:$0xff]
      %v3120 = vld [vmem:[%s417 + $0x6d] sm:$0xff]
      %v3121 = vld [vmem:[%s417 + $0x75] sm:$0xff]
      %v3122 = vld [vmem:[%s417 + $0x7d] sm:$0xff]
      %v3123 = vld [vmem:[%s417 + $0x85] sm:$0xff]
      %v3124 = vld [vmem:[%s417 + $0x8d] sm:$0xff]
      %v3125 = vld [vmem:[%s417 + $0x95] sm:$0xff]
      %v3126 = vld [vmem:[%s417 + $0x9d] sm:$0xff]
      %v3127 = vld [vmem:[%s417 + $0xa5] sm:$0xff]
      %v3128 = vld [vmem:[%s417 + $0xad] sm:$0xff]
      %v3129 = vld [vmem:[%s417 + $0xb5] sm:$0xff]
      %v3130 = vld [vmem:[%s417 + $0xbd] sm:$0xff]
      %v3131 = vld [vmem:[%s417 + $0xc5] sm:$0xff]
      %v3132 = vld [vmem:[%s417 + $0xcd] sm:$0xff]
      %v3133 = vld [vmem:[%s417 + $0xd5] sm:$0xff]
      %v3134 = vld [vmem:[%s417 + $0xdd] sm:$0xff]
      %v3135 = vld [vmem:[%s417 + $0xe5] sm:$0xff]
      %v3136 = vld [vmem:[%s417 + $0xed] sm:$0xff]
      %v3137 = vld [vmem:[%s417 + $0xf5] sm:$0xff]
      %v3138 = vld [vmem:[%s417 + $0xfd] sm:$0xff]
      %v3139 = vld [vmem:[%s417 + $0x105] sm:$0xff]
      %v3140 = vld [vmem:[%s417 + $0x10d] sm:$0xff]
      %v3141 = vld [vmem:[%s417 + $0x115] sm:$0xff]
      %v3142 = vld [vmem:[%s417 + $0x11d] sm:$0xff]
      %v3143 = vld [vmem:[%s417 + $0x125] sm:$0xff]
      %v3144 = vld [vmem:[%s417 + $0x12d] sm:$0xff]
      %v3145 = vld [vmem:[%s417 + $0x135] sm:$0xff]
      %v3146 = vld [vmem:[%s417 + $0x13d] sm:$0x3f]
      %v3147 = vpack.c.bf16 %v3112, %v3111
      %v3148 = vpack.c.bf16 %v3114, %v3113
      %v3149 = vpack.c.bf16 %v3116, %v3115
      %v3150 = vpack.c.bf16 %v3118, %v3117
      %v3151 = vpack.c.bf16 %v3120, %v3119
      %v3152 = vpack.c.bf16 %v3122, %v3121
      %v3153 = vpack.c.bf16 %v3124, %v3123
      %v3154 = vpack.c.bf16 %v3126, %v3125
      %v3155 = vpack.c.bf16 %v3128, %v3127
      %v3156 = vpack.c.bf16 %v3130, %v3129
      %v3157 = vpack.c.bf16 %v3132, %v3131
      %v3158 = vpack.c.bf16 %v3134, %v3133
      %v3159 = vpack.c.bf16 %v3136, %v3135
      %v3160 = vpack.c.bf16 %v3138, %v3137
      %v3161 = vpack.c.bf16 %v3140, %v3139
      %v3162 = vpack.c.bf16 %v3142, %v3141
      %v3163 = vpack.c.bf16 %v3144, %v3143
      %v3164 = vpack.c.bf16 %v3146, %v3145
      %s3165 = scalar_lea.vmem %s5, 14
      %v3166 = vld [vmem:[%s3165] sm:$0x3]
      %v3168 = vsel %vm779, %v3147, 0
      %v3171 = vsel %vm779, %v3148, 0
      %v3174 = vsel %vm779, %v3149, 0
      %v3177 = vsel %vm779, %v3150, 0
      %v3180 = vsel %vm779, %v3151, 0
      %v3183 = vsel %vm779, %v3152, 0
      %v3186 = vsel %vm779, %v3153, 0
      %v3189 = vsel %vm779, %v3154, 0
      %v3192 = vsel %vm779, %v3155, 0
      %v3195 = vsel %vm779, %v3156, 0
      %v3198 = vsel %vm779, %v3157, 0
      %v3201 = vsel %vm779, %v3158, 0
      %v3204 = vsel %vm779, %v3159, 0
      %v3207 = vsel %vm779, %v3160, 0
      %v3210 = vsel %vm779, %v3161, 0
      %v3213 = vsel %vm779, %v3162, 0
      %v3216 = vsel %vm779, %v3163, 0
      %v3219 = vsel %vm779, %v3164, 0
      %v3222 = vsel %vm792, %v3166, 0
      %3224 = vmatprep.subr.bf16.mxu0 0
      %3225 = vmatpush1.bf16.msra.mxu0 0
      %3226 = vmatprep.subr.bf16.mxu0 0
      %3227 = vmatpush1.bf16.msra.mxu0 0
      %3228 = vmatprep.subr.bf16.mxu0 0
      %3229 = vmatpush1.bf16.msra.mxu0 0
      %3230 = vmatprep.subr.bf16.mxu0 0
      %3231 = vmatpush1.bf16.msra.mxu0 0
      %3232 = vmatprep.subr.bf16.mxu0 0
      %3233 = vmatpush1.bf16.msra.mxu0 0
      %3234 = vmatprep.subr.bf16.mxu0 0
      %3235 = vmatpush1.bf16.msra.mxu0 0
      %3236 = vmatprep.subr.bf16.mxu0 0
      %3237 = vmatpush1.bf16.msra.mxu0 0
      %3238 = vmatprep.subr.bf16.mxu0 0
      %3239 = vmatpush1.bf16.msra.mxu0 %v3222
      %3240 = vmatprep.subr.bf16.mxu0 0
      %3241 = vmatpush2.bf16.msra.mxu0 0
      %3242 = vmatprep.subr.bf16.mxu0 0
      %3243 = vmatpush2.bf16.msra.mxu0 0
      %3244 = vmatprep.subr.bf16.mxu0 0
      %3245 = vmatpush2.bf16.msra.mxu0 0
      %3246 = vmatprep.subr.bf16.mxu0 0
      %3247 = vmatpush2.bf16.msra.mxu0 0
      %3248 = vmatprep.subr.bf16.mxu0 0
      %3249 = vmatpush2.bf16.msra.mxu0 0
      %3250 = vmatprep.subr.bf16.mxu0 0
      %3251 = vmatpush2.bf16.msra.mxu0 0
      %3252 = vmatprep.subr.bf16.mxu0 0
      %3253 = vmatpush2.bf16.msra.mxu0 0
      %3254 = vmatprep.subr.bf16.mxu0 0
      %3255 = vmatpush2.bf16.msra.mxu0 0
      %3256 = vmatprep.mubr.bf16.mxu0 0
      %3257 = vmatmul.mubr.bf16.gmra.mxu0 %v3168
      %v3258 = vpop.f32.mrf.mxu0
      %v3259 = vadd.f32 0.0, %v3258
      %v3260 = vpop.f32.mrf.mxu0
      %v3261 = vpop.f32.mrf.mxu0
      %v3262 = vadd.f32 0.0, %v3261
      %v3263 = vpop.f32.mrf.mxu0
      %3264 = vmatprep.mubr.bf16.mxu0 0
      %3265 = vmatmul.mubr.bf16.gmra.mxu0 %v3171
      %v3266 = vpop.f32.mrf.mxu0
      %v3267 = vadd.f32 0.0, %v3266
      %v3268 = vpop.f32.mrf.mxu0
      %v3269 = vpop.f32.mrf.mxu0
      %v3270 = vadd.f32 0.0, %v3269
      %v3271 = vpop.f32.mrf.mxu0
      %3272 = vmatprep.mubr.bf16.mxu0 0
      %3273 = vmatmul.mubr.bf16.gmra.mxu0 %v3174
      %v3274 = vpop.f32.mrf.mxu0
      %v3275 = vadd.f32 0.0, %v3274
      %v3276 = vpop.f32.mrf.mxu0
      %v3277 = vpop.f32.mrf.mxu0
      %v3278 = vadd.f32 0.0, %v3277
      %v3279 = vpop.f32.mrf.mxu0
      %3280 = vmatprep.mubr.bf16.mxu0 0
      %3281 = vmatmul.mubr.bf16.gmra.mxu0 %v3177
      %v3282 = vpop.f32.mrf.mxu0
      %v3283 = vadd.f32 0.0, %v3282
      %v3284 = vpop.f32.mrf.mxu0
      %v3285 = vpop.f32.mrf.mxu0
      %v3286 = vadd.f32 0.0, %v3285
      %v3287 = vpop.f32.mrf.mxu0
      %3288 = vmatprep.mubr.bf16.mxu0 0
      %3289 = vmatmul.mubr.bf16.gmra.mxu0 %v3180
      %v3290 = vpop.f32.mrf.mxu0
      %v3291 = vadd.f32 0.0, %v3290
      %v3292 = vpop.f32.mrf.mxu0
      %v3293 = vpop.f32.mrf.mxu0
      %v3294 = vadd.f32 0.0, %v3293
      %v3295 = vpop.f32.mrf.mxu0
      %3296 = vmatprep.mubr.bf16.mxu0 0
      %3297 = vmatmul.mubr.bf16.gmra.mxu0 %v3183
      %v3298 = vpop.f32.mrf.mxu0
      %v3299 = vadd.f32 0.0, %v3298
      %v3300 = vpop.f32.mrf.mxu0
      %v3301 = vpop.f32.mrf.mxu0
      %v3302 = vadd.f32 0.0, %v3301
      %v3303 = vpop.f32.mrf.mxu0
      %3304 = vmatprep.mubr.bf16.mxu0 0
      %3305 = vmatmul.mubr.bf16.gmra.mxu0 %v3186
      %v3306 = vpop.f32.mrf.mxu0
      %v3307 = vadd.f32 0.0, %v3306
      %v3308 = vpop.f32.mrf.mxu0
      %v3309 = vpop.f32.mrf.mxu0
      %v3310 = vadd.f32 0.0, %v3309
      %v3311 = vpop.f32.mrf.mxu0
      %3312 = vmatprep.mubr.bf16.mxu0 0
      %3313 = vmatmul.mubr.bf16.gmra.mxu0 %v3189
      %v3314 = vpop.f32.mrf.mxu0
      %v3315 = vadd.f32 0.0, %v3314
      %v3316 = vpop.f32.mrf.mxu0
      %v3317 = vpop.f32.mrf.mxu0
      %v3318 = vadd.f32 0.0, %v3317
      %v3319 = vpop.f32.mrf.mxu0
      %3320 = vmatprep.mubr.bf16.mxu0 0
      %3321 = vmatmul.mubr.bf16.gmra.mxu0 %v3192
      %v3322 = vpop.f32.mrf.mxu0
      %v3323 = vadd.f32 0.0, %v3322
      %v3324 = vpop.f32.mrf.mxu0
      %v3325 = vpop.f32.mrf.mxu0
      %v3326 = vadd.f32 0.0, %v3325
      %v3327 = vpop.f32.mrf.mxu0
      %3328 = vmatprep.mubr.bf16.mxu0 0
      %3329 = vmatmul.mubr.bf16.gmra.mxu0 %v3195
      %v3330 = vpop.f32.mrf.mxu0
      %v3331 = vadd.f32 0.0, %v3330
      %v3332 = vpop.f32.mrf.mxu0
      %v3333 = vpop.f32.mrf.mxu0
      %v3334 = vadd.f32 0.0, %v3333
      %v3335 = vpop.f32.mrf.mxu0
      %3336 = vmatprep.mubr.bf16.mxu0 0
      %3337 = vmatmul.mubr.bf16.gmra.mxu0 %v3198
      %v3338 = vpop.f32.mrf.mxu0
      %v3339 = vadd.f32 0.0, %v3338
      %v3340 = vpop.f32.mrf.mxu0
      %v3341 = vpop.f32.mrf.mxu0
      %v3342 = vadd.f32 0.0, %v3341
      %v3343 = vpop.f32.mrf.mxu0
      %3344 = vmatprep.mubr.bf16.mxu0 0
      %3345 = vmatmul.mubr.bf16.gmra.mxu0 %v3201
      %v3346 = vpop.f32.mrf.mxu0
      %v3347 = vadd.f32 0.0, %v3346
      %v3348 = vpop.f32.mrf.mxu0
      %v3349 = vpop.f32.mrf.mxu0
      %v3350 = vadd.f32 0.0, %v3349
      %v3351 = vpop.f32.mrf.mxu0
      %3352 = vmatprep.mubr.bf16.mxu0 0
      %3353 = vmatmul.mubr.bf16.gmra.mxu0 %v3204
      %v3354 = vpop.f32.mrf.mxu0
      %v3355 = vadd.f32 0.0, %v3354
      %v3356 = vpop.f32.mrf.mxu0
      %v3357 = vpop.f32.mrf.mxu0
      %v3358 = vadd.f32 0.0, %v3357
      %v3359 = vpop.f32.mrf.mxu0
      %3360 = vmatprep.mubr.bf16.mxu0 0
      %3361 = vmatmul.mubr.bf16.gmra.mxu0 %v3207
      %v3362 = vpop.f32.mrf.mxu0
      %v3363 = vadd.f32 0.0, %v3362
      %v3364 = vpop.f32.mrf.mxu0
      %v3365 = vpop.f32.mrf.mxu0
      %v3366 = vadd.f32 0.0, %v3365
      %v3367 = vpop.f32.mrf.mxu0
      %3368 = vmatprep.mubr.bf16.mxu0 0
      %3369 = vmatmul.mubr.bf16.gmra.mxu0 %v3210
      %v3370 = vpop.f32.mrf.mxu0
      %v3371 = vadd.f32 0.0, %v3370
      %v3372 = vpop.f32.mrf.mxu0
      %v3373 = vpop.f32.mrf.mxu0
      %v3374 = vadd.f32 0.0, %v3373
      %v3375 = vpop.f32.mrf.mxu0
      %3376 = vmatprep.mubr.bf16.mxu0 0
      %3377 = vmatmul.mubr.bf16.gmra.mxu0 %v3213
      %v3378 = vpop.f32.mrf.mxu0
      %v3379 = vadd.f32 0.0, %v3378
      %v3380 = vpop.f32.mrf.mxu0
      %v3381 = vpop.f32.mrf.mxu0
      %v3382 = vadd.f32 0.0, %v3381
      %v3383 = vpop.f32.mrf.mxu0
      %3384 = vmatprep.mubr.bf16.mxu0 0
      %3385 = vmatmul.mubr.bf16.gmra.mxu0 %v3216
      %v3386 = vpop.f32.mrf.mxu0
      %v3387 = vadd.f32 0.0, %v3386
      %v3388 = vpop.f32.mrf.mxu0
      %v3389 = vpop.f32.mrf.mxu0
      %v3390 = vadd.f32 0.0, %v3389
      %v3391 = vpop.f32.mrf.mxu0
      %3392 = vmatprep.mubr.bf16.mxu0 0
      %3393 = vmatmul.mubr.bf16.gmra.mxu0 %v3219
      %v3394 = vpop.f32.mrf.mxu0
      %v3395 = vadd.f32 0.0, %v3394
      %v3396 = vpop.f32.mrf.mxu0
      %v3397 = vpop.f32.mrf.mxu0
      %v3398 = vadd.f32 0.0, %v3397
      %v3399 = vpop.f32.mrf.mxu0
      %3400 = vdwg.mxu0
      %v3401 = vadd.f32 %v3075, %v3259
      %v3402 = vadd.f32 %v3076, %v3262
      %v3403 = vadd.f32 %v3077, %v3267
      %v3404 = vadd.f32 %v3078, %v3270
      %v3405 = vadd.f32 %v3079, %v3275
      %v3406 = vadd.f32 %v3080, %v3278
      %v3407 = vadd.f32 %v3081, %v3283
      %v3408 = vadd.f32 %v3082, %v3286
      %v3409 = vadd.f32 %v3083, %v3291
      %v3410 = vadd.f32 %v3084, %v3294
      %v3411 = vadd.f32 %v3085, %v3299
      %v3412 = vadd.f32 %v3086, %v3302
      %v3413 = vadd.f32 %v3087, %v3307
      %v3414 = vadd.f32 %v3088, %v3310
      %v3415 = vadd.f32 %v3089, %v3315
      %v3416 = vadd.f32 %v3090, %v3318
      %v3417 = vadd.f32 %v3091, %v3323
      %v3418 = vadd.f32 %v3092, %v3326
      %v3419 = vadd.f32 %v3093, %v3331
      %v3420 = vadd.f32 %v3094, %v3334
      %v3421 = vadd.f32 %v3095, %v3339
      %v3422 = vadd.f32 %v3096, %v3342
      %v3423 = vadd.f32 %v3097, %v3347
      %v3424 = vadd.f32 %v3098, %v3350
      %v3425 = vadd.f32 %v3099, %v3355
      %v3426 = vadd.f32 %v3100, %v3358
      %v3427 = vadd.f32 %v3101, %v3363
      %v3428 = vadd.f32 %v3102, %v3366
      %v3429 = vadd.f32 %v3103, %v3371
      %v3430 = vadd.f32 %v3104, %v3374
      %v3431 = vadd.f32 %v3105, %v3379
      %v3432 = vadd.f32 %v3106, %v3382
      %v3433 = vadd.f32 %v3107, %v3387
      %v3434 = vadd.f32 %v3108, %v3390
      %v3435 = vadd.f32 %v3109, %v3395
      %v3436 = vadd.f32 %v3110, %v3398
      %v3437 = vld [vmem:[%s417 + $0x26] sm:$0xff]
      %v3438 = vld [vmem:[%s417 + $0x2e] sm:$0xff]
      %v3439 = vld [vmem:[%s417 + $0x36] sm:$0xff]
      %v3440 = vld [vmem:[%s417 + $0x3e] sm:$0xff]
      %v3441 = vld [vmem:[%s417 + $0x46] sm:$0xff]
      %v3442 = vld [vmem:[%s417 + $0x4e] sm:$0xff]
      %v3443 = vld [vmem:[%s417 + $0x56] sm:$0xff]
      %v3444 = vld [vmem:[%s417 + $0x5e] sm:$0xff]
      %v3445 = vld [vmem:[%s417 + $0x66] sm:$0xff]
      %v3446 = vld [vmem:[%s417 + $0x6e] sm:$0xff]
      %v3447 = vld [vmem:[%s417 + $0x76] sm:$0xff]
      %v3448 = vld [vmem:[%s417 + $0x7e] sm:$0xff]
      %v3449 = vld [vmem:[%s417 + $0x86] sm:$0xff]
      %v3450 = vld [vmem:[%s417 + $0x8e] sm:$0xff]
      %v3451 = vld [vmem:[%s417 + $0x96] sm:$0xff]
      %v3452 = vld [vmem:[%s417 + $0x9e] sm:$0xff]
      %v3453 = vld [vmem:[%s417 + $0xa6] sm:$0xff]
      %v3454 = vld [vmem:[%s417 + $0xae] sm:$0xff]
      %v3455 = vld [vmem:[%s417 + $0xb6] sm:$0xff]
      %v3456 = vld [vmem:[%s417 + $0xbe] sm:$0xff]
      %v3457 = vld [vmem:[%s417 + $0xc6] sm:$0xff]
      %v3458 = vld [vmem:[%s417 + $0xce] sm:$0xff]
      %v3459 = vld [vmem:[%s417 + $0xd6] sm:$0xff]
      %v3460 = vld [vmem:[%s417 + $0xde] sm:$0xff]
      %v3461 = vld [vmem:[%s417 + $0xe6] sm:$0xff]
      %v3462 = vld [vmem:[%s417 + $0xee] sm:$0xff]
      %v3463 = vld [vmem:[%s417 + $0xf6] sm:$0xff]
      %v3464 = vld [vmem:[%s417 + $0xfe] sm:$0xff]
      %v3465 = vld [vmem:[%s417 + $0x106] sm:$0xff]
      %v3466 = vld [vmem:[%s417 + $0x10e] sm:$0xff]
      %v3467 = vld [vmem:[%s417 + $0x116] sm:$0xff]
      %v3468 = vld [vmem:[%s417 + $0x11e] sm:$0xff]
      %v3469 = vld [vmem:[%s417 + $0x126] sm:$0xff]
      %v3470 = vld [vmem:[%s417 + $0x12e] sm:$0xff]
      %v3471 = vld [vmem:[%s417 + $0x136] sm:$0xff]
      %v3472 = vld [vmem:[%s417 + $0x13e] sm:$0x3f]
      %v3473 = vpack.c.bf16 %v3438, %v3437
      %v3474 = vpack.c.bf16 %v3440, %v3439
      %v3475 = vpack.c.bf16 %v3442, %v3441
      %v3476 = vpack.c.bf16 %v3444, %v3443
      %v3477 = vpack.c.bf16 %v3446, %v3445
      %v3478 = vpack.c.bf16 %v3448, %v3447
      %v3479 = vpack.c.bf16 %v3450, %v3449
      %v3480 = vpack.c.bf16 %v3452, %v3451
      %v3481 = vpack.c.bf16 %v3454, %v3453
      %v3482 = vpack.c.bf16 %v3456, %v3455
      %v3483 = vpack.c.bf16 %v3458, %v3457
      %v3484 = vpack.c.bf16 %v3460, %v3459
      %v3485 = vpack.c.bf16 %v3462, %v3461
      %v3486 = vpack.c.bf16 %v3464, %v3463
      %v3487 = vpack.c.bf16 %v3466, %v3465
      %v3488 = vpack.c.bf16 %v3468, %v3467
      %v3489 = vpack.c.bf16 %v3470, %v3469
      %v3490 = vpack.c.bf16 %v3472, %v3471
      %s3491 = scalar_lea.vmem %s5, 16
      %v3492 = vld [vmem:[%s3491] sm:$0x3]
      %v3494 = vsel %vm779, %v3473, 0
      %v3497 = vsel %vm779, %v3474, 0
      %v3500 = vsel %vm779, %v3475, 0
      %v3503 = vsel %vm779, %v3476, 0
      %v3506 = vsel %vm779, %v3477, 0
      %v3509 = vsel %vm779, %v3478, 0
      %v3512 = vsel %vm779, %v3479, 0
      %v3515 = vsel %vm779, %v3480, 0
      %v3518 = vsel %vm779, %v3481, 0
      %v3521 = vsel %vm779, %v3482, 0
      %v3524 = vsel %vm779, %v3483, 0
      %v3527 = vsel %vm779, %v3484, 0
      %v3530 = vsel %vm779, %v3485, 0
      %v3533 = vsel %vm779, %v3486, 0
      %v3536 = vsel %vm779, %v3487, 0
      %v3539 = vsel %vm779, %v3488, 0
      %v3542 = vsel %vm779, %v3489, 0
      %v3545 = vsel %vm779, %v3490, 0
      %v3548 = vsel %vm792, %v3492, 0
      %3550 = vmatprep.subr.bf16.mxu0 0
      %3551 = vmatpush1.bf16.msra.mxu0 0
      %3552 = vmatprep.subr.bf16.mxu0 0
      %3553 = vmatpush1.bf16.msra.mxu0 0
      %3554 = vmatprep.subr.bf16.mxu0 0
      %3555 = vmatpush1.bf16.msra.mxu0 0
      %3556 = vmatprep.subr.bf16.mxu0 0
      %3557 = vmatpush1.bf16.msra.mxu0 0
      %3558 = vmatprep.subr.bf16.mxu0 0
      %3559 = vmatpush1.bf16.msra.mxu0 0
      %3560 = vmatprep.subr.bf16.mxu0 0
      %3561 = vmatpush1.bf16.msra.mxu0 0
      %3562 = vmatprep.subr.bf16.mxu0 0
      %3563 = vmatpush1.bf16.msra.mxu0 0
      %3564 = vmatprep.subr.bf16.mxu0 0
      %3565 = vmatpush1.bf16.msra.mxu0 %v3548
      %3566 = vmatprep.subr.bf16.mxu0 0
      %3567 = vmatpush2.bf16.msra.mxu0 0
      %3568 = vmatprep.subr.bf16.mxu0 0
      %3569 = vmatpush2.bf16.msra.mxu0 0
      %3570 = vmatprep.subr.bf16.mxu0 0
      %3571 = vmatpush2.bf16.msra.mxu0 0
      %3572 = vmatprep.subr.bf16.mxu0 0
      %3573 = vmatpush2.bf16.msra.mxu0 0
      %3574 = vmatprep.subr.bf16.mxu0 0
      %3575 = vmatpush2.bf16.msra.mxu0 0
      %3576 = vmatprep.subr.bf16.mxu0 0
      %3577 = vmatpush2.bf16.msra.mxu0 0
      %3578 = vmatprep.subr.bf16.mxu0 0
      %3579 = vmatpush2.bf16.msra.mxu0 0
      %3580 = vmatprep.subr.bf16.mxu0 0
      %3581 = vmatpush2.bf16.msra.mxu0 0
      %3582 = vmatprep.mubr.bf16.mxu0 0
      %3583 = vmatmul.mubr.bf16.gmra.mxu0 %v3494
      %v3584 = vpop.f32.mrf.mxu0
      %v3585 = vadd.f32 0.0, %v3584
      %v3586 = vpop.f32.mrf.mxu0
      %v3587 = vpop.f32.mrf.mxu0
      %v3588 = vadd.f32 0.0, %v3587
      %v3589 = vpop.f32.mrf.mxu0
      %3590 = vmatprep.mubr.bf16.mxu0 0
      %3591 = vmatmul.mubr.bf16.gmra.mxu0 %v3497
      %v3592 = vpop.f32.mrf.mxu0
      %v3593 = vadd.f32 0.0, %v3592
      %v3594 = vpop.f32.mrf.mxu0
      %v3595 = vpop.f32.mrf.mxu0
      %v3596 = vadd.f32 0.0, %v3595
      %v3597 = vpop.f32.mrf.mxu0
      %3598 = vmatprep.mubr.bf16.mxu0 0
      %3599 = vmatmul.mubr.bf16.gmra.mxu0 %v3500
      %v3600 = vpop.f32.mrf.mxu0
      %v3601 = vadd.f32 0.0, %v3600
      %v3602 = vpop.f32.mrf.mxu0
      %v3603 = vpop.f32.mrf.mxu0
      %v3604 = vadd.f32 0.0, %v3603
      %v3605 = vpop.f32.mrf.mxu0
      %3606 = vmatprep.mubr.bf16.mxu0 0
      %3607 = vmatmul.mubr.bf16.gmra.mxu0 %v3503
      %v3608 = vpop.f32.mrf.mxu0
      %v3609 = vadd.f32 0.0, %v3608
      %v3610 = vpop.f32.mrf.mxu0
      %v3611 = vpop.f32.mrf.mxu0
      %v3612 = vadd.f32 0.0, %v3611
      %v3613 = vpop.f32.mrf.mxu0
      %3614 = vmatprep.mubr.bf16.mxu0 0
      %3615 = vmatmul.mubr.bf16.gmra.mxu0 %v3506
      %v3616 = vpop.f32.mrf.mxu0
      %v3617 = vadd.f32 0.0, %v3616
      %v3618 = vpop.f32.mrf.mxu0
      %v3619 = vpop.f32.mrf.mxu0
      %v3620 = vadd.f32 0.0, %v3619
      %v3621 = vpop.f32.mrf.mxu0
      %3622 = vmatprep.mubr.bf16.mxu0 0
      %3623 = vmatmul.mubr.bf16.gmra.mxu0 %v3509
      %v3624 = vpop.f32.mrf.mxu0
      %v3625 = vadd.f32 0.0, %v3624
      %v3626 = vpop.f32.mrf.mxu0
      %v3627 = vpop.f32.mrf.mxu0
      %v3628 = vadd.f32 0.0, %v3627
      %v3629 = vpop.f32.mrf.mxu0
      %3630 = vmatprep.mubr.bf16.mxu0 0
      %3631 = vmatmul.mubr.bf16.gmra.mxu0 %v3512
      %v3632 = vpop.f32.mrf.mxu0
      %v3633 = vadd.f32 0.0, %v3632
      %v3634 = vpop.f32.mrf.mxu0
      %v3635 = vpop.f32.mrf.mxu0
      %v3636 = vadd.f32 0.0, %v3635
      %v3637 = vpop.f32.mrf.mxu0
      %3638 = vmatprep.mubr.bf16.mxu0 0
      %3639 = vmatmul.mubr.bf16.gmra.mxu0 %v3515
      %v3640 = vpop.f32.mrf.mxu0
      %v3641 = vadd.f32 0.0, %v3640
      %v3642 = vpop.f32.mrf.mxu0
      %v3643 = vpop.f32.mrf.mxu0
      %v3644 = vadd.f32 0.0, %v3643
      %v3645 = vpop.f32.mrf.mxu0
      %3646 = vmatprep.mubr.bf16.mxu0 0
      %3647 = vmatmul.mubr.bf16.gmra.mxu0 %v3518
      %v3648 = vpop.f32.mrf.mxu0
      %v3649 = vadd.f32 0.0, %v3648
      %v3650 = vpop.f32.mrf.mxu0
      %v3651 = vpop.f32.mrf.mxu0
      %v3652 = vadd.f32 0.0, %v3651
      %v3653 = vpop.f32.mrf.mxu0
      %3654 = vmatprep.mubr.bf16.mxu0 0
      %3655 = vmatmul.mubr.bf16.gmra.mxu0 %v3521
      %v3656 = vpop.f32.mrf.mxu0
      %v3657 = vadd.f32 0.0, %v3656
      %v3658 = vpop.f32.mrf.mxu0
      %v3659 = vpop.f32.mrf.mxu0
      %v3660 = vadd.f32 0.0, %v3659
      %v3661 = vpop.f32.mrf.mxu0
      %3662 = vmatprep.mubr.bf16.mxu0 0
      %3663 = vmatmul.mubr.bf16.gmra.mxu0 %v3524
      %v3664 = vpop.f32.mrf.mxu0
      %v3665 = vadd.f32 0.0, %v3664
      %v3666 = vpop.f32.mrf.mxu0
      %v3667 = vpop.f32.mrf.mxu0
      %v3668 = vadd.f32 0.0, %v3667
      %v3669 = vpop.f32.mrf.mxu0
      %3670 = vmatprep.mubr.bf16.mxu0 0
      %3671 = vmatmul.mubr.bf16.gmra.mxu0 %v3527
      %v3672 = vpop.f32.mrf.mxu0
      %v3673 = vadd.f32 0.0, %v3672
      %v3674 = vpop.f32.mrf.mxu0
      %v3675 = vpop.f32.mrf.mxu0
      %v3676 = vadd.f32 0.0, %v3675
      %v3677 = vpop.f32.mrf.mxu0
      %3678 = vmatprep.mubr.bf16.mxu0 0
      %3679 = vmatmul.mubr.bf16.gmra.mxu0 %v3530
      %v3680 = vpop.f32.mrf.mxu0
      %v3681 = vadd.f32 0.0, %v3680
      %v3682 = vpop.f32.mrf.mxu0
      %v3683 = vpop.f32.mrf.mxu0
      %v3684 = vadd.f32 0.0, %v3683
      %v3685 = vpop.f32.mrf.mxu0
      %3686 = vmatprep.mubr.bf16.mxu0 0
      %3687 = vmatmul.mubr.bf16.gmra.mxu0 %v3533
      %v3688 = vpop.f32.mrf.mxu0
      %v3689 = vadd.f32 0.0, %v3688
      %v3690 = vpop.f32.mrf.mxu0
      %v3691 = vpop.f32.mrf.mxu0
      %v3692 = vadd.f32 0.0, %v3691
      %v3693 = vpop.f32.mrf.mxu0
      %3694 = vmatprep.mubr.bf16.mxu0 0
      %3695 = vmatmul.mubr.bf16.gmra.mxu0 %v3536
      %v3696 = vpop.f32.mrf.mxu0
      %v3697 = vadd.f32 0.0, %v3696
      %v3698 = vpop.f32.mrf.mxu0
      %v3699 = vpop.f32.mrf.mxu0
      %v3700 = vadd.f32 0.0, %v3699
      %v3701 = vpop.f32.mrf.mxu0
      %3702 = vmatprep.mubr.bf16.mxu0 0
      %3703 = vmatmul.mubr.bf16.gmra.mxu0 %v3539
      %v3704 = vpop.f32.mrf.mxu0
      %v3705 = vadd.f32 0.0, %v3704
      %v3706 = vpop.f32.mrf.mxu0
      %v3707 = vpop.f32.mrf.mxu0
      %v3708 = vadd.f32 0.0, %v3707
      %v3709 = vpop.f32.mrf.mxu0
      %3710 = vmatprep.mubr.bf16.mxu0 0
      %3711 = vmatmul.mubr.bf16.gmra.mxu0 %v3542
      %v3712 = vpop.f32.mrf.mxu0
      %v3713 = vadd.f32 0.0, %v3712
      %v3714 = vpop.f32.mrf.mxu0
      %v3715 = vpop.f32.mrf.mxu0
      %v3716 = vadd.f32 0.0, %v3715
      %v3717 = vpop.f32.mrf.mxu0
      %3718 = vmatprep.mubr.bf16.mxu0 0
      %3719 = vmatmul.mubr.bf16.gmra.mxu0 %v3545
      %v3720 = vpop.f32.mrf.mxu0
      %v3721 = vadd.f32 0.0, %v3720
      %v3722 = vpop.f32.mrf.mxu0
      %v3723 = vpop.f32.mrf.mxu0
      %v3724 = vadd.f32 0.0, %v3723
      %v3725 = vpop.f32.mrf.mxu0
      %3726 = vdwg.mxu0
      %v3727 = vadd.f32 %v3401, %v3585
      %v3728 = vadd.f32 %v3402, %v3588
      %v3729 = vadd.f32 %v3403, %v3593
      %v3730 = vadd.f32 %v3404, %v3596
      %v3731 = vadd.f32 %v3405, %v3601
      %v3732 = vadd.f32 %v3406, %v3604
      %v3733 = vadd.f32 %v3407, %v3609
      %v3734 = vadd.f32 %v3408, %v3612
      %v3735 = vadd.f32 %v3409, %v3617
      %v3736 = vadd.f32 %v3410, %v3620
      %v3737 = vadd.f32 %v3411, %v3625
      %v3738 = vadd.f32 %v3412, %v3628
      %v3739 = vadd.f32 %v3413, %v3633
      %v3740 = vadd.f32 %v3414, %v3636
      %v3741 = vadd.f32 %v3415, %v3641
      %v3742 = vadd.f32 %v3416, %v3644
      %v3743 = vadd.f32 %v3417, %v3649
      %v3744 = vadd.f32 %v3418, %v3652
      %v3745 = vadd.f32 %v3419, %v3657
      %v3746 = vadd.f32 %v3420, %v3660
      %v3747 = vadd.f32 %v3421, %v3665
      %v3748 = vadd.f32 %v3422, %v3668
      %v3749 = vadd.f32 %v3423, %v3673
      %v3750 = vadd.f32 %v3424, %v3676
      %v3751 = vadd.f32 %v3425, %v3681
      %v3752 = vadd.f32 %v3426, %v3684
      %v3753 = vadd.f32 %v3427, %v3689
      %v3754 = vadd.f32 %v3428, %v3692
      %v3755 = vadd.f32 %v3429, %v3697
      %v3756 = vadd.f32 %v3430, %v3700
      %v3757 = vadd.f32 %v3431, %v3705
      %v3758 = vadd.f32 %v3432, %v3708
      %v3759 = vadd.f32 %v3433, %v3713
      %v3760 = vadd.f32 %v3434, %v3716
      %v3761 = vadd.f32 %v3435, %v3721
      %v3762 = vadd.f32 %v3436, %v3724
      %v3763 = vld [vmem:[%s6] sm:$0x1]
      %v3765 = vlaneseq
      %v3766 = vshrl.u32 %v3765, 7
      %v3767 = vsub.s32 0, %v3766
      %v3768 = vrot.slane %v3763, %v3767
      %v3770 = vadd.f32 %v3727, %v3768
      %v3771 = vadd.f32 %v3728, %v3768
      %v3772 = vadd.f32 %v3729, %v3768
      %v3773 = vadd.f32 %v3730, %v3768
      %v3774 = vadd.f32 %v3731, %v3768
      %v3775 = vadd.f32 %v3732, %v3768
      %v3776 = vadd.f32 %v3733, %v3768
      %v3777 = vadd.f32 %v3734, %v3768
      %v3778 = vadd.f32 %v3735, %v3768
      %v3779 = vadd.f32 %v3736, %v3768
      %v3780 = vadd.f32 %v3737, %v3768
      %v3781 = vadd.f32 %v3738, %v3768
      %v3782 = vadd.f32 %v3739, %v3768
      %v3783 = vadd.f32 %v3740, %v3768
      %v3784 = vadd.f32 %v3741, %v3768
      %v3785 = vadd.f32 %v3742, %v3768
      %v3786 = vadd.f32 %v3743, %v3768
      %v3787 = vadd.f32 %v3744, %v3768
      %v3788 = vadd.f32 %v3745, %v3768
      %v3789 = vadd.f32 %v3746, %v3768
      %v3790 = vadd.f32 %v3747, %v3768
      %v3791 = vadd.f32 %v3748, %v3768
      %v3792 = vadd.f32 %v3749, %v3768
      %v3793 = vadd.f32 %v3750, %v3768
      %v3794 = vadd.f32 %v3751, %v3768
      %v3795 = vadd.f32 %v3752, %v3768
      %v3796 = vadd.f32 %v3753, %v3768
      %v3797 = vadd.f32 %v3754, %v3768
      %v3798 = vadd.f32 %v3755, %v3768
      %v3799 = vadd.f32 %v3756, %v3768
      %v3800 = vadd.f32 %v3757, %v3768
      %v3801 = vadd.f32 %v3758, %v3768
      %v3802 = vadd.f32 %v3759, %v3768
      %v3803 = vadd.f32 %v3760, %v3768
      %v3804 = vadd.f32 %v3761, %v3768
      %v3805 = vadd.f32 %v3762, %v3768
      %v3806 = vmul.f32 %v3770, 0.2
      %v3807 = vmul.f32 %v3771, 0.2
      %v3808 = vmul.f32 %v3772, 0.2
      %v3809 = vmul.f32 %v3773, 0.2
      %v3810 = vmul.f32 %v3774, 0.2
      %v3811 = vmul.f32 %v3775, 0.2
      %v3812 = vmul.f32 %v3776, 0.2
      %v3813 = vmul.f32 %v3777, 0.2
      %v3814 = vmul.f32 %v3778, 0.2
      %v3815 = vmul.f32 %v3779, 0.2
      %v3816 = vmul.f32 %v3780, 0.2
      %v3817 = vmul.f32 %v3781, 0.2
      %v3818 = vmul.f32 %v3782, 0.2
      %v3819 = vmul.f32 %v3783, 0.2
      %v3820 = vmul.f32 %v3784, 0.2
      %v3821 = vmul.f32 %v3785, 0.2
      %v3822 = vmul.f32 %v3786, 0.2
      %v3823 = vmul.f32 %v3787, 0.2
      %v3824 = vmul.f32 %v3788, 0.2
      %v3825 = vmul.f32 %v3789, 0.2
      %v3826 = vmul.f32 %v3790, 0.2
      %v3827 = vmul.f32 %v3791, 0.2
      %v3828 = vmul.f32 %v3792, 0.2
      %v3829 = vmul.f32 %v3793, 0.2
      %v3830 = vmul.f32 %v3794, 0.2
      %v3831 = vmul.f32 %v3795, 0.2
      %v3832 = vmul.f32 %v3796, 0.2
      %v3833 = vmul.f32 %v3797, 0.2
      %v3834 = vmul.f32 %v3798, 0.2
      %v3835 = vmul.f32 %v3799, 0.2
      %v3836 = vmul.f32 %v3800, 0.2
      %v3837 = vmul.f32 %v3801, 0.2
      %v3838 = vmul.f32 %v3802, 0.2
      %v3839 = vmul.f32 %v3803, 0.2
      %v3840 = vmul.f32 %v3804, 0.2
      %v3841 = vmul.f32 %v3805, 0.2
      %v3842 = vmax.f32 %v3770, %v3806
      %v3843 = vmax.f32 %v3771, %v3807
      %v3844 = vmax.f32 %v3772, %v3808
      %v3845 = vmax.f32 %v3773, %v3809
      %v3846 = vmax.f32 %v3774, %v3810
      %v3847 = vmax.f32 %v3775, %v3811
      %v3848 = vmax.f32 %v3776, %v3812
      %v3849 = vmax.f32 %v3777, %v3813
      %v3850 = vmax.f32 %v3778, %v3814
      %v3851 = vmax.f32 %v3779, %v3815
      %v3852 = vmax.f32 %v3780, %v3816
      %v3853 = vmax.f32 %v3781, %v3817
      %v3854 = vmax.f32 %v3782, %v3818
      %v3855 = vmax.f32 %v3783, %v3819
      %v3856 = vmax.f32 %v3784, %v3820
      %v3857 = vmax.f32 %v3785, %v3821
      %v3858 = vmax.f32 %v3786, %v3822
      %v3859 = vmax.f32 %v3787, %v3823
      %v3860 = vmax.f32 %v3788, %v3824
      %v3861 = vmax.f32 %v3789, %v3825
      %v3862 = vmax.f32 %v3790, %v3826
      %v3863 = vmax.f32 %v3791, %v3827
      %v3864 = vmax.f32 %v3792, %v3828
      %v3865 = vmax.f32 %v3793, %v3829
      %v3866 = vmax.f32 %v3794, %v3830
      %v3867 = vmax.f32 %v3795, %v3831
      %v3868 = vmax.f32 %v3796, %v3832
      %v3869 = vmax.f32 %v3797, %v3833
      %v3870 = vmax.f32 %v3798, %v3834
      %v3871 = vmax.f32 %v3799, %v3835
      %v3872 = vmax.f32 %v3800, %v3836
      %v3873 = vmax.f32 %v3801, %v3837
      %v3874 = vmax.f32 %v3802, %v3838
      %v3875 = vmax.f32 %v3803, %v3839
      %v3876 = vmax.f32 %v3804, %v3840
      %v3877 = vmax.f32 %v3805, %v3841
      %3879 = vset.pattern.permute.xlu0 0
      %3880 = vperm.xlu0 %3879, %v432
      %v3881 = vpop.permute.xlu0 %3880
      %3884 = vset.pattern.permute.xlu0 0
      %3885 = vperm.xlu0 %3884, %v433
      %v3886 = vpop.permute.xlu0 %3885
      %3889 = vset.pattern.permute.xlu0 0
      %3890 = vperm.xlu0 %3889, %v434
      %v3891 = vpop.permute.xlu0 %3890
      %3894 = vset.pattern.permute.xlu0 0
      %3895 = vperm.xlu0 %3894, %v435
      %v3896 = vpop.permute.xlu0 %3895
      %3899 = vset.pattern.permute.xlu0 0
      %3900 = vperm.xlu0 %3899, %v436
      %v3901 = vpop.permute.xlu0 %3900
      %3904 = vset.pattern.permute.xlu0 0
      %3905 = vperm.xlu0 %3904, %v437
      %v3906 = vpop.permute.xlu0 %3905
      %3909 = vset.pattern.permute.xlu0 0
      %3910 = vperm.xlu0 %3909, %v438
      %v3911 = vpop.permute.xlu0 %3910
      %3914 = vset.pattern.permute.xlu0 0
      %3915 = vperm.xlu0 %3914, %v439
      %v3916 = vpop.permute.xlu0 %3915
      %3919 = vset.pattern.permute.xlu0 0
      %3920 = vperm.xlu0 %3919, %v440
      %v3921 = vpop.permute.xlu0 %3920
      %3924 = vset.pattern.permute.xlu0 0
      %3925 = vperm.xlu0 %3924, %v441
      %v3926 = vpop.permute.xlu0 %3925
      %3929 = vset.pattern.permute.xlu0 0
      %3930 = vperm.xlu0 %3929, %v442
      %v3931 = vpop.permute.xlu0 %3930
      %3934 = vset.pattern.permute.xlu0 0
      %3935 = vperm.xlu0 %3934, %v443
      %v3936 = vpop.permute.xlu0 %3935
      %3939 = vset.pattern.permute.xlu0 0
      %3940 = vperm.xlu0 %3939, %v444
      %v3941 = vpop.permute.xlu0 %3940
      %3944 = vset.pattern.permute.xlu0 0
      %3945 = vperm.xlu0 %3944, %v445
      %v3946 = vpop.permute.xlu0 %3945
      %3949 = vset.pattern.permute.xlu0 0
      %3950 = vperm.xlu0 %3949, %v446
      %v3951 = vpop.permute.xlu0 %3950
      %3954 = vset.pattern.permute.xlu0 0
      %3955 = vperm.xlu0 %3954, %v447
      %v3956 = vpop.permute.xlu0 %3955
      %3959 = vset.pattern.permute.xlu0 0
      %3960 = vperm.xlu0 %3959, %v448
      %v3961 = vpop.permute.xlu0 %3960
      %3964 = vset.pattern.permute.xlu0 0
      %3965 = vperm.xlu0 %3964, %v449
      %v3966 = vpop.permute.xlu0 %3965
      %3969 = vset.pattern.permute.xlu0 0
      %3970 = vperm.xlu0 %3969, %v450
      %v3971 = vpop.permute.xlu0 %3970
      %3974 = vset.pattern.permute.xlu0 0
      %3975 = vperm.xlu0 %3974, %v451
      %v3976 = vpop.permute.xlu0 %3975
      %3979 = vset.pattern.permute.xlu0 0
      %3980 = vperm.xlu0 %3979, %v452
      %v3981 = vpop.permute.xlu0 %3980
      %3984 = vset.pattern.permute.xlu0 0
      %3985 = vperm.xlu0 %3984, %v453
      %v3986 = vpop.permute.xlu0 %3985
      %3989 = vset.pattern.permute.xlu0 0
      %3990 = vperm.xlu0 %3989, %v454
      %v3991 = vpop.permute.xlu0 %3990
      %3994 = vset.pattern.permute.xlu0 0
      %3995 = vperm.xlu0 %3994, %v455
      %v3996 = vpop.permute.xlu0 %3995
      %3999 = vset.pattern.permute.xlu0 0
      %4000 = vperm.xlu0 %3999, %v456
      %v4001 = vpop.permute.xlu0 %4000
      %4004 = vset.pattern.permute.xlu0 0
      %4005 = vperm.xlu0 %4004, %v457
      %v4006 = vpop.permute.xlu0 %4005
      %4009 = vset.pattern.permute.xlu0 0
      %4010 = vperm.xlu0 %4009, %v458
      %v4011 = vpop.permute.xlu0 %4010
      %4014 = vset.pattern.permute.xlu0 0
      %4015 = vperm.xlu0 %4014, %v459
      %v4016 = vpop.permute.xlu0 %4015
      %4019 = vset.pattern.permute.xlu0 0
      %4020 = vperm.xlu0 %4019, %v460
      %v4021 = vpop.permute.xlu0 %4020
      %4024 = vset.pattern.permute.xlu0 0
      %4025 = vperm.xlu0 %4024, %v461
      %v4026 = vpop.permute.xlu0 %4025
      %4029 = vset.pattern.permute.xlu0 0
      %4030 = vperm.xlu0 %4029, %v462
      %v4031 = vpop.permute.xlu0 %4030
      %4034 = vset.pattern.permute.xlu0 0
      %4035 = vperm.xlu0 %4034, %v463
      %v4036 = vpop.permute.xlu0 %4035
      %4039 = vset.pattern.permute.xlu0 0
      %4040 = vperm.xlu0 %4039, %v464
      %v4041 = vpop.permute.xlu0 %4040
      %4044 = vset.pattern.permute.xlu0 0
      %4045 = vperm.xlu0 %4044, %v465
      %v4046 = vpop.permute.xlu0 %4045
      %4049 = vset.pattern.permute.xlu0 0
      %4050 = vperm.xlu0 %4049, %v466
      %v4051 = vpop.permute.xlu0 %4050
      %4054 = vset.pattern.permute.xlu0 0
      %4055 = vperm.xlu0 %4054, %v467
      %v4056 = vpop.permute.xlu0 %4055
      %v4058 = vmul.f32 %v3842, %v3881
      %v4059 = vmul.f32 %v3843, %v3886
      %v4060 = vmul.f32 %v3844, %v3891
      %v4061 = vmul.f32 %v3845, %v3896
      %v4062 = vmul.f32 %v3846, %v3901
      %v4063 = vmul.f32 %v3847, %v3906
      %v4064 = vmul.f32 %v3848, %v3911
      %v4065 = vmul.f32 %v3849, %v3916
      %v4066 = vmul.f32 %v3850, %v3921
      %v4067 = vmul.f32 %v3851, %v3926
      %v4068 = vmul.f32 %v3852, %v3931
      %v4069 = vmul.f32 %v3853, %v3936
      %v4070 = vmul.f32 %v3854, %v3941
      %v4071 = vmul.f32 %v3855, %v3946
      %v4072 = vmul.f32 %v3856, %v3951
      %v4073 = vmul.f32 %v3857, %v3956
      %v4074 = vmul.f32 %v3858, %v3961
      %v4075 = vmul.f32 %v3859, %v3966
      %v4076 = vmul.f32 %v3860, %v3971
      %v4077 = vmul.f32 %v3861, %v3976
      %v4078 = vmul.f32 %v3862, %v3981
      %v4079 = vmul.f32 %v3863, %v3986
      %v4080 = vmul.f32 %v3864, %v3991
      %v4081 = vmul.f32 %v3865, %v3996
      %v4082 = vmul.f32 %v3866, %v4001
      %v4083 = vmul.f32 %v3867, %v4006
      %v4084 = vmul.f32 %v3868, %v4011
      %v4085 = vmul.f32 %v3869, %v4016
      %v4086 = vmul.f32 %v3870, %v4021
      %v4087 = vmul.f32 %v3871, %v4026
      %v4088 = vmul.f32 %v3872, %v4031
      %v4089 = vmul.f32 %v3873, %v4036
      %v4090 = vmul.f32 %v3874, %v4041
      %v4091 = vmul.f32 %v3875, %v4046
      %v4092 = vmul.f32 %v3876, %v4051
      %v4093 = vmul.f32 %v3877, %v4056
      %v4094 = vpack.c.bf16 %v4059, %v4058
      %v4095 = vpack.c.bf16 %v4061, %v4060
      %v4096 = vpack.c.bf16 %v4063, %v4062
      %v4097 = vpack.c.bf16 %v4065, %v4064
      %v4098 = vpack.c.bf16 %v4067, %v4066
      %v4099 = vpack.c.bf16 %v4069, %v4068
      %v4100 = vpack.c.bf16 %v4071, %v4070
      %v4101 = vpack.c.bf16 %v4073, %v4072
      %v4102 = vpack.c.bf16 %v4075, %v4074
      %v4103 = vpack.c.bf16 %v4077, %v4076
      %v4104 = vpack.c.bf16 %v4079, %v4078
      %v4105 = vpack.c.bf16 %v4081, %v4080
      %v4106 = vpack.c.bf16 %v4083, %v4082
      %v4107 = vpack.c.bf16 %v4085, %v4084
      %v4108 = vpack.c.bf16 %v4087, %v4086
      %v4109 = vpack.c.bf16 %v4089, %v4088
      %v4110 = vpack.c.bf16 %v4091, %v4090
      %v4111 = vpack.c.bf16 %v4093, %v4092
      %v4130 = vunpack.c.l.b16 %v4094
      %v4131 = vunpack.c.h.b16 %v4094
      %v4132 = vunpack.c.l.b16 %v4095
      %v4133 = vunpack.c.h.b16 %v4095
      %v4134 = vunpack.c.l.b16 %v4096
      %v4135 = vunpack.c.h.b16 %v4096
      %v4136 = vunpack.c.l.b16 %v4097
      %v4137 = vunpack.c.h.b16 %v4097
      %v4138 = vunpack.c.l.b16 %v4098
      %v4139 = vunpack.c.h.b16 %v4098
      %v4140 = vunpack.c.l.b16 %v4099
      %v4141 = vunpack.c.h.b16 %v4099
      %v4142 = vunpack.c.l.b16 %v4100
      %v4143 = vunpack.c.h.b16 %v4100
      %v4144 = vunpack.c.l.b16 %v4101
      %v4145 = vunpack.c.h.b16 %v4101
      %v4146 = vunpack.c.l.b16 %v4102
      %v4147 = vunpack.c.h.b16 %v4102
      %v4148 = vunpack.c.l.b16 %v4103
      %v4149 = vunpack.c.h.b16 %v4103
      %v4150 = vunpack.c.l.b16 %v4104
      %v4151 = vunpack.c.h.b16 %v4104
      %v4152 = vunpack.c.l.b16 %v4105
      %v4153 = vunpack.c.h.b16 %v4105
      %v4154 = vunpack.c.l.b16 %v4106
      %v4155 = vunpack.c.h.b16 %v4106
      %v4156 = vunpack.c.l.b16 %v4107
      %v4157 = vunpack.c.h.b16 %v4107
      %v4158 = vunpack.c.l.b16 %v4108
      %v4159 = vunpack.c.h.b16 %v4108
      %v4160 = vunpack.c.l.b16 %v4109
      %v4161 = vunpack.c.h.b16 %v4109
      %v4162 = vunpack.c.l.b16 %v4110
      %v4163 = vunpack.c.h.b16 %v4110
      %v4164 = vunpack.c.l.b16 %v4111
      %v4165 = vunpack.c.h.b16 %v4111
      %v4166 = vpack.c.b16 %v4130, %v4130
      %v4167 = vpack.c.b16 %v4131, %v4131
      %v4168 = vpack.c.b16 %v4132, %v4132
      %v4169 = vpack.c.b16 %v4133, %v4133
      %v4170 = vpack.c.b16 %v4134, %v4134
      %v4171 = vpack.c.b16 %v4135, %v4135
      %v4172 = vpack.c.b16 %v4136, %v4136
      %v4173 = vpack.c.b16 %v4137, %v4137
      %v4174 = vpack.c.b16 %v4138, %v4138
      %v4175 = vpack.c.b16 %v4139, %v4139
      %v4176 = vpack.c.b16 %v4140, %v4140
      %v4177 = vpack.c.b16 %v4141, %v4141
      %v4178 = vpack.c.b16 %v4142, %v4142
      %v4179 = vpack.c.b16 %v4143, %v4143
      %v4180 = vpack.c.b16 %v4144, %v4144
      %v4181 = vpack.c.b16 %v4145, %v4145
      %v4182 = vpack.c.b16 %v4146, %v4146
      %v4183 = vpack.c.b16 %v4147, %v4147
      %v4184 = vpack.c.b16 %v4148, %v4148
      %v4185 = vpack.c.b16 %v4149, %v4149
      %v4186 = vpack.c.b16 %v4150, %v4150
      %v4187 = vpack.c.b16 %v4151, %v4151
      %v4188 = vpack.c.b16 %v4152, %v4152
      %v4189 = vpack.c.b16 %v4153, %v4153
      %v4190 = vpack.c.b16 %v4154, %v4154
      %v4191 = vpack.c.b16 %v4155, %v4155
      %v4192 = vpack.c.b16 %v4156, %v4156
      %v4193 = vpack.c.b16 %v4157, %v4157
      %v4194 = vpack.c.b16 %v4158, %v4158
      %v4195 = vpack.c.b16 %v4159, %v4159
      %v4196 = vpack.c.b16 %v4160, %v4160
      %v4197 = vpack.c.b16 %v4161, %v4161
      %v4198 = vpack.c.b16 %v4162, %v4162
      %v4199 = vpack.c.b16 %v4163, %v4163
      %v4200 = vpack.c.b16 %v4164, %v4164
      %v4201 = vpack.c.b16 %v4165, %v4165
      %vm4202 = vsmask.f32 1280
      %vm4203 = vsmask.f32 5392
      %vm4204 = vmor %vm4202, %vm4203
      %v4206 = vshrl.u32 %v4166, 16
      %v4208 = vrot.slane %v4206, 6
      %v4209 = vshll.u32 %v4166, 16
      %v4211 = vrot.slane %v4209, 7
      %v4212 = vor.u32 %v4208, %v4211
      %v4213 = vrot.slane %v4212, 4
      %v4215 = vshrl.u32 %v4167, 16
      %v4217 = vrot.slane %v4215, 6
      %v4218 = vshll.u32 %v4167, 16
      %v4220 = vrot.slane %v4218, 7
      %v4221 = vor.u32 %v4217, %v4220
      %v4222 = vsel %vm4204, %v4213, %v4221
      %v4223 = vrot.slane %v4221, 4
      %v4225 = vshrl.u32 %v4168, 16
      %v4227 = vrot.slane %v4225, 6
      %v4228 = vshll.u32 %v4168, 16
      %v4230 = vrot.slane %v4228, 7
      %v4231 = vor.u32 %v4227, %v4230
      %v4232 = vsel %vm4204, %v4223, %v4231
      %v4233 = vrot.slane %v4231, 4
      %v4235 = vshrl.u32 %v4169, 16
      %v4237 = vrot.slane %v4235, 6
      %v4238 = vshll.u32 %v4169, 16
      %v4240 = vrot.slane %v4238, 7
      %v4241 = vor.u32 %v4237, %v4240
      %v4242 = vsel %vm4204, %v4233, %v4241
      %v4243 = vrot.slane %v4241, 4
      %v4245 = vshrl.u32 %v4170, 16
      %v4247 = vrot.slane %v4245, 6
      %v4248 = vshll.u32 %v4170, 16
      %v4250 = vrot.slane %v4248, 7
      %v4251 = vor.u32 %v4247, %v4250
      %v4252 = vsel %vm4204, %v4243, %v4251
      %v4253 = vrot.slane %v4251, 4
      %v4255 = vshrl.u32 %v4171, 16
      %v4257 = vrot.slane %v4255, 6
      %v4258 = vshll.u32 %v4171, 16
      %v4260 = vrot.slane %v4258, 7
      %v4261 = vor.u32 %v4257, %v4260
      %v4262 = vsel %vm4204, %v4253, %v4261
      %v4263 = vrot.slane %v4261, 4
      %v4265 = vshrl.u32 %v4172, 16
      %v4267 = vrot.slane %v4265, 6
      %v4268 = vshll.u32 %v4172, 16
      %v4270 = vrot.slane %v4268, 7
      %v4271 = vor.u32 %v4267, %v4270
      %v4272 = vsel %vm4204, %v4263, %v4271
      %v4273 = vrot.slane %v4271, 4
      %v4275 = vshrl.u32 %v4173, 16
      %v4277 = vrot.slane %v4275, 6
      %v4278 = vshll.u32 %v4173, 16
      %v4280 = vrot.slane %v4278, 7
      %v4281 = vor.u32 %v4277, %v4280
      %v4282 = vsel %vm4204, %v4273, %v4281
      %v4283 = vrot.slane %v4281, 4
      %v4285 = vshrl.u32 %v4174, 16
      %v4287 = vrot.slane %v4285, 6
      %v4288 = vshll.u32 %v4174, 16
      %v4290 = vrot.slane %v4288, 7
      %v4291 = vor.u32 %v4287, %v4290
      %v4292 = vsel %vm4204, %v4283, %v4291
      %v4293 = vrot.slane %v4291, 4
      %v4295 = vshrl.u32 %v4175, 16
      %v4297 = vrot.slane %v4295, 6
      %v4298 = vshll.u32 %v4175, 16
      %v4300 = vrot.slane %v4298, 7
      %v4301 = vor.u32 %v4297, %v4300
      %v4302 = vsel %vm4204, %v4293, %v4301
      %v4303 = vrot.slane %v4301, 4
      %v4305 = vshrl.u32 %v4176, 16
      %v4307 = vrot.slane %v4305, 6
      %v4308 = vshll.u32 %v4176, 16
      %v4310 = vrot.slane %v4308, 7
      %v4311 = vor.u32 %v4307, %v4310
      %v4312 = vsel %vm4204, %v4303, %v4311
      %v4313 = vrot.slane %v4311, 4
      %v4315 = vshrl.u32 %v4177, 16
      %v4317 = vrot.slane %v4315, 6
      %v4318 = vshll.u32 %v4177, 16
      %v4320 = vrot.slane %v4318, 7
      %v4321 = vor.u32 %v4317, %v4320
      %v4322 = vsel %vm4204, %v4313, %v4321
      %v4323 = vrot.slane %v4321, 4
      %v4325 = vshrl.u32 %v4178, 16
      %v4327 = vrot.slane %v4325, 6
      %v4328 = vshll.u32 %v4178, 16
      %v4330 = vrot.slane %v4328, 7
      %v4331 = vor.u32 %v4327, %v4330
      %v4332 = vsel %vm4204, %v4323, %v4331
      %v4333 = vrot.slane %v4331, 4
      %v4335 = vshrl.u32 %v4179, 16
      %v4337 = vrot.slane %v4335, 6
      %v4338 = vshll.u32 %v4179, 16
      %v4340 = vrot.slane %v4338, 7
      %v4341 = vor.u32 %v4337, %v4340
      %v4342 = vsel %vm4204, %v4333, %v4341
      %v4343 = vrot.slane %v4341, 4
      %v4345 = vshrl.u32 %v4180, 16
      %v4347 = vrot.slane %v4345, 6
      %v4348 = vshll.u32 %v4180, 16
      %v4350 = vrot.slane %v4348, 7
      %v4351 = vor.u32 %v4347, %v4350
      %v4352 = vsel %vm4204, %v4343, %v4351
      %v4353 = vrot.slane %v4351, 4
      %v4355 = vshrl.u32 %v4181, 16
      %v4357 = vrot.slane %v4355, 6
      %v4358 = vshll.u32 %v4181, 16
      %v4360 = vrot.slane %v4358, 7
      %v4361 = vor.u32 %v4357, %v4360
      %v4362 = vsel %vm4204, %v4353, %v4361
      %v4363 = vrot.slane %v4361, 4
      %v4365 = vshrl.u32 %v4182, 16
      %v4367 = vrot.slane %v4365, 6
      %v4368 = vshll.u32 %v4182, 16
      %v4370 = vrot.slane %v4368, 7
      %v4371 = vor.u32 %v4367, %v4370
      %v4372 = vsel %vm4204, %v4363, %v4371
      %v4373 = vrot.slane %v4371, 4
      %v4375 = vshrl.u32 %v4183, 16
      %v4377 = vrot.slane %v4375, 6
      %v4378 = vshll.u32 %v4183, 16
      %v4380 = vrot.slane %v4378, 7
      %v4381 = vor.u32 %v4377, %v4380
      %v4382 = vsel %vm4204, %v4373, %v4381
      %v4383 = vrot.slane %v4381, 4
      %v4385 = vshrl.u32 %v4184, 16
      %v4387 = vrot.slane %v4385, 6
      %v4388 = vshll.u32 %v4184, 16
      %v4390 = vrot.slane %v4388, 7
      %v4391 = vor.u32 %v4387, %v4390
      %v4392 = vsel %vm4204, %v4383, %v4391
      %v4393 = vrot.slane %v4391, 4
      %v4395 = vshrl.u32 %v4185, 16
      %v4397 = vrot.slane %v4395, 6
      %v4398 = vshll.u32 %v4185, 16
      %v4400 = vrot.slane %v4398, 7
      %v4401 = vor.u32 %v4397, %v4400
      %v4402 = vsel %vm4204, %v4393, %v4401
      %v4403 = vrot.slane %v4401, 4
      %v4405 = vshrl.u32 %v4186, 16
      %v4407 = vrot.slane %v4405, 6
      %v4408 = vshll.u32 %v4186, 16
      %v4410 = vrot.slane %v4408, 7
      %v4411 = vor.u32 %v4407, %v4410
      %v4412 = vsel %vm4204, %v4403, %v4411
      %v4413 = vrot.slane %v4411, 4
      %v4415 = vshrl.u32 %v4187, 16
      %v4417 = vrot.slane %v4415, 6
      %v4418 = vshll.u32 %v4187, 16
      %v4420 = vrot.slane %v4418, 7
      %v4421 = vor.u32 %v4417, %v4420
      %v4422 = vsel %vm4204, %v4413, %v4421
      %v4423 = vrot.slane %v4421, 4
      %v4425 = vshrl.u32 %v4188, 16
      %v4427 = vrot.slane %v4425, 6
      %v4428 = vshll.u32 %v4188, 16
      %v4430 = vrot.slane %v4428, 7
      %v4431 = vor.u32 %v4427, %v4430
      %v4432 = vsel %vm4204, %v4423, %v4431
      %v4433 = vrot.slane %v4431, 4
      %v4435 = vshrl.u32 %v4189, 16
      %v4437 = vrot.slane %v4435, 6
      %v4438 = vshll.u32 %v4189, 16
      %v4440 = vrot.slane %v4438, 7
      %v4441 = vor.u32 %v4437, %v4440
      %v4442 = vsel %vm4204, %v4433, %v4441
      %v4443 = vrot.slane %v4441, 4
      %v4445 = vshrl.u32 %v4190, 16
      %v4447 = vrot.slane %v4445, 6
      %v4448 = vshll.u32 %v4190, 16
      %v4450 = vrot.slane %v4448, 7
      %v4451 = vor.u32 %v4447, %v4450
      %v4452 = vsel %vm4204, %v4443, %v4451
      %v4453 = vrot.slane %v4451, 4
      %v4455 = vshrl.u32 %v4191, 16
      %v4457 = vrot.slane %v4455, 6
      %v4458 = vshll.u32 %v4191, 16
      %v4460 = vrot.slane %v4458, 7
      %v4461 = vor.u32 %v4457, %v4460
      %v4462 = vsel %vm4204, %v4453, %v4461
      %v4463 = vrot.slane %v4461, 4
      %v4465 = vshrl.u32 %v4192, 16
      %v4467 = vrot.slane %v4465, 6
      %v4468 = vshll.u32 %v4192, 16
      %v4470 = vrot.slane %v4468, 7
      %v4471 = vor.u32 %v4467, %v4470
      %v4472 = vsel %vm4204, %v4463, %v4471
      %v4473 = vrot.slane %v4471, 4
      %v4475 = vshrl.u32 %v4193, 16
      %v4477 = vrot.slane %v4475, 6
      %v4478 = vshll.u32 %v4193, 16
      %v4480 = vrot.slane %v4478, 7
      %v4481 = vor.u32 %v4477, %v4480
      %v4482 = vsel %vm4204, %v4473, %v4481
      %v4483 = vrot.slane %v4481, 4
      %v4485 = vshrl.u32 %v4194, 16
      %v4487 = vrot.slane %v4485, 6
      %v4488 = vshll.u32 %v4194, 16
      %v4490 = vrot.slane %v4488, 7
      %v4491 = vor.u32 %v4487, %v4490
      %v4492 = vsel %vm4204, %v4483, %v4491
      %v4493 = vrot.slane %v4491, 4
      %v4495 = vshrl.u32 %v4195, 16
      %v4497 = vrot.slane %v4495, 6
      %v4498 = vshll.u32 %v4195, 16
      %v4500 = vrot.slane %v4498, 7
      %v4501 = vor.u32 %v4497, %v4500
      %v4502 = vsel %vm4204, %v4493, %v4501
      %v4503 = vrot.slane %v4501, 4
      %v4505 = vshrl.u32 %v4196, 16
      %v4507 = vrot.slane %v4505, 6
      %v4508 = vshll.u32 %v4196, 16
      %v4510 = vrot.slane %v4508, 7
      %v4511 = vor.u32 %v4507, %v4510
      %v4512 = vsel %vm4204, %v4503, %v4511
      %v4513 = vrot.slane %v4511, 4
      %v4515 = vshrl.u32 %v4197, 16
      %v4517 = vrot.slane %v4515, 6
      %v4518 = vshll.u32 %v4197, 16
      %v4520 = vrot.slane %v4518, 7
      %v4521 = vor.u32 %v4517, %v4520
      %v4522 = vsel %vm4204, %v4513, %v4521
      %v4523 = vrot.slane %v4521, 4
      %v4525 = vshrl.u32 %v4198, 16
      %v4527 = vrot.slane %v4525, 6
      %v4528 = vshll.u32 %v4198, 16
      %v4530 = vrot.slane %v4528, 7
      %v4531 = vor.u32 %v4527, %v4530
      %v4532 = vsel %vm4204, %v4523, %v4531
      %v4533 = vrot.slane %v4531, 4
      %v4535 = vshrl.u32 %v4199, 16
      %v4537 = vrot.slane %v4535, 6
      %v4538 = vshll.u32 %v4199, 16
      %v4540 = vrot.slane %v4538, 7
      %v4541 = vor.u32 %v4537, %v4540
      %v4542 = vsel %vm4204, %v4533, %v4541
      %v4543 = vrot.slane %v4541, 4
      %v4545 = vshrl.u32 %v4200, 16
      %v4547 = vrot.slane %v4545, 6
      %v4548 = vshll.u32 %v4200, 16
      %v4550 = vrot.slane %v4548, 7
      %v4551 = vor.u32 %v4547, %v4550
      %v4552 = vsel %vm4204, %v4543, %v4551
      %v4553 = vrot.slane %v4551, 4
      %v4555 = vshrl.u32 %v4201, 16
      %v4557 = vrot.slane %v4555, 6
      %v4558 = vshll.u32 %v4201, 16
      %v4560 = vrot.slane %v4558, 7
      %v4561 = vor.u32 %v4557, %v4560
      %v4562 = vsel %vm4204, %v4553, %v4561
      %v4563 = vrot.slane %v4557, 4
      %vm4601 = vcmask 1043457
      %vm4602 = vsmask.f32 7942
      %vm4603 = vmand %vm4601, %vm4602
      %v4604 = vld [vmem:[#allocation2 + $0x8] sm:$0xe]
      %v4605 = vsel %vm4603, %v4212, %v4604
      %4606 = vst [vmem:[#allocation2 + $0x8] sm:$0xe] %v4605
      %4607 = vst [vmem:[#allocation2 + $0xc] sm:$0xf] %v4222
      %4608 = vst [vmem:[#allocation2 + $0x10] sm:$0xf] %v4232
      %4609 = vst [vmem:[#allocation2 + $0x14] sm:$0xf] %v4242
      %4610 = vst [vmem:[#allocation2 + $0x18] sm:$0xf] %v4252
      %4611 = vst [vmem:[#allocation2 + $0x1c] sm:$0xf] %v4262
      %4612 = vst [vmem:[#allocation2 + $0x20] sm:$0xf] %v4272
      %4613 = vst [vmem:[#allocation2 + $0x24] sm:$0xf] %v4282
      %4614 = vst [vmem:[#allocation2 + $0x28] sm:$0xf] %v4292
      %4615 = vst [vmem:[#allocation2 + $0x2c] sm:$0xf] %v4302
      %4616 = vst [vmem:[#allocation2 + $0x30] sm:$0xf] %v4312
      %4617 = vst [vmem:[#allocation2 + $0x34] sm:$0xf] %v4322
      %4618 = vst [vmem:[#allocation2 + $0x38] sm:$0xf] %v4332
      %4619 = vst [vmem:[#allocation2 + $0x3c] sm:$0xf] %v4342
      %4620 = vst [vmem:[#allocation2 + $0x40] sm:$0xf] %v4352
      %4621 = vst [vmem:[#allocation2 + $0x44] sm:$0xf] %v4362
      %4622 = vst [vmem:[#allocation2 + $0x48] sm:$0xf] %v4372
      %4623 = vst [vmem:[#allocation2 + $0x4c] sm:$0xf] %v4382
      %4624 = vst [vmem:[#allocation2 + $0x50] sm:$0xf] %v4392
      %4625 = vst [vmem:[#allocation2 + $0x54] sm:$0xf] %v4402
      %4626 = vst [vmem:[#allocation2 + $0x58] sm:$0xf] %v4412
      %4627 = vst [vmem:[#allocation2 + $0x5c] sm:$0xf] %v4422
      %4628 = vst [vmem:[#allocation2 + $0x60] sm:$0xf] %v4432
      %4629 = vst [vmem:[#allocation2 + $0x64] sm:$0xf] %v4442
      %4630 = vst [vmem:[#allocation2 + $0x68] sm:$0xf] %v4452
      %4631 = vst [vmem:[#allocation2 + $0x6c] sm:$0xf] %v4462
      %4632 = vst [vmem:[#allocation2 + $0x70] sm:$0xf] %v4472
      %4633 = vst [vmem:[#allocation2 + $0x74] sm:$0xf] %v4482
      %4634 = vst [vmem:[#allocation2 + $0x78] sm:$0xf] %v4492
      %4635 = vst [vmem:[#allocation2 + $0x7c] sm:$0xf] %v4502
      %4636 = vst [vmem:[#allocation2 + $0x80] sm:$0xf] %v4512
      %4637 = vst [vmem:[#allocation2 + $0x84] sm:$0xf] %v4522
      %4638 = vst [vmem:[#allocation2 + $0x88] sm:$0xf] %v4532
      %4639 = vst [vmem:[#allocation2 + $0x8c] sm:$0xf] %v4542
      %4640 = vst [vmem:[#allocation2 + $0x90] sm:$0xf] %v4552
      %4641 = vst [vmem:[#allocation2 + $0x94] sm:$0xf] %v4562
      %vm4642 = vcmask 1040384
      %vm4643 = vsmask.f32 256
      %vm4644 = vmand %vm4642, %vm4643
      %v4645 = vld [vmem:[#allocation2 + $0x98] sm:$0x1]
      %v4646 = vsel %vm4644, %v4563, %v4645
      %4647 = vst [vmem:[#allocation2 + $0x98] sm:$0x1] %v4646
      %4648 = vst [vmem:[%s429] sm:$0xff] 0.0
      %4649 = vst [vmem:[%s429 + $0x8] sm:$0xff] 0.0
      %4650 = vst [vmem:[%s429 + $0x10] sm:$0xff] 0.0
      %4651 = vst [vmem:[%s429 + $0x18] sm:$0xff] 0.0
      %4652 = vst [vmem:[%s429 + $0x20] sm:$0xff] 0.0
      %4653 = vst [vmem:[%s429 + $0x28] sm:$0xff] 0.0
      %4654 = vst [vmem:[%s429 + $0x30] sm:$0xff] 0.0
      %4655 = vst [vmem:[%s429 + $0x38] sm:$0xff] 0.0
      %4656 = vst [vmem:[%s429 + $0x40] sm:$0xff] 0.0
      %4657 = vst [vmem:[%s429 + $0x48] sm:$0xff] 0.0
      %4658 = vst [vmem:[%s429 + $0x50] sm:$0xff] 0.0
      %4659 = vst [vmem:[%s429 + $0x58] sm:$0xff] 0.0
      %4660 = vst [vmem:[%s429 + $0x60] sm:$0xff] 0.0
      %4661 = vst [vmem:[%s429 + $0x68] sm:$0xff] 0.0
      %4662 = vst [vmem:[%s429 + $0x70] sm:$0xff] 0.0
      %4663 = vst [vmem:[%s429 + $0x78] sm:$0xff] 0.0
      %4664 = vst [vmem:[%s429 + $0x80] sm:$0xff] 0.0
      %4665 = vst [vmem:[%s429 + $0x88] sm:$0xff] 0.0
      %4666 = vst [vmem:[%s429 + $0x90] sm:$0xff] 0.0
      %4667 = vst [vmem:[%s429 + $0x98] sm:$0xff] 0.0
      %4668 = vst [vmem:[%s429 + $0xa0] sm:$0xff] 0.0
      %4669 = vst [vmem:[%s429 + $0xa8] sm:$0xff] 0.0
      %4670 = vst [vmem:[%s429 + $0xb0] sm:$0xff] 0.0
      %4671 = vst [vmem:[%s429 + $0xb8] sm:$0xff] 0.0
      %4672 = vst [vmem:[%s429 + $0xc0] sm:$0xff] 0.0
      %4673 = vst [vmem:[%s429 + $0xc8] sm:$0xff] 0.0
      %4674 = vst [vmem:[%s429 + $0xd0] sm:$0xff] 0.0
      %4675 = vst [vmem:[%s429 + $0xd8] sm:$0xff] 0.0
      %4676 = vst [vmem:[%s429 + $0xe0] sm:$0xff] 0.0
      %4677 = vst [vmem:[%s429 + $0xe8] sm:$0xff] 0.0
      %4678 = vst [vmem:[%s429 + $0xf0] sm:$0xff] 0.0
      %4679 = vst [vmem:[%s429 + $0xf8] sm:$0xff] 0.0
      %4680 = vst [vmem:[%s429 + $0x100] sm:$0xff] 0.0
      %4681 = vst [vmem:[%s429 + $0x108] sm:$0xff] 0.0
      %4682 = vst [vmem:[%s429 + $0x110] sm:$0xff] 0.0
      %4683 = vst [vmem:[%s429 + $0x118] sm:$0xff] 0.0
      %4684 = vst [vmem:[%s429 + $0x120] sm:$0xff] 0.0
      %4685 = vst [vmem:[%s429 + $0x128] sm:$0xff] 0.0
      %4686 = vst [vmem:[%s429 + $0x130] sm:$0xff] 0.0
      %4687 = vst [vmem:[%s429 + $0x138] sm:$0xff] 0.0
      %4688 = vst [vmem:[%s429 + $0x140] sm:$0xff] 0.0
      %v4689 = vld [vmem:[#allocation2] sm:$0xf]
      %v4690 = vld [vmem:[#allocation2 + $0x4] sm:$0xf]
      %v4691 = vld [vmem:[#allocation2 + $0x8] sm:$0xf]
      %v4692 = vld [vmem:[#allocation2 + $0xc] sm:$0xf]
      %v4693 = vld [vmem:[#allocation2 + $0x10] sm:$0xf]
      %v4694 = vld [vmem:[#allocation2 + $0x14] sm:$0xf]
      %v4695 = vld [vmem:[#allocation2 + $0x18] sm:$0xf]
      %v4696 = vld [vmem:[#allocation2 + $0x1c] sm:$0xf]
      %v4697 = vld [vmem:[#allocation2 + $0x20] sm:$0xf]
      %v4698 = vld [vmem:[#allocation2 + $0x24] sm:$0xf]
      %v4699 = vld [vmem:[#allocation2 + $0x28] sm:$0xf]
      %v4700 = vld [vmem:[#allocation2 + $0x2c] sm:$0xf]
      %v4701 = vld [vmem:[#allocation2 + $0x30] sm:$0xf]
      %v4702 = vld [vmem:[#allocation2 + $0x34] sm:$0xf]
      %v4703 = vld [vmem:[#allocation2 + $0x38] sm:$0xf]
      %v4704 = vld [vmem:[#allocation2 + $0x3c] sm:$0xf]
      %v4705 = vld [vmem:[#allocation2 + $0x40] sm:$0xf]
      %v4706 = vld [vmem:[#allocation2 + $0x44] sm:$0xf]
      %v4707 = vld [vmem:[#allocation2 + $0x48] sm:$0xf]
      %v4708 = vld [vmem:[#allocation2 + $0x4c] sm:$0xf]
      %v4709 = vld [vmem:[#allocation2 + $0x50] sm:$0xf]
      %v4710 = vld [vmem:[#allocation2 + $0x54] sm:$0xf]
      %v4711 = vld [vmem:[#allocation2 + $0x58] sm:$0xf]
      %v4712 = vld [vmem:[#allocation2 + $0x5c] sm:$0xf]
      %v4713 = vld [vmem:[#allocation2 + $0x60] sm:$0xf]
      %v4714 = vld [vmem:[#allocation2 + $0x64] sm:$0xf]
      %v4715 = vld [vmem:[#allocation2 + $0x68] sm:$0xf]
      %v4716 = vld [vmem:[#allocation2 + $0x6c] sm:$0xf]
      %v4717 = vld [vmem:[#allocation2 + $0x70] sm:$0xf]
      %v4718 = vld [vmem:[#allocation2 + $0x74] sm:$0xf]
      %v4719 = vld [vmem:[#allocation2 + $0x78] sm:$0xf]
      %v4720 = vld [vmem:[#allocation2 + $0x7c] sm:$0xf]
      %v4721 = vld [vmem:[#allocation2 + $0x80] sm:$0xf]
      %v4722 = vld [vmem:[#allocation2 + $0x84] sm:$0xf]
      %v4723 = vld [vmem:[#allocation2 + $0x88] sm:$0xf]
      %v4724 = vld [vmem:[#allocation2 + $0x8c] sm:$0x7]
      %v4725 = vld [vmem:[%s7] sm:$0xf]
      %v4726 = vld [vmem:[%s7 + $0x4] sm:$0xf]
      %v4727 = vld [vmem:[%s7 + $0x8] sm:$0xf]
      %v4728 = vld [vmem:[%s7 + $0xc] sm:$0xf]
      %v4729 = vld [vmem:[%s7 + $0x10] sm:$0xf]
      %v4730 = vld [vmem:[%s7 + $0x14] sm:$0xf]
      %v4731 = vld [vmem:[%s7 + $0x18] sm:$0xf]
      %v4732 = vld [vmem:[%s7 + $0x1c] sm:$0xf]
      %v4733 = vld [vmem:[%s7 + $0x20] sm:$0xf]
      %v4734 = vld [vmem:[%s7 + $0x24] sm:$0xf]
      %v4735 = vld [vmem:[%s7 + $0x28] sm:$0xf]
      %v4736 = vld [vmem:[%s7 + $0x2c] sm:$0xf]
      %v4737 = vld [vmem:[%s7 + $0x30] sm:$0xf]
      %v4738 = vld [vmem:[%s7 + $0x34] sm:$0xf]
      %v4739 = vld [vmem:[%s7 + $0x38] sm:$0xf]
      %v4740 = vld [vmem:[%s7 + $0x3c] sm:$0xf]
      %v4741 = vld [vmem:[#allocation2 + $0x8c] sm:$0xf]
      %s4742 = scalar_lea.vmem %s7, 64
      %v4743 = vld [vmem:[%s4742] sm:$0xf]
      %v4744 = vld [vmem:[%s4742 + $0x4] sm:$0xf]
      %v4745 = vld [vmem:[%s4742 + $0x8] sm:$0xf]
      %v4746 = vld [vmem:[%s4742 + $0xc] sm:$0xf]
      %v4747 = vld [vmem:[%s4742 + $0x10] sm:$0xf]
      %v4748 = vld [vmem:[%s4742 + $0x14] sm:$0xf]
      %v4749 = vld [vmem:[%s4742 + $0x18] sm:$0xf]
      %v4750 = vld [vmem:[%s4742 + $0x1c] sm:$0xf]
      %v4751 = vld [vmem:[%s4742 + $0x20] sm:$0xf]
      %v4752 = vld [vmem:[%s4742 + $0x24] sm:$0xf]
      %v4753 = vld [vmem:[%s4742 + $0x28] sm:$0xf]
      %v4754 = vld [vmem:[%s4742 + $0x2c] sm:$0xf]
      %v4755 = vld [vmem:[%s4742 + $0x30] sm:$0xf]
      %v4756 = vld [vmem:[%s4742 + $0x34] sm:$0xf]
      %v4757 = vld [vmem:[%s4742 + $0x38] sm:$0xf]
      %v4758 = vld [vmem:[%s4742 + $0x3c] sm:$0xf]
      %v4795 = vunpack.c.l.b16 %v4689
      %v4796 = vunpack.c.l.b16 %v4690
      %v4797 = vunpack.c.l.b16 %v4691
      %v4798 = vunpack.c.l.b16 %v4692
      %v4799 = vunpack.c.l.b16 %v4693
      %v4800 = vunpack.c.l.b16 %v4694
      %v4801 = vunpack.c.l.b16 %v4695
      %v4802 = vunpack.c.l.b16 %v4696
      %v4803 = vunpack.c.l.b16 %v4697
      %v4804 = vunpack.c.l.b16 %v4698
      %v4805 = vunpack.c.l.b16 %v4699
      %v4806 = vunpack.c.l.b16 %v4700
      %v4807 = vunpack.c.l.b16 %v4701
      %v4808 = vunpack.c.l.b16 %v4702
      %v4809 = vunpack.c.l.b16 %v4703
      %v4810 = vunpack.c.l.b16 %v4704
      %v4811 = vunpack.c.l.b16 %v4705
      %v4812 = vunpack.c.l.b16 %v4706
      %v4813 = vunpack.c.l.b16 %v4707
      %v4814 = vunpack.c.l.b16 %v4708
      %v4815 = vunpack.c.l.b16 %v4709
      %v4816 = vunpack.c.l.b16 %v4710
      %v4817 = vunpack.c.l.b16 %v4711
      %v4818 = vunpack.c.l.b16 %v4712
      %v4819 = vunpack.c.l.b16 %v4713
      %v4820 = vunpack.c.l.b16 %v4714
      %v4821 = vunpack.c.l.b16 %v4715
      %v4822 = vunpack.c.l.b16 %v4716
      %v4823 = vunpack.c.l.b16 %v4717
      %v4824 = vunpack.c.l.b16 %v4718
      %v4825 = vunpack.c.l.b16 %v4719
      %v4826 = vunpack.c.l.b16 %v4720
      %v4827 = vunpack.c.l.b16 %v4721
      %v4828 = vunpack.c.l.b16 %v4722
      %v4829 = vunpack.c.l.b16 %v4723
      %v4830 = vunpack.c.l.b16 %v4741
      %v4831 = vpack.c.b16 %v4796, %v4795
      %v4832 = vpack.c.b16 %v4798, %v4797
      %v4833 = vpack.c.b16 %v4800, %v4799
      %v4834 = vpack.c.b16 %v4802, %v4801
      %v4835 = vpack.c.b16 %v4804, %v4803
      %v4836 = vpack.c.b16 %v4806, %v4805
      %v4837 = vpack.c.b16 %v4808, %v4807
      %v4838 = vpack.c.b16 %v4810, %v4809
      %v4839 = vpack.c.b16 %v4812, %v4811
      %v4840 = vpack.c.b16 %v4814, %v4813
      %v4841 = vpack.c.b16 %v4816, %v4815
      %v4842 = vpack.c.b16 %v4818, %v4817
      %v4843 = vpack.c.b16 %v4820, %v4819
      %v4844 = vpack.c.b16 %v4822, %v4821
      %v4845 = vpack.c.b16 %v4824, %v4823
      %v4846 = vpack.c.b16 %v4826, %v4825
      %v4847 = vpack.c.b16 %v4828, %v4827
      %v4848 = vpack.c.b16 %v4830, %v4829
      %vm4849 = vsmask.f32 7424
      %v4851 = vshrl.u32 %v4831, 16
      %v4853 = vshll.u32 %v4831, 16
      %v4855 = vrot.slane %v4853, 1
      %v4856 = vor.u32 %v4851, %v4855
      %v4858 = vshll.u32 %v4832, 16
      %v4860 = vrot.slane %v4858, 1
      %v4861 = vsel %vm4849, %v4856, %v4860
      %v4862 = vshrl.u32 %v4832, 16
      %v4864 = vor.u32 %v4862, %v4860
      %v4866 = vshll.u32 %v4833, 16
      %v4868 = vrot.slane %v4866, 1
      %v4869 = vsel %vm4849, %v4864, %v4868
      %v4870 = vshrl.u32 %v4833, 16
      %v4872 = vor.u32 %v4870, %v4868
      %v4874 = vshll.u32 %v4834, 16
      %v4876 = vrot.slane %v4874, 1
      %v4877 = vsel %vm4849, %v4872, %v4876
      %v4878 = vshrl.u32 %v4834, 16
      %v4880 = vor.u32 %v4878, %v4876
      %v4882 = vshll.u32 %v4835, 16
      %v4884 = vrot.slane %v4882, 1
      %v4885 = vsel %vm4849, %v4880, %v4884
      %v4886 = vshrl.u32 %v4835, 16
      %v4888 = vor.u32 %v4886, %v4884
      %v4890 = vshll.u32 %v4836, 16
      %v4892 = vrot.slane %v4890, 1
      %v4893 = vsel %vm4849, %v4888, %v4892
      %v4894 = vshrl.u32 %v4836, 16
      %v4896 = vor.u32 %v4894, %v4892
      %v4898 = vshll.u32 %v4837, 16
      %v4900 = vrot.slane %v4898, 1
      %v4901 = vsel %vm4849, %v4896, %v4900
      %v4902 = vshrl.u32 %v4837, 16
      %v4904 = vor.u32 %v4902, %v4900
      %v4906 = vshll.u32 %v4838, 16
      %v4908 = vrot.slane %v4906, 1
      %v4909 = vsel %vm4849, %v4904, %v4908
      %v4910 = vshrl.u32 %v4838, 16
      %v4912 = vor.u32 %v4910, %v4908
      %v4914 = vshll.u32 %v4839, 16
      %v4916 = vrot.slane %v4914, 1
      %v4917 = vsel %vm4849, %v4912, %v4916
      %v4918 = vshrl.u32 %v4839, 16
      %v4920 = vor.u32 %v4918, %v4916
      %v4922 = vshll.u32 %v4840, 16
      %v4924 = vrot.slane %v4922, 1
      %v4925 = vsel %vm4849, %v4920, %v4924
      %v4926 = vshrl.u32 %v4840, 16
      %v4928 = vor.u32 %v4926, %v4924
      %v4930 = vshll.u32 %v4841, 16
      %v4932 = vrot.slane %v4930, 1
      %v4933 = vsel %vm4849, %v4928, %v4932
      %v4934 = vshrl.u32 %v4841, 16
      %v4936 = vor.u32 %v4934, %v4932
      %v4938 = vshll.u32 %v4842, 16
      %v4940 = vrot.slane %v4938, 1
      %v4941 = vsel %vm4849, %v4936, %v4940
      %v4942 = vshrl.u32 %v4842, 16
      %v4944 = vor.u32 %v4942, %v4940
      %v4946 = vshll.u32 %v4843, 16
      %v4948 = vrot.slane %v4946, 1
      %v4949 = vsel %vm4849, %v4944, %v4948
      %v4950 = vshrl.u32 %v4843, 16
      %v4952 = vor.u32 %v4950, %v4948
      %v4954 = vshll.u32 %v4844, 16
      %v4956 = vrot.slane %v4954, 1
      %v4957 = vsel %vm4849, %v4952, %v4956
      %v4958 = vshrl.u32 %v4844, 16
      %v4960 = vor.u32 %v4958, %v4956
      %v4962 = vshll.u32 %v4845, 16
      %v4964 = vrot.slane %v4962, 1
      %v4965 = vsel %vm4849, %v4960, %v4964
      %v4966 = vshrl.u32 %v4845, 16
      %v4968 = vor.u32 %v4966, %v4964
      %v4970 = vshll.u32 %v4846, 16
      %v4972 = vrot.slane %v4970, 1
      %v4973 = vsel %vm4849, %v4968, %v4972
      %v4974 = vshrl.u32 %v4846, 16
      %v4976 = vor.u32 %v4974, %v4972
      %v4978 = vshll.u32 %v4847, 16
      %v4980 = vrot.slane %v4978, 1
      %v4981 = vsel %vm4849, %v4976, %v4980
      %v4982 = vshrl.u32 %v4847, 16
      %v4984 = vor.u32 %v4982, %v4980
      %v4986 = vshll.u32 %v4848, 16
      %v4988 = vrot.slane %v4986, 1
      %v4989 = vsel %vm4849, %v4984, %v4988
      %v4990 = vshrl.u32 %v4848, 16
      %v4992 = vor.u32 %v4990, %v4988
      %v5027 = vunpack.c.l.b16 %v4743
      %v5028 = vunpack.c.l.b16 %v4744
      %v5029 = vunpack.c.l.b16 %v4745
      %v5030 = vunpack.c.l.b16 %v4746
      %v5031 = vunpack.c.l.b16 %v4747
      %v5032 = vunpack.c.l.b16 %v4748
      %v5033 = vunpack.c.l.b16 %v4749
      %v5034 = vunpack.c.l.b16 %v4750
      %v5035 = vunpack.c.l.b16 %v4751
      %v5036 = vunpack.c.l.b16 %v4752
      %v5037 = vunpack.c.l.b16 %v4753
      %v5038 = vunpack.c.l.b16 %v4754
      %v5039 = vunpack.c.l.b16 %v4755
      %v5040 = vunpack.c.l.b16 %v4756
      %v5041 = vunpack.c.l.b16 %v4757
      %v5042 = vunpack.c.l.b16 %v4758
      %v5043 = vpack.c.b16 %v5028, %v5027
      %v5044 = vpack.c.b16 %v5030, %v5029
      %v5045 = vpack.c.b16 %v5032, %v5031
      %v5046 = vpack.c.b16 %v5034, %v5033
      %v5047 = vpack.c.b16 %v5036, %v5035
      %v5048 = vpack.c.b16 %v5038, %v5037
      %v5049 = vpack.c.b16 %v5040, %v5039
      %v5050 = vpack.c.b16 %v5042, %v5041
      %5059 = vmatprep.subr.bf16.mxu0 0
      %5060 = vmatpush1.bf16.msra.mxu0 %v5050
      %5061 = vmatprep.subr.bf16.mxu0 0
      %5062 = vmatpush1.bf16.msra.mxu0 %v5049
      %5063 = vmatprep.subr.bf16.mxu0 0
      %5064 = vmatpush1.bf16.msra.mxu0 %v5048
      %5065 = vmatprep.subr.bf16.mxu0 0
      %5066 = vmatpush1.bf16.msra.mxu0 %v5047
      %5067 = vmatprep.subr.bf16.mxu0 0
      %5068 = vmatpush1.bf16.msra.mxu0 %v5046
      %5069 = vmatprep.subr.bf16.mxu0 0
      %5070 = vmatpush1.bf16.msra.mxu0 %v5045
      %5071 = vmatprep.subr.bf16.mxu0 0
      %5072 = vmatpush1.bf16.msra.mxu0 %v5044
      %5073 = vmatprep.subr.bf16.mxu0 0
      %5074 = vmatpush1.bf16.msra.mxu0 %v5043
      %5075 = vmatprep.subr.bf16.mxu0 0
      %5076 = vmatpush2.bf16.msra.mxu0 0
      %5077 = vmatprep.subr.bf16.mxu0 0
      %5078 = vmatpush2.bf16.msra.mxu0 0
      %5079 = vmatprep.subr.bf16.mxu0 0
      %5080 = vmatpush2.bf16.msra.mxu0 0
      %5081 = vmatprep.subr.bf16.mxu0 0
      %5082 = vmatpush2.bf16.msra.mxu0 0
      %5083 = vmatprep.subr.bf16.mxu0 0
      %5084 = vmatpush2.bf16.msra.mxu0 0
      %5085 = vmatprep.subr.bf16.mxu0 0
      %5086 = vmatpush2.bf16.msra.mxu0 0
      %5087 = vmatprep.subr.bf16.mxu0 0
      %5088 = vmatpush2.bf16.msra.mxu0 0
      %5089 = vmatprep.subr.bf16.mxu0 0
      %5090 = vmatpush2.bf16.msra.mxu0 0
      %5091 = vmatprep.mubr.bf16.mxu0 0
      %5092 = vmatmul.mubr.bf16.gmra.mxu0 %v4861
      %v5093 = vpop.f32.mrf.mxu0
      %v5094 = vadd.f32 0.0, %v5093
      %v5095 = vpop.f32.mrf.mxu0
      %v5096 = vpop.f32.mrf.mxu0
      %v5097 = vadd.f32 0.0, %v5096
      %v5098 = vpop.f32.mrf.mxu0
      %5099 = vmatprep.mubr.bf16.mxu0 0
      %5100 = vmatmul.mubr.bf16.gmra.mxu0 %v4869
      %v5101 = vpop.f32.mrf.mxu0
      %v5102 = vadd.f32 0.0, %v5101
      %v5103 = vpop.f32.mrf.mxu0
      %v5104 = vpop.f32.mrf.mxu0
      %v5105 = vadd.f32 0.0, %v5104
      %v5106 = vpop.f32.mrf.mxu0
      %5107 = vmatprep.mubr.bf16.mxu0 0
      %5108 = vmatmul.mubr.bf16.gmra.mxu0 %v4877
      %v5109 = vpop.f32.mrf.mxu0
      %v5110 = vadd.f32 0.0, %v5109
      %v5111 = vpop.f32.mrf.mxu0
      %v5112 = vpop.f32.mrf.mxu0
      %v5113 = vadd.f32 0.0, %v5112
      %v5114 = vpop.f32.mrf.mxu0
      %5115 = vmatprep.mubr.bf16.mxu0 0
      %5116 = vmatmul.mubr.bf16.gmra.mxu0 %v4885
      %v5117 = vpop.f32.mrf.mxu0
      %v5118 = vadd.f32 0.0, %v5117
      %v5119 = vpop.f32.mrf.mxu0
      %v5120 = vpop.f32.mrf.mxu0
      %v5121 = vadd.f32 0.0, %v5120
      %v5122 = vpop.f32.mrf.mxu0
      %5123 = vmatprep.mubr.bf16.mxu0 0
      %5124 = vmatmul.mubr.bf16.gmra.mxu0 %v4893
      %v5125 = vpop.f32.mrf.mxu0
      %v5126 = vadd.f32 0.0, %v5125
      %v5127 = vpop.f32.mrf.mxu0
      %v5128 = vpop.f32.mrf.mxu0
      %v5129 = vadd.f32 0.0, %v5128
      %v5130 = vpop.f32.mrf.mxu0
      %5131 = vmatprep.mubr.bf16.mxu0 0
      %5132 = vmatmul.mubr.bf16.gmra.mxu0 %v4901
      %v5133 = vpop.f32.mrf.mxu0
      %v5134 = vadd.f32 0.0, %v5133
      %v5135 = vpop.f32.mrf.mxu0
      %v5136 = vpop.f32.mrf.mxu0
      %v5137 = vadd.f32 0.0, %v5136
      %v5138 = vpop.f32.mrf.mxu0
      %5139 = vmatprep.mubr.bf16.mxu0 0
      %5140 = vmatmul.mubr.bf16.gmra.mxu0 %v4909
      %v5141 = vpop.f32.mrf.mxu0
      %v5142 = vadd.f32 0.0, %v5141
      %v5143 = vpop.f32.mrf.mxu0
      %v5144 = vpop.f32.mrf.mxu0
      %v5145 = vadd.f32 0.0, %v5144
      %v5146 = vpop.f32.mrf.mxu0
      %5147 = vmatprep.mubr.bf16.mxu0 0
      %5148 = vmatmul.mubr.bf16.gmra.mxu0 %v4917
      %v5149 = vpop.f32.mrf.mxu0
      %v5150 = vadd.f32 0.0, %v5149
      %v5151 = vpop.f32.mrf.mxu0
      %v5152 = vpop.f32.mrf.mxu0
      %v5153 = vadd.f32 0.0, %v5152
      %v5154 = vpop.f32.mrf.mxu0
      %5155 = vmatprep.mubr.bf16.mxu0 0
      %5156 = vmatmul.mubr.bf16.gmra.mxu0 %v4925
      %v5157 = vpop.f32.mrf.mxu0
      %v5158 = vadd.f32 0.0, %v5157
      %v5159 = vpop.f32.mrf.mxu0
      %v5160 = vpop.f32.mrf.mxu0
      %v5161 = vadd.f32 0.0, %v5160
      %v5162 = vpop.f32.mrf.mxu0
      %5163 = vmatprep.mubr.bf16.mxu0 0
      %5164 = vmatmul.mubr.bf16.gmra.mxu0 %v4933
      %v5165 = vpop.f32.mrf.mxu0
      %v5166 = vadd.f32 0.0, %v5165
      %v5167 = vpop.f32.mrf.mxu0
      %v5168 = vpop.f32.mrf.mxu0
      %v5169 = vadd.f32 0.0, %v5168
      %v5170 = vpop.f32.mrf.mxu0
      %5171 = vmatprep.mubr.bf16.mxu0 0
      %5172 = vmatmul.mubr.bf16.gmra.mxu0 %v4941
      %v5173 = vpop.f32.mrf.mxu0
      %v5174 = vadd.f32 0.0, %v5173
      %v5175 = vpop.f32.mrf.mxu0
      %v5176 = vpop.f32.mrf.mxu0
      %v5177 = vadd.f32 0.0, %v5176
      %v5178 = vpop.f32.mrf.mxu0
      %5179 = vmatprep.mubr.bf16.mxu0 0
      %5180 = vmatmul.mubr.bf16.gmra.mxu0 %v4949
      %v5181 = vpop.f32.mrf.mxu0
      %v5182 = vadd.f32 0.0, %v5181
      %v5183 = vpop.f32.mrf.mxu0
      %v5184 = vpop.f32.mrf.mxu0
      %v5185 = vadd.f32 0.0, %v5184
      %v5186 = vpop.f32.mrf.mxu0
      %5187 = vmatprep.mubr.bf16.mxu0 0
      %5188 = vmatmul.mubr.bf16.gmra.mxu0 %v4957
      %v5189 = vpop.f32.mrf.mxu0
      %v5190 = vadd.f32 0.0, %v5189
      %v5191 = vpop.f32.mrf.mxu0
      %v5192 = vpop.f32.mrf.mxu0
      %v5193 = vadd.f32 0.0, %v5192
      %v5194 = vpop.f32.mrf.mxu0
      %5195 = vmatprep.mubr.bf16.mxu0 0
      %5196 = vmatmul.mubr.bf16.gmra.mxu0 %v4965
      %v5197 = vpop.f32.mrf.mxu0
      %v5198 = vadd.f32 0.0, %v5197
      %v5199 = vpop.f32.mrf.mxu0
      %v5200 = vpop.f32.mrf.mxu0
      %v5201 = vadd.f32 0.0, %v5200
      %v5202 = vpop.f32.mrf.mxu0
      %5203 = vmatprep.mubr.bf16.mxu0 0
      %5204 = vmatmul.mubr.bf16.gmra.mxu0 %v4973
      %v5205 = vpop.f32.mrf.mxu0
      %v5206 = vadd.f32 0.0, %v5205
      %v5207 = vpop.f32.mrf.mxu0
      %v5208 = vpop.f32.mrf.mxu0
      %v5209 = vadd.f32 0.0, %v5208
      %v5210 = vpop.f32.mrf.mxu0
      %5211 = vmatprep.mubr.bf16.mxu0 0
      %5212 = vmatmul.mubr.bf16.gmra.mxu0 %v4981
      %v5213 = vpop.f32.mrf.mxu0
      %v5214 = vadd.f32 0.0, %v5213
      %v5215 = vpop.f32.mrf.mxu0
      %v5216 = vpop.f32.mrf.mxu0
      %v5217 = vadd.f32 0.0, %v5216
      %v5218 = vpop.f32.mrf.mxu0
      %5219 = vmatprep.mubr.bf16.mxu0 0
      %5220 = vmatmul.mubr.bf16.gmra.mxu0 %v4989
      %v5221 = vpop.f32.mrf.mxu0
      %v5222 = vadd.f32 0.0, %v5221
      %v5223 = vpop.f32.mrf.mxu0
      %v5224 = vpop.f32.mrf.mxu0
      %v5225 = vadd.f32 0.0, %v5224
      %v5226 = vpop.f32.mrf.mxu0
      %5227 = vmatprep.mubr.bf16.mxu0 0
      %5228 = vmatmul.mubr.bf16.gmra.mxu0 %v4992
      %v5229 = vpop.f32.mrf.mxu0
      %v5230 = vadd.f32 0.0, %v5229
      %v5231 = vpop.f32.mrf.mxu0
      %v5232 = vpop.f32.mrf.mxu0
      %v5233 = vadd.f32 0.0, %v5232
      %v5234 = vpop.f32.mrf.mxu0
      %5235 = vdwg.mxu0
      %v5237 = vunpack.c.l.b16 %v4724
      %v5238 = vpack.c.b16 %v5237, %v4829
      %v5273 = vunpack.c.l.b16 %v4725
      %v5274 = vunpack.c.l.b16 %v4726
      %v5275 = vunpack.c.l.b16 %v4727
      %v5276 = vunpack.c.l.b16 %v4728
      %v5277 = vunpack.c.l.b16 %v4729
      %v5278 = vunpack.c.l.b16 %v4730
      %v5279 = vunpack.c.l.b16 %v4731
      %v5280 = vunpack.c.l.b16 %v4732
      %v5281 = vunpack.c.l.b16 %v4733
      %v5282 = vunpack.c.l.b16 %v4734
      %v5283 = vunpack.c.l.b16 %v4735
      %v5284 = vunpack.c.l.b16 %v4736
      %v5285 = vunpack.c.l.b16 %v4737
      %v5286 = vunpack.c.l.b16 %v4738
      %v5287 = vunpack.c.l.b16 %v4739
      %v5288 = vunpack.c.l.b16 %v4740
      %v5289 = vpack.c.b16 %v5274, %v5273
      %v5290 = vpack.c.b16 %v5276, %v5275
      %v5291 = vpack.c.b16 %v5278, %v5277
      %v5292 = vpack.c.b16 %v5280, %v5279
      %v5293 = vpack.c.b16 %v5282, %v5281
      %v5294 = vpack.c.b16 %v5284, %v5283
      %v5295 = vpack.c.b16 %v5286, %v5285
      %v5296 = vpack.c.b16 %v5288, %v5287
      %5305 = vmatprep.subr.bf16.mxu0 0
      %5306 = vmatpush1.bf16.msra.mxu0 %v5296
      %5307 = vmatprep.subr.bf16.mxu0 0
      %5308 = vmatpush1.bf16.msra.mxu0 %v5295
      %5309 = vmatprep.subr.bf16.mxu0 0
      %5310 = vmatpush1.bf16.msra.mxu0 %v5294
      %5311 = vmatprep.subr.bf16.mxu0 0
      %5312 = vmatpush1.bf16.msra.mxu0 %v5293
      %5313 = vmatprep.subr.bf16.mxu0 0
      %5314 = vmatpush1.bf16.msra.mxu0 %v5292
      %5315 = vmatprep.subr.bf16.mxu0 0
      %5316 = vmatpush1.bf16.msra.mxu0 %v5291
      %5317 = vmatprep.subr.bf16.mxu0 0
      %5318 = vmatpush1.bf16.msra.mxu0 %v5290
      %5319 = vmatprep.subr.bf16.mxu0 0
      %5320 = vmatpush1.bf16.msra.mxu0 %v5289
      %5321 = vmatprep.subr.bf16.mxu0 0
      %5322 = vmatpush2.bf16.msra.mxu0 0
      %5323 = vmatprep.subr.bf16.mxu0 0
      %5324 = vmatpush2.bf16.msra.mxu0 0
      %5325 = vmatprep.subr.bf16.mxu0 0
      %5326 = vmatpush2.bf16.msra.mxu0 0
      %5327 = vmatprep.subr.bf16.mxu0 0
      %5328 = vmatpush2.bf16.msra.mxu0 0
      %5329 = vmatprep.subr.bf16.mxu0 0
      %5330 = vmatpush2.bf16.msra.mxu0 0
      %5331 = vmatprep.subr.bf16.mxu0 0
      %5332 = vmatpush2.bf16.msra.mxu0 0
      %5333 = vmatprep.subr.bf16.mxu0 0
      %5334 = vmatpush2.bf16.msra.mxu0 0
      %5335 = vmatprep.subr.bf16.mxu0 0
      %5336 = vmatpush2.bf16.msra.mxu0 0
      %5337 = vmatprep.mubr.bf16.mxu0 0
      %5338 = vmatmul.mubr.bf16.gmra.mxu0 %v4831
      %v5339 = vpop.f32.mrf.mxu0
      %v5340 = vadd.f32 %v5094, %v5339
      %v5341 = vpop.f32.mrf.mxu0
      %v5342 = vpop.f32.mrf.mxu0
      %v5343 = vadd.f32 %v5097, %v5342
      %v5344 = vpop.f32.mrf.mxu0
      %5345 = vmatprep.mubr.bf16.mxu0 0
      %5346 = vmatmul.mubr.bf16.gmra.mxu0 %v4832
      %v5347 = vpop.f32.mrf.mxu0
      %v5348 = vadd.f32 %v5102, %v5347
      %v5349 = vpop.f32.mrf.mxu0
      %v5350 = vpop.f32.mrf.mxu0
      %v5351 = vadd.f32 %v5105, %v5350
      %v5352 = vpop.f32.mrf.mxu0
      %5353 = vmatprep.mubr.bf16.mxu0 0
      %5354 = vmatmul.mubr.bf16.gmra.mxu0 %v4833
      %v5355 = vpop.f32.mrf.mxu0
      %v5356 = vadd.f32 %v5110, %v5355
      %v5357 = vpop.f32.mrf.mxu0
      %v5358 = vpop.f32.mrf.mxu0
      %v5359 = vadd.f32 %v5113, %v5358
      %v5360 = vpop.f32.mrf.mxu0
      %5361 = vmatprep.mubr.bf16.mxu0 0
      %5362 = vmatmul.mubr.bf16.gmra.mxu0 %v4834
      %v5363 = vpop.f32.mrf.mxu0
      %v5364 = vadd.f32 %v5118, %v5363
      %v5365 = vpop.f32.mrf.mxu0
      %v5366 = vpop.f32.mrf.mxu0
      %v5367 = vadd.f32 %v5121, %v5366
      %v5368 = vpop.f32.mrf.mxu0
      %5369 = vmatprep.mubr.bf16.mxu0 0
      %5370 = vmatmul.mubr.bf16.gmra.mxu0 %v4835
      %v5371 = vpop.f32.mrf.mxu0
      %v5372 = vadd.f32 %v5126, %v5371
      %v5373 = vpop.f32.mrf.mxu0
      %v5374 = vpop.f32.mrf.mxu0
      %v5375 = vadd.f32 %v5129, %v5374
      %v5376 = vpop.f32.mrf.mxu0
      %5377 = vmatprep.mubr.bf16.mxu0 0
      %5378 = vmatmul.mubr.bf16.gmra.mxu0 %v4836
      %v5379 = vpop.f32.mrf.mxu0
      %v5380 = vadd.f32 %v5134, %v5379
      %v5381 = vpop.f32.mrf.mxu0
      %v5382 = vpop.f32.mrf.mxu0
      %v5383 = vadd.f32 %v5137, %v5382
      %v5384 = vpop.f32.mrf.mxu0
      %5385 = vmatprep.mubr.bf16.mxu0 0
      %5386 = vmatmul.mubr.bf16.gmra.mxu0 %v4837
      %v5387 = vpop.f32.mrf.mxu0
      %v5388 = vadd.f32 %v5142, %v5387
      %v5389 = vpop.f32.mrf.mxu0
      %v5390 = vpop.f32.mrf.mxu0
      %v5391 = vadd.f32 %v5145, %v5390
      %v5392 = vpop.f32.mrf.mxu0
      %5393 = vmatprep.mubr.bf16.mxu0 0
      %5394 = vmatmul.mubr.bf16.gmra.mxu0 %v4838
      %v5395 = vpop.f32.mrf.mxu0
      %v5396 = vadd.f32 %v5150, %v5395
      %v5397 = vpop.f32.mrf.mxu0
      %v5398 = vpop.f32.mrf.mxu0
      %v5399 = vadd.f32 %v5153, %v5398
      %v5400 = vpop.f32.mrf.mxu0
      %5401 = vmatprep.mubr.bf16.mxu0 0
      %5402 = vmatmul.mubr.bf16.gmra.mxu0 %v4839
      %v5403 = vpop.f32.mrf.mxu0
      %v5404 = vadd.f32 %v5158, %v5403
      %v5405 = vpop.f32.mrf.mxu0
      %v5406 = vpop.f32.mrf.mxu0
      %v5407 = vadd.f32 %v5161, %v5406
      %v5408 = vpop.f32.mrf.mxu0
      %5409 = vmatprep.mubr.bf16.mxu0 0
      %5410 = vmatmul.mubr.bf16.gmra.mxu0 %v4840
      %v5411 = vpop.f32.mrf.mxu0
      %v5412 = vadd.f32 %v5166, %v5411
      %v5413 = vpop.f32.mrf.mxu0
      %v5414 = vpop.f32.mrf.mxu0
      %v5415 = vadd.f32 %v5169, %v5414
      %v5416 = vpop.f32.mrf.mxu0
      %5417 = vmatprep.mubr.bf16.mxu0 0
      %5418 = vmatmul.mubr.bf16.gmra.mxu0 %v4841
      %v5419 = vpop.f32.mrf.mxu0
      %v5420 = vadd.f32 %v5174, %v5419
      %v5421 = vpop.f32.mrf.mxu0
      %v5422 = vpop.f32.mrf.mxu0
      %v5423 = vadd.f32 %v5177, %v5422
      %v5424 = vpop.f32.mrf.mxu0
      %5425 = vmatprep.mubr.bf16.mxu0 0
      %5426 = vmatmul.mubr.bf16.gmra.mxu0 %v4842
      %v5427 = vpop.f32.mrf.mxu0
      %v5428 = vadd.f32 %v5182, %v5427
      %v5429 = vpop.f32.mrf.mxu0
      %v5430 = vpop.f32.mrf.mxu0
      %v5431 = vadd.f32 %v5185, %v5430
      %v5432 = vpop.f32.mrf.mxu0
      %5433 = vmatprep.mubr.bf16.mxu0 0
      %5434 = vmatmul.mubr.bf16.gmra.mxu0 %v4843
      %v5435 = vpop.f32.mrf.mxu0
      %v5436 = vadd.f32 %v5190, %v5435
      %v5437 = vpop.f32.mrf.mxu0
      %v5438 = vpop.f32.mrf.mxu0
      %v5439 = vadd.f32 %v5193, %v5438
      %v5440 = vpop.f32.mrf.mxu0
      %5441 = vmatprep.mubr.bf16.mxu0 0
      %5442 = vmatmul.mubr.bf16.gmra.mxu0 %v4844
      %v5443 = vpop.f32.mrf.mxu0
      %v5444 = vadd.f32 %v5198, %v5443
      %v5445 = vpop.f32.mrf.mxu0
      %v5446 = vpop.f32.mrf.mxu0
      %v5447 = vadd.f32 %v5201, %v5446
      %v5448 = vpop.f32.mrf.mxu0
      %5449 = vmatprep.mubr.bf16.mxu0 0
      %5450 = vmatmul.mubr.bf16.gmra.mxu0 %v4845
      %v5451 = vpop.f32.mrf.mxu0
      %v5452 = vadd.f32 %v5206, %v5451
      %v5453 = vpop.f32.mrf.mxu0
      %v5454 = vpop.f32.mrf.mxu0
      %v5455 = vadd.f32 %v5209, %v5454
      %v5456 = vpop.f32.mrf.mxu0
      %5457 = vmatprep.mubr.bf16.mxu0 0
      %5458 = vmatmul.mubr.bf16.gmra.mxu0 %v4846
      %v5459 = vpop.f32.mrf.mxu0
      %v5460 = vadd.f32 %v5214, %v5459
      %v5461 = vpop.f32.mrf.mxu0
      %v5462 = vpop.f32.mrf.mxu0
      %v5463 = vadd.f32 %v5217, %v5462
      %v5464 = vpop.f32.mrf.mxu0
      %5465 = vmatprep.mubr.bf16.mxu0 0
      %5466 = vmatmul.mubr.bf16.gmra.mxu0 %v4847
      %v5467 = vpop.f32.mrf.mxu0
      %v5468 = vadd.f32 %v5222, %v5467
      %v5469 = vpop.f32.mrf.mxu0
      %v5470 = vpop.f32.mrf.mxu0
      %v5471 = vadd.f32 %v5225, %v5470
      %v5472 = vpop.f32.mrf.mxu0
      %5473 = vmatprep.mubr.bf16.mxu0 0
      %5474 = vmatmul.mubr.bf16.gmra.mxu0 %v5238
      %v5475 = vpop.f32.mrf.mxu0
      %v5476 = vadd.f32 %v5230, %v5475
      %v5477 = vpop.f32.mrf.mxu0
      %v5478 = vpop.f32.mrf.mxu0
      %v5479 = vadd.f32 %v5233, %v5478
      %v5480 = vpop.f32.mrf.mxu0
      %5481 = vdwg.mxu0
      %v5482 = vld [vmem:[#allocation2] sm:$0xe]
      %s5483 = scalar_lea.vmem %s7, 128
      %v5484 = vld [vmem:[%s5483] sm:$0xf]
      %v5485 = vld [vmem:[%s5483 + $0x4] sm:$0xf]
      %v5486 = vld [vmem:[%s5483 + $0x8] sm:$0xf]
      %v5487 = vld [vmem:[%s5483 + $0xc] sm:$0xf]
      %v5488 = vld [vmem:[%s5483 + $0x10] sm:$0xf]
      %v5489 = vld [vmem:[%s5483 + $0x14] sm:$0xf]
      %v5490 = vld [vmem:[%s5483 + $0x18] sm:$0xf]
      %v5491 = vld [vmem:[%s5483 + $0x1c] sm:$0xf]
      %v5492 = vld [vmem:[%s5483 + $0x20] sm:$0xf]
      %v5493 = vld [vmem:[%s5483 + $0x24] sm:$0xf]
      %v5494 = vld [vmem:[%s5483 + $0x28] sm:$0xf]
      %v5495 = vld [vmem:[%s5483 + $0x2c] sm:$0xf]
      %v5496 = vld [vmem:[%s5483 + $0x30] sm:$0xf]
      %v5497 = vld [vmem:[%s5483 + $0x34] sm:$0xf]
      %v5498 = vld [vmem:[%s5483 + $0x38] sm:$0xf]
      %v5499 = vld [vmem:[%s5483 + $0x3c] sm:$0xf]
      %v5501 = vunpack.c.l.b16 %v5482
      %v5502 = vpack.c.b16 %v4796, %v5501
      %vm5503 = vcmask 1046528
      %v5504 = vrot.slane %v5502, 1
      %v5505 = vrot.slane %v4832, 1
      %v5506 = vsel %vm5503, %v5504, %v5505
      %v5507 = vrot.slane %v4833, 1
      %v5508 = vsel %vm5503, %v5505, %v5507
      %v5509 = vrot.slane %v4834, 1
      %v5510 = vsel %vm5503, %v5507, %v5509
      %v5511 = vrot.slane %v4835, 1
      %v5512 = vsel %vm5503, %v5509, %v5511
      %v5513 = vrot.slane %v4836, 1
      %v5514 = vsel %vm5503, %v5511, %v5513
      %v5515 = vrot.slane %v4837, 1
      %v5516 = vsel %vm5503, %v5513, %v5515
      %v5517 = vrot.slane %v4838, 1
      %v5518 = vsel %vm5503, %v5515, %v5517
      %v5519 = vrot.slane %v4839, 1
      %v5520 = vsel %vm5503, %v5517, %v5519
      %v5521 = vrot.slane %v4840, 1
      %v5522 = vsel %vm5503, %v5519, %v5521
      %v5523 = vrot.slane %v4841, 1
      %v5524 = vsel %vm5503, %v5521, %v5523
      %v5525 = vrot.slane %v4842, 1
      %v5526 = vsel %vm5503, %v5523, %v5525
      %v5527 = vrot.slane %v4843, 1
      %v5528 = vsel %vm5503, %v5525, %v5527
      %v5529 = vrot.slane %v4844, 1
      %v5530 = vsel %vm5503, %v5527, %v5529
      %v5531 = vrot.slane %v4845, 1
      %v5532 = vsel %vm5503, %v5529, %v5531
      %v5533 = vrot.slane %v4846, 1
      %v5534 = vsel %vm5503, %v5531, %v5533
      %v5535 = vrot.slane %v4847, 1
      %v5536 = vsel %vm5503, %v5533, %v5535
      %v5537 = vrot.slane %v4848, 1
      %v5538 = vsel %vm5503, %v5535, %v5537
      %v5573 = vunpack.c.l.b16 %v5484
      %v5574 = vunpack.c.l.b16 %v5485
      %v5575 = vunpack.c.l.b16 %v5486
      %v5576 = vunpack.c.l.b16 %v5487
      %v5577 = vunpack.c.l.b16 %v5488
      %v5578 = vunpack.c.l.b16 %v5489
      %v5579 = vunpack.c.l.b16 %v5490
      %v5580 = vunpack.c.l.b16 %v5491
      %v5581 = vunpack.c.l.b16 %v5492
      %v5582 = vunpack.c.l.b16 %v5493
      %v5583 = vunpack.c.l.b16 %v5494
      %v5584 = vunpack.c.l.b16 %v5495
      %v5585 = vunpack.c.l.b16 %v5496
      %v5586 = vunpack.c.l.b16 %v5497
      %v5587 = vunpack.c.l.b16 %v5498
      %v5588 = vunpack.c.l.b16 %v5499
      %v5589 = vpack.c.b16 %v5574, %v5573
      %v5590 = vpack.c.b16 %v5576, %v5575
      %v5591 = vpack.c.b16 %v5578, %v5577
      %v5592 = vpack.c.b16 %v5580, %v5579
      %v5593 = vpack.c.b16 %v5582, %v5581
      %v5594 = vpack.c.b16 %v5584, %v5583
      %v5595 = vpack.c.b16 %v5586, %v5585
      %v5596 = vpack.c.b16 %v5588, %v5587
      %5605 = vmatprep.subr.bf16.mxu0 0
      %5606 = vmatpush1.bf16.msra.mxu0 %v5596
      %5607 = vmatprep.subr.bf16.mxu0 0
      %5608 = vmatpush1.bf16.msra.mxu0 %v5595
      %5609 = vmatprep.subr.bf16.mxu0 0
      %5610 = vmatpush1.bf16.msra.mxu0 %v5594
      %5611 = vmatprep.subr.bf16.mxu0 0
      %5612 = vmatpush1.bf16.msra.mxu0 %v5593
      %5613 = vmatprep.subr.bf16.mxu0 0
      %5614 = vmatpush1.bf16.msra.mxu0 %v5592
      %5615 = vmatprep.subr.bf16.mxu0 0
      %5616 = vmatpush1.bf16.msra.mxu0 %v5591
      %5617 = vmatprep.subr.bf16.mxu0 0
      %5618 = vmatpush1.bf16.msra.mxu0 %v5590
      %5619 = vmatprep.subr.bf16.mxu0 0
      %5620 = vmatpush1.bf16.msra.mxu0 %v5589
      %5621 = vmatprep.subr.bf16.mxu0 0
      %5622 = vmatpush2.bf16.msra.mxu0 0
      %5623 = vmatprep.subr.bf16.mxu0 0
      %5624 = vmatpush2.bf16.msra.mxu0 0
      %5625 = vmatprep.subr.bf16.mxu0 0
      %5626 = vmatpush2.bf16.msra.mxu0 0
      %5627 = vmatprep.subr.bf16.mxu0 0
      %5628 = vmatpush2.bf16.msra.mxu0 0
      %5629 = vmatprep.subr.bf16.mxu0 0
      %5630 = vmatpush2.bf16.msra.mxu0 0
      %5631 = vmatprep.subr.bf16.mxu0 0
      %5632 = vmatpush2.bf16.msra.mxu0 0
      %5633 = vmatprep.subr.bf16.mxu0 0
      %5634 = vmatpush2.bf16.msra.mxu0 0
      %5635 = vmatprep.subr.bf16.mxu0 0
      %5636 = vmatpush2.bf16.msra.mxu0 0
      %5637 = vmatprep.mubr.bf16.mxu0 0
      %5638 = vmatmul.mubr.bf16.gmra.mxu0 %v5506
      %v5639 = vpop.f32.mrf.mxu0
      %v5640 = vadd.f32 0.0, %v5639
      %v5641 = vpop.f32.mrf.mxu0
      %v5642 = vpop.f32.mrf.mxu0
      %v5643 = vadd.f32 0.0, %v5642
      %v5644 = vpop.f32.mrf.mxu0
      %5645 = vmatprep.mubr.bf16.mxu0 0
      %5646 = vmatmul.mubr.bf16.gmra.mxu0 %v5508
      %v5647 = vpop.f32.mrf.mxu0
      %v5648 = vadd.f32 0.0, %v5647
      %v5649 = vpop.f32.mrf.mxu0
      %v5650 = vpop.f32.mrf.mxu0
      %v5651 = vadd.f32 0.0, %v5650
      %v5652 = vpop.f32.mrf.mxu0
      %5653 = vmatprep.mubr.bf16.mxu0 0
      %5654 = vmatmul.mubr.bf16.gmra.mxu0 %v5510
      %v5655 = vpop.f32.mrf.mxu0
      %v5656 = vadd.f32 0.0, %v5655
      %v5657 = vpop.f32.mrf.mxu0
      %v5658 = vpop.f32.mrf.mxu0
      %v5659 = vadd.f32 0.0, %v5658
      %v5660 = vpop.f32.mrf.mxu0
      %5661 = vmatprep.mubr.bf16.mxu0 0
      %5662 = vmatmul.mubr.bf16.gmra.mxu0 %v5512
      %v5663 = vpop.f32.mrf.mxu0
      %v5664 = vadd.f32 0.0, %v5663
      %v5665 = vpop.f32.mrf.mxu0
      %v5666 = vpop.f32.mrf.mxu0
      %v5667 = vadd.f32 0.0, %v5666
      %v5668 = vpop.f32.mrf.mxu0
      %5669 = vmatprep.mubr.bf16.mxu0 0
      %5670 = vmatmul.mubr.bf16.gmra.mxu0 %v5514
      %v5671 = vpop.f32.mrf.mxu0
      %v5672 = vadd.f32 0.0, %v5671
      %v5673 = vpop.f32.mrf.mxu0
      %v5674 = vpop.f32.mrf.mxu0
      %v5675 = vadd.f32 0.0, %v5674
      %v5676 = vpop.f32.mrf.mxu0
      %5677 = vmatprep.mubr.bf16.mxu0 0
      %5678 = vmatmul.mubr.bf16.gmra.mxu0 %v5516
      %v5679 = vpop.f32.mrf.mxu0
      %v5680 = vadd.f32 0.0, %v5679
      %v5681 = vpop.f32.mrf.mxu0
      %v5682 = vpop.f32.mrf.mxu0
      %v5683 = vadd.f32 0.0, %v5682
      %v5684 = vpop.f32.mrf.mxu0
      %5685 = vmatprep.mubr.bf16.mxu0 0
      %5686 = vmatmul.mubr.bf16.gmra.mxu0 %v5518
      %v5687 = vpop.f32.mrf.mxu0
      %v5688 = vadd.f32 0.0, %v5687
      %v5689 = vpop.f32.mrf.mxu0
      %v5690 = vpop.f32.mrf.mxu0
      %v5691 = vadd.f32 0.0, %v5690
      %v5692 = vpop.f32.mrf.mxu0
      %5693 = vmatprep.mubr.bf16.mxu0 0
      %5694 = vmatmul.mubr.bf16.gmra.mxu0 %v5520
      %v5695 = vpop.f32.mrf.mxu0
      %v5696 = vadd.f32 0.0, %v5695
      %v5697 = vpop.f32.mrf.mxu0
      %v5698 = vpop.f32.mrf.mxu0
      %v5699 = vadd.f32 0.0, %v5698
      %v5700 = vpop.f32.mrf.mxu0
      %5701 = vmatprep.mubr.bf16.mxu0 0
      %5702 = vmatmul.mubr.bf16.gmra.mxu0 %v5522
      %v5703 = vpop.f32.mrf.mxu0
      %v5704 = vadd.f32 0.0, %v5703
      %v5705 = vpop.f32.mrf.mxu0
      %v5706 = vpop.f32.mrf.mxu0
      %v5707 = vadd.f32 0.0, %v5706
      %v5708 = vpop.f32.mrf.mxu0
      %5709 = vmatprep.mubr.bf16.mxu0 0
      %5710 = vmatmul.mubr.bf16.gmra.mxu0 %v5524
      %v5711 = vpop.f32.mrf.mxu0
      %v5712 = vadd.f32 0.0, %v5711
      %v5713 = vpop.f32.mrf.mxu0
      %v5714 = vpop.f32.mrf.mxu0
      %v5715 = vadd.f32 0.0, %v5714
      %v5716 = vpop.f32.mrf.mxu0
      %5717 = vmatprep.mubr.bf16.mxu0 0
      %5718 = vmatmul.mubr.bf16.gmra.mxu0 %v5526
      %v5719 = vpop.f32.mrf.mxu0
      %v5720 = vadd.f32 0.0, %v5719
      %v5721 = vpop.f32.mrf.mxu0
      %v5722 = vpop.f32.mrf.mxu0
      %v5723 = vadd.f32 0.0, %v5722
      %v5724 = vpop.f32.mrf.mxu0
      %5725 = vmatprep.mubr.bf16.mxu0 0
      %5726 = vmatmul.mubr.bf16.gmra.mxu0 %v5528
      %v5727 = vpop.f32.mrf.mxu0
      %v5728 = vadd.f32 0.0, %v5727
      %v5729 = vpop.f32.mrf.mxu0
      %v5730 = vpop.f32.mrf.mxu0
      %v5731 = vadd.f32 0.0, %v5730
      %v5732 = vpop.f32.mrf.mxu0
      %5733 = vmatprep.mubr.bf16.mxu0 0
      %5734 = vmatmul.mubr.bf16.gmra.mxu0 %v5530
      %v5735 = vpop.f32.mrf.mxu0
      %v5736 = vadd.f32 0.0, %v5735
      %v5737 = vpop.f32.mrf.mxu0
      %v5738 = vpop.f32.mrf.mxu0
      %v5739 = vadd.f32 0.0, %v5738
      %v5740 = vpop.f32.mrf.mxu0
      %5741 = vmatprep.mubr.bf16.mxu0 0
      %5742 = vmatmul.mubr.bf16.gmra.mxu0 %v5532
      %v5743 = vpop.f32.mrf.mxu0
      %v5744 = vadd.f32 0.0, %v5743
      %v5745 = vpop.f32.mrf.mxu0
      %v5746 = vpop.f32.mrf.mxu0
      %v5747 = vadd.f32 0.0, %v5746
      %v5748 = vpop.f32.mrf.mxu0
      %5749 = vmatprep.mubr.bf16.mxu0 0
      %5750 = vmatmul.mubr.bf16.gmra.mxu0 %v5534
      %v5751 = vpop.f32.mrf.mxu0
      %v5752 = vadd.f32 0.0, %v5751
      %v5753 = vpop.f32.mrf.mxu0
      %v5754 = vpop.f32.mrf.mxu0
      %v5755 = vadd.f32 0.0, %v5754
      %v5756 = vpop.f32.mrf.mxu0
      %5757 = vmatprep.mubr.bf16.mxu0 0
      %5758 = vmatmul.mubr.bf16.gmra.mxu0 %v5536
      %v5759 = vpop.f32.mrf.mxu0
      %v5760 = vadd.f32 0.0, %v5759
      %v5761 = vpop.f32.mrf.mxu0
      %v5762 = vpop.f32.mrf.mxu0
      %v5763 = vadd.f32 0.0, %v5762
      %v5764 = vpop.f32.mrf.mxu0
      %5765 = vmatprep.mubr.bf16.mxu0 0
      %5766 = vmatmul.mubr.bf16.gmra.mxu0 %v5538
      %v5767 = vpop.f32.mrf.mxu0
      %v5768 = vadd.f32 0.0, %v5767
      %v5769 = vpop.f32.mrf.mxu0
      %v5770 = vpop.f32.mrf.mxu0
      %v5771 = vadd.f32 0.0, %v5770
      %v5772 = vpop.f32.mrf.mxu0
      %5773 = vmatprep.mubr.bf16.mxu0 0
      %5774 = vmatmul.mubr.bf16.gmra.mxu0 %v5537
      %v5775 = vpop.f32.mrf.mxu0
      %v5776 = vadd.f32 0.0, %v5775
      %v5777 = vpop.f32.mrf.mxu0
      %v5778 = vpop.f32.mrf.mxu0
      %v5779 = vadd.f32 0.0, %v5778
      %v5780 = vpop.f32.mrf.mxu0
      %5781 = vdwg.mxu0
      %v5782 = vadd.f32 %v5340, %v5640
      %v5783 = vadd.f32 %v5343, %v5643
      %v5784 = vadd.f32 %v5348, %v5648
      %v5785 = vadd.f32 %v5351, %v5651
      %v5786 = vadd.f32 %v5356, %v5656
      %v5787 = vadd.f32 %v5359, %v5659
      %v5788 = vadd.f32 %v5364, %v5664
      %v5789 = vadd.f32 %v5367, %v5667
      %v5790 = vadd.f32 %v5372, %v5672
      %v5791 = vadd.f32 %v5375, %v5675
      %v5792 = vadd.f32 %v5380, %v5680
      %v5793 = vadd.f32 %v5383, %v5683
      %v5794 = vadd.f32 %v5388, %v5688
      %v5795 = vadd.f32 %v5391, %v5691
      %v5796 = vadd.f32 %v5396, %v5696
      %v5797 = vadd.f32 %v5399, %v5699
      %v5798 = vadd.f32 %v5404, %v5704
      %v5799 = vadd.f32 %v5407, %v5707
      %v5800 = vadd.f32 %v5412, %v5712
      %v5801 = vadd.f32 %v5415, %v5715
      %v5802 = vadd.f32 %v5420, %v5720
      %v5803 = vadd.f32 %v5423, %v5723
      %v5804 = vadd.f32 %v5428, %v5728
      %v5805 = vadd.f32 %v5431, %v5731
      %v5806 = vadd.f32 %v5436, %v5736
      %v5807 = vadd.f32 %v5439, %v5739
      %v5808 = vadd.f32 %v5444, %v5744
      %v5809 = vadd.f32 %v5447, %v5747
      %v5810 = vadd.f32 %v5452, %v5752
      %v5811 = vadd.f32 %v5455, %v5755
      %v5812 = vadd.f32 %v5460, %v5760
      %v5813 = vadd.f32 %v5463, %v5763
      %v5814 = vadd.f32 %v5468, %v5768
      %v5815 = vadd.f32 %v5471, %v5771
      %v5816 = vadd.f32 %v5476, %v5776
      %v5817 = vadd.f32 %v5479, %v5779
      %v5818 = vld [vmem:[#allocation2 + $0x8] sm:$0xe]
      %v5819 = vld [vmem:[#allocation2 + $0xc] sm:$0xf]
      %v5820 = vld [vmem:[#allocation2 + $0x10] sm:$0xf]
      %v5821 = vld [vmem:[#allocation2 + $0x14] sm:$0xf]
      %v5822 = vld [vmem:[#allocation2 + $0x18] sm:$0xf]
      %v5823 = vld [vmem:[#allocation2 + $0x1c] sm:$0xf]
      %v5824 = vld [vmem:[#allocation2 + $0x20] sm:$0xf]
      %v5825 = vld [vmem:[#allocation2 + $0x24] sm:$0xf]
      %v5826 = vld [vmem:[#allocation2 + $0x28] sm:$0xf]
      %v5827 = vld [vmem:[#allocation2 + $0x2c] sm:$0xf]
      %v5828 = vld [vmem:[#allocation2 + $0x30] sm:$0xf]
      %v5829 = vld [vmem:[#allocation2 + $0x34] sm:$0xf]
      %v5830 = vld [vmem:[#allocation2 + $0x38] sm:$0xf]
      %v5831 = vld [vmem:[#allocation2 + $0x3c] sm:$0xf]
      %v5832 = vld [vmem:[#allocation2 + $0x40] sm:$0xf]
      %v5833 = vld [vmem:[#allocation2 + $0x44] sm:$0xf]
      %v5834 = vld [vmem:[#allocation2 + $0x48] sm:$0xf]
      %v5835 = vld [vmem:[#allocation2 + $0x4c] sm:$0xf]
      %v5836 = vld [vmem:[#allocation2 + $0x50] sm:$0xf]
      %v5837 = vld [vmem:[#allocation2 + $0x54] sm:$0xf]
      %v5838 = vld [vmem:[#allocation2 + $0x58] sm:$0xf]
      %v5839 = vld [vmem:[#allocation2 + $0x5c] sm:$0xf]
      %v5840 = vld [vmem:[#allocation2 + $0x60] sm:$0xf]
      %v5841 = vld [vmem:[#allocation2 + $0x64] sm:$0xf]
      %v5842 = vld [vmem:[#allocation2 + $0x68] sm:$0xf]
      %v5843 = vld [vmem:[#allocation2 + $0x6c] sm:$0xf]
      %v5844 = vld [vmem:[#allocation2 + $0x70] sm:$0xf]
      %v5845 = vld [vmem:[#allocation2 + $0x74] sm:$0xf]
      %v5846 = vld [vmem:[#allocation2 + $0x78] sm:$0xf]
      %v5847 = vld [vmem:[#allocation2 + $0x7c] sm:$0xf]
      %v5848 = vld [vmem:[#allocation2 + $0x80] sm:$0xf]
      %v5849 = vld [vmem:[#allocation2 + $0x84] sm:$0xf]
      %v5850 = vld [vmem:[#allocation2 + $0x88] sm:$0xf]
      %v5851 = vld [vmem:[#allocation2 + $0x8c] sm:$0xf]
      %v5852 = vld [vmem:[#allocation2 + $0x90] sm:$0xf]
      %v5853 = vld [vmem:[#allocation2 + $0x94] sm:$0xf]
      %s5854 = scalar_lea.vmem %s7, 192
      %v5855 = vld [vmem:[%s5854] sm:$0xf]
      %v5856 = vld [vmem:[%s5854 + $0x4] sm:$0xf]
      %v5857 = vld [vmem:[%s5854 + $0x8] sm:$0xf]
      %v5858 = vld [vmem:[%s5854 + $0xc] sm:$0xf]
      %v5859 = vld [vmem:[%s5854 + $0x10] sm:$0xf]
      %v5860 = vld [vmem:[%s5854 + $0x14] sm:$0xf]
      %v5861 = vld [vmem:[%s5854 + $0x18] sm:$0xf]
      %v5862 = vld [vmem:[%s5854 + $0x1c] sm:$0xf]
      %v5863 = vld [vmem:[%s5854 + $0x20] sm:$0xf]
      %v5864 = vld [vmem:[%s5854 + $0x24] sm:$0xf]
      %v5865 = vld [vmem:[%s5854 + $0x28] sm:$0xf]
      %v5866 = vld [vmem:[%s5854 + $0x2c] sm:$0xf]
      %v5867 = vld [vmem:[%s5854 + $0x30] sm:$0xf]
      %v5868 = vld [vmem:[%s5854 + $0x34] sm:$0xf]
      %v5869 = vld [vmem:[%s5854 + $0x38] sm:$0xf]
      %v5870 = vld [vmem:[%s5854 + $0x3c] sm:$0xf]
      %v5907 = vunpack.c.l.b16 %v5818
      %v5908 = vunpack.c.l.b16 %v5819
      %v5909 = vunpack.c.l.b16 %v5820
      %v5910 = vunpack.c.l.b16 %v5821
      %v5911 = vunpack.c.l.b16 %v5822
      %v5912 = vunpack.c.l.b16 %v5823
      %v5913 = vunpack.c.l.b16 %v5824
      %v5914 = vunpack.c.l.b16 %v5825
      %v5915 = vunpack.c.l.b16 %v5826
      %v5916 = vunpack.c.l.b16 %v5827
      %v5917 = vunpack.c.l.b16 %v5828
      %v5918 = vunpack.c.l.b16 %v5829
      %v5919 = vunpack.c.l.b16 %v5830
      %v5920 = vunpack.c.l.b16 %v5831
      %v5921 = vunpack.c.l.b16 %v5832
      %v5922 = vunpack.c.l.b16 %v5833
      %v5923 = vunpack.c.l.b16 %v5834
      %v5924 = vunpack.c.l.b16 %v5835
      %v5925 = vunpack.c.l.b16 %v5836
      %v5926 = vunpack.c.l.b16 %v5837
      %v5927 = vunpack.c.l.b16 %v5838
      %v5928 = vunpack.c.l.b16 %v5839
      %v5929 = vunpack.c.l.b16 %v5840
      %v5930 = vunpack.c.l.b16 %v5841
      %v5931 = vunpack.c.l.b16 %v5842
      %v5932 = vunpack.c.l.b16 %v5843
      %v5933 = vunpack.c.l.b16 %v5844
      %v5934 = vunpack.c.l.b16 %v5845
      %v5935 = vunpack.c.l.b16 %v5846
      %v5936 = vunpack.c.l.b16 %v5847
      %v5937 = vunpack.c.l.b16 %v5848
      %v5938 = vunpack.c.l.b16 %v5849
      %v5939 = vunpack.c.l.b16 %v5850
      %v5940 = vunpack.c.l.b16 %v5851
      %v5941 = vunpack.c.l.b16 %v5852
      %v5942 = vunpack.c.l.b16 %v5853
      %v5943 = vpack.c.b16 %v5908, %v5907
      %v5944 = vpack.c.b16 %v5910, %v5909
      %v5945 = vpack.c.b16 %v5912, %v5911
      %v5946 = vpack.c.b16 %v5914, %v5913
      %v5947 = vpack.c.b16 %v5916, %v5915
      %v5948 = vpack.c.b16 %v5918, %v5917
      %v5949 = vpack.c.b16 %v5920, %v5919
      %v5950 = vpack.c.b16 %v5922, %v5921
      %v5951 = vpack.c.b16 %v5924, %v5923
      %v5952 = vpack.c.b16 %v5926, %v5925
      %v5953 = vpack.c.b16 %v5928, %v5927
      %v5954 = vpack.c.b16 %v5930, %v5929
      %v5955 = vpack.c.b16 %v5932, %v5931
      %v5956 = vpack.c.b16 %v5934, %v5933
      %v5957 = vpack.c.b16 %v5936, %v5935
      %v5958 = vpack.c.b16 %v5938, %v5937
      %v5959 = vpack.c.b16 %v5940, %v5939
      %v5960 = vpack.c.b16 %v5942, %v5941
      %v5961 = vrot.slane %v5943, 1
      %v5962 = vrot.slane %v5944, 1
      %v5963 = vsel %vm5503, %v5961, %v5962
      %v5964 = vrot.slane %v5945, 1
      %v5965 = vsel %vm5503, %v5962, %v5964
      %v5966 = vrot.slane %v5946, 1
      %v5967 = vsel %vm5503, %v5964, %v5966
      %v5968 = vrot.slane %v5947, 1
      %v5969 = vsel %vm5503, %v5966, %v5968
      %v5970 = vrot.slane %v5948, 1
      %v5971 = vsel %vm5503, %v5968, %v5970
      %v5972 = vrot.slane %v5949, 1
      %v5973 = vsel %vm5503, %v5970, %v5972
      %v5974 = vrot.slane %v5950, 1
      %v5975 = vsel %vm5503, %v5972, %v5974
      %v5976 = vrot.slane %v5951, 1
      %v5977 = vsel %vm5503, %v5974, %v5976
      %v5978 = vrot.slane %v5952, 1
      %v5979 = vsel %vm5503, %v5976, %v5978
      %v5980 = vrot.slane %v5953, 1
      %v5981 = vsel %vm5503, %v5978, %v5980
      %v5982 = vrot.slane %v5954, 1
      %v5983 = vsel %vm5503, %v5980, %v5982
      %v5984 = vrot.slane %v5955, 1
      %v5985 = vsel %vm5503, %v5982, %v5984
      %v5986 = vrot.slane %v5956, 1
      %v5987 = vsel %vm5503, %v5984, %v5986
      %v5988 = vrot.slane %v5957, 1
      %v5989 = vsel %vm5503, %v5986, %v5988
      %v5990 = vrot.slane %v5958, 1
      %v5991 = vsel %vm5503, %v5988, %v5990
      %v5992 = vrot.slane %v5959, 1
      %v5993 = vsel %vm5503, %v5990, %v5992
      %v5994 = vrot.slane %v5960, 1
      %v5995 = vsel %vm5503, %v5992, %v5994
      %v6030 = vunpack.c.l.b16 %v5855
      %v6031 = vunpack.c.l.b16 %v5856
      %v6032 = vunpack.c.l.b16 %v5857
      %v6033 = vunpack.c.l.b16 %v5858
      %v6034 = vunpack.c.l.b16 %v5859
      %v6035 = vunpack.c.l.b16 %v5860
      %v6036 = vunpack.c.l.b16 %v5861
      %v6037 = vunpack.c.l.b16 %v5862
      %v6038 = vunpack.c.l.b16 %v5863
      %v6039 = vunpack.c.l.b16 %v5864
      %v6040 = vunpack.c.l.b16 %v5865
      %v6041 = vunpack.c.l.b16 %v5866
      %v6042 = vunpack.c.l.b16 %v5867
      %v6043 = vunpack.c.l.b16 %v5868
      %v6044 = vunpack.c.l.b16 %v5869
      %v6045 = vunpack.c.l.b16 %v5870
      %v6046 = vpack.c.b16 %v6031, %v6030
      %v6047 = vpack.c.b16 %v6033, %v6032
      %v6048 = vpack.c.b16 %v6035, %v6034
      %v6049 = vpack.c.b16 %v6037, %v6036
      %v6050 = vpack.c.b16 %v6039, %v6038
      %v6051 = vpack.c.b16 %v6041, %v6040
      %v6052 = vpack.c.b16 %v6043, %v6042
      %v6053 = vpack.c.b16 %v6045, %v6044
      %6062 = vmatprep.subr.bf16.mxu0 0
      %6063 = vmatpush1.bf16.msra.mxu0 %v6053
      %6064 = vmatprep.subr.bf16.mxu0 0
      %6065 = vmatpush1.bf16.msra.mxu0 %v6052
      %6066 = vmatprep.subr.bf16.mxu0 0
      %6067 = vmatpush1.bf16.msra.mxu0 %v6051
      %6068 = vmatprep.subr.bf16.mxu0 0
      %6069 = vmatpush1.bf16.msra.mxu0 %v6050
      %6070 = vmatprep.subr.bf16.mxu0 0
      %6071 = vmatpush1.bf16.msra.mxu0 %v6049
      %6072 = vmatprep.subr.bf16.mxu0 0
      %6073 = vmatpush1.bf16.msra.mxu0 %v6048
      %6074 = vmatprep.subr.bf16.mxu0 0
      %6075 = vmatpush1.bf16.msra.mxu0 %v6047
      %6076 = vmatprep.subr.bf16.mxu0 0
      %6077 = vmatpush1.bf16.msra.mxu0 %v6046
      %6078 = vmatprep.subr.bf16.mxu0 0
      %6079 = vmatpush2.bf16.msra.mxu0 0
      %6080 = vmatprep.subr.bf16.mxu0 0
      %6081 = vmatpush2.bf16.msra.mxu0 0
      %6082 = vmatprep.subr.bf16.mxu0 0
      %6083 = vmatpush2.bf16.msra.mxu0 0
      %6084 = vmatprep.subr.bf16.mxu0 0
      %6085 = vmatpush2.bf16.msra.mxu0 0
      %6086 = vmatprep.subr.bf16.mxu0 0
      %6087 = vmatpush2.bf16.msra.mxu0 0
      %6088 = vmatprep.subr.bf16.mxu0 0
      %6089 = vmatpush2.bf16.msra.mxu0 0
      %6090 = vmatprep.subr.bf16.mxu0 0
      %6091 = vmatpush2.bf16.msra.mxu0 0
      %6092 = vmatprep.subr.bf16.mxu0 0
      %6093 = vmatpush2.bf16.msra.mxu0 0
      %6094 = vmatprep.mubr.bf16.mxu0 0
      %6095 = vmatmul.mubr.bf16.gmra.mxu0 %v5963
      %v6096 = vpop.f32.mrf.mxu0
      %v6097 = vadd.f32 0.0, %v6096
      %v6098 = vpop.f32.mrf.mxu0
      %v6099 = vpop.f32.mrf.mxu0
      %v6100 = vadd.f32 0.0, %v6099
      %v6101 = vpop.f32.mrf.mxu0
      %6102 = vmatprep.mubr.bf16.mxu0 0
      %6103 = vmatmul.mubr.bf16.gmra.mxu0 %v5965
      %v6104 = vpop.f32.mrf.mxu0
      %v6105 = vadd.f32 0.0, %v6104
      %v6106 = vpop.f32.mrf.mxu0
      %v6107 = vpop.f32.mrf.mxu0
      %v6108 = vadd.f32 0.0, %v6107
      %v6109 = vpop.f32.mrf.mxu0
      %6110 = vmatprep.mubr.bf16.mxu0 0
      %6111 = vmatmul.mubr.bf16.gmra.mxu0 %v5967
      %v6112 = vpop.f32.mrf.mxu0
      %v6113 = vadd.f32 0.0, %v6112
      %v6114 = vpop.f32.mrf.mxu0
      %v6115 = vpop.f32.mrf.mxu0
      %v6116 = vadd.f32 0.0, %v6115
      %v6117 = vpop.f32.mrf.mxu0
      %6118 = vmatprep.mubr.bf16.mxu0 0
      %6119 = vmatmul.mubr.bf16.gmra.mxu0 %v5969
      %v6120 = vpop.f32.mrf.mxu0
      %v6121 = vadd.f32 0.0, %v6120
      %v6122 = vpop.f32.mrf.mxu0
      %v6123 = vpop.f32.mrf.mxu0
      %v6124 = vadd.f32 0.0, %v6123
      %v6125 = vpop.f32.mrf.mxu0
      %6126 = vmatprep.mubr.bf16.mxu0 0
      %6127 = vmatmul.mubr.bf16.gmra.mxu0 %v5971
      %v6128 = vpop.f32.mrf.mxu0
      %v6129 = vadd.f32 0.0, %v6128
      %v6130 = vpop.f32.mrf.mxu0
      %v6131 = vpop.f32.mrf.mxu0
      %v6132 = vadd.f32 0.0, %v6131
      %v6133 = vpop.f32.mrf.mxu0
      %6134 = vmatprep.mubr.bf16.mxu0 0
      %6135 = vmatmul.mubr.bf16.gmra.mxu0 %v5973
      %v6136 = vpop.f32.mrf.mxu0
      %v6137 = vadd.f32 0.0, %v6136
      %v6138 = vpop.f32.mrf.mxu0
      %v6139 = vpop.f32.mrf.mxu0
      %v6140 = vadd.f32 0.0, %v6139
      %v6141 = vpop.f32.mrf.mxu0
      %6142 = vmatprep.mubr.bf16.mxu0 0
      %6143 = vmatmul.mubr.bf16.gmra.mxu0 %v5975
      %v6144 = vpop.f32.mrf.mxu0
      %v6145 = vadd.f32 0.0, %v6144
      %v6146 = vpop.f32.mrf.mxu0
      %v6147 = vpop.f32.mrf.mxu0
      %v6148 = vadd.f32 0.0, %v6147
      %v6149 = vpop.f32.mrf.mxu0
      %6150 = vmatprep.mubr.bf16.mxu0 0
      %6151 = vmatmul.mubr.bf16.gmra.mxu0 %v5977
      %v6152 = vpop.f32.mrf.mxu0
      %v6153 = vadd.f32 0.0, %v6152
      %v6154 = vpop.f32.mrf.mxu0
      %v6155 = vpop.f32.mrf.mxu0
      %v6156 = vadd.f32 0.0, %v6155
      %v6157 = vpop.f32.mrf.mxu0
      %6158 = vmatprep.mubr.bf16.mxu0 0
      %6159 = vmatmul.mubr.bf16.gmra.mxu0 %v5979
      %v6160 = vpop.f32.mrf.mxu0
      %v6161 = vadd.f32 0.0, %v6160
      %v6162 = vpop.f32.mrf.mxu0
      %v6163 = vpop.f32.mrf.mxu0
      %v6164 = vadd.f32 0.0, %v6163
      %v6165 = vpop.f32.mrf.mxu0
      %6166 = vmatprep.mubr.bf16.mxu0 0
      %6167 = vmatmul.mubr.bf16.gmra.mxu0 %v5981
      %v6168 = vpop.f32.mrf.mxu0
      %v6169 = vadd.f32 0.0, %v6168
      %v6170 = vpop.f32.mrf.mxu0
      %v6171 = vpop.f32.mrf.mxu0
      %v6172 = vadd.f32 0.0, %v6171
      %v6173 = vpop.f32.mrf.mxu0
      %6174 = vmatprep.mubr.bf16.mxu0 0
      %6175 = vmatmul.mubr.bf16.gmra.mxu0 %v5983
      %v6176 = vpop.f32.mrf.mxu0
      %v6177 = vadd.f32 0.0, %v6176
      %v6178 = vpop.f32.mrf.mxu0
      %v6179 = vpop.f32.mrf.mxu0
      %v6180 = vadd.f32 0.0, %v6179
      %v6181 = vpop.f32.mrf.mxu0
      %6182 = vmatprep.mubr.bf16.mxu0 0
      %6183 = vmatmul.mubr.bf16.gmra.mxu0 %v5985
      %v6184 = vpop.f32.mrf.mxu0
      %v6185 = vadd.f32 0.0, %v6184
      %v6186 = vpop.f32.mrf.mxu0
      %v6187 = vpop.f32.mrf.mxu0
      %v6188 = vadd.f32 0.0, %v6187
      %v6189 = vpop.f32.mrf.mxu0
      %6190 = vmatprep.mubr.bf16.mxu0 0
      %6191 = vmatmul.mubr.bf16.gmra.mxu0 %v5987
      %v6192 = vpop.f32.mrf.mxu0
      %v6193 = vadd.f32 0.0, %v6192
      %v6194 = vpop.f32.mrf.mxu0
      %v6195 = vpop.f32.mrf.mxu0
      %v6196 = vadd.f32 0.0, %v6195
      %v6197 = vpop.f32.mrf.mxu0
      %6198 = vmatprep.mubr.bf16.mxu0 0
      %6199 = vmatmul.mubr.bf16.gmra.mxu0 %v5989
      %v6200 = vpop.f32.mrf.mxu0
      %v6201 = vadd.f32 0.0, %v6200
      %v6202 = vpop.f32.mrf.mxu0
      %v6203 = vpop.f32.mrf.mxu0
      %v6204 = vadd.f32 0.0, %v6203
      %v6205 = vpop.f32.mrf.mxu0
      %6206 = vmatprep.mubr.bf16.mxu0 0
      %6207 = vmatmul.mubr.bf16.gmra.mxu0 %v5991
      %v6208 = vpop.f32.mrf.mxu0
      %v6209 = vadd.f32 0.0, %v6208
      %v6210 = vpop.f32.mrf.mxu0
      %v6211 = vpop.f32.mrf.mxu0
      %v6212 = vadd.f32 0.0, %v6211
      %v6213 = vpop.f32.mrf.mxu0
      %6214 = vmatprep.mubr.bf16.mxu0 0
      %6215 = vmatmul.mubr.bf16.gmra.mxu0 %v5993
      %v6216 = vpop.f32.mrf.mxu0
      %v6217 = vadd.f32 0.0, %v6216
      %v6218 = vpop.f32.mrf.mxu0
      %v6219 = vpop.f32.mrf.mxu0
      %v6220 = vadd.f32 0.0, %v6219
      %v6221 = vpop.f32.mrf.mxu0
      %6222 = vmatprep.mubr.bf16.mxu0 0
      %6223 = vmatmul.mubr.bf16.gmra.mxu0 %v5995
      %v6224 = vpop.f32.mrf.mxu0
      %v6225 = vadd.f32 0.0, %v6224
      %v6226 = vpop.f32.mrf.mxu0
      %v6227 = vpop.f32.mrf.mxu0
      %v6228 = vadd.f32 0.0, %v6227
      %v6229 = vpop.f32.mrf.mxu0
      %6230 = vmatprep.mubr.bf16.mxu0 0
      %6231 = vmatmul.mubr.bf16.gmra.mxu0 %v5994
      %v6232 = vpop.f32.mrf.mxu0
      %v6233 = vadd.f32 0.0, %v6232
      %v6234 = vpop.f32.mrf.mxu0
      %v6235 = vpop.f32.mrf.mxu0
      %v6236 = vadd.f32 0.0, %v6235
      %v6237 = vpop.f32.mrf.mxu0
      %6238 = vdwg.mxu0
      %v6239 = vadd.f32 %v5782, %v6097
      %v6240 = vadd.f32 %v5783, %v6100
      %v6241 = vadd.f32 %v5784, %v6105
      %v6242 = vadd.f32 %v5785, %v6108
      %v6243 = vadd.f32 %v5786, %v6113
      %v6244 = vadd.f32 %v5787, %v6116
      %v6245 = vadd.f32 %v5788, %v6121
      %v6246 = vadd.f32 %v5789, %v6124
      %v6247 = vadd.f32 %v5790, %v6129
      %v6248 = vadd.f32 %v5791, %v6132
      %v6249 = vadd.f32 %v5792, %v6137
      %v6250 = vadd.f32 %v5793, %v6140
      %v6251 = vadd.f32 %v5794, %v6145
      %v6252 = vadd.f32 %v5795, %v6148
      %v6253 = vadd.f32 %v5796, %v6153
      %v6254 = vadd.f32 %v5797, %v6156
      %v6255 = vadd.f32 %v5798, %v6161
      %v6256 = vadd.f32 %v5799, %v6164
      %v6257 = vadd.f32 %v5800, %v6169
      %v6258 = vadd.f32 %v5801, %v6172
      %v6259 = vadd.f32 %v5802, %v6177
      %v6260 = vadd.f32 %v5803, %v6180
      %v6261 = vadd.f32 %v5804, %v6185
      %v6262 = vadd.f32 %v5805, %v6188
      %v6263 = vadd.f32 %v5806, %v6193
      %v6264 = vadd.f32 %v5807, %v6196
      %v6265 = vadd.f32 %v5808, %v6201
      %v6266 = vadd.f32 %v5809, %v6204
      %v6267 = vadd.f32 %v5810, %v6209
      %v6268 = vadd.f32 %v5811, %v6212
      %v6269 = vadd.f32 %v5812, %v6217
      %v6270 = vadd.f32 %v5813, %v6220
      %v6271 = vadd.f32 %v5814, %v6225
      %v6272 = vadd.f32 %v5815, %v6228
      %v6273 = vadd.f32 %v5816, %v6233
      %v6274 = vadd.f32 %v5817, %v6236
      %v6275 = vld [vmem:[#allocation2 + $0x8] sm:$0xe]
      %v6276 = vld [vmem:[#allocation2 + $0xc] sm:$0xf]
      %v6277 = vld [vmem:[#allocation2 + $0x10] sm:$0xf]
      %v6278 = vld [vmem:[#allocation2 + $0x14] sm:$0xf]
      %v6279 = vld [vmem:[#allocation2 + $0x18] sm:$0xf]
      %v6280 = vld [vmem:[#allocation2 + $0x1c] sm:$0xf]
      %v6281 = vld [vmem:[#allocation2 + $0x20] sm:$0xf]
      %v6282 = vld [vmem:[#allocation2 + $0x24] sm:$0xf]
      %v6283 = vld [vmem:[#allocation2 + $0x28] sm:$0xf]
      %v6284 = vld [vmem:[#allocation2 + $0x2c] sm:$0xf]
      %v6285 = vld [vmem:[#allocation2 + $0x30] sm:$0xf]
      %v6286 = vld [vmem:[#allocation2 + $0x34] sm:$0xf]
      %v6287 = vld [vmem:[#allocation2 + $0x38] sm:$0xf]
      %v6288 = vld [vmem:[#allocation2 + $0x3c] sm:$0xf]
      %v6289 = vld [vmem:[#allocation2 + $0x40] sm:$0xf]
      %v6290 = vld [vmem:[#allocation2 + $0x44] sm:$0xf]
      %v6291 = vld [vmem:[#allocation2 + $0x48] sm:$0xf]
      %v6292 = vld [vmem:[#allocation2 + $0x4c] sm:$0xf]
      %v6293 = vld [vmem:[#allocation2 + $0x50] sm:$0xf]
      %v6294 = vld [vmem:[#allocation2 + $0x54] sm:$0xf]
      %v6295 = vld [vmem:[#allocation2 + $0x58] sm:$0xf]
      %v6296 = vld [vmem:[#allocation2 + $0x5c] sm:$0xf]
      %v6297 = vld [vmem:[#allocation2 + $0x60] sm:$0xf]
      %v6298 = vld [vmem:[#allocation2 + $0x64] sm:$0xf]
      %v6299 = vld [vmem:[#allocation2 + $0x68] sm:$0xf]
      %v6300 = vld [vmem:[#allocation2 + $0x6c] sm:$0xf]
      %v6301 = vld [vmem:[#allocation2 + $0x70] sm:$0xf]
      %v6302 = vld [vmem:[#allocation2 + $0x74] sm:$0xf]
      %v6303 = vld [vmem:[#allocation2 + $0x78] sm:$0xf]
      %v6304 = vld [vmem:[#allocation2 + $0x7c] sm:$0xf]
      %v6305 = vld [vmem:[#allocation2 + $0x80] sm:$0xf]
      %v6306 = vld [vmem:[#allocation2 + $0x84] sm:$0xf]
      %v6307 = vld [vmem:[#allocation2 + $0x88] sm:$0xf]
      %v6308 = vld [vmem:[#allocation2 + $0x8c] sm:$0xf]
      %v6309 = vld [vmem:[#allocation2 + $0x90] sm:$0xf]
      %v6310 = vld [vmem:[#allocation2 + $0x94] sm:$0xf]
      %v6311 = vld [vmem:[#allocation2 + $0x98] sm:$0x1]
      %s6312 = scalar_lea.vmem %s7, 256
      %v6313 = vld [vmem:[%s6312] sm:$0xf]
      %v6314 = vld [vmem:[%s6312 + $0x4] sm:$0xf]
      %v6315 = vld [vmem:[%s6312 + $0x8] sm:$0xf]
      %v6316 = vld [vmem:[%s6312 + $0xc] sm:$0xf]
      %v6317 = vld [vmem:[%s6312 + $0x10] sm:$0xf]
      %v6318 = vld [vmem:[%s6312 + $0x14] sm:$0xf]
      %v6319 = vld [vmem:[%s6312 + $0x18] sm:$0xf]
      %v6320 = vld [vmem:[%s6312 + $0x1c] sm:$0xf]
      %v6321 = vld [vmem:[%s6312 + $0x20] sm:$0xf]
      %v6322 = vld [vmem:[%s6312 + $0x24] sm:$0xf]
      %v6323 = vld [vmem:[%s6312 + $0x28] sm:$0xf]
      %v6324 = vld [vmem:[%s6312 + $0x2c] sm:$0xf]
      %v6325 = vld [vmem:[%s6312 + $0x30] sm:$0xf]
      %v6326 = vld [vmem:[%s6312 + $0x34] sm:$0xf]
      %v6327 = vld [vmem:[%s6312 + $0x38] sm:$0xf]
      %v6328 = vld [vmem:[%s6312 + $0x3c] sm:$0xf]
      %v6366 = vunpack.c.l.b16 %v6275
      %v6367 = vunpack.c.l.b16 %v6276
      %v6368 = vunpack.c.l.b16 %v6277
      %v6369 = vunpack.c.l.b16 %v6278
      %v6370 = vunpack.c.l.b16 %v6279
      %v6371 = vunpack.c.l.b16 %v6280
      %v6372 = vunpack.c.l.b16 %v6281
      %v6373 = vunpack.c.l.b16 %v6282
      %v6374 = vunpack.c.l.b16 %v6283
      %v6375 = vunpack.c.l.b16 %v6284
      %v6376 = vunpack.c.l.b16 %v6285
      %v6377 = vunpack.c.l.b16 %v6286
      %v6378 = vunpack.c.l.b16 %v6287
      %v6379 = vunpack.c.l.b16 %v6288
      %v6380 = vunpack.c.l.b16 %v6289
      %v6381 = vunpack.c.l.b16 %v6290
      %v6382 = vunpack.c.l.b16 %v6291
      %v6383 = vunpack.c.l.b16 %v6292
      %v6384 = vunpack.c.l.b16 %v6293
      %v6385 = vunpack.c.l.b16 %v6294
      %v6386 = vunpack.c.l.b16 %v6295
      %v6387 = vunpack.c.l.b16 %v6296
      %v6388 = vunpack.c.l.b16 %v6297
      %v6389 = vunpack.c.l.b16 %v6298
      %v6390 = vunpack.c.l.b16 %v6299
      %v6391 = vunpack.c.l.b16 %v6300
      %v6392 = vunpack.c.l.b16 %v6301
      %v6393 = vunpack.c.l.b16 %v6302
      %v6394 = vunpack.c.l.b16 %v6303
      %v6395 = vunpack.c.l.b16 %v6304
      %v6396 = vunpack.c.l.b16 %v6305
      %v6397 = vunpack.c.l.b16 %v6306
      %v6398 = vunpack.c.l.b16 %v6307
      %v6399 = vunpack.c.l.b16 %v6308
      %v6400 = vunpack.c.l.b16 %v6309
      %v6401 = vunpack.c.l.b16 %v6310
      %v6402 = vunpack.c.l.b16 %v6311
      %v6403 = vpack.c.b16 %v6367, %v6366
      %v6404 = vpack.c.b16 %v6369, %v6368
      %v6405 = vpack.c.b16 %v6371, %v6370
      %v6406 = vpack.c.b16 %v6373, %v6372
      %v6407 = vpack.c.b16 %v6375, %v6374
      %v6408 = vpack.c.b16 %v6377, %v6376
      %v6409 = vpack.c.b16 %v6379, %v6378
      %v6410 = vpack.c.b16 %v6381, %v6380
      %v6411 = vpack.c.b16 %v6383, %v6382
      %v6412 = vpack.c.b16 %v6385, %v6384
      %v6413 = vpack.c.b16 %v6387, %v6386
      %v6414 = vpack.c.b16 %v6389, %v6388
      %v6415 = vpack.c.b16 %v6391, %v6390
      %v6416 = vpack.c.b16 %v6393, %v6392
      %v6417 = vpack.c.b16 %v6395, %v6394
      %v6418 = vpack.c.b16 %v6397, %v6396
      %v6419 = vpack.c.b16 %v6399, %v6398
      %v6420 = vpack.c.b16 %v6401, %v6400
      %v6421 = vpack.c.b16 %v6402, %v6402
      %vm6422 = vsmask.f32 6400
      %v6424 = vshrl.u32 %v6403, 16
      %v6426 = vrot.slane %v6424, 1
      %v6427 = vshll.u32 %v6403, 16
      %v6429 = vrot.slane %v6427, 2
      %v6430 = vor.u32 %v6426, %v6429
      %v6432 = vshrl.u32 %v6404, 16
      %v6434 = vrot.slane %v6432, 1
      %v6435 = vshll.u32 %v6404, 16
      %v6437 = vrot.slane %v6435, 2
      %v6438 = vor.u32 %v6434, %v6437
      %v6439 = vsel %vm6422, %v6430, %v6438
      %v6441 = vshrl.u32 %v6405, 16
      %v6443 = vrot.slane %v6441, 1
      %v6444 = vshll.u32 %v6405, 16
      %v6446 = vrot.slane %v6444, 2
      %v6447 = vor.u32 %v6443, %v6446
      %v6448 = vsel %vm6422, %v6438, %v6447
      %v6450 = vshrl.u32 %v6406, 16
      %v6452 = vrot.slane %v6450, 1
      %v6453 = vshll.u32 %v6406, 16
      %v6455 = vrot.slane %v6453, 2
      %v6456 = vor.u32 %v6452, %v6455
      %v6457 = vsel %vm6422, %v6447, %v6456
      %v6459 = vshrl.u32 %v6407, 16
      %v6461 = vrot.slane %v6459, 1
      %v6462 = vshll.u32 %v6407, 16
      %v6464 = vrot.slane %v6462, 2
      %v6465 = vor.u32 %v6461, %v6464
      %v6466 = vsel %vm6422, %v6456, %v6465
      %v6468 = vshrl.u32 %v6408, 16
      %v6470 = vrot.slane %v6468, 1
      %v6471 = vshll.u32 %v6408, 16
      %v6473 = vrot.slane %v6471, 2
      %v6474 = vor.u32 %v6470, %v6473
      %v6475 = vsel %vm6422, %v6465, %v6474
      %v6477 = vshrl.u32 %v6409, 16
      %v6479 = vrot.slane %v6477, 1
      %v6480 = vshll.u32 %v6409, 16
      %v6482 = vrot.slane %v6480, 2
      %v6483 = vor.u32 %v6479, %v6482
      %v6484 = vsel %vm6422, %v6474, %v6483
      %v6486 = vshrl.u32 %v6410, 16
      %v6488 = vrot.slane %v6486, 1
      %v6489 = vshll.u32 %v6410, 16
      %v6491 = vrot.slane %v6489, 2
      %v6492 = vor.u32 %v6488, %v6491
      %v6493 = vsel %vm6422, %v6483, %v6492
      %v6495 = vshrl.u32 %v6411, 16
      %v6497 = vrot.slane %v6495, 1
      %v6498 = vshll.u32 %v6411, 16
      %v6500 = vrot.slane %v6498, 2
      %v6501 = vor.u32 %v6497, %v6500
      %v6502 = vsel %vm6422, %v6492, %v6501
      %v6504 = vshrl.u32 %v6412, 16
      %v6506 = vrot.slane %v6504, 1
      %v6507 = vshll.u32 %v6412, 16
      %v6509 = vrot.slane %v6507, 2
      %v6510 = vor.u32 %v6506, %v6509
      %v6511 = vsel %vm6422, %v6501, %v6510
      %v6513 = vshrl.u32 %v6413, 16
      %v6515 = vrot.slane %v6513, 1
      %v6516 = vshll.u32 %v6413, 16
      %v6518 = vrot.slane %v6516, 2
      %v6519 = vor.u32 %v6515, %v6518
      %v6520 = vsel %vm6422, %v6510, %v6519
      %v6522 = vshrl.u32 %v6414, 16
      %v6524 = vrot.slane %v6522, 1
      %v6525 = vshll.u32 %v6414, 16
      %v6527 = vrot.slane %v6525, 2
      %v6528 = vor.u32 %v6524, %v6527
      %v6529 = vsel %vm6422, %v6519, %v6528
      %v6531 = vshrl.u32 %v6415, 16
      %v6533 = vrot.slane %v6531, 1
      %v6534 = vshll.u32 %v6415, 16
      %v6536 = vrot.slane %v6534, 2
      %v6537 = vor.u32 %v6533, %v6536
      %v6538 = vsel %vm6422, %v6528, %v6537
      %v6540 = vshrl.u32 %v6416, 16
      %v6542 = vrot.slane %v6540, 1
      %v6543 = vshll.u32 %v6416, 16
      %v6545 = vrot.slane %v6543, 2
      %v6546 = vor.u32 %v6542, %v6545
      %v6547 = vsel %vm6422, %v6537, %v6546
      %v6549 = vshrl.u32 %v6417, 16
      %v6551 = vrot.slane %v6549, 1
      %v6552 = vshll.u32 %v6417, 16
      %v6554 = vrot.slane %v6552, 2
      %v6555 = vor.u32 %v6551, %v6554
      %v6556 = vsel %vm6422, %v6546, %v6555
      %v6558 = vshrl.u32 %v6418, 16
      %v6560 = vrot.slane %v6558, 1
      %v6561 = vshll.u32 %v6418, 16
      %v6563 = vrot.slane %v6561, 2
      %v6564 = vor.u32 %v6560, %v6563
      %v6565 = vsel %vm6422, %v6555, %v6564
      %v6567 = vshrl.u32 %v6419, 16
      %v6569 = vrot.slane %v6567, 1
      %v6570 = vshll.u32 %v6419, 16
      %v6572 = vrot.slane %v6570, 2
      %v6573 = vor.u32 %v6569, %v6572
      %v6574 = vsel %vm6422, %v6564, %v6573
      %v6576 = vshrl.u32 %v6420, 16
      %v6578 = vrot.slane %v6576, 1
      %v6579 = vshll.u32 %v6420, 16
      %v6581 = vrot.slane %v6579, 2
      %v6582 = vor.u32 %v6578, %v6581
      %v6583 = vsel %vm6422, %v6573, %v6582
      %v6585 = vshll.u32 %v6421, 16
      %v6587 = vrot.slane %v6585, 2
      %v6588 = vsel %vm6422, %v6582, %v6587
      %v6623 = vunpack.c.l.b16 %v6313
      %v6624 = vunpack.c.l.b16 %v6314
      %v6625 = vunpack.c.l.b16 %v6315
      %v6626 = vunpack.c.l.b16 %v6316
      %v6627 = vunpack.c.l.b16 %v6317
      %v6628 = vunpack.c.l.b16 %v6318
      %v6629 = vunpack.c.l.b16 %v6319
      %v6630 = vunpack.c.l.b16 %v6320
      %v6631 = vunpack.c.l.b16 %v6321
      %v6632 = vunpack.c.l.b16 %v6322
      %v6633 = vunpack.c.l.b16 %v6323
      %v6634 = vunpack.c.l.b16 %v6324
      %v6635 = vunpack.c.l.b16 %v6325
      %v6636 = vunpack.c.l.b16 %v6326
      %v6637 = vunpack.c.l.b16 %v6327
      %v6638 = vunpack.c.l.b16 %v6328
      %v6639 = vpack.c.b16 %v6624, %v6623
      %v6640 = vpack.c.b16 %v6626, %v6625
      %v6641 = vpack.c.b16 %v6628, %v6627
      %v6642 = vpack.c.b16 %v6630, %v6629
      %v6643 = vpack.c.b16 %v6632, %v6631
      %v6644 = vpack.c.b16 %v6634, %v6633
      %v6645 = vpack.c.b16 %v6636, %v6635
      %v6646 = vpack.c.b16 %v6638, %v6637
      %6655 = vmatprep.subr.bf16.mxu0 0
      %6656 = vmatpush1.bf16.msra.mxu0 %v6646
      %6657 = vmatprep.subr.bf16.mxu0 0
      %6658 = vmatpush1.bf16.msra.mxu0 %v6645
      %6659 = vmatprep.subr.bf16.mxu0 0
      %6660 = vmatpush1.bf16.msra.mxu0 %v6644
      %6661 = vmatprep.subr.bf16.mxu0 0
      %6662 = vmatpush1.bf16.msra.mxu0 %v6643
      %6663 = vmatprep.subr.bf16.mxu0 0
      %6664 = vmatpush1.bf16.msra.mxu0 %v6642
      %6665 = vmatprep.subr.bf16.mxu0 0
      %6666 = vmatpush1.bf16.msra.mxu0 %v6641
      %6667 = vmatprep.subr.bf16.mxu0 0
      %6668 = vmatpush1.bf16.msra.mxu0 %v6640
      %6669 = vmatprep.subr.bf16.mxu0 0
      %6670 = vmatpush1.bf16.msra.mxu0 %v6639
      %6671 = vmatprep.subr.bf16.mxu0 0
      %6672 = vmatpush2.bf16.msra.mxu0 0
      %6673 = vmatprep.subr.bf16.mxu0 0
      %6674 = vmatpush2.bf16.msra.mxu0 0
      %6675 = vmatprep.subr.bf16.mxu0 0
      %6676 = vmatpush2.bf16.msra.mxu0 0
      %6677 = vmatprep.subr.bf16.mxu0 0
      %6678 = vmatpush2.bf16.msra.mxu0 0
      %6679 = vmatprep.subr.bf16.mxu0 0
      %6680 = vmatpush2.bf16.msra.mxu0 0
      %6681 = vmatprep.subr.bf16.mxu0 0
      %6682 = vmatpush2.bf16.msra.mxu0 0
      %6683 = vmatprep.subr.bf16.mxu0 0
      %6684 = vmatpush2.bf16.msra.mxu0 0
      %6685 = vmatprep.subr.bf16.mxu0 0
      %6686 = vmatpush2.bf16.msra.mxu0 0
      %6687 = vmatprep.mubr.bf16.mxu0 0
      %6688 = vmatmul.mubr.bf16.gmra.mxu0 %v6439
      %v6689 = vpop.f32.mrf.mxu0
      %v6690 = vadd.f32 0.0, %v6689
      %v6691 = vpop.f32.mrf.mxu0
      %v6692 = vpop.f32.mrf.mxu0
      %v6693 = vadd.f32 0.0, %v6692
      %v6694 = vpop.f32.mrf.mxu0
      %6695 = vmatprep.mubr.bf16.mxu0 0
      %6696 = vmatmul.mubr.bf16.gmra.mxu0 %v6448
      %v6697 = vpop.f32.mrf.mxu0
      %v6698 = vadd.f32 0.0, %v6697
      %v6699 = vpop.f32.mrf.mxu0
      %v6700 = vpop.f32.mrf.mxu0
      %v6701 = vadd.f32 0.0, %v6700
      %v6702 = vpop.f32.mrf.mxu0
      %6703 = vmatprep.mubr.bf16.mxu0 0
      %6704 = vmatmul.mubr.bf16.gmra.mxu0 %v6457
      %v6705 = vpop.f32.mrf.mxu0
      %v6706 = vadd.f32 0.0, %v6705
      %v6707 = vpop.f32.mrf.mxu0
      %v6708 = vpop.f32.mrf.mxu0
      %v6709 = vadd.f32 0.0, %v6708
      %v6710 = vpop.f32.mrf.mxu0
      %6711 = vmatprep.mubr.bf16.mxu0 0
      %6712 = vmatmul.mubr.bf16.gmra.mxu0 %v6466
      %v6713 = vpop.f32.mrf.mxu0
      %v6714 = vadd.f32 0.0, %v6713
      %v6715 = vpop.f32.mrf.mxu0
      %v6716 = vpop.f32.mrf.mxu0
      %v6717 = vadd.f32 0.0, %v6716
      %v6718 = vpop.f32.mrf.mxu0
      %6719 = vmatprep.mubr.bf16.mxu0 0
      %6720 = vmatmul.mubr.bf16.gmra.mxu0 %v6475
      %v6721 = vpop.f32.mrf.mxu0
      %v6722 = vadd.f32 0.0, %v6721
      %v6723 = vpop.f32.mrf.mxu0
      %v6724 = vpop.f32.mrf.mxu0
      %v6725 = vadd.f32 0.0, %v6724
      %v6726 = vpop.f32.mrf.mxu0
      %6727 = vmatprep.mubr.bf16.mxu0 0
      %6728 = vmatmul.mubr.bf16.gmra.mxu0 %v6484
      %v6729 = vpop.f32.mrf.mxu0
      %v6730 = vadd.f32 0.0, %v6729
      %v6731 = vpop.f32.mrf.mxu0
      %v6732 = vpop.f32.mrf.mxu0
      %v6733 = vadd.f32 0.0, %v6732
      %v6734 = vpop.f32.mrf.mxu0
      %6735 = vmatprep.mubr.bf16.mxu0 0
      %6736 = vmatmul.mubr.bf16.gmra.mxu0 %v6493
      %v6737 = vpop.f32.mrf.mxu0
      %v6738 = vadd.f32 0.0, %v6737
      %v6739 = vpop.f32.mrf.mxu0
      %v6740 = vpop.f32.mrf.mxu0
      %v6741 = vadd.f32 0.0, %v6740
      %v6742 = vpop.f32.mrf.mxu0
      %6743 = vmatprep.mubr.bf16.mxu0 0
      %6744 = vmatmul.mubr.bf16.gmra.mxu0 %v6502
      %v6745 = vpop.f32.mrf.mxu0
      %v6746 = vadd.f32 0.0, %v6745
      %v6747 = vpop.f32.mrf.mxu0
      %v6748 = vpop.f32.mrf.mxu0
      %v6749 = vadd.f32 0.0, %v6748
      %v6750 = vpop.f32.mrf.mxu0
      %6751 = vmatprep.mubr.bf16.mxu0 0
      %6752 = vmatmul.mubr.bf16.gmra.mxu0 %v6511
      %v6753 = vpop.f32.mrf.mxu0
      %v6754 = vadd.f32 0.0, %v6753
      %v6755 = vpop.f32.mrf.mxu0
      %v6756 = vpop.f32.mrf.mxu0
      %v6757 = vadd.f32 0.0, %v6756
      %v6758 = vpop.f32.mrf.mxu0
      %6759 = vmatprep.mubr.bf16.mxu0 0
      %6760 = vmatmul.mubr.bf16.gmra.mxu0 %v6520
      %v6761 = vpop.f32.mrf.mxu0
      %v6762 = vadd.f32 0.0, %v6761
      %v6763 = vpop.f32.mrf.mxu0
      %v6764 = vpop.f32.mrf.mxu0
      %v6765 = vadd.f32 0.0, %v6764
      %v6766 = vpop.f32.mrf.mxu0
      %6767 = vmatprep.mubr.bf16.mxu0 0
      %6768 = vmatmul.mubr.bf16.gmra.mxu0 %v6529
      %v6769 = vpop.f32.mrf.mxu0
      %v6770 = vadd.f32 0.0, %v6769
      %v6771 = vpop.f32.mrf.mxu0
      %v6772 = vpop.f32.mrf.mxu0
      %v6773 = vadd.f32 0.0, %v6772
      %v6774 = vpop.f32.mrf.mxu0
      %6775 = vmatprep.mubr.bf16.mxu0 0
      %6776 = vmatmul.mubr.bf16.gmra.mxu0 %v6538
      %v6777 = vpop.f32.mrf.mxu0
      %v6778 = vadd.f32 0.0, %v6777
      %v6779 = vpop.f32.mrf.mxu0
      %v6780 = vpop.f32.mrf.mxu0
      %v6781 = vadd.f32 0.0, %v6780
      %v6782 = vpop.f32.mrf.mxu0
      %6783 = vmatprep.mubr.bf16.mxu0 0
      %6784 = vmatmul.mubr.bf16.gmra.mxu0 %v6547
      %v6785 = vpop.f32.mrf.mxu0
      %v6786 = vadd.f32 0.0, %v6785
      %v6787 = vpop.f32.mrf.mxu0
      %v6788 = vpop.f32.mrf.mxu0
      %v6789 = vadd.f32 0.0, %v6788
      %v6790 = vpop.f32.mrf.mxu0
      %6791 = vmatprep.mubr.bf16.mxu0 0
      %6792 = vmatmul.mubr.bf16.gmra.mxu0 %v6556
      %v6793 = vpop.f32.mrf.mxu0
      %v6794 = vadd.f32 0.0, %v6793
      %v6795 = vpop.f32.mrf.mxu0
      %v6796 = vpop.f32.mrf.mxu0
      %v6797 = vadd.f32 0.0, %v6796
      %v6798 = vpop.f32.mrf.mxu0
      %6799 = vmatprep.mubr.bf16.mxu0 0
      %6800 = vmatmul.mubr.bf16.gmra.mxu0 %v6565
      %v6801 = vpop.f32.mrf.mxu0
      %v6802 = vadd.f32 0.0, %v6801
      %v6803 = vpop.f32.mrf.mxu0
      %v6804 = vpop.f32.mrf.mxu0
      %v6805 = vadd.f32 0.0, %v6804
      %v6806 = vpop.f32.mrf.mxu0
      %6807 = vmatprep.mubr.bf16.mxu0 0
      %6808 = vmatmul.mubr.bf16.gmra.mxu0 %v6574
      %v6809 = vpop.f32.mrf.mxu0
      %v6810 = vadd.f32 0.0, %v6809
      %v6811 = vpop.f32.mrf.mxu0
      %v6812 = vpop.f32.mrf.mxu0
      %v6813 = vadd.f32 0.0, %v6812
      %v6814 = vpop.f32.mrf.mxu0
      %6815 = vmatprep.mubr.bf16.mxu0 0
      %6816 = vmatmul.mubr.bf16.gmra.mxu0 %v6583
      %v6817 = vpop.f32.mrf.mxu0
      %v6818 = vadd.f32 0.0, %v6817
      %v6819 = vpop.f32.mrf.mxu0
      %v6820 = vpop.f32.mrf.mxu0
      %v6821 = vadd.f32 0.0, %v6820
      %v6822 = vpop.f32.mrf.mxu0
      %6823 = vmatprep.mubr.bf16.mxu0 0
      %6824 = vmatmul.mubr.bf16.gmra.mxu0 %v6588
      %v6825 = vpop.f32.mrf.mxu0
      %v6826 = vadd.f32 0.0, %v6825
      %v6827 = vpop.f32.mrf.mxu0
      %v6828 = vpop.f32.mrf.mxu0
      %v6829 = vadd.f32 0.0, %v6828
      %v6830 = vpop.f32.mrf.mxu0
      %6831 = vdwg.mxu0
      %v6832 = vadd.f32 %v6239, %v6690
      %v6833 = vadd.f32 %v6240, %v6693
      %v6834 = vadd.f32 %v6241, %v6698
      %v6835 = vadd.f32 %v6242, %v6701
      %v6836 = vadd.f32 %v6243, %v6706
      %v6837 = vadd.f32 %v6244, %v6709
      %v6838 = vadd.f32 %v6245, %v6714
      %v6839 = vadd.f32 %v6246, %v6717
      %v6840 = vadd.f32 %v6247, %v6722
      %v6841 = vadd.f32 %v6248, %v6725
      %v6842 = vadd.f32 %v6249, %v6730
      %v6843 = vadd.f32 %v6250, %v6733
      %v6844 = vadd.f32 %v6251, %v6738
      %v6845 = vadd.f32 %v6252, %v6741
      %v6846 = vadd.f32 %v6253, %v6746
      %v6847 = vadd.f32 %v6254, %v6749
      %v6848 = vadd.f32 %v6255, %v6754
      %v6849 = vadd.f32 %v6256, %v6757
      %v6850 = vadd.f32 %v6257, %v6762
      %v6851 = vadd.f32 %v6258, %v6765
      %v6852 = vadd.f32 %v6259, %v6770
      %v6853 = vadd.f32 %v6260, %v6773
      %v6854 = vadd.f32 %v6261, %v6778
      %v6855 = vadd.f32 %v6262, %v6781
      %v6856 = vadd.f32 %v6263, %v6786
      %v6857 = vadd.f32 %v6264, %v6789
      %v6858 = vadd.f32 %v6265, %v6794
      %v6859 = vadd.f32 %v6266, %v6797
      %v6860 = vadd.f32 %v6267, %v6802
      %v6861 = vadd.f32 %v6268, %v6805
      %v6862 = vadd.f32 %v6269, %v6810
      %v6863 = vadd.f32 %v6270, %v6813
      %v6864 = vadd.f32 %v6271, %v6818
      %v6865 = vadd.f32 %v6272, %v6821
      %v6866 = vadd.f32 %v6273, %v6826
      %v6867 = vadd.f32 %v6274, %v6829
      %v6868 = vld [vmem:[#allocation2 + $0x8] sm:$0xc]
      %s6869 = scalar_lea.vmem %s7, 320
      %v6870 = vld [vmem:[%s6869] sm:$0xf]
      %v6871 = vld [vmem:[%s6869 + $0x4] sm:$0xf]
      %v6872 = vld [vmem:[%s6869 + $0x8] sm:$0xf]
      %v6873 = vld [vmem:[%s6869 + $0xc] sm:$0xf]
      %v6874 = vld [vmem:[%s6869 + $0x10] sm:$0xf]
      %v6875 = vld [vmem:[%s6869 + $0x14] sm:$0xf]
      %v6876 = vld [vmem:[%s6869 + $0x18] sm:$0xf]
      %v6877 = vld [vmem:[%s6869 + $0x1c] sm:$0xf]
      %v6878 = vld [vmem:[%s6869 + $0x20] sm:$0xf]
      %v6879 = vld [vmem:[%s6869 + $0x24] sm:$0xf]
      %v6880 = vld [vmem:[%s6869 + $0x28] sm:$0xf]
      %v6881 = vld [vmem:[%s6869 + $0x2c] sm:$0xf]
      %v6882 = vld [vmem:[%s6869 + $0x30] sm:$0xf]
      %v6883 = vld [vmem:[%s6869 + $0x34] sm:$0xf]
      %v6884 = vld [vmem:[%s6869 + $0x38] sm:$0xf]
      %v6885 = vld [vmem:[%s6869 + $0x3c] sm:$0xf]
      %v6887 = vunpack.c.l.b16 %v6868
      %v6888 = vpack.c.b16 %v6367, %v6887
      %vm6889 = vcmask 1045504
      %v6890 = vrot.slane %v6888, 2
      %v6891 = vrot.slane %v6404, 2
      %v6892 = vsel %vm6889, %v6890, %v6891
      %v6893 = vrot.slane %v6405, 2
      %v6894 = vsel %vm6889, %v6891, %v6893
      %v6895 = vrot.slane %v6406, 2
      %v6896 = vsel %vm6889, %v6893, %v6895
      %v6897 = vrot.slane %v6407, 2
      %v6898 = vsel %vm6889, %v6895, %v6897
      %v6899 = vrot.slane %v6408, 2
      %v6900 = vsel %vm6889, %v6897, %v6899
      %v6901 = vrot.slane %v6409, 2
      %v6902 = vsel %vm6889, %v6899, %v6901
      %v6903 = vrot.slane %v6410, 2
      %v6904 = vsel %vm6889, %v6901, %v6903
      %v6905 = vrot.slane %v6411, 2
      %v6906 = vsel %vm6889, %v6903, %v6905
      %v6907 = vrot.slane %v6412, 2
      %v6908 = vsel %vm6889, %v6905, %v6907
      %v6909 = vrot.slane %v6413, 2
      %v6910 = vsel %vm6889, %v6907, %v6909
      %v6911 = vrot.slane %v6414, 2
      %v6912 = vsel %vm6889, %v6909, %v6911
      %v6913 = vrot.slane %v6415, 2
      %v6914 = vsel %vm6889, %v6911, %v6913
      %v6915 = vrot.slane %v6416, 2
      %v6916 = vsel %vm6889, %v6913, %v6915
      %v6917 = vrot.slane %v6417, 2
      %v6918 = vsel %vm6889, %v6915, %v6917
      %v6919 = vrot.slane %v6418, 2
      %v6920 = vsel %vm6889, %v6917, %v6919
      %v6921 = vrot.slane %v6419, 2
      %v6922 = vsel %vm6889, %v6919, %v6921
      %v6923 = vrot.slane %v6420, 2
      %v6924 = vsel %vm6889, %v6921, %v6923
      %v6925 = vrot.slane %v6421, 2
      %v6926 = vsel %vm6889, %v6923, %v6925
      %v6961 = vunpack.c.l.b16 %v6870
      %v6962 = vunpack.c.l.b16 %v6871
      %v6963 = vunpack.c.l.b16 %v6872
      %v6964 = vunpack.c.l.b16 %v6873
      %v6965 = vunpack.c.l.b16 %v6874
      %v6966 = vunpack.c.l.b16 %v6875
      %v6967 = vunpack.c.l.b16 %v6876
      %v6968 = vunpack.c.l.b16 %v6877
      %v6969 = vunpack.c.l.b16 %v6878
      %v6970 = vunpack.c.l.b16 %v6879
      %v6971 = vunpack.c.l.b16 %v6880
      %v6972 = vunpack.c.l.b16 %v6881
      %v6973 = vunpack.c.l.b16 %v6882
      %v6974 = vunpack.c.l.b16 %v6883
      %v6975 = vunpack.c.l.b16 %v6884
      %v6976 = vunpack.c.l.b16 %v6885
      %v6977 = vpack.c.b16 %v6962, %v6961
      %v6978 = vpack.c.b16 %v6964, %v6963
      %v6979 = vpack.c.b16 %v6966, %v6965
      %v6980 = vpack.c.b16 %v6968, %v6967
      %v6981 = vpack.c.b16 %v6970, %v6969
      %v6982 = vpack.c.b16 %v6972, %v6971
      %v6983 = vpack.c.b16 %v6974, %v6973
      %v6984 = vpack.c.b16 %v6976, %v6975
      %6993 = vmatprep.subr.bf16.mxu0 0
      %6994 = vmatpush1.bf16.msra.mxu0 %v6984
      %6995 = vmatprep.subr.bf16.mxu0 0
      %6996 = vmatpush1.bf16.msra.mxu0 %v6983
      %6997 = vmatprep.subr.bf16.mxu0 0
      %6998 = vmatpush1.bf16.msra.mxu0 %v6982
      %6999 = vmatprep.subr.bf16.mxu0 0
      %7000 = vmatpush1.bf16.msra.mxu0 %v6981
      %7001 = vmatprep.subr.bf16.mxu0 0
      %7002 = vmatpush1.bf16.msra.mxu0 %v6980
      %7003 = vmatprep.subr.bf16.mxu0 0
      %7004 = vmatpush1.bf16.msra.mxu0 %v6979
      %7005 = vmatprep.subr.bf16.mxu0 0
      %7006 = vmatpush1.bf16.msra.mxu0 %v6978
      %7007 = vmatprep.subr.bf16.mxu0 0
      %7008 = vmatpush1.bf16.msra.mxu0 %v6977
      %7009 = vmatprep.subr.bf16.mxu0 0
      %7010 = vmatpush2.bf16.msra.mxu0 0
      %7011 = vmatprep.subr.bf16.mxu0 0
      %7012 = vmatpush2.bf16.msra.mxu0 0
      %7013 = vmatprep.subr.bf16.mxu0 0
      %7014 = vmatpush2.bf16.msra.mxu0 0
      %7015 = vmatprep.subr.bf16.mxu0 0
      %7016 = vmatpush2.bf16.msra.mxu0 0
      %7017 = vmatprep.subr.bf16.mxu0 0
      %7018 = vmatpush2.bf16.msra.mxu0 0
      %7019 = vmatprep.subr.bf16.mxu0 0
      %7020 = vmatpush2.bf16.msra.mxu0 0
      %7021 = vmatprep.subr.bf16.mxu0 0
      %7022 = vmatpush2.bf16.msra.mxu0 0
      %7023 = vmatprep.subr.bf16.mxu0 0
      %7024 = vmatpush2.bf16.msra.mxu0 0
      %7025 = vmatprep.mubr.bf16.mxu0 0
      %7026 = vmatmul.mubr.bf16.gmra.mxu0 %v6892
      %v7027 = vpop.f32.mrf.mxu0
      %v7028 = vadd.f32 0.0, %v7027
      %v7029 = vpop.f32.mrf.mxu0
      %v7030 = vpop.f32.mrf.mxu0
      %v7031 = vadd.f32 0.0, %v7030
      %v7032 = vpop.f32.mrf.mxu0
      %7033 = vmatprep.mubr.bf16.mxu0 0
      %7034 = vmatmul.mubr.bf16.gmra.mxu0 %v6894
      %v7035 = vpop.f32.mrf.mxu0
      %v7036 = vadd.f32 0.0, %v7035
      %v7037 = vpop.f32.mrf.mxu0
      %v7038 = vpop.f32.mrf.mxu0
      %v7039 = vadd.f32 0.0, %v7038
      %v7040 = vpop.f32.mrf.mxu0
      %7041 = vmatprep.mubr.bf16.mxu0 0
      %7042 = vmatmul.mubr.bf16.gmra.mxu0 %v6896
      %v7043 = vpop.f32.mrf.mxu0
      %v7044 = vadd.f32 0.0, %v7043
      %v7045 = vpop.f32.mrf.mxu0
      %v7046 = vpop.f32.mrf.mxu0
      %v7047 = vadd.f32 0.0, %v7046
      %v7048 = vpop.f32.mrf.mxu0
      %7049 = vmatprep.mubr.bf16.mxu0 0
      %7050 = vmatmul.mubr.bf16.gmra.mxu0 %v6898
      %v7051 = vpop.f32.mrf.mxu0
      %v7052 = vadd.f32 0.0, %v7051
      %v7053 = vpop.f32.mrf.mxu0
      %v7054 = vpop.f32.mrf.mxu0
      %v7055 = vadd.f32 0.0, %v7054
      %v7056 = vpop.f32.mrf.mxu0
      %7057 = vmatprep.mubr.bf16.mxu0 0
      %7058 = vmatmul.mubr.bf16.gmra.mxu0 %v6900
      %v7059 = vpop.f32.mrf.mxu0
      %v7060 = vadd.f32 0.0, %v7059
      %v7061 = vpop.f32.mrf.mxu0
      %v7062 = vpop.f32.mrf.mxu0
      %v7063 = vadd.f32 0.0, %v7062
      %v7064 = vpop.f32.mrf.mxu0
      %7065 = vmatprep.mubr.bf16.mxu0 0
      %7066 = vmatmul.mubr.bf16.gmra.mxu0 %v6902
      %v7067 = vpop.f32.mrf.mxu0
      %v7068 = vadd.f32 0.0, %v7067
      %v7069 = vpop.f32.mrf.mxu0
      %v7070 = vpop.f32.mrf.mxu0
      %v7071 = vadd.f32 0.0, %v7070
      %v7072 = vpop.f32.mrf.mxu0
      %7073 = vmatprep.mubr.bf16.mxu0 0
      %7074 = vmatmul.mubr.bf16.gmra.mxu0 %v6904
      %v7075 = vpop.f32.mrf.mxu0
      %v7076 = vadd.f32 0.0, %v7075
      %v7077 = vpop.f32.mrf.mxu0
      %v7078 = vpop.f32.mrf.mxu0
      %v7079 = vadd.f32 0.0, %v7078
      %v7080 = vpop.f32.mrf.mxu0
      %7081 = vmatprep.mubr.bf16.mxu0 0
      %7082 = vmatmul.mubr.bf16.gmra.mxu0 %v6906
      %v7083 = vpop.f32.mrf.mxu0
      %v7084 = vadd.f32 0.0, %v7083
      %v7085 = vpop.f32.mrf.mxu0
      %v7086 = vpop.f32.mrf.mxu0
      %v7087 = vadd.f32 0.0, %v7086
      %v7088 = vpop.f32.mrf.mxu0
      %7089 = vmatprep.mubr.bf16.mxu0 0
      %7090 = vmatmul.mubr.bf16.gmra.mxu0 %v6908
      %v7091 = vpop.f32.mrf.mxu0
      %v7092 = vadd.f32 0.0, %v7091
      %v7093 = vpop.f32.mrf.mxu0
      %v7094 = vpop.f32.mrf.mxu0
      %v7095 = vadd.f32 0.0, %v7094
      %v7096 = vpop.f32.mrf.mxu0
      %7097 = vmatprep.mubr.bf16.mxu0 0
      %7098 = vmatmul.mubr.bf16.gmra.mxu0 %v6910
      %v7099 = vpop.f32.mrf.mxu0
      %v7100 = vadd.f32 0.0, %v7099
      %v7101 = vpop.f32.mrf.mxu0
      %v7102 = vpop.f32.mrf.mxu0
      %v7103 = vadd.f32 0.0, %v7102
      %v7104 = vpop.f32.mrf.mxu0
      %7105 = vmatprep.mubr.bf16.mxu0 0
      %7106 = vmatmul.mubr.bf16.gmra.mxu0 %v6912
      %v7107 = vpop.f32.mrf.mxu0
      %v7108 = vadd.f32 0.0, %v7107
      %v7109 = vpop.f32.mrf.mxu0
      %v7110 = vpop.f32.mrf.mxu0
      %v7111 = vadd.f32 0.0, %v7110
      %v7112 = vpop.f32.mrf.mxu0
      %7113 = vmatprep.mubr.bf16.mxu0 0
      %7114 = vmatmul.mubr.bf16.gmra.mxu0 %v6914
      %v7115 = vpop.f32.mrf.mxu0
      %v7116 = vadd.f32 0.0, %v7115
      %v7117 = vpop.f32.mrf.mxu0
      %v7118 = vpop.f32.mrf.mxu0
      %v7119 = vadd.f32 0.0, %v7118
      %v7120 = vpop.f32.mrf.mxu0
      %7121 = vmatprep.mubr.bf16.mxu0 0
      %7122 = vmatmul.mubr.bf16.gmra.mxu0 %v6916
      %v7123 = vpop.f32.mrf.mxu0
      %v7124 = vadd.f32 0.0, %v7123
      %v7125 = vpop.f32.mrf.mxu0
      %v7126 = vpop.f32.mrf.mxu0
      %v7127 = vadd.f32 0.0, %v7126
      %v7128 = vpop.f32.mrf.mxu0
      %7129 = vmatprep.mubr.bf16.mxu0 0
      %7130 = vmatmul.mubr.bf16.gmra.mxu0 %v6918
      %v7131 = vpop.f32.mrf.mxu0
      %v7132 = vadd.f32 0.0, %v7131
      %v7133 = vpop.f32.mrf.mxu0
      %v7134 = vpop.f32.mrf.mxu0
      %v7135 = vadd.f32 0.0, %v7134
      %v7136 = vpop.f32.mrf.mxu0
      %7137 = vmatprep.mubr.bf16.mxu0 0
      %7138 = vmatmul.mubr.bf16.gmra.mxu0 %v6920
      %v7139 = vpop.f32.mrf.mxu0
      %v7140 = vadd.f32 0.0, %v7139
      %v7141 = vpop.f32.mrf.mxu0
      %v7142 = vpop.f32.mrf.mxu0
      %v7143 = vadd.f32 0.0, %v7142
      %v7144 = vpop.f32.mrf.mxu0
      %7145 = vmatprep.mubr.bf16.mxu0 0
      %7146 = vmatmul.mubr.bf16.gmra.mxu0 %v6922
      %v7147 = vpop.f32.mrf.mxu0
      %v7148 = vadd.f32 0.0, %v7147
      %v7149 = vpop.f32.mrf.mxu0
      %v7150 = vpop.f32.mrf.mxu0
      %v7151 = vadd.f32 0.0, %v7150
      %v7152 = vpop.f32.mrf.mxu0
      %7153 = vmatprep.mubr.bf16.mxu0 0
      %7154 = vmatmul.mubr.bf16.gmra.mxu0 %v6924
      %v7155 = vpop.f32.mrf.mxu0
      %v7156 = vadd.f32 0.0, %v7155
      %v7157 = vpop.f32.mrf.mxu0
      %v7158 = vpop.f32.mrf.mxu0
      %v7159 = vadd.f32 0.0, %v7158
      %v7160 = vpop.f32.mrf.mxu0
      %7161 = vmatprep.mubr.bf16.mxu0 0
      %7162 = vmatmul.mubr.bf16.gmra.mxu0 %v6926
      %v7163 = vpop.f32.mrf.mxu0
      %v7164 = vadd.f32 0.0, %v7163
      %v7165 = vpop.f32.mrf.mxu0
      %v7166 = vpop.f32.mrf.mxu0
      %v7167 = vadd.f32 0.0, %v7166
      %v7168 = vpop.f32.mrf.mxu0
      %7169 = vdwg.mxu0
      %v7170 = vadd.f32 %v6832, %v7028
      %v7171 = vadd.f32 %v6833, %v7031
      %v7172 = vadd.f32 %v6834, %v7036
      %v7173 = vadd.f32 %v6835, %v7039
      %v7174 = vadd.f32 %v6836, %v7044
      %v7175 = vadd.f32 %v6837, %v7047
      %v7176 = vadd.f32 %v6838, %v7052
      %v7177 = vadd.f32 %v6839, %v7055
      %v7178 = vadd.f32 %v6840, %v7060
      %v7179 = vadd.f32 %v6841, %v7063
      %v7180 = vadd.f32 %v6842, %v7068
      %v7181 = vadd.f32 %v6843, %v7071
      %v7182 = vadd.f32 %v6844, %v7076
      %v7183 = vadd.f32 %v6845, %v7079
      %v7184 = vadd.f32 %v6846, %v7084
      %v7185 = vadd.f32 %v6847, %v7087
      %v7186 = vadd.f32 %v6848, %v7092
      %v7187 = vadd.f32 %v6849, %v7095
      %v7188 = vadd.f32 %v6850, %v7100
      %v7189 = vadd.f32 %v6851, %v7103
      %v7190 = vadd.f32 %v6852, %v7108
      %v7191 = vadd.f32 %v6853, %v7111
      %v7192 = vadd.f32 %v6854, %v7116
      %v7193 = vadd.f32 %v6855, %v7119
      %v7194 = vadd.f32 %v6856, %v7124
      %v7195 = vadd.f32 %v6857, %v7127
      %v7196 = vadd.f32 %v6858, %v7132
      %v7197 = vadd.f32 %v6859, %v7135
      %v7198 = vadd.f32 %v6860, %v7140
      %v7199 = vadd.f32 %v6861, %v7143
      %v7200 = vadd.f32 %v6862, %v7148
      %v7201 = vadd.f32 %v6863, %v7151
      %v7202 = vadd.f32 %v6864, %v7156
      %v7203 = vadd.f32 %v6865, %v7159
      %v7204 = vadd.f32 %v6866, %v7164
      %v7205 = vadd.f32 %v6867, %v7167
      %v7206 = vld [vmem:[#allocation2 + $0x10] sm:$0xc]
      %v7207 = vld [vmem:[#allocation2 + $0x14] sm:$0xf]
      %v7208 = vld [vmem:[#allocation2 + $0x18] sm:$0xf]
      %v7209 = vld [vmem:[#allocation2 + $0x1c] sm:$0xf]
      %v7210 = vld [vmem:[#allocation2 + $0x20] sm:$0xf]
      %v7211 = vld [vmem:[#allocation2 + $0x24] sm:$0xf]
      %v7212 = vld [vmem:[#allocation2 + $0x28] sm:$0xf]
      %v7213 = vld [vmem:[#allocation2 + $0x2c] sm:$0xf]
      %v7214 = vld [vmem:[#allocation2 + $0x30] sm:$0xf]
      %v7215 = vld [vmem:[#allocation2 + $0x34] sm:$0xf]
      %v7216 = vld [vmem:[#allocation2 + $0x38] sm:$0xf]
      %v7217 = vld [vmem:[#allocation2 + $0x3c] sm:$0xf]
      %v7218 = vld [vmem:[#allocation2 + $0x40] sm:$0xf]
      %v7219 = vld [vmem:[#allocation2 + $0x44] sm:$0xf]
      %v7220 = vld [vmem:[#allocation2 + $0x48] sm:$0xf]
      %v7221 = vld [vmem:[#allocation2 + $0x4c] sm:$0xf]
      %v7222 = vld [vmem:[#allocation2 + $0x50] sm:$0xf]
      %v7223 = vld [vmem:[#allocation2 + $0x54] sm:$0xf]
      %v7224 = vld [vmem:[#allocation2 + $0x58] sm:$0xf]
      %v7225 = vld [vmem:[#allocation2 + $0x5c] sm:$0xf]
      %v7226 = vld [vmem:[#allocation2 + $0x60] sm:$0xf]
      %v7227 = vld [vmem:[#allocation2 + $0x64] sm:$0xf]
      %v7228 = vld [vmem:[#allocation2 + $0x68] sm:$0xf]
      %v7229 = vld [vmem:[#allocation2 + $0x6c] sm:$0xf]
      %v7230 = vld [vmem:[#allocation2 + $0x70] sm:$0xf]
      %v7231 = vld [vmem:[#allocation2 + $0x74] sm:$0xf]
      %v7232 = vld [vmem:[#allocation2 + $0x78] sm:$0xf]
      %v7233 = vld [vmem:[#allocation2 + $0x7c] sm:$0xf]
      %v7234 = vld [vmem:[#allocation2 + $0x80] sm:$0xf]
      %v7235 = vld [vmem:[#allocation2 + $0x84] sm:$0xf]
      %v7236 = vld [vmem:[#allocation2 + $0x88] sm:$0xf]
      %v7237 = vld [vmem:[#allocation2 + $0x8c] sm:$0xf]
      %v7238 = vld [vmem:[#allocation2 + $0x90] sm:$0xf]
      %v7239 = vld [vmem:[#allocation2 + $0x94] sm:$0xf]
      %v7240 = vld [vmem:[#allocation2 + $0x98] sm:$0xf]
      %v7241 = vld [vmem:[#allocation2 + $0x9c] sm:$0xf]
      %v7242 = vld [vmem:[#allocation2 + $0xa0] sm:$0x1]
      %s7243 = scalar_lea.vmem %s7, 384
      %v7244 = vld [vmem:[%s7243] sm:$0xf]
      %v7245 = vld [vmem:[%s7243 + $0x4] sm:$0xf]
      %v7246 = vld [vmem:[%s7243 + $0x8] sm:$0xf]
      %v7247 = vld [vmem:[%s7243 + $0xc] sm:$0xf]
      %v7248 = vld [vmem:[%s7243 + $0x10] sm:$0xf]
      %v7249 = vld [vmem:[%s7243 + $0x14] sm:$0xf]
      %v7250 = vld [vmem:[%s7243 + $0x18] sm:$0xf]
      %v7251 = vld [vmem:[%s7243 + $0x1c] sm:$0xf]
      %v7252 = vld [vmem:[%s7243 + $0x20] sm:$0xf]
      %v7253 = vld [vmem:[%s7243 + $0x24] sm:$0xf]
      %v7254 = vld [vmem:[%s7243 + $0x28] sm:$0xf]
      %v7255 = vld [vmem:[%s7243 + $0x2c] sm:$0xf]
      %v7256 = vld [vmem:[%s7243 + $0x30] sm:$0xf]
      %v7257 = vld [vmem:[%s7243 + $0x34] sm:$0xf]
      %v7258 = vld [vmem:[%s7243 + $0x38] sm:$0xf]
      %v7259 = vld [vmem:[%s7243 + $0x3c] sm:$0xf]
      %v7297 = vunpack.c.l.b16 %v7206
      %v7298 = vunpack.c.l.b16 %v7207
      %v7299 = vunpack.c.l.b16 %v7208
      %v7300 = vunpack.c.l.b16 %v7209
      %v7301 = vunpack.c.l.b16 %v7210
      %v7302 = vunpack.c.l.b16 %v7211
      %v7303 = vunpack.c.l.b16 %v7212
      %v7304 = vunpack.c.l.b16 %v7213
      %v7305 = vunpack.c.l.b16 %v7214
      %v7306 = vunpack.c.l.b16 %v7215
      %v7307 = vunpack.c.l.b16 %v7216
      %v7308 = vunpack.c.l.b16 %v7217
      %v7309 = vunpack.c.l.b16 %v7218
      %v7310 = vunpack.c.l.b16 %v7219
      %v7311 = vunpack.c.l.b16 %v7220
      %v7312 = vunpack.c.l.b16 %v7221
      %v7313 = vunpack.c.l.b16 %v7222
      %v7314 = vunpack.c.l.b16 %v7223
      %v7315 = vunpack.c.l.b16 %v7224
      %v7316 = vunpack.c.l.b16 %v7225
      %v7317 = vunpack.c.l.b16 %v7226
      %v7318 = vunpack.c.l.b16 %v7227
      %v7319 = vunpack.c.l.b16 %v7228
      %v7320 = vunpack.c.l.b16 %v7229
      %v7321 = vunpack.c.l.b16 %v7230
      %v7322 = vunpack.c.l.b16 %v7231
      %v7323 = vunpack.c.l.b16 %v7232
      %v7324 = vunpack.c.l.b16 %v7233
      %v7325 = vunpack.c.l.b16 %v7234
      %v7326 = vunpack.c.l.b16 %v7235
      %v7327 = vunpack.c.l.b16 %v7236
      %v7328 = vunpack.c.l.b16 %v7237
      %v7329 = vunpack.c.l.b16 %v7238
      %v7330 = vunpack.c.l.b16 %v7239
      %v7331 = vunpack.c.l.b16 %v7240
      %v7332 = vunpack.c.l.b16 %v7241
      %v7333 = vunpack.c.l.b16 %v7242
      %v7334 = vpack.c.b16 %v7298, %v7297
      %v7335 = vpack.c.b16 %v7300, %v7299
      %v7336 = vpack.c.b16 %v7302, %v7301
      %v7337 = vpack.c.b16 %v7304, %v7303
      %v7338 = vpack.c.b16 %v7306, %v7305
      %v7339 = vpack.c.b16 %v7308, %v7307
      %v7340 = vpack.c.b16 %v7310, %v7309
      %v7341 = vpack.c.b16 %v7312, %v7311
      %v7342 = vpack.c.b16 %v7314, %v7313
      %v7343 = vpack.c.b16 %v7316, %v7315
      %v7344 = vpack.c.b16 %v7318, %v7317
      %v7345 = vpack.c.b16 %v7320, %v7319
      %v7346 = vpack.c.b16 %v7322, %v7321
      %v7347 = vpack.c.b16 %v7324, %v7323
      %v7348 = vpack.c.b16 %v7326, %v7325
      %v7349 = vpack.c.b16 %v7328, %v7327
      %v7350 = vpack.c.b16 %v7330, %v7329
      %v7351 = vpack.c.b16 %v7332, %v7331
      %v7352 = vpack.c.b16 %v7333, %v7333
      %v7353 = vrot.slane %v7334, 2
      %v7354 = vrot.slane %v7335, 2
      %v7355 = vsel %vm6889, %v7353, %v7354
      %v7356 = vrot.slane %v7336, 2
      %v7357 = vsel %vm6889, %v7354, %v7356
      %v7358 = vrot.slane %v7337, 2
      %v7359 = vsel %vm6889, %v7356, %v7358
      %v7360 = vrot.slane %v7338, 2
      %v7361 = vsel %vm6889, %v7358, %v7360
      %v7362 = vrot.slane %v7339, 2
      %v7363 = vsel %vm6889, %v7360, %v7362
      %v7364 = vrot.slane %v7340, 2
      %v7365 = vsel %vm6889, %v7362, %v7364
      %v7366 = vrot.slane %v7341, 2
      %v7367 = vsel %vm6889, %v7364, %v7366
      %v7368 = vrot.slane %v7342, 2
      %v7369 = vsel %vm6889, %v7366, %v7368
      %v7370 = vrot.slane %v7343, 2
      %v7371 = vsel %vm6889, %v7368, %v7370
      %v7372 = vrot.slane %v7344, 2
      %v7373 = vsel %vm6889, %v7370, %v7372
      %v7374 = vrot.slane %v7345, 2
      %v7375 = vsel %vm6889, %v7372, %v7374
      %v7376 = vrot.slane %v7346, 2
      %v7377 = vsel %vm6889, %v7374, %v7376
      %v7378 = vrot.slane %v7347, 2
      %v7379 = vsel %vm6889, %v7376, %v7378
      %v7380 = vrot.slane %v7348, 2
      %v7381 = vsel %vm6889, %v7378, %v7380
      %v7382 = vrot.slane %v7349, 2
      %v7383 = vsel %vm6889, %v7380, %v7382
      %v7384 = vrot.slane %v7350, 2
      %v7385 = vsel %vm6889, %v7382, %v7384
      %v7386 = vrot.slane %v7351, 2
      %v7387 = vsel %vm6889, %v7384, %v7386
      %v7388 = vrot.slane %v7352, 2
      %v7389 = vsel %vm6889, %v7386, %v7388
      %v7424 = vunpack.c.l.b16 %v7244
      %v7425 = vunpack.c.l.b16 %v7245
      %v7426 = vunpack.c.l.b16 %v7246
      %v7427 = vunpack.c.l.b16 %v7247
      %v7428 = vunpack.c.l.b16 %v7248
      %v7429 = vunpack.c.l.b16 %v7249
      %v7430 = vunpack.c.l.b16 %v7250
      %v7431 = vunpack.c.l.b16 %v7251
      %v7432 = vunpack.c.l.b16 %v7252
      %v7433 = vunpack.c.l.b16 %v7253
      %v7434 = vunpack.c.l.b16 %v7254
      %v7435 = vunpack.c.l.b16 %v7255
      %v7436 = vunpack.c.l.b16 %v7256
      %v7437 = vunpack.c.l.b16 %v7257
      %v7438 = vunpack.c.l.b16 %v7258
      %v7439 = vunpack.c.l.b16 %v7259
      %v7440 = vpack.c.b16 %v7425, %v7424
      %v7441 = vpack.c.b16 %v7427, %v7426
      %v7442 = vpack.c.b16 %v7429, %v7428
      %v7443 = vpack.c.b16 %v7431, %v7430
      %v7444 = vpack.c.b16 %v7433, %v7432
      %v7445 = vpack.c.b16 %v7435, %v7434
      %v7446 = vpack.c.b16 %v7437, %v7436
      %v7447 = vpack.c.b16 %v7439, %v7438
      %7456 = vmatprep.subr.bf16.mxu0 0
      %7457 = vmatpush1.bf16.msra.mxu0 %v7447
      %7458 = vmatprep.subr.bf16.mxu0 0
      %7459 = vmatpush1.bf16.msra.mxu0 %v7446
      %7460 = vmatprep.subr.bf16.mxu0 0
      %7461 = vmatpush1.bf16.msra.mxu0 %v7445
      %7462 = vmatprep.subr.bf16.mxu0 0
      %7463 = vmatpush1.bf16.msra.mxu0 %v7444
      %7464 = vmatprep.subr.bf16.mxu0 0
      %7465 = vmatpush1.bf16.msra.mxu0 %v7443
      %7466 = vmatprep.subr.bf16.mxu0 0
      %7467 = vmatpush1.bf16.msra.mxu0 %v7442
      %7468 = vmatprep.subr.bf16.mxu0 0
      %7469 = vmatpush1.bf16.msra.mxu0 %v7441
      %7470 = vmatprep.subr.bf16.mxu0 0
      %7471 = vmatpush1.bf16.msra.mxu0 %v7440
      %7472 = vmatprep.subr.bf16.mxu0 0
      %7473 = vmatpush2.bf16.msra.mxu0 0
      %7474 = vmatprep.subr.bf16.mxu0 0
      %7475 = vmatpush2.bf16.msra.mxu0 0
      %7476 = vmatprep.subr.bf16.mxu0 0
      %7477 = vmatpush2.bf16.msra.mxu0 0
      %7478 = vmatprep.subr.bf16.mxu0 0
      %7479 = vmatpush2.bf16.msra.mxu0 0
      %7480 = vmatprep.subr.bf16.mxu0 0
      %7481 = vmatpush2.bf16.msra.mxu0 0
      %7482 = vmatprep.subr.bf16.mxu0 0
      %7483 = vmatpush2.bf16.msra.mxu0 0
      %7484 = vmatprep.subr.bf16.mxu0 0
      %7485 = vmatpush2.bf16.msra.mxu0 0
      %7486 = vmatprep.subr.bf16.mxu0 0
      %7487 = vmatpush2.bf16.msra.mxu0 0
      %7488 = vmatprep.mubr.bf16.mxu0 0
      %7489 = vmatmul.mubr.bf16.gmra.mxu0 %v7355
      %v7490 = vpop.f32.mrf.mxu0
      %v7491 = vadd.f32 0.0, %v7490
      %v7492 = vpop.f32.mrf.mxu0
      %v7493 = vpop.f32.mrf.mxu0
      %v7494 = vadd.f32 0.0, %v7493
      %v7495 = vpop.f32.mrf.mxu0
      %7496 = vmatprep.mubr.bf16.mxu0 0
      %7497 = vmatmul.mubr.bf16.gmra.mxu0 %v7357
      %v7498 = vpop.f32.mrf.mxu0
      %v7499 = vadd.f32 0.0, %v7498
      %v7500 = vpop.f32.mrf.mxu0
      %v7501 = vpop.f32.mrf.mxu0
      %v7502 = vadd.f32 0.0, %v7501
      %v7503 = vpop.f32.mrf.mxu0
      %7504 = vmatprep.mubr.bf16.mxu0 0
      %7505 = vmatmul.mubr.bf16.gmra.mxu0 %v7359
      %v7506 = vpop.f32.mrf.mxu0
      %v7507 = vadd.f32 0.0, %v7506
      %v7508 = vpop.f32.mrf.mxu0
      %v7509 = vpop.f32.mrf.mxu0
      %v7510 = vadd.f32 0.0, %v7509
      %v7511 = vpop.f32.mrf.mxu0
      %7512 = vmatprep.mubr.bf16.mxu0 0
      %7513 = vmatmul.mubr.bf16.gmra.mxu0 %v7361
      %v7514 = vpop.f32.mrf.mxu0
      %v7515 = vadd.f32 0.0, %v7514
      %v7516 = vpop.f32.mrf.mxu0
      %v7517 = vpop.f32.mrf.mxu0
      %v7518 = vadd.f32 0.0, %v7517
      %v7519 = vpop.f32.mrf.mxu0
      %7520 = vmatprep.mubr.bf16.mxu0 0
      %7521 = vmatmul.mubr.bf16.gmra.mxu0 %v7363
      %v7522 = vpop.f32.mrf.mxu0
      %v7523 = vadd.f32 0.0, %v7522
      %v7524 = vpop.f32.mrf.mxu0
      %v7525 = vpop.f32.mrf.mxu0
      %v7526 = vadd.f32 0.0, %v7525
      %v7527 = vpop.f32.mrf.mxu0
      %7528 = vmatprep.mubr.bf16.mxu0 0
      %7529 = vmatmul.mubr.bf16.gmra.mxu0 %v7365
      %v7530 = vpop.f32.mrf.mxu0
      %v7531 = vadd.f32 0.0, %v7530
      %v7532 = vpop.f32.mrf.mxu0
      %v7533 = vpop.f32.mrf.mxu0
      %v7534 = vadd.f32 0.0, %v7533
      %v7535 = vpop.f32.mrf.mxu0
      %7536 = vmatprep.mubr.bf16.mxu0 0
      %7537 = vmatmul.mubr.bf16.gmra.mxu0 %v7367
      %v7538 = vpop.f32.mrf.mxu0
      %v7539 = vadd.f32 0.0, %v7538
      %v7540 = vpop.f32.mrf.mxu0
      %v7541 = vpop.f32.mrf.mxu0
      %v7542 = vadd.f32 0.0, %v7541
      %v7543 = vpop.f32.mrf.mxu0
      %7544 = vmatprep.mubr.bf16.mxu0 0
      %7545 = vmatmul.mubr.bf16.gmra.mxu0 %v7369
      %v7546 = vpop.f32.mrf.mxu0
      %v7547 = vadd.f32 0.0, %v7546
      %v7548 = vpop.f32.mrf.mxu0
      %v7549 = vpop.f32.mrf.mxu0
      %v7550 = vadd.f32 0.0, %v7549
      %v7551 = vpop.f32.mrf.mxu0
      %7552 = vmatprep.mubr.bf16.mxu0 0
      %7553 = vmatmul.mubr.bf16.gmra.mxu0 %v7371
      %v7554 = vpop.f32.mrf.mxu0
      %v7555 = vadd.f32 0.0, %v7554
      %v7556 = vpop.f32.mrf.mxu0
      %v7557 = vpop.f32.mrf.mxu0
      %v7558 = vadd.f32 0.0, %v7557
      %v7559 = vpop.f32.mrf.mxu0
      %7560 = vmatprep.mubr.bf16.mxu0 0
      %7561 = vmatmul.mubr.bf16.gmra.mxu0 %v7373
      %v7562 = vpop.f32.mrf.mxu0
      %v7563 = vadd.f32 0.0, %v7562
      %v7564 = vpop.f32.mrf.mxu0
      %v7565 = vpop.f32.mrf.mxu0
      %v7566 = vadd.f32 0.0, %v7565
      %v7567 = vpop.f32.mrf.mxu0
      %7568 = vmatprep.mubr.bf16.mxu0 0
      %7569 = vmatmul.mubr.bf16.gmra.mxu0 %v7375
      %v7570 = vpop.f32.mrf.mxu0
      %v7571 = vadd.f32 0.0, %v7570
      %v7572 = vpop.f32.mrf.mxu0
      %v7573 = vpop.f32.mrf.mxu0
      %v7574 = vadd.f32 0.0, %v7573
      %v7575 = vpop.f32.mrf.mxu0
      %7576 = vmatprep.mubr.bf16.mxu0 0
      %7577 = vmatmul.mubr.bf16.gmra.mxu0 %v7377
      %v7578 = vpop.f32.mrf.mxu0
      %v7579 = vadd.f32 0.0, %v7578
      %v7580 = vpop.f32.mrf.mxu0
      %v7581 = vpop.f32.mrf.mxu0
      %v7582 = vadd.f32 0.0, %v7581
      %v7583 = vpop.f32.mrf.mxu0
      %7584 = vmatprep.mubr.bf16.mxu0 0
      %7585 = vmatmul.mubr.bf16.gmra.mxu0 %v7379
      %v7586 = vpop.f32.mrf.mxu0
      %v7587 = vadd.f32 0.0, %v7586
      %v7588 = vpop.f32.mrf.mxu0
      %v7589 = vpop.f32.mrf.mxu0
      %v7590 = vadd.f32 0.0, %v7589
      %v7591 = vpop.f32.mrf.mxu0
      %7592 = vmatprep.mubr.bf16.mxu0 0
      %7593 = vmatmul.mubr.bf16.gmra.mxu0 %v7381
      %v7594 = vpop.f32.mrf.mxu0
      %v7595 = vadd.f32 0.0, %v7594
      %v7596 = vpop.f32.mrf.mxu0
      %v7597 = vpop.f32.mrf.mxu0
      %v7598 = vadd.f32 0.0, %v7597
      %v7599 = vpop.f32.mrf.mxu0
      %7600 = vmatprep.mubr.bf16.mxu0 0
      %7601 = vmatmul.mubr.bf16.gmra.mxu0 %v7383
      %v7602 = vpop.f32.mrf.mxu0
      %v7603 = vadd.f32 0.0, %v7602
      %v7604 = vpop.f32.mrf.mxu0
      %v7605 = vpop.f32.mrf.mxu0
      %v7606 = vadd.f32 0.0, %v7605
      %v7607 = vpop.f32.mrf.mxu0
      %7608 = vmatprep.mubr.bf16.mxu0 0
      %7609 = vmatmul.mubr.bf16.gmra.mxu0 %v7385
      %v7610 = vpop.f32.mrf.mxu0
      %v7611 = vadd.f32 0.0, %v7610
      %v7612 = vpop.f32.mrf.mxu0
      %v7613 = vpop.f32.mrf.mxu0
      %v7614 = vadd.f32 0.0, %v7613
      %v7615 = vpop.f32.mrf.mxu0
      %7616 = vmatprep.mubr.bf16.mxu0 0
      %7617 = vmatmul.mubr.bf16.gmra.mxu0 %v7387
      %v7618 = vpop.f32.mrf.mxu0
      %v7619 = vadd.f32 0.0, %v7618
      %v7620 = vpop.f32.mrf.mxu0
      %v7621 = vpop.f32.mrf.mxu0
      %v7622 = vadd.f32 0.0, %v7621
      %v7623 = vpop.f32.mrf.mxu0
      %7624 = vmatprep.mubr.bf16.mxu0 0
      %7625 = vmatmul.mubr.bf16.gmra.mxu0 %v7389
      %v7626 = vpop.f32.mrf.mxu0
      %v7627 = vadd.f32 0.0, %v7626
      %v7628 = vpop.f32.mrf.mxu0
      %v7629 = vpop.f32.mrf.mxu0
      %v7630 = vadd.f32 0.0, %v7629
      %v7631 = vpop.f32.mrf.mxu0
      %7632 = vdwg.mxu0
      %v7633 = vadd.f32 %v7170, %v7491
      %v7634 = vadd.f32 %v7171, %v7494
      %v7635 = vadd.f32 %v7172, %v7499
      %v7636 = vadd.f32 %v7173, %v7502
      %v7637 = vadd.f32 %v7174, %v7507
      %v7638 = vadd.f32 %v7175, %v7510
      %v7639 = vadd.f32 %v7176, %v7515
      %v7640 = vadd.f32 %v7177, %v7518
      %v7641 = vadd.f32 %v7178, %v7523
      %v7642 = vadd.f32 %v7179, %v7526
      %v7643 = vadd.f32 %v7180, %v7531
      %v7644 = vadd.f32 %v7181, %v7534
      %v7645 = vadd.f32 %v7182, %v7539
      %v7646 = vadd.f32 %v7183, %v7542
      %v7647 = vadd.f32 %v7184, %v7547
      %v7648 = vadd.f32 %v7185, %v7550
      %v7649 = vadd.f32 %v7186, %v7555
      %v7650 = vadd.f32 %v7187, %v7558
      %v7651 = vadd.f32 %v7188, %v7563
      %v7652 = vadd.f32 %v7189, %v7566
      %v7653 = vadd.f32 %v7190, %v7571
      %v7654 = vadd.f32 %v7191, %v7574
      %v7655 = vadd.f32 %v7192, %v7579
      %v7656 = vadd.f32 %v7193, %v7582
      %v7657 = vadd.f32 %v7194, %v7587
      %v7658 = vadd.f32 %v7195, %v7590
      %v7659 = vadd.f32 %v7196, %v7595
      %v7660 = vadd.f32 %v7197, %v7598
      %v7661 = vadd.f32 %v7198, %v7603
      %v7662 = vadd.f32 %v7199, %v7606
      %v7663 = vadd.f32 %v7200, %v7611
      %v7664 = vadd.f32 %v7201, %v7614
      %v7665 = vadd.f32 %v7202, %v7619
      %v7666 = vadd.f32 %v7203, %v7622
      %v7667 = vadd.f32 %v7204, %v7627
      %v7668 = vadd.f32 %v7205, %v7630
      %v7669 = vld [vmem:[#allocation2 + $0xa0] sm:$0x3]
      %s7670 = scalar_lea.vmem %s7, 448
      %v7671 = vld [vmem:[%s7670] sm:$0xf]
      %v7672 = vld [vmem:[%s7670 + $0x4] sm:$0xf]
      %v7673 = vld [vmem:[%s7670 + $0x8] sm:$0xf]
      %v7674 = vld [vmem:[%s7670 + $0xc] sm:$0xf]
      %v7675 = vld [vmem:[%s7670 + $0x10] sm:$0xf]
      %v7676 = vld [vmem:[%s7670 + $0x14] sm:$0xf]
      %v7677 = vld [vmem:[%s7670 + $0x18] sm:$0xf]
      %v7678 = vld [vmem:[%s7670 + $0x1c] sm:$0xf]
      %v7679 = vld [vmem:[%s7670 + $0x20] sm:$0xf]
      %v7680 = vld [vmem:[%s7670 + $0x24] sm:$0xf]
      %v7681 = vld [vmem:[%s7670 + $0x28] sm:$0xf]
      %v7682 = vld [vmem:[%s7670 + $0x2c] sm:$0xf]
      %v7683 = vld [vmem:[%s7670 + $0x30] sm:$0xf]
      %v7684 = vld [vmem:[%s7670 + $0x34] sm:$0xf]
      %v7685 = vld [vmem:[%s7670 + $0x38] sm:$0xf]
      %v7686 = vld [vmem:[%s7670 + $0x3c] sm:$0xf]
      %v7688 = vunpack.c.l.b16 %v7669
      %v7689 = vpack.c.b16 %v7688, %v7688
      %vm7690 = vsmask.f32 5376
      %v7692 = vshrl.u32 %v7334, 16
      %v7694 = vrot.slane %v7692, 2
      %v7695 = vshll.u32 %v7334, 16
      %v7697 = vrot.slane %v7695, 3
      %v7698 = vor.u32 %v7694, %v7697
      %v7700 = vshrl.u32 %v7335, 16
      %v7702 = vrot.slane %v7700, 2
      %v7703 = vshll.u32 %v7335, 16
      %v7705 = vrot.slane %v7703, 3
      %v7706 = vor.u32 %v7702, %v7705
      %v7707 = vsel %vm7690, %v7698, %v7706
      %v7709 = vshrl.u32 %v7336, 16
      %v7711 = vrot.slane %v7709, 2
      %v7712 = vshll.u32 %v7336, 16
      %v7714 = vrot.slane %v7712, 3
      %v7715 = vor.u32 %v7711, %v7714
      %v7716 = vsel %vm7690, %v7706, %v7715
      %v7718 = vshrl.u32 %v7337, 16
      %v7720 = vrot.slane %v7718, 2
      %v7721 = vshll.u32 %v7337, 16
      %v7723 = vrot.slane %v7721, 3
      %v7724 = vor.u32 %v7720, %v7723
      %v7725 = vsel %vm7690, %v7715, %v7724
      %v7727 = vshrl.u32 %v7338, 16
      %v7729 = vrot.slane %v7727, 2
      %v7730 = vshll.u32 %v7338, 16
      %v7732 = vrot.slane %v7730, 3
      %v7733 = vor.u32 %v7729, %v7732
      %v7734 = vsel %vm7690, %v7724, %v7733
      %v7736 = vshrl.u32 %v7339, 16
      %v7738 = vrot.slane %v7736, 2
      %v7739 = vshll.u32 %v7339, 16
      %v7741 = vrot.slane %v7739, 3
      %v7742 = vor.u32 %v7738, %v7741
      %v7743 = vsel %vm7690, %v7733, %v7742
      %v7745 = vshrl.u32 %v7340, 16
      %v7747 = vrot.slane %v7745, 2
      %v7748 = vshll.u32 %v7340, 16
      %v7750 = vrot.slane %v7748, 3
      %v7751 = vor.u32 %v7747, %v7750
      %v7752 = vsel %vm7690, %v7742, %v7751
      %v7754 = vshrl.u32 %v7341, 16
      %v7756 = vrot.slane %v7754, 2
      %v7757 = vshll.u32 %v7341, 16
      %v7759 = vrot.slane %v7757, 3
      %v7760 = vor.u32 %v7756, %v7759
      %v7761 = vsel %vm7690, %v7751, %v7760
      %v7763 = vshrl.u32 %v7342, 16
      %v7765 = vrot.slane %v7763, 2
      %v7766 = vshll.u32 %v7342, 16
      %v7768 = vrot.slane %v7766, 3
      %v7769 = vor.u32 %v7765, %v7768
      %v7770 = vsel %vm7690, %v7760, %v7769
      %v7772 = vshrl.u32 %v7343, 16
      %v7774 = vrot.slane %v7772, 2
      %v7775 = vshll.u32 %v7343, 16
      %v7777 = vrot.slane %v7775, 3
      %v7778 = vor.u32 %v7774, %v7777
      %v7779 = vsel %vm7690, %v7769, %v7778
      %v7781 = vshrl.u32 %v7344, 16
      %v7783 = vrot.slane %v7781, 2
      %v7784 = vshll.u32 %v7344, 16
      %v7786 = vrot.slane %v7784, 3
      %v7787 = vor.u32 %v7783, %v7786
      %v7788 = vsel %vm7690, %v7778, %v7787
      %v7790 = vshrl.u32 %v7345, 16
      %v7792 = vrot.slane %v7790, 2
      %v7793 = vshll.u32 %v7345, 16
      %v7795 = vrot.slane %v7793, 3
      %v7796 = vor.u32 %v7792, %v7795
      %v7797 = vsel %vm7690, %v7787, %v7796
      %v7799 = vshrl.u32 %v7346, 16
      %v7801 = vrot.slane %v7799, 2
      %v7802 = vshll.u32 %v7346, 16
      %v7804 = vrot.slane %v7802, 3
      %v7805 = vor.u32 %v7801, %v7804
      %v7806 = vsel %vm7690, %v7796, %v7805
      %v7808 = vshrl.u32 %v7347, 16
      %v7810 = vrot.slane %v7808, 2
      %v7811 = vshll.u32 %v7347, 16
      %v7813 = vrot.slane %v7811, 3
      %v7814 = vor.u32 %v7810, %v7813
      %v7815 = vsel %vm7690, %v7805, %v7814
      %v7817 = vshrl.u32 %v7348, 16
      %v7819 = vrot.slane %v7817, 2
      %v7820 = vshll.u32 %v7348, 16
      %v7822 = vrot.slane %v7820, 3
      %v7823 = vor.u32 %v7819, %v7822
      %v7824 = vsel %vm7690, %v7814, %v7823
      %v7826 = vshrl.u32 %v7349, 16
      %v7828 = vrot.slane %v7826, 2
      %v7829 = vshll.u32 %v7349, 16
      %v7831 = vrot.slane %v7829, 3
      %v7832 = vor.u32 %v7828, %v7831
      %v7833 = vsel %vm7690, %v7823, %v7832
      %v7835 = vshrl.u32 %v7350, 16
      %v7837 = vrot.slane %v7835, 2
      %v7838 = vshll.u32 %v7350, 16
      %v7840 = vrot.slane %v7838, 3
      %v7841 = vor.u32 %v7837, %v7840
      %v7842 = vsel %vm7690, %v7832, %v7841
      %v7844 = vshrl.u32 %v7351, 16
      %v7846 = vrot.slane %v7844, 2
      %v7847 = vshll.u32 %v7351, 16
      %v7849 = vrot.slane %v7847, 3
      %v7850 = vor.u32 %v7846, %v7849
      %v7851 = vsel %vm7690, %v7841, %v7850
      %v7853 = vshrl.u32 %v7689, 16
      %v7855 = vrot.slane %v7853, 2
      %v7856 = vshll.u32 %v7689, 16
      %v7858 = vrot.slane %v7856, 3
      %v7859 = vor.u32 %v7855, %v7858
      %v7860 = vsel %vm7690, %v7850, %v7859
      %v7895 = vunpack.c.l.b16 %v7671
      %v7896 = vunpack.c.l.b16 %v7672
      %v7897 = vunpack.c.l.b16 %v7673
      %v7898 = vunpack.c.l.b16 %v7674
      %v7899 = vunpack.c.l.b16 %v7675
      %v7900 = vunpack.c.l.b16 %v7676
      %v7901 = vunpack.c.l.b16 %v7677
      %v7902 = vunpack.c.l.b16 %v7678
      %v7903 = vunpack.c.l.b16 %v7679
      %v7904 = vunpack.c.l.b16 %v7680
      %v7905 = vunpack.c.l.b16 %v7681
      %v7906 = vunpack.c.l.b16 %v7682
      %v7907 = vunpack.c.l.b16 %v7683
      %v7908 = vunpack.c.l.b16 %v7684
      %v7909 = vunpack.c.l.b16 %v7685
      %v7910 = vunpack.c.l.b16 %v7686
      %v7911 = vpack.c.b16 %v7896, %v7895
      %v7912 = vpack.c.b16 %v7898, %v7897
      %v7913 = vpack.c.b16 %v7900, %v7899
      %v7914 = vpack.c.b16 %v7902, %v7901
      %v7915 = vpack.c.b16 %v7904, %v7903
      %v7916 = vpack.c.b16 %v7906, %v7905
      %v7917 = vpack.c.b16 %v7908, %v7907
      %v7918 = vpack.c.b16 %v7910, %v7909
      %7927 = vmatprep.subr.bf16.mxu0 0
      %7928 = vmatpush1.bf16.msra.mxu0 %v7918
      %7929 = vmatprep.subr.bf16.mxu0 0
      %7930 = vmatpush1.bf16.msra.mxu0 %v7917
      %7931 = vmatprep.subr.bf16.mxu0 0
      %7932 = vmatpush1.bf16.msra.mxu0 %v7916
      %7933 = vmatprep.subr.bf16.mxu0 0
      %7934 = vmatpush1.bf16.msra.mxu0 %v7915
      %7935 = vmatprep.subr.bf16.mxu0 0
      %7936 = vmatpush1.bf16.msra.mxu0 %v7914
      %7937 = vmatprep.subr.bf16.mxu0 0
      %7938 = vmatpush1.bf16.msra.mxu0 %v7913
      %7939 = vmatprep.subr.bf16.mxu0 0
      %7940 = vmatpush1.bf16.msra.mxu0 %v7912
      %7941 = vmatprep.subr.bf16.mxu0 0
      %7942 = vmatpush1.bf16.msra.mxu0 %v7911
      %7943 = vmatprep.subr.bf16.mxu0 0
      %7944 = vmatpush2.bf16.msra.mxu0 0
      %7945 = vmatprep.subr.bf16.mxu0 0
      %7946 = vmatpush2.bf16.msra.mxu0 0
      %7947 = vmatprep.subr.bf16.mxu0 0
      %7948 = vmatpush2.bf16.msra.mxu0 0
      %7949 = vmatprep.subr.bf16.mxu0 0
      %7950 = vmatpush2.bf16.msra.mxu0 0
      %7951 = vmatprep.subr.bf16.mxu0 0
      %7952 = vmatpush2.bf16.msra.mxu0 0
      %7953 = vmatprep.subr.bf16.mxu0 0
      %7954 = vmatpush2.bf16.msra.mxu0 0
      %7955 = vmatprep.subr.bf16.mxu0 0
      %7956 = vmatpush2.bf16.msra.mxu0 0
      %7957 = vmatprep.subr.bf16.mxu0 0
      %7958 = vmatpush2.bf16.msra.mxu0 0
      %7959 = vmatprep.mubr.bf16.mxu0 0
      %7960 = vmatmul.mubr.bf16.gmra.mxu0 %v7707
      %v7961 = vpop.f32.mrf.mxu0
      %v7962 = vadd.f32 0.0, %v7961
      %v7963 = vpop.f32.mrf.mxu0
      %v7964 = vpop.f32.mrf.mxu0
      %v7965 = vadd.f32 0.0, %v7964
      %v7966 = vpop.f32.mrf.mxu0
      %7967 = vmatprep.mubr.bf16.mxu0 0
      %7968 = vmatmul.mubr.bf16.gmra.mxu0 %v7716
      %v7969 = vpop.f32.mrf.mxu0
      %v7970 = vadd.f32 0.0, %v7969
      %v7971 = vpop.f32.mrf.mxu0
      %v7972 = vpop.f32.mrf.mxu0
      %v7973 = vadd.f32 0.0, %v7972
      %v7974 = vpop.f32.mrf.mxu0
      %7975 = vmatprep.mubr.bf16.mxu0 0
      %7976 = vmatmul.mubr.bf16.gmra.mxu0 %v7725
      %v7977 = vpop.f32.mrf.mxu0
      %v7978 = vadd.f32 0.0, %v7977
      %v7979 = vpop.f32.mrf.mxu0
      %v7980 = vpop.f32.mrf.mxu0
      %v7981 = vadd.f32 0.0, %v7980
      %v7982 = vpop.f32.mrf.mxu0
      %7983 = vmatprep.mubr.bf16.mxu0 0
      %7984 = vmatmul.mubr.bf16.gmra.mxu0 %v7734
      %v7985 = vpop.f32.mrf.mxu0
      %v7986 = vadd.f32 0.0, %v7985
      %v7987 = vpop.f32.mrf.mxu0
      %v7988 = vpop.f32.mrf.mxu0
      %v7989 = vadd.f32 0.0, %v7988
      %v7990 = vpop.f32.mrf.mxu0
      %7991 = vmatprep.mubr.bf16.mxu0 0
      %7992 = vmatmul.mubr.bf16.gmra.mxu0 %v7743
      %v7993 = vpop.f32.mrf.mxu0
      %v7994 = vadd.f32 0.0, %v7993
      %v7995 = vpop.f32.mrf.mxu0
      %v7996 = vpop.f32.mrf.mxu0
      %v7997 = vadd.f32 0.0, %v7996
      %v7998 = vpop.f32.mrf.mxu0
      %7999 = vmatprep.mubr.bf16.mxu0 0
      %8000 = vmatmul.mubr.bf16.gmra.mxu0 %v7752
      %v8001 = vpop.f32.mrf.mxu0
      %v8002 = vadd.f32 0.0, %v8001
      %v8003 = vpop.f32.mrf.mxu0
      %v8004 = vpop.f32.mrf.mxu0
      %v8005 = vadd.f32 0.0, %v8004
      %v8006 = vpop.f32.mrf.mxu0
      %8007 = vmatprep.mubr.bf16.mxu0 0
      %8008 = vmatmul.mubr.bf16.gmra.mxu0 %v7761
      %v8009 = vpop.f32.mrf.mxu0
      %v8010 = vadd.f32 0.0, %v8009
      %v8011 = vpop.f32.mrf.mxu0
      %v8012 = vpop.f32.mrf.mxu0
      %v8013 = vadd.f32 0.0, %v8012
      %v8014 = vpop.f32.mrf.mxu0
      %8015 = vmatprep.mubr.bf16.mxu0 0
      %8016 = vmatmul.mubr.bf16.gmra.mxu0 %v7770
      %v8017 = vpop.f32.mrf.mxu0
      %v8018 = vadd.f32 0.0, %v8017
      %v8019 = vpop.f32.mrf.mxu0
      %v8020 = vpop.f32.mrf.mxu0
      %v8021 = vadd.f32 0.0, %v8020
      %v8022 = vpop.f32.mrf.mxu0
      %8023 = vmatprep.mubr.bf16.mxu0 0
      %8024 = vmatmul.mubr.bf16.gmra.mxu0 %v7779
      %v8025 = vpop.f32.mrf.mxu0
      %v8026 = vadd.f32 0.0, %v8025
      %v8027 = vpop.f32.mrf.mxu0
      %v8028 = vpop.f32.mrf.mxu0
      %v8029 = vadd.f32 0.0, %v8028
      %v8030 = vpop.f32.mrf.mxu0
      %8031 = vmatprep.mubr.bf16.mxu0 0
      %8032 = vmatmul.mubr.bf16.gmra.mxu0 %v7788
      %v8033 = vpop.f32.mrf.mxu0
      %v8034 = vadd.f32 0.0, %v8033
      %v8035 = vpop.f32.mrf.mxu0
      %v8036 = vpop.f32.mrf.mxu0
      %v8037 = vadd.f32 0.0, %v8036
      %v8038 = vpop.f32.mrf.mxu0
      %8039 = vmatprep.mubr.bf16.mxu0 0
      %8040 = vmatmul.mubr.bf16.gmra.mxu0 %v7797
      %v8041 = vpop.f32.mrf.mxu0
      %v8042 = vadd.f32 0.0, %v8041
      %v8043 = vpop.f32.mrf.mxu0
      %v8044 = vpop.f32.mrf.mxu0
      %v8045 = vadd.f32 0.0, %v8044
      %v8046 = vpop.f32.mrf.mxu0
      %8047 = vmatprep.mubr.bf16.mxu0 0
      %8048 = vmatmul.mubr.bf16.gmra.mxu0 %v7806
      %v8049 = vpop.f32.mrf.mxu0
      %v8050 = vadd.f32 0.0, %v8049
      %v8051 = vpop.f32.mrf.mxu0
      %v8052 = vpop.f32.mrf.mxu0
      %v8053 = vadd.f32 0.0, %v8052
      %v8054 = vpop.f32.mrf.mxu0
      %8055 = vmatprep.mubr.bf16.mxu0 0
      %8056 = vmatmul.mubr.bf16.gmra.mxu0 %v7815
      %v8057 = vpop.f32.mrf.mxu0
      %v8058 = vadd.f32 0.0, %v8057
      %v8059 = vpop.f32.mrf.mxu0
      %v8060 = vpop.f32.mrf.mxu0
      %v8061 = vadd.f32 0.0, %v8060
      %v8062 = vpop.f32.mrf.mxu0
      %8063 = vmatprep.mubr.bf16.mxu0 0
      %8064 = vmatmul.mubr.bf16.gmra.mxu0 %v7824
      %v8065 = vpop.f32.mrf.mxu0
      %v8066 = vadd.f32 0.0, %v8065
      %v8067 = vpop.f32.mrf.mxu0
      %v8068 = vpop.f32.mrf.mxu0
      %v8069 = vadd.f32 0.0, %v8068
      %v8070 = vpop.f32.mrf.mxu0
      %8071 = vmatprep.mubr.bf16.mxu0 0
      %8072 = vmatmul.mubr.bf16.gmra.mxu0 %v7833
      %v8073 = vpop.f32.mrf.mxu0
      %v8074 = vadd.f32 0.0, %v8073
      %v8075 = vpop.f32.mrf.mxu0
      %v8076 = vpop.f32.mrf.mxu0
      %v8077 = vadd.f32 0.0, %v8076
      %v8078 = vpop.f32.mrf.mxu0
      %8079 = vmatprep.mubr.bf16.mxu0 0
      %8080 = vmatmul.mubr.bf16.gmra.mxu0 %v7842
      %v8081 = vpop.f32.mrf.mxu0
      %v8082 = vadd.f32 0.0, %v8081
      %v8083 = vpop.f32.mrf.mxu0
      %v8084 = vpop.f32.mrf.mxu0
      %v8085 = vadd.f32 0.0, %v8084
      %v8086 = vpop.f32.mrf.mxu0
      %8087 = vmatprep.mubr.bf16.mxu0 0
      %8088 = vmatmul.mubr.bf16.gmra.mxu0 %v7851
      %v8089 = vpop.f32.mrf.mxu0
      %v8090 = vadd.f32 0.0, %v8089
      %v8091 = vpop.f32.mrf.mxu0
      %v8092 = vpop.f32.mrf.mxu0
      %v8093 = vadd.f32 0.0, %v8092
      %v8094 = vpop.f32.mrf.mxu0
      %8095 = vmatprep.mubr.bf16.mxu0 0
      %8096 = vmatmul.mubr.bf16.gmra.mxu0 %v7860
      %v8097 = vpop.f32.mrf.mxu0
      %v8098 = vadd.f32 0.0, %v8097
      %v8099 = vpop.f32.mrf.mxu0
      %v8100 = vpop.f32.mrf.mxu0
      %v8101 = vadd.f32 0.0, %v8100
      %v8102 = vpop.f32.mrf.mxu0
      %8103 = vdwg.mxu0
      %v8104 = vadd.f32 %v7633, %v7962
      %v8105 = vadd.f32 %v7634, %v7965
      %v8106 = vadd.f32 %v7635, %v7970
      %v8107 = vadd.f32 %v7636, %v7973
      %v8108 = vadd.f32 %v7637, %v7978
      %v8109 = vadd.f32 %v7638, %v7981
      %v8110 = vadd.f32 %v7639, %v7986
      %v8111 = vadd.f32 %v7640, %v7989
      %v8112 = vadd.f32 %v7641, %v7994
      %v8113 = vadd.f32 %v7642, %v7997
      %v8114 = vadd.f32 %v7643, %v8002
      %v8115 = vadd.f32 %v7644, %v8005
      %v8116 = vadd.f32 %v7645, %v8010
      %v8117 = vadd.f32 %v7646, %v8013
      %v8118 = vadd.f32 %v7647, %v8018
      %v8119 = vadd.f32 %v7648, %v8021
      %v8120 = vadd.f32 %v7649, %v8026
      %v8121 = vadd.f32 %v7650, %v8029
      %v8122 = vadd.f32 %v7651, %v8034
      %v8123 = vadd.f32 %v7652, %v8037
      %v8124 = vadd.f32 %v7653, %v8042
      %v8125 = vadd.f32 %v7654, %v8045
      %v8126 = vadd.f32 %v7655, %v8050
      %v8127 = vadd.f32 %v7656, %v8053
      %v8128 = vadd.f32 %v7657, %v8058
      %v8129 = vadd.f32 %v7658, %v8061
      %v8130 = vadd.f32 %v7659, %v8066
      %v8131 = vadd.f32 %v7660, %v8069
      %v8132 = vadd.f32 %v7661, %v8074
      %v8133 = vadd.f32 %v7662, %v8077
      %v8134 = vadd.f32 %v7663, %v8082
      %v8135 = vadd.f32 %v7664, %v8085
      %v8136 = vadd.f32 %v7665, %v8090
      %v8137 = vadd.f32 %v7666, %v8093
      %v8138 = vadd.f32 %v7667, %v8098
      %v8139 = vadd.f32 %v7668, %v8101
      %v8140 = vld [vmem:[#allocation2 + $0x10] sm:$0x8]
      %s8141 = scalar_lea.vmem %s7, 512
      %v8142 = vld [vmem:[%s8141] sm:$0xf]
      %v8143 = vld [vmem:[%s8141 + $0x4] sm:$0xf]
      %v8144 = vld [vmem:[%s8141 + $0x8] sm:$0xf]
      %v8145 = vld [vmem:[%s8141 + $0xc] sm:$0xf]
      %v8146 = vld [vmem:[%s8141 + $0x10] sm:$0xf]
      %v8147 = vld [vmem:[%s8141 + $0x14] sm:$0xf]
      %v8148 = vld [vmem:[%s8141 + $0x18] sm:$0xf]
      %v8149 = vld [vmem:[%s8141 + $0x1c] sm:$0xf]
      %v8150 = vld [vmem:[%s8141 + $0x20] sm:$0xf]
      %v8151 = vld [vmem:[%s8141 + $0x24] sm:$0xf]
      %v8152 = vld [vmem:[%s8141 + $0x28] sm:$0xf]
      %v8153 = vld [vmem:[%s8141 + $0x2c] sm:$0xf]
      %v8154 = vld [vmem:[%s8141 + $0x30] sm:$0xf]
      %v8155 = vld [vmem:[%s8141 + $0x34] sm:$0xf]
      %v8156 = vld [vmem:[%s8141 + $0x38] sm:$0xf]
      %v8157 = vld [vmem:[%s8141 + $0x3c] sm:$0xf]
      %v8159 = vunpack.c.l.b16 %v8140
      %v8160 = vpack.c.b16 %v7298, %v8159
      %vm8161 = vcmask 1044480
      %v8162 = vrot.slane %v8160, 3
      %v8163 = vrot.slane %v7335, 3
      %v8164 = vsel %vm8161, %v8162, %v8163
      %v8165 = vrot.slane %v7336, 3
      %v8166 = vsel %vm8161, %v8163, %v8165
      %v8167 = vrot.slane %v7337, 3
      %v8168 = vsel %vm8161, %v8165, %v8167
      %v8169 = vrot.slane %v7338, 3
      %v8170 = vsel %vm8161, %v8167, %v8169
      %v8171 = vrot.slane %v7339, 3
      %v8172 = vsel %vm8161, %v8169, %v8171
      %v8173 = vrot.slane %v7340, 3
      %v8174 = vsel %vm8161, %v8171, %v8173
      %v8175 = vrot.slane %v7341, 3
      %v8176 = vsel %vm8161, %v8173, %v8175
      %v8177 = vrot.slane %v7342, 3
      %v8178 = vsel %vm8161, %v8175, %v8177
      %v8179 = vrot.slane %v7343, 3
      %v8180 = vsel %vm8161, %v8177, %v8179
      %v8181 = vrot.slane %v7344, 3
      %v8182 = vsel %vm8161, %v8179, %v8181
      %v8183 = vrot.slane %v7345, 3
      %v8184 = vsel %vm8161, %v8181, %v8183
      %v8185 = vrot.slane %v7346, 3
      %v8186 = vsel %vm8161, %v8183, %v8185
      %v8187 = vrot.slane %v7347, 3
      %v8188 = vsel %vm8161, %v8185, %v8187
      %v8189 = vrot.slane %v7348, 3
      %v8190 = vsel %vm8161, %v8187, %v8189
      %v8191 = vrot.slane %v7349, 3
      %v8192 = vsel %vm8161, %v8189, %v8191
      %v8193 = vrot.slane %v7350, 3
      %v8194 = vsel %vm8161, %v8191, %v8193
      %v8195 = vrot.slane %v7351, 3
      %v8196 = vsel %vm8161, %v8193, %v8195
      %v8197 = vrot.slane %v7689, 3
      %v8198 = vsel %vm8161, %v8195, %v8197
      %v8233 = vunpack.c.l.b16 %v8142
      %v8234 = vunpack.c.l.b16 %v8143
      %v8235 = vunpack.c.l.b16 %v8144
      %v8236 = vunpack.c.l.b16 %v8145
      %v8237 = vunpack.c.l.b16 %v8146
      %v8238 = vunpack.c.l.b16 %v8147
      %v8239 = vunpack.c.l.b16 %v8148
      %v8240 = vunpack.c.l.b16 %v8149
      %v8241 = vunpack.c.l.b16 %v8150
      %v8242 = vunpack.c.l.b16 %v8151
      %v8243 = vunpack.c.l.b16 %v8152
      %v8244 = vunpack.c.l.b16 %v8153
      %v8245 = vunpack.c.l.b16 %v8154
      %v8246 = vunpack.c.l.b16 %v8155
      %v8247 = vunpack.c.l.b16 %v8156
      %v8248 = vunpack.c.l.b16 %v8157
      %v8249 = vpack.c.b16 %v8234, %v8233
      %v8250 = vpack.c.b16 %v8236, %v8235
      %v8251 = vpack.c.b16 %v8238, %v8237
      %v8252 = vpack.c.b16 %v8240, %v8239
      %v8253 = vpack.c.b16 %v8242, %v8241
      %v8254 = vpack.c.b16 %v8244, %v8243
      %v8255 = vpack.c.b16 %v8246, %v8245
      %v8256 = vpack.c.b16 %v8248, %v8247
      %8265 = vmatprep.subr.bf16.mxu0 0
      %8266 = vmatpush1.bf16.msra.mxu0 %v8256
      %8267 = vmatprep.subr.bf16.mxu0 0
      %8268 = vmatpush1.bf16.msra.mxu0 %v8255
      %8269 = vmatprep.subr.bf16.mxu0 0
      %8270 = vmatpush1.bf16.msra.mxu0 %v8254
      %8271 = vmatprep.subr.bf16.mxu0 0
      %8272 = vmatpush1.bf16.msra.mxu0 %v8253
      %8273 = vmatprep.subr.bf16.mxu0 0
      %8274 = vmatpush1.bf16.msra.mxu0 %v8252
      %8275 = vmatprep.subr.bf16.mxu0 0
      %8276 = vmatpush1.bf16.msra.mxu0 %v8251
      %8277 = vmatprep.subr.bf16.mxu0 0
      %8278 = vmatpush1.bf16.msra.mxu0 %v8250
      %8279 = vmatprep.subr.bf16.mxu0 0
      %8280 = vmatpush1.bf16.msra.mxu0 %v8249
      %8281 = vmatprep.subr.bf16.mxu0 0
      %8282 = vmatpush2.bf16.msra.mxu0 0
      %8283 = vmatprep.subr.bf16.mxu0 0
      %8284 = vmatpush2.bf16.msra.mxu0 0
      %8285 = vmatprep.subr.bf16.mxu0 0
      %8286 = vmatpush2.bf16.msra.mxu0 0
      %8287 = vmatprep.subr.bf16.mxu0 0
      %8288 = vmatpush2.bf16.msra.mxu0 0
      %8289 = vmatprep.subr.bf16.mxu0 0
      %8290 = vmatpush2.bf16.msra.mxu0 0
      %8291 = vmatprep.subr.bf16.mxu0 0
      %8292 = vmatpush2.bf16.msra.mxu0 0
      %8293 = vmatprep.subr.bf16.mxu0 0
      %8294 = vmatpush2.bf16.msra.mxu0 0
      %8295 = vmatprep.subr.bf16.mxu0 0
      %8296 = vmatpush2.bf16.msra.mxu0 0
      %8297 = vmatprep.mubr.bf16.mxu0 0
      %8298 = vmatmul.mubr.bf16.gmra.mxu0 %v8164
      %v8299 = vpop.f32.mrf.mxu0
      %v8300 = vadd.f32 0.0, %v8299
      %v8301 = vpop.f32.mrf.mxu0
      %v8302 = vpop.f32.mrf.mxu0
      %v8303 = vadd.f32 0.0, %v8302
      %v8304 = vpop.f32.mrf.mxu0
      %8305 = vmatprep.mubr.bf16.mxu0 0
      %8306 = vmatmul.mubr.bf16.gmra.mxu0 %v8166
      %v8307 = vpop.f32.mrf.mxu0
      %v8308 = vadd.f32 0.0, %v8307
      %v8309 = vpop.f32.mrf.mxu0
      %v8310 = vpop.f32.mrf.mxu0
      %v8311 = vadd.f32 0.0, %v8310
      %v8312 = vpop.f32.mrf.mxu0
      %8313 = vmatprep.mubr.bf16.mxu0 0
      %8314 = vmatmul.mubr.bf16.gmra.mxu0 %v8168
      %v8315 = vpop.f32.mrf.mxu0
      %v8316 = vadd.f32 0.0, %v8315
      %v8317 = vpop.f32.mrf.mxu0
      %v8318 = vpop.f32.mrf.mxu0
      %v8319 = vadd.f32 0.0, %v8318
      %v8320 = vpop.f32.mrf.mxu0
      %8321 = vmatprep.mubr.bf16.mxu0 0
      %8322 = vmatmul.mubr.bf16.gmra.mxu0 %v8170
      %v8323 = vpop.f32.mrf.mxu0
      %v8324 = vadd.f32 0.0, %v8323
      %v8325 = vpop.f32.mrf.mxu0
      %v8326 = vpop.f32.mrf.mxu0
      %v8327 = vadd.f32 0.0, %v8326
      %v8328 = vpop.f32.mrf.mxu0
      %8329 = vmatprep.mubr.bf16.mxu0 0
      %8330 = vmatmul.mubr.bf16.gmra.mxu0 %v8172
      %v8331 = vpop.f32.mrf.mxu0
      %v8332 = vadd.f32 0.0, %v8331
      %v8333 = vpop.f32.mrf.mxu0
      %v8334 = vpop.f32.mrf.mxu0
      %v8335 = vadd.f32 0.0, %v8334
      %v8336 = vpop.f32.mrf.mxu0
      %8337 = vmatprep.mubr.bf16.mxu0 0
      %8338 = vmatmul.mubr.bf16.gmra.mxu0 %v8174
      %v8339 = vpop.f32.mrf.mxu0
      %v8340 = vadd.f32 0.0, %v8339
      %v8341 = vpop.f32.mrf.mxu0
      %v8342 = vpop.f32.mrf.mxu0
      %v8343 = vadd.f32 0.0, %v8342
      %v8344 = vpop.f32.mrf.mxu0
      %8345 = vmatprep.mubr.bf16.mxu0 0
      %8346 = vmatmul.mubr.bf16.gmra.mxu0 %v8176
      %v8347 = vpop.f32.mrf.mxu0
      %v8348 = vadd.f32 0.0, %v8347
      %v8349 = vpop.f32.mrf.mxu0
      %v8350 = vpop.f32.mrf.mxu0
      %v8351 = vadd.f32 0.0, %v8350
      %v8352 = vpop.f32.mrf.mxu0
      %8353 = vmatprep.mubr.bf16.mxu0 0
      %8354 = vmatmul.mubr.bf16.gmra.mxu0 %v8178
      %v8355 = vpop.f32.mrf.mxu0
      %v8356 = vadd.f32 0.0, %v8355
      %v8357 = vpop.f32.mrf.mxu0
      %v8358 = vpop.f32.mrf.mxu0
      %v8359 = vadd.f32 0.0, %v8358
      %v8360 = vpop.f32.mrf.mxu0
      %8361 = vmatprep.mubr.bf16.mxu0 0
      %8362 = vmatmul.mubr.bf16.gmra.mxu0 %v8180
      %v8363 = vpop.f32.mrf.mxu0
      %v8364 = vadd.f32 0.0, %v8363
      %v8365 = vpop.f32.mrf.mxu0
      %v8366 = vpop.f32.mrf.mxu0
      %v8367 = vadd.f32 0.0, %v8366
      %v8368 = vpop.f32.mrf.mxu0
      %8369 = vmatprep.mubr.bf16.mxu0 0
      %8370 = vmatmul.mubr.bf16.gmra.mxu0 %v8182
      %v8371 = vpop.f32.mrf.mxu0
      %v8372 = vadd.f32 0.0, %v8371
      %v8373 = vpop.f32.mrf.mxu0
      %v8374 = vpop.f32.mrf.mxu0
      %v8375 = vadd.f32 0.0, %v8374
      %v8376 = vpop.f32.mrf.mxu0
      %8377 = vmatprep.mubr.bf16.mxu0 0
      %8378 = vmatmul.mubr.bf16.gmra.mxu0 %v8184
      %v8379 = vpop.f32.mrf.mxu0
      %v8380 = vadd.f32 0.0, %v8379
      %v8381 = vpop.f32.mrf.mxu0
      %v8382 = vpop.f32.mrf.mxu0
      %v8383 = vadd.f32 0.0, %v8382
      %v8384 = vpop.f32.mrf.mxu0
      %8385 = vmatprep.mubr.bf16.mxu0 0
      %8386 = vmatmul.mubr.bf16.gmra.mxu0 %v8186
      %v8387 = vpop.f32.mrf.mxu0
      %v8388 = vadd.f32 0.0, %v8387
      %v8389 = vpop.f32.mrf.mxu0
      %v8390 = vpop.f32.mrf.mxu0
      %v8391 = vadd.f32 0.0, %v8390
      %v8392 = vpop.f32.mrf.mxu0
      %8393 = vmatprep.mubr.bf16.mxu0 0
      %8394 = vmatmul.mubr.bf16.gmra.mxu0 %v8188
      %v8395 = vpop.f32.mrf.mxu0
      %v8396 = vadd.f32 0.0, %v8395
      %v8397 = vpop.f32.mrf.mxu0
      %v8398 = vpop.f32.mrf.mxu0
      %v8399 = vadd.f32 0.0, %v8398
      %v8400 = vpop.f32.mrf.mxu0
      %8401 = vmatprep.mubr.bf16.mxu0 0
      %8402 = vmatmul.mubr.bf16.gmra.mxu0 %v8190
      %v8403 = vpop.f32.mrf.mxu0
      %v8404 = vadd.f32 0.0, %v8403
      %v8405 = vpop.f32.mrf.mxu0
      %v8406 = vpop.f32.mrf.mxu0
      %v8407 = vadd.f32 0.0, %v8406
      %v8408 = vpop.f32.mrf.mxu0
      %8409 = vmatprep.mubr.bf16.mxu0 0
      %8410 = vmatmul.mubr.bf16.gmra.mxu0 %v8192
      %v8411 = vpop.f32.mrf.mxu0
      %v8412 = vadd.f32 0.0, %v8411
      %v8413 = vpop.f32.mrf.mxu0
      %v8414 = vpop.f32.mrf.mxu0
      %v8415 = vadd.f32 0.0, %v8414
      %v8416 = vpop.f32.mrf.mxu0
      %8417 = vmatprep.mubr.bf16.mxu0 0
      %8418 = vmatmul.mubr.bf16.gmra.mxu0 %v8194
      %v8419 = vpop.f32.mrf.mxu0
      %v8420 = vadd.f32 0.0, %v8419
      %v8421 = vpop.f32.mrf.mxu0
      %v8422 = vpop.f32.mrf.mxu0
      %v8423 = vadd.f32 0.0, %v8422
      %v8424 = vpop.f32.mrf.mxu0
      %8425 = vmatprep.mubr.bf16.mxu0 0
      %8426 = vmatmul.mubr.bf16.gmra.mxu0 %v8196
      %v8427 = vpop.f32.mrf.mxu0
      %v8428 = vadd.f32 0.0, %v8427
      %v8429 = vpop.f32.mrf.mxu0
      %v8430 = vpop.f32.mrf.mxu0
      %v8431 = vadd.f32 0.0, %v8430
      %v8432 = vpop.f32.mrf.mxu0
      %8433 = vmatprep.mubr.bf16.mxu0 0
      %8434 = vmatmul.mubr.bf16.gmra.mxu0 %v8198
      %v8435 = vpop.f32.mrf.mxu0
      %v8436 = vadd.f32 0.0, %v8435
      %v8437 = vpop.f32.mrf.mxu0
      %v8438 = vpop.f32.mrf.mxu0
      %v8439 = vadd.f32 0.0, %v8438
      %v8440 = vpop.f32.mrf.mxu0
      %8441 = vdwg.mxu0
      %v8442 = vadd.f32 %v8104, %v8300
      %v8443 = vadd.f32 %v8105, %v8303
      %v8444 = vadd.f32 %v8106, %v8308
      %v8445 = vadd.f32 %v8107, %v8311
      %v8446 = vadd.f32 %v8108, %v8316
      %v8447 = vadd.f32 %v8109, %v8319
      %v8448 = vadd.f32 %v8110, %v8324
      %v8449 = vadd.f32 %v8111, %v8327
      %v8450 = vadd.f32 %v8112, %v8332
      %v8451 = vadd.f32 %v8113, %v8335
      %v8452 = vadd.f32 %v8114, %v8340
      %v8453 = vadd.f32 %v8115, %v8343
      %v8454 = vadd.f32 %v8116, %v8348
      %v8455 = vadd.f32 %v8117, %v8351
      %v8456 = vadd.f32 %v8118, %v8356
      %v8457 = vadd.f32 %v8119, %v8359
      %v8458 = vadd.f32 %v8120, %v8364
      %v8459 = vadd.f32 %v8121, %v8367
      %v8460 = vadd.f32 %v8122, %v8372
      %v8461 = vadd.f32 %v8123, %v8375
      %v8462 = vadd.f32 %v8124, %v8380
      %v8463 = vadd.f32 %v8125, %v8383
      %v8464 = vadd.f32 %v8126, %v8388
      %v8465 = vadd.f32 %v8127, %v8391
      %v8466 = vadd.f32 %v8128, %v8396
      %v8467 = vadd.f32 %v8129, %v8399
      %v8468 = vadd.f32 %v8130, %v8404
      %v8469 = vadd.f32 %v8131, %v8407
      %v8470 = vadd.f32 %v8132, %v8412
      %v8471 = vadd.f32 %v8133, %v8415
      %v8472 = vadd.f32 %v8134, %v8420
      %v8473 = vadd.f32 %v8135, %v8423
      %v8474 = vadd.f32 %v8136, %v8428
      %v8475 = vadd.f32 %v8137, %v8431
      %v8476 = vadd.f32 %v8138, %v8436
      %v8477 = vadd.f32 %v8139, %v8439
      %v8478 = vld [vmem:[%s8] sm:$0x1]
      %v8480 = vlaneseq
      %v8481 = vshrl.u32 %v8480, 7
      %v8482 = vsub.s32 0, %v8481
      %v8483 = vrot.slane %v8478, %v8482
      %v8485 = vadd.f32 %v8442, %v8483
      %v8486 = vadd.f32 %v8443, %v8483
      %v8487 = vadd.f32 %v8444, %v8483
      %v8488 = vadd.f32 %v8445, %v8483
      %v8489 = vadd.f32 %v8446, %v8483
      %v8490 = vadd.f32 %v8447, %v8483
      %v8491 = vadd.f32 %v8448, %v8483
      %v8492 = vadd.f32 %v8449, %v8483
      %v8493 = vadd.f32 %v8450, %v8483
      %v8494 = vadd.f32 %v8451, %v8483
      %v8495 = vadd.f32 %v8452, %v8483
      %v8496 = vadd.f32 %v8453, %v8483
      %v8497 = vadd.f32 %v8454, %v8483
      %v8498 = vadd.f32 %v8455, %v8483
      %v8499 = vadd.f32 %v8456, %v8483
      %v8500 = vadd.f32 %v8457, %v8483
      %v8501 = vadd.f32 %v8458, %v8483
      %v8502 = vadd.f32 %v8459, %v8483
      %v8503 = vadd.f32 %v8460, %v8483
      %v8504 = vadd.f32 %v8461, %v8483
      %v8505 = vadd.f32 %v8462, %v8483
      %v8506 = vadd.f32 %v8463, %v8483
      %v8507 = vadd.f32 %v8464, %v8483
      %v8508 = vadd.f32 %v8465, %v8483
      %v8509 = vadd.f32 %v8466, %v8483
      %v8510 = vadd.f32 %v8467, %v8483
      %v8511 = vadd.f32 %v8468, %v8483
      %v8512 = vadd.f32 %v8469, %v8483
      %v8513 = vadd.f32 %v8470, %v8483
      %v8514 = vadd.f32 %v8471, %v8483
      %v8515 = vadd.f32 %v8472, %v8483
      %v8516 = vadd.f32 %v8473, %v8483
      %v8517 = vadd.f32 %v8474, %v8483
      %v8518 = vadd.f32 %v8475, %v8483
      %v8519 = vadd.f32 %v8476, %v8483
      %v8520 = vadd.f32 %v8477, %v8483
      %v8521 = vmul.f32 %v8485, 0.2
      %v8522 = vmul.f32 %v8486, 0.2
      %v8523 = vmul.f32 %v8487, 0.2
      %v8524 = vmul.f32 %v8488, 0.2
      %v8525 = vmul.f32 %v8489, 0.2
      %v8526 = vmul.f32 %v8490, 0.2
      %v8527 = vmul.f32 %v8491, 0.2
      %v8528 = vmul.f32 %v8492, 0.2
      %v8529 = vmul.f32 %v8493, 0.2
      %v8530 = vmul.f32 %v8494, 0.2
      %v8531 = vmul.f32 %v8495, 0.2
      %v8532 = vmul.f32 %v8496, 0.2
      %v8533 = vmul.f32 %v8497, 0.2
      %v8534 = vmul.f32 %v8498, 0.2
      %v8535 = vmul.f32 %v8499, 0.2
      %v8536 = vmul.f32 %v8500, 0.2
      %v8537 = vmul.f32 %v8501, 0.2
      %v8538 = vmul.f32 %v8502, 0.2
      %v8539 = vmul.f32 %v8503, 0.2
      %v8540 = vmul.f32 %v8504, 0.2
      %v8541 = vmul.f32 %v8505, 0.2
      %v8542 = vmul.f32 %v8506, 0.2
      %v8543 = vmul.f32 %v8507, 0.2
      %v8544 = vmul.f32 %v8508, 0.2
      %v8545 = vmul.f32 %v8509, 0.2
      %v8546 = vmul.f32 %v8510, 0.2
      %v8547 = vmul.f32 %v8511, 0.2
      %v8548 = vmul.f32 %v8512, 0.2
      %v8549 = vmul.f32 %v8513, 0.2
      %v8550 = vmul.f32 %v8514, 0.2
      %v8551 = vmul.f32 %v8515, 0.2
      %v8552 = vmul.f32 %v8516, 0.2
      %v8553 = vmul.f32 %v8517, 0.2
      %v8554 = vmul.f32 %v8518, 0.2
      %v8555 = vmul.f32 %v8519, 0.2
      %v8556 = vmul.f32 %v8520, 0.2
      %v8557 = vmax.f32 %v8485, %v8521
      %v8558 = vmax.f32 %v8486, %v8522
      %v8559 = vmax.f32 %v8487, %v8523
      %v8560 = vmax.f32 %v8488, %v8524
      %v8561 = vmax.f32 %v8489, %v8525
      %v8562 = vmax.f32 %v8490, %v8526
      %v8563 = vmax.f32 %v8491, %v8527
      %v8564 = vmax.f32 %v8492, %v8528
      %v8565 = vmax.f32 %v8493, %v8529
      %v8566 = vmax.f32 %v8494, %v8530
      %v8567 = vmax.f32 %v8495, %v8531
      %v8568 = vmax.f32 %v8496, %v8532
      %v8569 = vmax.f32 %v8497, %v8533
      %v8570 = vmax.f32 %v8498, %v8534
      %v8571 = vmax.f32 %v8499, %v8535
      %v8572 = vmax.f32 %v8500, %v8536
      %v8573 = vmax.f32 %v8501, %v8537
      %v8574 = vmax.f32 %v8502, %v8538
      %v8575 = vmax.f32 %v8503, %v8539
      %v8576 = vmax.f32 %v8504, %v8540
      %v8577 = vmax.f32 %v8505, %v8541
      %v8578 = vmax.f32 %v8506, %v8542
      %v8579 = vmax.f32 %v8507, %v8543
      %v8580 = vmax.f32 %v8508, %v8544
      %v8581 = vmax.f32 %v8509, %v8545
      %v8582 = vmax.f32 %v8510, %v8546
      %v8583 = vmax.f32 %v8511, %v8547
      %v8584 = vmax.f32 %v8512, %v8548
      %v8585 = vmax.f32 %v8513, %v8549
      %v8586 = vmax.f32 %v8514, %v8550
      %v8587 = vmax.f32 %v8515, %v8551
      %v8588 = vmax.f32 %v8516, %v8552
      %v8589 = vmax.f32 %v8517, %v8553
      %v8590 = vmax.f32 %v8518, %v8554
      %v8591 = vmax.f32 %v8519, %v8555
      %v8592 = vmax.f32 %v8520, %v8556
      %v8593 = vmul.f32 %v8557, %v3881
      %v8594 = vmul.f32 %v8558, %v3886
      %v8595 = vmul.f32 %v8559, %v3891
      %v8596 = vmul.f32 %v8560, %v3896
      %v8597 = vmul.f32 %v8561, %v3901
      %v8598 = vmul.f32 %v8562, %v3906
      %v8599 = vmul.f32 %v8563, %v3911
      %v8600 = vmul.f32 %v8564, %v3916
      %v8601 = vmul.f32 %v8565, %v3921
      %v8602 = vmul.f32 %v8566, %v3926
      %v8603 = vmul.f32 %v8567, %v3931
      %v8604 = vmul.f32 %v8568, %v3936
      %v8605 = vmul.f32 %v8569, %v3941
      %v8606 = vmul.f32 %v8570, %v3946
      %v8607 = vmul.f32 %v8571, %v3951
      %v8608 = vmul.f32 %v8572, %v3956
      %v8609 = vmul.f32 %v8573, %v3961
      %v8610 = vmul.f32 %v8574, %v3966
      %v8611 = vmul.f32 %v8575, %v3971
      %v8612 = vmul.f32 %v8576, %v3976
      %v8613 = vmul.f32 %v8577, %v3981
      %v8614 = vmul.f32 %v8578, %v3986
      %v8615 = vmul.f32 %v8579, %v3991
      %v8616 = vmul.f32 %v8580, %v3996
      %v8617 = vmul.f32 %v8581, %v4001
      %v8618 = vmul.f32 %v8582, %v4006
      %v8619 = vmul.f32 %v8583, %v4011
      %v8620 = vmul.f32 %v8584, %v4016
      %v8621 = vmul.f32 %v8585, %v4021
      %v8622 = vmul.f32 %v8586, %v4026
      %v8623 = vmul.f32 %v8587, %v4031
      %v8624 = vmul.f32 %v8588, %v4036
      %v8625 = vmul.f32 %v8589, %v4041
      %v8626 = vmul.f32 %v8590, %v4046
      %v8627 = vmul.f32 %v8591, %v4051
      %v8628 = vmul.f32 %v8592, %v4056
      %8629 = vst [vmem:[%s429 + $0x13] sm:$0xff] %v8593
      %8630 = vst [vmem:[%s429 + $0x1b] sm:$0xff] %v8594
      %8631 = vst [vmem:[%s429 + $0x23] sm:$0xff] %v8595
      %8632 = vst [vmem:[%s429 + $0x2b] sm:$0xff] %v8596
      %8633 = vst [vmem:[%s429 + $0x33] sm:$0xff] %v8597
      %8634 = vst [vmem:[%s429 + $0x3b] sm:$0xff] %v8598
      %8635 = vst [vmem:[%s429 + $0x43] sm:$0xff] %v8599
      %8636 = vst [vmem:[%s429 + $0x4b] sm:$0xff] %v8600
      %8637 = vst [vmem:[%s429 + $0x53] sm:$0xff] %v8601
      %8638 = vst [vmem:[%s429 + $0x5b] sm:$0xff] %v8602
      %8639 = vst [vmem:[%s429 + $0x63] sm:$0xff] %v8603
      %8640 = vst [vmem:[%s429 + $0x6b] sm:$0xff] %v8604
      %8641 = vst [vmem:[%s429 + $0x73] sm:$0xff] %v8605
      %8642 = vst [vmem:[%s429 + $0x7b] sm:$0xff] %v8606
      %8643 = vst [vmem:[%s429 + $0x83] sm:$0xff] %v8607
      %8644 = vst [vmem:[%s429 + $0x8b] sm:$0xff] %v8608
      %8645 = vst [vmem:[%s429 + $0x93] sm:$0xff] %v8609
      %8646 = vst [vmem:[%s429 + $0x9b] sm:$0xff] %v8610
      %8647 = vst [vmem:[%s429 + $0xa3] sm:$0xff] %v8611
      %8648 = vst [vmem:[%s429 + $0xab] sm:$0xff] %v8612
      %8649 = vst [vmem:[%s429 + $0xb3] sm:$0xff] %v8613
      %8650 = vst [vmem:[%s429 + $0xbb] sm:$0xff] %v8614
      %8651 = vst [vmem:[%s429 + $0xc3] sm:$0xff] %v8615
      %8652 = vst [vmem:[%s429 + $0xcb] sm:$0xff] %v8616
      %8653 = vst [vmem:[%s429 + $0xd3] sm:$0xff] %v8617
      %8654 = vst [vmem:[%s429 + $0xdb] sm:$0xff] %v8618
      %8655 = vst [vmem:[%s429 + $0xe3] sm:$0xff] %v8619
      %8656 = vst [vmem:[%s429 + $0xeb] sm:$0xff] %v8620
      %8657 = vst [vmem:[%s429 + $0xf3] sm:$0xff] %v8621
      %8658 = vst [vmem:[%s429 + $0xfb] sm:$0xff] %v8622
      %8659 = vst [vmem:[%s429 + $0x103] sm:$0xff] %v8623
      %8660 = vst [vmem:[%s429 + $0x10b] sm:$0xff] %v8624
      %8661 = vst [vmem:[%s429 + $0x113] sm:$0xff] %v8625
      %8662 = vst [vmem:[%s429 + $0x11b] sm:$0xff] %v8626
      %8663 = vst [vmem:[%s429 + $0x123] sm:$0xff] %v8627
      %8664 = vst [vmem:[%s429 + $0x12b] sm:$0x3f] %v8628
      %v8665 = vld [vmem:[%s429] sm:$0xff]
      %v8666 = vld [vmem:[%s429 + $0x8] sm:$0xff]
      %v8667 = vld [vmem:[%s429 + $0x10] sm:$0xff]
      %v8668 = vld [vmem:[%s429 + $0x18] sm:$0xff]
      %v8669 = vld [vmem:[%s429 + $0x20] sm:$0xff]
      %v8670 = vld [vmem:[%s429 + $0x28] sm:$0xff]
      %v8671 = vld [vmem:[%s429 + $0x30] sm:$0xff]
      %v8672 = vld [vmem:[%s429 + $0x38] sm:$0xff]
      %v8673 = vld [vmem:[%s429 + $0x40] sm:$0xff]
      %v8674 = vld [vmem:[%s429 + $0x48] sm:$0xff]
      %v8675 = vld [vmem:[%s429 + $0x50] sm:$0xff]
      %v8676 = vld [vmem:[%s429 + $0x58] sm:$0xff]
      %v8677 = vld [vmem:[%s429 + $0x60] sm:$0xff]
      %v8678 = vld [vmem:[%s429 + $0x68] sm:$0xff]
      %v8679 = vld [vmem:[%s429 + $0x70] sm:$0xff]
      %v8680 = vld [vmem:[%s429 + $0x78] sm:$0xff]
      %v8681 = vld [vmem:[%s429 + $0x80] sm:$0xff]
      %v8682 = vld [vmem:[%s429 + $0x88] sm:$0xff]
      %v8683 = vld [vmem:[%s429 + $0x90] sm:$0xff]
      %v8684 = vld [vmem:[%s429 + $0x98] sm:$0xff]
      %v8685 = vld [vmem:[%s429 + $0xa0] sm:$0xff]
      %v8686 = vld [vmem:[%s429 + $0xa8] sm:$0xff]
      %v8687 = vld [vmem:[%s429 + $0xb0] sm:$0xff]
      %v8688 = vld [vmem:[%s429 + $0xb8] sm:$0xff]
      %v8689 = vld [vmem:[%s429 + $0xc0] sm:$0xff]
      %v8690 = vld [vmem:[%s429 + $0xc8] sm:$0xff]
      %v8691 = vld [vmem:[%s429 + $0xd0] sm:$0xff]
      %v8692 = vld [vmem:[%s429 + $0xd8] sm:$0xff]
      %v8693 = vld [vmem:[%s429 + $0xe0] sm:$0xff]
      %v8694 = vld [vmem:[%s429 + $0xe8] sm:$0xff]
      %v8695 = vld [vmem:[%s429 + $0xf0] sm:$0xff]
      %v8696 = vld [vmem:[%s429 + $0xf8] sm:$0xff]
      %v8697 = vld [vmem:[%s429 + $0x100] sm:$0xff]
      %v8698 = vld [vmem:[%s429 + $0x108] sm:$0xff]
      %v8699 = vld [vmem:[%s429 + $0x110] sm:$0xff]
      %v8700 = vld [vmem:[%s429 + $0x118] sm:$0x3f]
      %v8701 = vpack.c.bf16 %v8666, %v8665
      %v8702 = vpack.c.bf16 %v8668, %v8667
      %v8703 = vpack.c.bf16 %v8670, %v8669
      %v8704 = vpack.c.bf16 %v8672, %v8671
      %v8705 = vpack.c.bf16 %v8674, %v8673
      %v8706 = vpack.c.bf16 %v8676, %v8675
      %v8707 = vpack.c.bf16 %v8678, %v8677
      %v8708 = vpack.c.bf16 %v8680, %v8679
      %v8709 = vpack.c.bf16 %v8682, %v8681
      %v8710 = vpack.c.bf16 %v8684, %v8683
      %v8711 = vpack.c.bf16 %v8686, %v8685
      %v8712 = vpack.c.bf16 %v8688, %v8687
      %v8713 = vpack.c.bf16 %v8690, %v8689
      %v8714 = vpack.c.bf16 %v8692, %v8691
      %v8715 = vpack.c.bf16 %v8694, %v8693
      %v8716 = vpack.c.bf16 %v8696, %v8695
      %v8717 = vpack.c.bf16 %v8698, %v8697
      %v8718 = vpack.c.bf16 %v8700, %v8699
      %v8719 = vld [vmem:[%s9] sm:$0xf]
      %v8720 = vld [vmem:[%s9 + $0x4] sm:$0xf]
      %v8721 = vld [vmem:[%s9 + $0x8] sm:$0xf]
      %v8722 = vld [vmem:[%s9 + $0xc] sm:$0xf]
      %v8723 = vld [vmem:[%s9 + $0x10] sm:$0xf]
      %v8724 = vld [vmem:[%s9 + $0x14] sm:$0xf]
      %v8725 = vld [vmem:[%s9 + $0x18] sm:$0xf]
      %v8726 = vld [vmem:[%s9 + $0x1c] sm:$0xf]
      %v8727 = vld [vmem:[%s9 + $0x20] sm:$0xf]
      %v8728 = vld [vmem:[%s9 + $0x24] sm:$0xf]
      %v8729 = vld [vmem:[%s9 + $0x28] sm:$0xf]
      %v8730 = vld [vmem:[%s9 + $0x2c] sm:$0xf]
      %v8731 = vld [vmem:[%s9 + $0x30] sm:$0xf]
      %v8732 = vld [vmem:[%s9 + $0x34] sm:$0xf]
      %v8733 = vld [vmem:[%s9 + $0x38] sm:$0xf]
      %v8734 = vld [vmem:[%s9 + $0x3c] sm:$0xf]
      %v8735 = vld [vmem:[%s429 + $0x1] sm:$0xff]
      %v8736 = vld [vmem:[%s429 + $0x9] sm:$0xff]
      %v8737 = vld [vmem:[%s429 + $0x11] sm:$0xff]
      %v8738 = vld [vmem:[%s429 + $0x19] sm:$0xff]
      %v8739 = vld [vmem:[%s429 + $0x21] sm:$0xff]
      %v8740 = vld [vmem:[%s429 + $0x29] sm:$0xff]
      %v8741 = vld [vmem:[%s429 + $0x31] sm:$0xff]
      %v8742 = vld [vmem:[%s429 + $0x39] sm:$0xff]
      %v8743 = vld [vmem:[%s429 + $0x41] sm:$0xff]
      %v8744 = vld [vmem:[%s429 + $0x49] sm:$0xff]
      %v8745 = vld [vmem:[%s429 + $0x51] sm:$0xff]
      %v8746 = vld [vmem:[%s429 + $0x59] sm:$0xff]
      %v8747 = vld [vmem:[%s429 + $0x61] sm:$0xff]
      %v8748 = vld [vmem:[%s429 + $0x69] sm:$0xff]
      %v8749 = vld [vmem:[%s429 + $0x71] sm:$0xff]
      %v8750 = vld [vmem:[%s429 + $0x79] sm:$0xff]
      %v8751 = vld [vmem:[%s429 + $0x81] sm:$0xff]
      %v8752 = vld [vmem:[%s429 + $0x89] sm:$0xff]
      %v8753 = vld [vmem:[%s429 + $0x91] sm:$0xff]
      %v8754 = vld [vmem:[%s429 + $0x99] sm:$0xff]
      %v8755 = vld [vmem:[%s429 + $0xa1] sm:$0xff]
      %v8756 = vld [vmem:[%s429 + $0xa9] sm:$0xff]
      %v8757 = vld [vmem:[%s429 + $0xb1] sm:$0xff]
      %v8758 = vld [vmem:[%s429 + $0xb9] sm:$0xff]
      %v8759 = vld [vmem:[%s429 + $0xc1] sm:$0xff]
      %v8760 = vld [vmem:[%s429 + $0xc9] sm:$0xff]
      %v8761 = vld [vmem:[%s429 + $0xd1] sm:$0xff]
      %v8762 = vld [vmem:[%s429 + $0xd9] sm:$0xff]
      %v8763 = vld [vmem:[%s429 + $0xe1] sm:$0xff]
      %v8764 = vld [vmem:[%s429 + $0xe9] sm:$0xff]
      %v8765 = vld [vmem:[%s429 + $0xf1] sm:$0xff]
      %v8766 = vld [vmem:[%s429 + $0xf9] sm:$0xff]
      %v8767 = vld [vmem:[%s429 + $0x101] sm:$0xff]
      %v8768 = vld [vmem:[%s429 + $0x109] sm:$0xff]
      %v8769 = vld [vmem:[%s429 + $0x111] sm:$0xff]
      %v8770 = vld [vmem:[%s429 + $0x119] sm:$0x3f]
      %v8771 = vpack.c.bf16 %v8736, %v8735
      %v8772 = vpack.c.bf16 %v8738, %v8737
      %v8773 = vpack.c.bf16 %v8740, %v8739
      %v8774 = vpack.c.bf16 %v8742, %v8741
      %v8775 = vpack.c.bf16 %v8744, %v8743
      %v8776 = vpack.c.bf16 %v8746, %v8745
      %v8777 = vpack.c.bf16 %v8748, %v8747
      %v8778 = vpack.c.bf16 %v8750, %v8749
      %v8779 = vpack.c.bf16 %v8752, %v8751
      %v8780 = vpack.c.bf16 %v8754, %v8753
      %v8781 = vpack.c.bf16 %v8756, %v8755
      %v8782 = vpack.c.bf16 %v8758, %v8757
      %v8783 = vpack.c.bf16 %v8760, %v8759
      %v8784 = vpack.c.bf16 %v8762, %v8761
      %v8785 = vpack.c.bf16 %v8764, %v8763
      %v8786 = vpack.c.bf16 %v8766, %v8765
      %v8787 = vpack.c.bf16 %v8768, %v8767
      %v8788 = vpack.c.bf16 %v8770, %v8769
      %s8789 = scalar_lea.vmem %s9, 64
      %v8790 = vld [vmem:[%s8789] sm:$0xf]
      %v8791 = vld [vmem:[%s8789 + $0x4] sm:$0xf]
      %v8792 = vld [vmem:[%s8789 + $0x8] sm:$0xf]
      %v8793 = vld [vmem:[%s8789 + $0xc] sm:$0xf]
      %v8794 = vld [vmem:[%s8789 + $0x10] sm:$0xf]
      %v8795 = vld [vmem:[%s8789 + $0x14] sm:$0xf]
      %v8796 = vld [vmem:[%s8789 + $0x18] sm:$0xf]
      %v8797 = vld [vmem:[%s8789 + $0x1c] sm:$0xf]
      %v8798 = vld [vmem:[%s8789 + $0x20] sm:$0xf]
      %v8799 = vld [vmem:[%s8789 + $0x24] sm:$0xf]
      %v8800 = vld [vmem:[%s8789 + $0x28] sm:$0xf]
      %v8801 = vld [vmem:[%s8789 + $0x2c] sm:$0xf]
      %v8802 = vld [vmem:[%s8789 + $0x30] sm:$0xf]
      %v8803 = vld [vmem:[%s8789 + $0x34] sm:$0xf]
      %v8804 = vld [vmem:[%s8789 + $0x38] sm:$0xf]
      %v8805 = vld [vmem:[%s8789 + $0x3c] sm:$0xf]
      %v8822 = vunpack.c.l.b16 %v8790
      %v8823 = vunpack.c.l.b16 %v8791
      %v8824 = vunpack.c.l.b16 %v8792
      %v8825 = vunpack.c.l.b16 %v8793
      %v8826 = vunpack.c.l.b16 %v8794
      %v8827 = vunpack.c.l.b16 %v8795
      %v8828 = vunpack.c.l.b16 %v8796
      %v8829 = vunpack.c.l.b16 %v8797
      %v8830 = vunpack.c.l.b16 %v8798
      %v8831 = vunpack.c.l.b16 %v8799
      %v8832 = vunpack.c.l.b16 %v8800
      %v8833 = vunpack.c.l.b16 %v8801
      %v8834 = vunpack.c.l.b16 %v8802
      %v8835 = vunpack.c.l.b16 %v8803
      %v8836 = vunpack.c.l.b16 %v8804
      %v8837 = vunpack.c.l.b16 %v8805
      %v8838 = vpack.c.b16 %v8823, %v8822
      %v8839 = vpack.c.b16 %v8825, %v8824
      %v8840 = vpack.c.b16 %v8827, %v8826
      %v8841 = vpack.c.b16 %v8829, %v8828
      %v8842 = vpack.c.b16 %v8831, %v8830
      %v8843 = vpack.c.b16 %v8833, %v8832
      %v8844 = vpack.c.b16 %v8835, %v8834
      %v8845 = vpack.c.b16 %v8837, %v8836
      %8854 = vmatprep.subr.bf16.mxu0 0
      %8855 = vmatpush1.bf16.msra.mxu0 %v8845
      %8856 = vmatprep.subr.bf16.mxu0 0
      %8857 = vmatpush1.bf16.msra.mxu0 %v8844
      %8858 = vmatprep.subr.bf16.mxu0 0
      %8859 = vmatpush1.bf16.msra.mxu0 %v8843
      %8860 = vmatprep.subr.bf16.mxu0 0
      %8861 = vmatpush1.bf16.msra.mxu0 %v8842
      %8862 = vmatprep.subr.bf16.mxu0 0
      %8863 = vmatpush1.bf16.msra.mxu0 %v8841
      %8864 = vmatprep.subr.bf16.mxu0 0
      %8865 = vmatpush1.bf16.msra.mxu0 %v8840
      %8866 = vmatprep.subr.bf16.mxu0 0
      %8867 = vmatpush1.bf16.msra.mxu0 %v8839
      %8868 = vmatprep.subr.bf16.mxu0 0
      %8869 = vmatpush1.bf16.msra.mxu0 %v8838
      %8870 = vmatprep.subr.bf16.mxu0 0
      %8871 = vmatpush2.bf16.msra.mxu0 0
      %8872 = vmatprep.subr.bf16.mxu0 0
      %8873 = vmatpush2.bf16.msra.mxu0 0
      %8874 = vmatprep.subr.bf16.mxu0 0
      %8875 = vmatpush2.bf16.msra.mxu0 0
      %8876 = vmatprep.subr.bf16.mxu0 0
      %8877 = vmatpush2.bf16.msra.mxu0 0
      %8878 = vmatprep.subr.bf16.mxu0 0
      %8879 = vmatpush2.bf16.msra.mxu0 0
      %8880 = vmatprep.subr.bf16.mxu0 0
      %8881 = vmatpush2.bf16.msra.mxu0 0
      %8882 = vmatprep.subr.bf16.mxu0 0
      %8883 = vmatpush2.bf16.msra.mxu0 0
      %8884 = vmatprep.subr.bf16.mxu0 0
      %8885 = vmatpush2.bf16.msra.mxu0 0
      %8886 = vmatprep.mubr.bf16.mxu0 0
      %8887 = vmatmul.mubr.bf16.gmra.mxu0 %v8771
      %v8888 = vpop.f32.mrf.mxu0
      %v8889 = vadd.f32 0.0, %v8888
      %v8890 = vpop.f32.mrf.mxu0
      %v8891 = vpop.f32.mrf.mxu0
      %v8892 = vadd.f32 0.0, %v8891
      %v8893 = vpop.f32.mrf.mxu0
      %8894 = vmatprep.mubr.bf16.mxu0 0
      %8895 = vmatmul.mubr.bf16.gmra.mxu0 %v8772
      %v8896 = vpop.f32.mrf.mxu0
      %v8897 = vadd.f32 0.0, %v8896
      %v8898 = vpop.f32.mrf.mxu0
      %v8899 = vpop.f32.mrf.mxu0
      %v8900 = vadd.f32 0.0, %v8899
      %v8901 = vpop.f32.mrf.mxu0
      %8902 = vmatprep.mubr.bf16.mxu0 0
      %8903 = vmatmul.mubr.bf16.gmra.mxu0 %v8773
      %v8904 = vpop.f32.mrf.mxu0
      %v8905 = vadd.f32 0.0, %v8904
      %v8906 = vpop.f32.mrf.mxu0
      %v8907 = vpop.f32.mrf.mxu0
      %v8908 = vadd.f32 0.0, %v8907
      %v8909 = vpop.f32.mrf.mxu0
      %8910 = vmatprep.mubr.bf16.mxu0 0
      %8911 = vmatmul.mubr.bf16.gmra.mxu0 %v8774
      %v8912 = vpop.f32.mrf.mxu0
      %v8913 = vadd.f32 0.0, %v8912
      %v8914 = vpop.f32.mrf.mxu0
      %v8915 = vpop.f32.mrf.mxu0
      %v8916 = vadd.f32 0.0, %v8915
      %v8917 = vpop.f32.mrf.mxu0
      %8918 = vmatprep.mubr.bf16.mxu0 0
      %8919 = vmatmul.mubr.bf16.gmra.mxu0 %v8775
      %v8920 = vpop.f32.mrf.mxu0
      %v8921 = vadd.f32 0.0, %v8920
      %v8922 = vpop.f32.mrf.mxu0
      %v8923 = vpop.f32.mrf.mxu0
      %v8924 = vadd.f32 0.0, %v8923
      %v8925 = vpop.f32.mrf.mxu0
      %8926 = vmatprep.mubr.bf16.mxu0 0
      %8927 = vmatmul.mubr.bf16.gmra.mxu0 %v8776
      %v8928 = vpop.f32.mrf.mxu0
      %v8929 = vadd.f32 0.0, %v8928
      %v8930 = vpop.f32.mrf.mxu0
      %v8931 = vpop.f32.mrf.mxu0
      %v8932 = vadd.f32 0.0, %v8931
      %v8933 = vpop.f32.mrf.mxu0
      %8934 = vmatprep.mubr.bf16.mxu0 0
      %8935 = vmatmul.mubr.bf16.gmra.mxu0 %v8777
      %v8936 = vpop.f32.mrf.mxu0
      %v8937 = vadd.f32 0.0, %v8936
      %v8938 = vpop.f32.mrf.mxu0
      %v8939 = vpop.f32.mrf.mxu0
      %v8940 = vadd.f32 0.0, %v8939
      %v8941 = vpop.f32.mrf.mxu0
      %8942 = vmatprep.mubr.bf16.mxu0 0
      %8943 = vmatmul.mubr.bf16.gmra.mxu0 %v8778
      %v8944 = vpop.f32.mrf.mxu0
      %v8945 = vadd.f32 0.0, %v8944
      %v8946 = vpop.f32.mrf.mxu0
      %v8947 = vpop.f32.mrf.mxu0
      %v8948 = vadd.f32 0.0, %v8947
      %v8949 = vpop.f32.mrf.mxu0
      %8950 = vmatprep.mubr.bf16.mxu0 0
      %8951 = vmatmul.mubr.bf16.gmra.mxu0 %v8779
      %v8952 = vpop.f32.mrf.mxu0
      %v8953 = vadd.f32 0.0, %v8952
      %v8954 = vpop.f32.mrf.mxu0
      %v8955 = vpop.f32.mrf.mxu0
      %v8956 = vadd.f32 0.0, %v8955
      %v8957 = vpop.f32.mrf.mxu0
      %8958 = vmatprep.mubr.bf16.mxu0 0
      %8959 = vmatmul.mubr.bf16.gmra.mxu0 %v8780
      %v8960 = vpop.f32.mrf.mxu0
      %v8961 = vadd.f32 0.0, %v8960
      %v8962 = vpop.f32.mrf.mxu0
      %v8963 = vpop.f32.mrf.mxu0
      %v8964 = vadd.f32 0.0, %v8963
      %v8965 = vpop.f32.mrf.mxu0
      %8966 = vmatprep.mubr.bf16.mxu0 0
      %8967 = vmatmul.mubr.bf16.gmra.mxu0 %v8781
      %v8968 = vpop.f32.mrf.mxu0
      %v8969 = vadd.f32 0.0, %v8968
      %v8970 = vpop.f32.mrf.mxu0
      %v8971 = vpop.f32.mrf.mxu0
      %v8972 = vadd.f32 0.0, %v8971
      %v8973 = vpop.f32.mrf.mxu0
      %8974 = vmatprep.mubr.bf16.mxu0 0
      %8975 = vmatmul.mubr.bf16.gmra.mxu0 %v8782
      %v8976 = vpop.f32.mrf.mxu0
      %v8977 = vadd.f32 0.0, %v8976
      %v8978 = vpop.f32.mrf.mxu0
      %v8979 = vpop.f32.mrf.mxu0
      %v8980 = vadd.f32 0.0, %v8979
      %v8981 = vpop.f32.mrf.mxu0
      %8982 = vmatprep.mubr.bf16.mxu0 0
      %8983 = vmatmul.mubr.bf16.gmra.mxu0 %v8783
      %v8984 = vpop.f32.mrf.mxu0
      %v8985 = vadd.f32 0.0, %v8984
      %v8986 = vpop.f32.mrf.mxu0
      %v8987 = vpop.f32.mrf.mxu0
      %v8988 = vadd.f32 0.0, %v8987
      %v8989 = vpop.f32.mrf.mxu0
      %8990 = vmatprep.mubr.bf16.mxu0 0
      %8991 = vmatmul.mubr.bf16.gmra.mxu0 %v8784
      %v8992 = vpop.f32.mrf.mxu0
      %v8993 = vadd.f32 0.0, %v8992
      %v8994 = vpop.f32.mrf.mxu0
      %v8995 = vpop.f32.mrf.mxu0
      %v8996 = vadd.f32 0.0, %v8995
      %v8997 = vpop.f32.mrf.mxu0
      %8998 = vmatprep.mubr.bf16.mxu0 0
      %8999 = vmatmul.mubr.bf16.gmra.mxu0 %v8785
      %v9000 = vpop.f32.mrf.mxu0
      %v9001 = vadd.f32 0.0, %v9000
      %v9002 = vpop.f32.mrf.mxu0
      %v9003 = vpop.f32.mrf.mxu0
      %v9004 = vadd.f32 0.0, %v9003
      %v9005 = vpop.f32.mrf.mxu0
      %9006 = vmatprep.mubr.bf16.mxu0 0
      %9007 = vmatmul.mubr.bf16.gmra.mxu0 %v8786
      %v9008 = vpop.f32.mrf.mxu0
      %v9009 = vadd.f32 0.0, %v9008
      %v9010 = vpop.f32.mrf.mxu0
      %v9011 = vpop.f32.mrf.mxu0
      %v9012 = vadd.f32 0.0, %v9011
      %v9013 = vpop.f32.mrf.mxu0
      %9014 = vmatprep.mubr.bf16.mxu0 0
      %9015 = vmatmul.mubr.bf16.gmra.mxu0 %v8787
      %v9016 = vpop.f32.mrf.mxu0
      %v9017 = vadd.f32 0.0, %v9016
      %v9018 = vpop.f32.mrf.mxu0
      %v9019 = vpop.f32.mrf.mxu0
      %v9020 = vadd.f32 0.0, %v9019
      %v9021 = vpop.f32.mrf.mxu0
      %9022 = vmatprep.mubr.bf16.mxu0 0
      %9023 = vmatmul.mubr.bf16.gmra.mxu0 %v8788
      %v9024 = vpop.f32.mrf.mxu0
      %v9025 = vadd.f32 0.0, %v9024
      %v9026 = vpop.f32.mrf.mxu0
      %v9027 = vpop.f32.mrf.mxu0
      %v9028 = vadd.f32 0.0, %v9027
      %v9029 = vpop.f32.mrf.mxu0
      %9030 = vdwg.mxu0
      %v9047 = vunpack.c.l.b16 %v8719
      %v9048 = vunpack.c.l.b16 %v8720
      %v9049 = vunpack.c.l.b16 %v8721
      %v9050 = vunpack.c.l.b16 %v8722
      %v9051 = vunpack.c.l.b16 %v8723
      %v9052 = vunpack.c.l.b16 %v8724
      %v9053 = vunpack.c.l.b16 %v8725
      %v9054 = vunpack.c.l.b16 %v8726
      %v9055 = vunpack.c.l.b16 %v8727
      %v9056 = vunpack.c.l.b16 %v8728
      %v9057 = vunpack.c.l.b16 %v8729
      %v9058 = vunpack.c.l.b16 %v8730
      %v9059 = vunpack.c.l.b16 %v8731
      %v9060 = vunpack.c.l.b16 %v8732
      %v9061 = vunpack.c.l.b16 %v8733
      %v9062 = vunpack.c.l.b16 %v8734
      %v9063 = vpack.c.b16 %v9048, %v9047
      %v9064 = vpack.c.b16 %v9050, %v9049
      %v9065 = vpack.c.b16 %v9052, %v9051
      %v9066 = vpack.c.b16 %v9054, %v9053
      %v9067 = vpack.c.b16 %v9056, %v9055
      %v9068 = vpack.c.b16 %v9058, %v9057
      %v9069 = vpack.c.b16 %v9060, %v9059
      %v9070 = vpack.c.b16 %v9062, %v9061
      %9079 = vmatprep.subr.bf16.mxu0 0
      %9080 = vmatpush1.bf16.msra.mxu0 %v9070
      %9081 = vmatprep.subr.bf16.mxu0 0
      %9082 = vmatpush1.bf16.msra.mxu0 %v9069
      %9083 = vmatprep.subr.bf16.mxu0 0
      %9084 = vmatpush1.bf16.msra.mxu0 %v9068
      %9085 = vmatprep.subr.bf16.mxu0 0
      %9086 = vmatpush1.bf16.msra.mxu0 %v9067
      %9087 = vmatprep.subr.bf16.mxu0 0
      %9088 = vmatpush1.bf16.msra.mxu0 %v9066
      %9089 = vmatprep.subr.bf16.mxu0 0
      %9090 = vmatpush1.bf16.msra.mxu0 %v9065
      %9091 = vmatprep.subr.bf16.mxu0 0
      %9092 = vmatpush1.bf16.msra.mxu0 %v9064
      %9093 = vmatprep.subr.bf16.mxu0 0
      %9094 = vmatpush1.bf16.msra.mxu0 %v9063
      %9095 = vmatprep.subr.bf16.mxu0 0
      %9096 = vmatpush2.bf16.msra.mxu0 0
      %9097 = vmatprep.subr.bf16.mxu0 0
      %9098 = vmatpush2.bf16.msra.mxu0 0
      %9099 = vmatprep.subr.bf16.mxu0 0
      %9100 = vmatpush2.bf16.msra.mxu0 0
      %9101 = vmatprep.subr.bf16.mxu0 0
      %9102 = vmatpush2.bf16.msra.mxu0 0
      %9103 = vmatprep.subr.bf16.mxu0 0
      %9104 = vmatpush2.bf16.msra.mxu0 0
      %9105 = vmatprep.subr.bf16.mxu0 0
      %9106 = vmatpush2.bf16.msra.mxu0 0
      %9107 = vmatprep.subr.bf16.mxu0 0
      %9108 = vmatpush2.bf16.msra.mxu0 0
      %9109 = vmatprep.subr.bf16.mxu0 0
      %9110 = vmatpush2.bf16.msra.mxu0 0
      %9111 = vmatprep.mubr.bf16.mxu0 0
      %9112 = vmatmul.mubr.bf16.gmra.mxu0 %v8701
      %v9113 = vpop.f32.mrf.mxu0
      %v9114 = vadd.f32 %v8889, %v9113
      %v9115 = vpop.f32.mrf.mxu0
      %v9116 = vpop.f32.mrf.mxu0
      %v9117 = vadd.f32 %v8892, %v9116
      %v9118 = vpop.f32.mrf.mxu0
      %9119 = vmatprep.mubr.bf16.mxu0 0
      %9120 = vmatmul.mubr.bf16.gmra.mxu0 %v8702
      %v9121 = vpop.f32.mrf.mxu0
      %v9122 = vadd.f32 %v8897, %v9121
      %v9123 = vpop.f32.mrf.mxu0
      %v9124 = vpop.f32.mrf.mxu0
      %v9125 = vadd.f32 %v8900, %v9124
      %v9126 = vpop.f32.mrf.mxu0
      %9127 = vmatprep.mubr.bf16.mxu0 0
      %9128 = vmatmul.mubr.bf16.gmra.mxu0 %v8703
      %v9129 = vpop.f32.mrf.mxu0
      %v9130 = vadd.f32 %v8905, %v9129
      %v9131 = vpop.f32.mrf.mxu0
      %v9132 = vpop.f32.mrf.mxu0
      %v9133 = vadd.f32 %v8908, %v9132
      %v9134 = vpop.f32.mrf.mxu0
      %9135 = vmatprep.mubr.bf16.mxu0 0
      %9136 = vmatmul.mubr.bf16.gmra.mxu0 %v8704
      %v9137 = vpop.f32.mrf.mxu0
      %v9138 = vadd.f32 %v8913, %v9137
      %v9139 = vpop.f32.mrf.mxu0
      %v9140 = vpop.f32.mrf.mxu0
      %v9141 = vadd.f32 %v8916, %v9140
      %v9142 = vpop.f32.mrf.mxu0
      %9143 = vmatprep.mubr.bf16.mxu0 0
      %9144 = vmatmul.mubr.bf16.gmra.mxu0 %v8705
      %v9145 = vpop.f32.mrf.mxu0
      %v9146 = vadd.f32 %v8921, %v9145
      %v9147 = vpop.f32.mrf.mxu0
      %v9148 = vpop.f32.mrf.mxu0
      %v9149 = vadd.f32 %v8924, %v9148
      %v9150 = vpop.f32.mrf.mxu0
      %9151 = vmatprep.mubr.bf16.mxu0 0
      %9152 = vmatmul.mubr.bf16.gmra.mxu0 %v8706
      %v9153 = vpop.f32.mrf.mxu0
      %v9154 = vadd.f32 %v8929, %v9153
      %v9155 = vpop.f32.mrf.mxu0
      %v9156 = vpop.f32.mrf.mxu0
      %v9157 = vadd.f32 %v8932, %v9156
      %v9158 = vpop.f32.mrf.mxu0
      %9159 = vmatprep.mubr.bf16.mxu0 0
      %9160 = vmatmul.mubr.bf16.gmra.mxu0 %v8707
      %v9161 = vpop.f32.mrf.mxu0
      %v9162 = vadd.f32 %v8937, %v9161
      %v9163 = vpop.f32.mrf.mxu0
      %v9164 = vpop.f32.mrf.mxu0
      %v9165 = vadd.f32 %v8940, %v9164
      %v9166 = vpop.f32.mrf.mxu0
      %9167 = vmatprep.mubr.bf16.mxu0 0
      %9168 = vmatmul.mubr.bf16.gmra.mxu0 %v8708
      %v9169 = vpop.f32.mrf.mxu0
      %v9170 = vadd.f32 %v8945, %v9169
      %v9171 = vpop.f32.mrf.mxu0
      %v9172 = vpop.f32.mrf.mxu0
      %v9173 = vadd.f32 %v8948, %v9172
      %v9174 = vpop.f32.mrf.mxu0
      %9175 = vmatprep.mubr.bf16.mxu0 0
      %9176 = vmatmul.mubr.bf16.gmra.mxu0 %v8709
      %v9177 = vpop.f32.mrf.mxu0
      %v9178 = vadd.f32 %v8953, %v9177
      %v9179 = vpop.f32.mrf.mxu0
      %v9180 = vpop.f32.mrf.mxu0
      %v9181 = vadd.f32 %v8956, %v9180
      %v9182 = vpop.f32.mrf.mxu0
      %9183 = vmatprep.mubr.bf16.mxu0 0
      %9184 = vmatmul.mubr.bf16.gmra.mxu0 %v8710
      %v9185 = vpop.f32.mrf.mxu0
      %v9186 = vadd.f32 %v8961, %v9185
      %v9187 = vpop.f32.mrf.mxu0
      %v9188 = vpop.f32.mrf.mxu0
      %v9189 = vadd.f32 %v8964, %v9188
      %v9190 = vpop.f32.mrf.mxu0
      %9191 = vmatprep.mubr.bf16.mxu0 0
      %9192 = vmatmul.mubr.bf16.gmra.mxu0 %v8711
      %v9193 = vpop.f32.mrf.mxu0
      %v9194 = vadd.f32 %v8969, %v9193
      %v9195 = vpop.f32.mrf.mxu0
      %v9196 = vpop.f32.mrf.mxu0
      %v9197 = vadd.f32 %v8972, %v9196
      %v9198 = vpop.f32.mrf.mxu0
      %9199 = vmatprep.mubr.bf16.mxu0 0
      %9200 = vmatmul.mubr.bf16.gmra.mxu0 %v8712
      %v9201 = vpop.f32.mrf.mxu0
      %v9202 = vadd.f32 %v8977, %v9201
      %v9203 = vpop.f32.mrf.mxu0
      %v9204 = vpop.f32.mrf.mxu0
      %v9205 = vadd.f32 %v8980, %v9204
      %v9206 = vpop.f32.mrf.mxu0
      %9207 = vmatprep.mubr.bf16.mxu0 0
      %9208 = vmatmul.mubr.bf16.gmra.mxu0 %v8713
      %v9209 = vpop.f32.mrf.mxu0
      %v9210 = vadd.f32 %v8985, %v9209
      %v9211 = vpop.f32.mrf.mxu0
      %v9212 = vpop.f32.mrf.mxu0
      %v9213 = vadd.f32 %v8988, %v9212
      %v9214 = vpop.f32.mrf.mxu0
      %9215 = vmatprep.mubr.bf16.mxu0 0
      %9216 = vmatmul.mubr.bf16.gmra.mxu0 %v8714
      %v9217 = vpop.f32.mrf.mxu0
      %v9218 = vadd.f32 %v8993, %v9217
      %v9219 = vpop.f32.mrf.mxu0
      %v9220 = vpop.f32.mrf.mxu0
      %v9221 = vadd.f32 %v8996, %v9220
      %v9222 = vpop.f32.mrf.mxu0
      %9223 = vmatprep.mubr.bf16.mxu0 0
      %9224 = vmatmul.mubr.bf16.gmra.mxu0 %v8715
      %v9225 = vpop.f32.mrf.mxu0
      %v9226 = vadd.f32 %v9001, %v9225
      %v9227 = vpop.f32.mrf.mxu0
      %v9228 = vpop.f32.mrf.mxu0
      %v9229 = vadd.f32 %v9004, %v9228
      %v9230 = vpop.f32.mrf.mxu0
      %9231 = vmatprep.mubr.bf16.mxu0 0
      %9232 = vmatmul.mubr.bf16.gmra.mxu0 %v8716
      %v9233 = vpop.f32.mrf.mxu0
      %v9234 = vadd.f32 %v9009, %v9233
      %v9235 = vpop.f32.mrf.mxu0
      %v9236 = vpop.f32.mrf.mxu0
      %v9237 = vadd.f32 %v9012, %v9236
      %v9238 = vpop.f32.mrf.mxu0
      %9239 = vmatprep.mubr.bf16.mxu0 0
      %9240 = vmatmul.mubr.bf16.gmra.mxu0 %v8717
      %v9241 = vpop.f32.mrf.mxu0
      %v9242 = vadd.f32 %v9017, %v9241
      %v9243 = vpop.f32.mrf.mxu0
      %v9244 = vpop.f32.mrf.mxu0
      %v9245 = vadd.f32 %v9020, %v9244
      %v9246 = vpop.f32.mrf.mxu0
      %9247 = vmatprep.mubr.bf16.mxu0 0
      %9248 = vmatmul.mubr.bf16.gmra.mxu0 %v8718
      %v9249 = vpop.f32.mrf.mxu0
      %v9250 = vadd.f32 %v9025, %v9249
      %v9251 = vpop.f32.mrf.mxu0
      %v9252 = vpop.f32.mrf.mxu0
      %v9253 = vadd.f32 %v9028, %v9252
      %v9254 = vpop.f32.mrf.mxu0
      %9255 = vdwg.mxu0
      %v9256 = vld [vmem:[%s429 + $0x2] sm:$0xff]
      %v9257 = vld [vmem:[%s429 + $0xa] sm:$0xff]
      %v9258 = vld [vmem:[%s429 + $0x12] sm:$0xff]
      %v9259 = vld [vmem:[%s429 + $0x1a] sm:$0xff]
      %v9260 = vld [vmem:[%s429 + $0x22] sm:$0xff]
      %v9261 = vld [vmem:[%s429 + $0x2a] sm:$0xff]
      %v9262 = vld [vmem:[%s429 + $0x32] sm:$0xff]
      %v9263 = vld [vmem:[%s429 + $0x3a] sm:$0xff]
      %v9264 = vld [vmem:[%s429 + $0x42] sm:$0xff]
      %v9265 = vld [vmem:[%s429 + $0x4a] sm:$0xff]
      %v9266 = vld [vmem:[%s429 + $0x52] sm:$0xff]
      %v9267 = vld [vmem:[%s429 + $0x5a] sm:$0xff]
      %v9268 = vld [vmem:[%s429 + $0x62] sm:$0xff]
      %v9269 = vld [vmem:[%s429 + $0x6a] sm:$0xff]
      %v9270 = vld [vmem:[%s429 + $0x72] sm:$0xff]
      %v9271 = vld [vmem:[%s429 + $0x7a] sm:$0xff]
      %v9272 = vld [vmem:[%s429 + $0x82] sm:$0xff]
      %v9273 = vld [vmem:[%s429 + $0x8a] sm:$0xff]
      %v9274 = vld [vmem:[%s429 + $0x92] sm:$0xff]
      %v9275 = vld [vmem:[%s429 + $0x9a] sm:$0xff]
      %v9276 = vld [vmem:[%s429 + $0xa2] sm:$0xff]
      %v9277 = vld [vmem:[%s429 + $0xaa] sm:$0xff]
      %v9278 = vld [vmem:[%s429 + $0xb2] sm:$0xff]
      %v9279 = vld [vmem:[%s429 + $0xba] sm:$0xff]
      %v9280 = vld [vmem:[%s429 + $0xc2] sm:$0xff]
      %v9281 = vld [vmem:[%s429 + $0xca] sm:$0xff]
      %v9282 = vld [vmem:[%s429 + $0xd2] sm:$0xff]
      %v9283 = vld [vmem:[%s429 + $0xda] sm:$0xff]
      %v9284 = vld [vmem:[%s429 + $0xe2] sm:$0xff]
      %v9285 = vld [vmem:[%s429 + $0xea] sm:$0xff]
      %v9286 = vld [vmem:[%s429 + $0xf2] sm:$0xff]
      %v9287 = vld [vmem:[%s429 + $0xfa] sm:$0xff]
      %v9288 = vld [vmem:[%s429 + $0x102] sm:$0xff]
      %v9289 = vld [vmem:[%s429 + $0x10a] sm:$0xff]
      %v9290 = vld [vmem:[%s429 + $0x112] sm:$0xff]
      %v9291 = vld [vmem:[%s429 + $0x11a] sm:$0x3f]
      %v9292 = vpack.c.bf16 %v9257, %v9256
      %v9293 = vpack.c.bf16 %v9259, %v9258
      %v9294 = vpack.c.bf16 %v9261, %v9260
      %v9295 = vpack.c.bf16 %v9263, %v9262
      %v9296 = vpack.c.bf16 %v9265, %v9264
      %v9297 = vpack.c.bf16 %v9267, %v9266
      %v9298 = vpack.c.bf16 %v9269, %v9268
      %v9299 = vpack.c.bf16 %v9271, %v9270
      %v9300 = vpack.c.bf16 %v9273, %v9272
      %v9301 = vpack.c.bf16 %v9275, %v9274
      %v9302 = vpack.c.bf16 %v9277, %v9276
      %v9303 = vpack.c.bf16 %v9279, %v9278
      %v9304 = vpack.c.bf16 %v9281, %v9280
      %v9305 = vpack.c.bf16 %v9283, %v9282
      %v9306 = vpack.c.bf16 %v9285, %v9284
      %v9307 = vpack.c.bf16 %v9287, %v9286
      %v9308 = vpack.c.bf16 %v9289, %v9288
      %v9309 = vpack.c.bf16 %v9291, %v9290
      %s9310 = scalar_lea.vmem %s9, 128
      %v9311 = vld [vmem:[%s9310] sm:$0xf]
      %v9312 = vld [vmem:[%s9310 + $0x4] sm:$0xf]
      %v9313 = vld [vmem:[%s9310 + $0x8] sm:$0xf]
      %v9314 = vld [vmem:[%s9310 + $0xc] sm:$0xf]
      %v9315 = vld [vmem:[%s9310 + $0x10] sm:$0xf]
      %v9316 = vld [vmem:[%s9310 + $0x14] sm:$0xf]
      %v9317 = vld [vmem:[%s9310 + $0x18] sm:$0xf]
      %v9318 = vld [vmem:[%s9310 + $0x1c] sm:$0xf]
      %v9319 = vld [vmem:[%s9310 + $0x20] sm:$0xf]
      %v9320 = vld [vmem:[%s9310 + $0x24] sm:$0xf]
      %v9321 = vld [vmem:[%s9310 + $0x28] sm:$0xf]
      %v9322 = vld [vmem:[%s9310 + $0x2c] sm:$0xf]
      %v9323 = vld [vmem:[%s9310 + $0x30] sm:$0xf]
      %v9324 = vld [vmem:[%s9310 + $0x34] sm:$0xf]
      %v9325 = vld [vmem:[%s9310 + $0x38] sm:$0xf]
      %v9326 = vld [vmem:[%s9310 + $0x3c] sm:$0xf]
      %v9343 = vunpack.c.l.b16 %v9311
      %v9344 = vunpack.c.l.b16 %v9312
      %v9345 = vunpack.c.l.b16 %v9313
      %v9346 = vunpack.c.l.b16 %v9314
      %v9347 = vunpack.c.l.b16 %v9315
      %v9348 = vunpack.c.l.b16 %v9316
      %v9349 = vunpack.c.l.b16 %v9317
      %v9350 = vunpack.c.l.b16 %v9318
      %v9351 = vunpack.c.l.b16 %v9319
      %v9352 = vunpack.c.l.b16 %v9320
      %v9353 = vunpack.c.l.b16 %v9321
      %v9354 = vunpack.c.l.b16 %v9322
      %v9355 = vunpack.c.l.b16 %v9323
      %v9356 = vunpack.c.l.b16 %v9324
      %v9357 = vunpack.c.l.b16 %v9325
      %v9358 = vunpack.c.l.b16 %v9326
      %v9359 = vpack.c.b16 %v9344, %v9343
      %v9360 = vpack.c.b16 %v9346, %v9345
      %v9361 = vpack.c.b16 %v9348, %v9347
      %v9362 = vpack.c.b16 %v9350, %v9349
      %v9363 = vpack.c.b16 %v9352, %v9351
      %v9364 = vpack.c.b16 %v9354, %v9353
      %v9365 = vpack.c.b16 %v9356, %v9355
      %v9366 = vpack.c.b16 %v9358, %v9357
      %9375 = vmatprep.subr.bf16.mxu0 0
      %9376 = vmatpush1.bf16.msra.mxu0 %v9366
      %9377 = vmatprep.subr.bf16.mxu0 0
      %9378 = vmatpush1.bf16.msra.mxu0 %v9365
      %9379 = vmatprep.subr.bf16.mxu0 0
      %9380 = vmatpush1.bf16.msra.mxu0 %v9364
      %9381 = vmatprep.subr.bf16.mxu0 0
      %9382 = vmatpush1.bf16.msra.mxu0 %v9363
      %9383 = vmatprep.subr.bf16.mxu0 0
      %9384 = vmatpush1.bf16.msra.mxu0 %v9362
      %9385 = vmatprep.subr.bf16.mxu0 0
      %9386 = vmatpush1.bf16.msra.mxu0 %v9361
      %9387 = vmatprep.subr.bf16.mxu0 0
      %9388 = vmatpush1.bf16.msra.mxu0 %v9360
      %9389 = vmatprep.subr.bf16.mxu0 0
      %9390 = vmatpush1.bf16.msra.mxu0 %v9359
      %9391 = vmatprep.subr.bf16.mxu0 0
      %9392 = vmatpush2.bf16.msra.mxu0 0
      %9393 = vmatprep.subr.bf16.mxu0 0
      %9394 = vmatpush2.bf16.msra.mxu0 0
      %9395 = vmatprep.subr.bf16.mxu0 0
      %9396 = vmatpush2.bf16.msra.mxu0 0
      %9397 = vmatprep.subr.bf16.mxu0 0
      %9398 = vmatpush2.bf16.msra.mxu0 0
      %9399 = vmatprep.subr.bf16.mxu0 0
      %9400 = vmatpush2.bf16.msra.mxu0 0
      %9401 = vmatprep.subr.bf16.mxu0 0
      %9402 = vmatpush2.bf16.msra.mxu0 0
      %9403 = vmatprep.subr.bf16.mxu0 0
      %9404 = vmatpush2.bf16.msra.mxu0 0
      %9405 = vmatprep.subr.bf16.mxu0 0
      %9406 = vmatpush2.bf16.msra.mxu0 0
      %9407 = vmatprep.mubr.bf16.mxu0 0
      %9408 = vmatmul.mubr.bf16.gmra.mxu0 %v9292
      %v9409 = vpop.f32.mrf.mxu0
      %v9410 = vadd.f32 0.0, %v9409
      %v9411 = vpop.f32.mrf.mxu0
      %v9412 = vpop.f32.mrf.mxu0
      %v9413 = vadd.f32 0.0, %v9412
      %v9414 = vpop.f32.mrf.mxu0
      %9415 = vmatprep.mubr.bf16.mxu0 0
      %9416 = vmatmul.mubr.bf16.gmra.mxu0 %v9293
      %v9417 = vpop.f32.mrf.mxu0
      %v9418 = vadd.f32 0.0, %v9417
      %v9419 = vpop.f32.mrf.mxu0
      %v9420 = vpop.f32.mrf.mxu0
      %v9421 = vadd.f32 0.0, %v9420
      %v9422 = vpop.f32.mrf.mxu0
      %9423 = vmatprep.mubr.bf16.mxu0 0
      %9424 = vmatmul.mubr.bf16.gmra.mxu0 %v9294
      %v9425 = vpop.f32.mrf.mxu0
      %v9426 = vadd.f32 0.0, %v9425
      %v9427 = vpop.f32.mrf.mxu0
      %v9428 = vpop.f32.mrf.mxu0
      %v9429 = vadd.f32 0.0, %v9428
      %v9430 = vpop.f32.mrf.mxu0
      %9431 = vmatprep.mubr.bf16.mxu0 0
      %9432 = vmatmul.mubr.bf16.gmra.mxu0 %v9295
      %v9433 = vpop.f32.mrf.mxu0
      %v9434 = vadd.f32 0.0, %v9433
      %v9435 = vpop.f32.mrf.mxu0
      %v9436 = vpop.f32.mrf.mxu0
      %v9437 = vadd.f32 0.0, %v9436
      %v9438 = vpop.f32.mrf.mxu0
      %9439 = vmatprep.mubr.bf16.mxu0 0
      %9440 = vmatmul.mubr.bf16.gmra.mxu0 %v9296
      %v9441 = vpop.f32.mrf.mxu0
      %v9442 = vadd.f32 0.0, %v9441
      %v9443 = vpop.f32.mrf.mxu0
      %v9444 = vpop.f32.mrf.mxu0
      %v9445 = vadd.f32 0.0, %v9444
      %v9446 = vpop.f32.mrf.mxu0
      %9447 = vmatprep.mubr.bf16.mxu0 0
      %9448 = vmatmul.mubr.bf16.gmra.mxu0 %v9297
      %v9449 = vpop.f32.mrf.mxu0
      %v9450 = vadd.f32 0.0, %v9449
      %v9451 = vpop.f32.mrf.mxu0
      %v9452 = vpop.f32.mrf.mxu0
      %v9453 = vadd.f32 0.0, %v9452
      %v9454 = vpop.f32.mrf.mxu0
      %9455 = vmatprep.mubr.bf16.mxu0 0
      %9456 = vmatmul.mubr.bf16.gmra.mxu0 %v9298
      %v9457 = vpop.f32.mrf.mxu0
      %v9458 = vadd.f32 0.0, %v9457
      %v9459 = vpop.f32.mrf.mxu0
      %v9460 = vpop.f32.mrf.mxu0
      %v9461 = vadd.f32 0.0, %v9460
      %v9462 = vpop.f32.mrf.mxu0
      %9463 = vmatprep.mubr.bf16.mxu0 0
      %9464 = vmatmul.mubr.bf16.gmra.mxu0 %v9299
      %v9465 = vpop.f32.mrf.mxu0
      %v9466 = vadd.f32 0.0, %v9465
      %v9467 = vpop.f32.mrf.mxu0
      %v9468 = vpop.f32.mrf.mxu0
      %v9469 = vadd.f32 0.0, %v9468
      %v9470 = vpop.f32.mrf.mxu0
      %9471 = vmatprep.mubr.bf16.mxu0 0
      %9472 = vmatmul.mubr.bf16.gmra.mxu0 %v9300
      %v9473 = vpop.f32.mrf.mxu0
      %v9474 = vadd.f32 0.0, %v9473
      %v9475 = vpop.f32.mrf.mxu0
      %v9476 = vpop.f32.mrf.mxu0
      %v9477 = vadd.f32 0.0, %v9476
      %v9478 = vpop.f32.mrf.mxu0
      %9479 = vmatprep.mubr.bf16.mxu0 0
      %9480 = vmatmul.mubr.bf16.gmra.mxu0 %v9301
      %v9481 = vpop.f32.mrf.mxu0
      %v9482 = vadd.f32 0.0, %v9481
      %v9483 = vpop.f32.mrf.mxu0
      %v9484 = vpop.f32.mrf.mxu0
      %v9485 = vadd.f32 0.0, %v9484
      %v9486 = vpop.f32.mrf.mxu0
      %9487 = vmatprep.mubr.bf16.mxu0 0
      %9488 = vmatmul.mubr.bf16.gmra.mxu0 %v9302
      %v9489 = vpop.f32.mrf.mxu0
      %v9490 = vadd.f32 0.0, %v9489
      %v9491 = vpop.f32.mrf.mxu0
      %v9492 = vpop.f32.mrf.mxu0
      %v9493 = vadd.f32 0.0, %v9492
      %v9494 = vpop.f32.mrf.mxu0
      %9495 = vmatprep.mubr.bf16.mxu0 0
      %9496 = vmatmul.mubr.bf16.gmra.mxu0 %v9303
      %v9497 = vpop.f32.mrf.mxu0
      %v9498 = vadd.f32 0.0, %v9497
      %v9499 = vpop.f32.mrf.mxu0
      %v9500 = vpop.f32.mrf.mxu0
      %v9501 = vadd.f32 0.0, %v9500
      %v9502 = vpop.f32.mrf.mxu0
      %9503 = vmatprep.mubr.bf16.mxu0 0
      %9504 = vmatmul.mubr.bf16.gmra.mxu0 %v9304
      %v9505 = vpop.f32.mrf.mxu0
      %v9506 = vadd.f32 0.0, %v9505
      %v9507 = vpop.f32.mrf.mxu0
      %v9508 = vpop.f32.mrf.mxu0
      %v9509 = vadd.f32 0.0, %v9508
      %v9510 = vpop.f32.mrf.mxu0
      %9511 = vmatprep.mubr.bf16.mxu0 0
      %9512 = vmatmul.mubr.bf16.gmra.mxu0 %v9305
      %v9513 = vpop.f32.mrf.mxu0
      %v9514 = vadd.f32 0.0, %v9513
      %v9515 = vpop.f32.mrf.mxu0
      %v9516 = vpop.f32.mrf.mxu0
      %v9517 = vadd.f32 0.0, %v9516
      %v9518 = vpop.f32.mrf.mxu0
      %9519 = vmatprep.mubr.bf16.mxu0 0
      %9520 = vmatmul.mubr.bf16.gmra.mxu0 %v9306
      %v9521 = vpop.f32.mrf.mxu0
      %v9522 = vadd.f32 0.0, %v9521
      %v9523 = vpop.f32.mrf.mxu0
      %v9524 = vpop.f32.mrf.mxu0
      %v9525 = vadd.f32 0.0, %v9524
      %v9526 = vpop.f32.mrf.mxu0
      %9527 = vmatprep.mubr.bf16.mxu0 0
      %9528 = vmatmul.mubr.bf16.gmra.mxu0 %v9307
      %v9529 = vpop.f32.mrf.mxu0
      %v9530 = vadd.f32 0.0, %v9529
      %v9531 = vpop.f32.mrf.mxu0
      %v9532 = vpop.f32.mrf.mxu0
      %v9533 = vadd.f32 0.0, %v9532
      %v9534 = vpop.f32.mrf.mxu0
      %9535 = vmatprep.mubr.bf16.mxu0 0
      %9536 = vmatmul.mubr.bf16.gmra.mxu0 %v9308
      %v9537 = vpop.f32.mrf.mxu0
      %v9538 = vadd.f32 0.0, %v9537
      %v9539 = vpop.f32.mrf.mxu0
      %v9540 = vpop.f32.mrf.mxu0
      %v9541 = vadd.f32 0.0, %v9540
      %v9542 = vpop.f32.mrf.mxu0
      %9543 = vmatprep.mubr.bf16.mxu0 0
      %9544 = vmatmul.mubr.bf16.gmra.mxu0 %v9309
      %v9545 = vpop.f32.mrf.mxu0
      %v9546 = vadd.f32 0.0, %v9545
      %v9547 = vpop.f32.mrf.mxu0
      %v9548 = vpop.f32.mrf.mxu0
      %v9549 = vadd.f32 0.0, %v9548
      %v9550 = vpop.f32.mrf.mxu0
      %9551 = vdwg.mxu0
      %v9552 = vadd.f32 %v9114, %v9410
      %v9553 = vadd.f32 %v9117, %v9413
      %v9554 = vadd.f32 %v9122, %v9418
      %v9555 = vadd.f32 %v9125, %v9421
      %v9556 = vadd.f32 %v9130, %v9426
      %v9557 = vadd.f32 %v9133, %v9429
      %v9558 = vadd.f32 %v9138, %v9434
      %v9559 = vadd.f32 %v9141, %v9437
      %v9560 = vadd.f32 %v9146, %v9442
      %v9561 = vadd.f32 %v9149, %v9445
      %v9562 = vadd.f32 %v9154, %v9450
      %v9563 = vadd.f32 %v9157, %v9453
      %v9564 = vadd.f32 %v9162, %v9458
      %v9565 = vadd.f32 %v9165, %v9461
      %v9566 = vadd.f32 %v9170, %v9466
      %v9567 = vadd.f32 %v9173, %v9469
      %v9568 = vadd.f32 %v9178, %v9474
      %v9569 = vadd.f32 %v9181, %v9477
      %v9570 = vadd.f32 %v9186, %v9482
      %v9571 = vadd.f32 %v9189, %v9485
      %v9572 = vadd.f32 %v9194, %v9490
      %v9573 = vadd.f32 %v9197, %v9493
      %v9574 = vadd.f32 %v9202, %v9498
      %v9575 = vadd.f32 %v9205, %v9501
      %v9576 = vadd.f32 %v9210, %v9506
      %v9577 = vadd.f32 %v9213, %v9509
      %v9578 = vadd.f32 %v9218, %v9514
      %v9579 = vadd.f32 %v9221, %v9517
      %v9580 = vadd.f32 %v9226, %v9522
      %v9581 = vadd.f32 %v9229, %v9525
      %v9582 = vadd.f32 %v9234, %v9530
      %v9583 = vadd.f32 %v9237, %v9533
      %v9584 = vadd.f32 %v9242, %v9538
      %v9585 = vadd.f32 %v9245, %v9541
      %v9586 = vadd.f32 %v9250, %v9546
      %v9587 = vadd.f32 %v9253, %v9549
      %v9588 = vld [vmem:[%s429 + $0x12] sm:$0xff]
      %v9589 = vld [vmem:[%s429 + $0x1a] sm:$0xff]
      %v9590 = vld [vmem:[%s429 + $0x22] sm:$0xff]
      %v9591 = vld [vmem:[%s429 + $0x2a] sm:$0xff]
      %v9592 = vld [vmem:[%s429 + $0x32] sm:$0xff]
      %v9593 = vld [vmem:[%s429 + $0x3a] sm:$0xff]
      %v9594 = vld [vmem:[%s429 + $0x42] sm:$0xff]
      %v9595 = vld [vmem:[%s429 + $0x4a] sm:$0xff]
      %v9596 = vld [vmem:[%s429 + $0x52] sm:$0xff]
      %v9597 = vld [vmem:[%s429 + $0x5a] sm:$0xff]
      %v9598 = vld [vmem:[%s429 + $0x62] sm:$0xff]
      %v9599 = vld [vmem:[%s429 + $0x6a] sm:$0xff]
      %v9600 = vld [vmem:[%s429 + $0x72] sm:$0xff]
      %v9601 = vld [vmem:[%s429 + $0x7a] sm:$0xff]
      %v9602 = vld [vmem:[%s429 + $0x82] sm:$0xff]
      %v9603 = vld [vmem:[%s429 + $0x8a] sm:$0xff]
      %v9604 = vld [vmem:[%s429 + $0x92] sm:$0xff]
      %v9605 = vld [vmem:[%s429 + $0x9a] sm:$0xff]
      %v9606 = vld [vmem:[%s429 + $0xa2] sm:$0xff]
      %v9607 = vld [vmem:[%s429 + $0xaa] sm:$0xff]
      %v9608 = vld [vmem:[%s429 + $0xb2] sm:$0xff]
      %v9609 = vld [vmem:[%s429 + $0xba] sm:$0xff]
      %v9610 = vld [vmem:[%s429 + $0xc2] sm:$0xff]
      %v9611 = vld [vmem:[%s429 + $0xca] sm:$0xff]
      %v9612 = vld [vmem:[%s429 + $0xd2] sm:$0xff]
      %v9613 = vld [vmem:[%s429 + $0xda] sm:$0xff]
      %v9614 = vld [vmem:[%s429 + $0xe2] sm:$0xff]
      %v9615 = vld [vmem:[%s429 + $0xea] sm:$0xff]
      %v9616 = vld [vmem:[%s429 + $0xf2] sm:$0xff]
      %v9617 = vld [vmem:[%s429 + $0xfa] sm:$0xff]
      %v9618 = vld [vmem:[%s429 + $0x102] sm:$0xff]
      %v9619 = vld [vmem:[%s429 + $0x10a] sm:$0xff]
      %v9620 = vld [vmem:[%s429 + $0x112] sm:$0xff]
      %v9621 = vld [vmem:[%s429 + $0x11a] sm:$0xff]
      %v9622 = vld [vmem:[%s429 + $0x122] sm:$0xff]
      %v9623 = vld [vmem:[%s429 + $0x12a] sm:$0x3f]
      %v9624 = vpack.c.bf16 %v9589, %v9588
      %v9625 = vpack.c.bf16 %v9591, %v9590
      %v9626 = vpack.c.bf16 %v9593, %v9592
      %v9627 = vpack.c.bf16 %v9595, %v9594
      %v9628 = vpack.c.bf16 %v9597, %v9596
      %v9629 = vpack.c.bf16 %v9599, %v9598
      %v9630 = vpack.c.bf16 %v9601, %v9600
      %v9631 = vpack.c.bf16 %v9603, %v9602
      %v9632 = vpack.c.bf16 %v9605, %v9604
      %v9633 = vpack.c.bf16 %v9607, %v9606
      %v9634 = vpack.c.bf16 %v9609, %v9608
      %v9635 = vpack.c.bf16 %v9611, %v9610
      %v9636 = vpack.c.bf16 %v9613, %v9612
      %v9637 = vpack.c.bf16 %v9615, %v9614
      %v9638 = vpack.c.bf16 %v9617, %v9616
      %v9639 = vpack.c.bf16 %v9619, %v9618
      %v9640 = vpack.c.bf16 %v9621, %v9620
      %v9641 = vpack.c.bf16 %v9623, %v9622
      %s9642 = scalar_lea.vmem %s9, 192
      %v9643 = vld [vmem:[%s9642] sm:$0xf]
      %v9644 = vld [vmem:[%s9642 + $0x4] sm:$0xf]
      %v9645 = vld [vmem:[%s9642 + $0x8] sm:$0xf]
      %v9646 = vld [vmem:[%s9642 + $0xc] sm:$0xf]
      %v9647 = vld [vmem:[%s9642 + $0x10] sm:$0xf]
      %v9648 = vld [vmem:[%s9642 + $0x14] sm:$0xf]
      %v9649 = vld [vmem:[%s9642 + $0x18] sm:$0xf]
      %v9650 = vld [vmem:[%s9642 + $0x1c] sm:$0xf]
      %v9651 = vld [vmem:[%s9642 + $0x20] sm:$0xf]
      %v9652 = vld [vmem:[%s9642 + $0x24] sm:$0xf]
      %v9653 = vld [vmem:[%s9642 + $0x28] sm:$0xf]
      %v9654 = vld [vmem:[%s9642 + $0x2c] sm:$0xf]
      %v9655 = vld [vmem:[%s9642 + $0x30] sm:$0xf]
      %v9656 = vld [vmem:[%s9642 + $0x34] sm:$0xf]
      %v9657 = vld [vmem:[%s9642 + $0x38] sm:$0xf]
      %v9658 = vld [vmem:[%s9642 + $0x3c] sm:$0xf]
      %v9675 = vunpack.c.l.b16 %v9643
      %v9676 = vunpack.c.l.b16 %v9644
      %v9677 = vunpack.c.l.b16 %v9645
      %v9678 = vunpack.c.l.b16 %v9646
      %v9679 = vunpack.c.l.b16 %v9647
      %v9680 = vunpack.c.l.b16 %v9648
      %v9681 = vunpack.c.l.b16 %v9649
      %v9682 = vunpack.c.l.b16 %v9650
      %v9683 = vunpack.c.l.b16 %v9651
      %v9684 = vunpack.c.l.b16 %v9652
      %v9685 = vunpack.c.l.b16 %v9653
      %v9686 = vunpack.c.l.b16 %v9654
      %v9687 = vunpack.c.l.b16 %v9655
      %v9688 = vunpack.c.l.b16 %v9656
      %v9689 = vunpack.c.l.b16 %v9657
      %v9690 = vunpack.c.l.b16 %v9658
      %v9691 = vpack.c.b16 %v9676, %v9675
      %v9692 = vpack.c.b16 %v9678, %v9677
      %v9693 = vpack.c.b16 %v9680, %v9679
      %v9694 = vpack.c.b16 %v9682, %v9681
      %v9695 = vpack.c.b16 %v9684, %v9683
      %v9696 = vpack.c.b16 %v9686, %v9685
      %v9697 = vpack.c.b16 %v9688, %v9687
      %v9698 = vpack.c.b16 %v9690, %v9689
      %9707 = vmatprep.subr.bf16.mxu0 0
      %9708 = vmatpush1.bf16.msra.mxu0 %v9698
      %9709 = vmatprep.subr.bf16.mxu0 0
      %9710 = vmatpush1.bf16.msra.mxu0 %v9697
      %9711 = vmatprep.subr.bf16.mxu0 0
      %9712 = vmatpush1.bf16.msra.mxu0 %v9696
      %9713 = vmatprep.subr.bf16.mxu0 0
      %9714 = vmatpush1.bf16.msra.mxu0 %v9695
      %9715 = vmatprep.subr.bf16.mxu0 0
      %9716 = vmatpush1.bf16.msra.mxu0 %v9694
      %9717 = vmatprep.subr.bf16.mxu0 0
      %9718 = vmatpush1.bf16.msra.mxu0 %v9693
      %9719 = vmatprep.subr.bf16.mxu0 0
      %9720 = vmatpush1.bf16.msra.mxu0 %v9692
      %9721 = vmatprep.subr.bf16.mxu0 0
      %9722 = vmatpush1.bf16.msra.mxu0 %v9691
      %9723 = vmatprep.subr.bf16.mxu0 0
      %9724 = vmatpush2.bf16.msra.mxu0 0
      %9725 = vmatprep.subr.bf16.mxu0 0
      %9726 = vmatpush2.bf16.msra.mxu0 0
      %9727 = vmatprep.subr.bf16.mxu0 0
      %9728 = vmatpush2.bf16.msra.mxu0 0
      %9729 = vmatprep.subr.bf16.mxu0 0
      %9730 = vmatpush2.bf16.msra.mxu0 0
      %9731 = vmatprep.subr.bf16.mxu0 0
      %9732 = vmatpush2.bf16.msra.mxu0 0
      %9733 = vmatprep.subr.bf16.mxu0 0
      %9734 = vmatpush2.bf16.msra.mxu0 0
      %9735 = vmatprep.subr.bf16.mxu0 0
      %9736 = vmatpush2.bf16.msra.mxu0 0
      %9737 = vmatprep.subr.bf16.mxu0 0
      %9738 = vmatpush2.bf16.msra.mxu0 0
      %9739 = vmatprep.mubr.bf16.mxu0 0
      %9740 = vmatmul.mubr.bf16.gmra.mxu0 %v9624
      %v9741 = vpop.f32.mrf.mxu0
      %v9742 = vadd.f32 0.0, %v9741
      %v9743 = vpop.f32.mrf.mxu0
      %v9744 = vpop.f32.mrf.mxu0
      %v9745 = vadd.f32 0.0, %v9744
      %v9746 = vpop.f32.mrf.mxu0
      %9747 = vmatprep.mubr.bf16.mxu0 0
      %9748 = vmatmul.mubr.bf16.gmra.mxu0 %v9625
      %v9749 = vpop.f32.mrf.mxu0
      %v9750 = vadd.f32 0.0, %v9749
      %v9751 = vpop.f32.mrf.mxu0
      %v9752 = vpop.f32.mrf.mxu0
      %v9753 = vadd.f32 0.0, %v9752
      %v9754 = vpop.f32.mrf.mxu0
      %9755 = vmatprep.mubr.bf16.mxu0 0
      %9756 = vmatmul.mubr.bf16.gmra.mxu0 %v9626
      %v9757 = vpop.f32.mrf.mxu0
      %v9758 = vadd.f32 0.0, %v9757
      %v9759 = vpop.f32.mrf.mxu0
      %v9760 = vpop.f32.mrf.mxu0
      %v9761 = vadd.f32 0.0, %v9760
      %v9762 = vpop.f32.mrf.mxu0
      %9763 = vmatprep.mubr.bf16.mxu0 0
      %9764 = vmatmul.mubr.bf16.gmra.mxu0 %v9627
      %v9765 = vpop.f32.mrf.mxu0
      %v9766 = vadd.f32 0.0, %v9765
      %v9767 = vpop.f32.mrf.mxu0
      %v9768 = vpop.f32.mrf.mxu0
      %v9769 = vadd.f32 0.0, %v9768
      %v9770 = vpop.f32.mrf.mxu0
      %9771 = vmatprep.mubr.bf16.mxu0 0
      %9772 = vmatmul.mubr.bf16.gmra.mxu0 %v9628
      %v9773 = vpop.f32.mrf.mxu0
      %v9774 = vadd.f32 0.0, %v9773
      %v9775 = vpop.f32.mrf.mxu0
      %v9776 = vpop.f32.mrf.mxu0
      %v9777 = vadd.f32 0.0, %v9776
      %v9778 = vpop.f32.mrf.mxu0
      %9779 = vmatprep.mubr.bf16.mxu0 0
      %9780 = vmatmul.mubr.bf16.gmra.mxu0 %v9629
      %v9781 = vpop.f32.mrf.mxu0
      %v9782 = vadd.f32 0.0, %v9781
      %v9783 = vpop.f32.mrf.mxu0
      %v9784 = vpop.f32.mrf.mxu0
      %v9785 = vadd.f32 0.0, %v9784
      %v9786 = vpop.f32.mrf.mxu0
      %9787 = vmatprep.mubr.bf16.mxu0 0
      %9788 = vmatmul.mubr.bf16.gmra.mxu0 %v9630
      %v9789 = vpop.f32.mrf.mxu0
      %v9790 = vadd.f32 0.0, %v9789
      %v9791 = vpop.f32.mrf.mxu0
      %v9792 = vpop.f32.mrf.mxu0
      %v9793 = vadd.f32 0.0, %v9792
      %v9794 = vpop.f32.mrf.mxu0
      %9795 = vmatprep.mubr.bf16.mxu0 0
      %9796 = vmatmul.mubr.bf16.gmra.mxu0 %v9631
      %v9797 = vpop.f32.mrf.mxu0
      %v9798 = vadd.f32 0.0, %v9797
      %v9799 = vpop.f32.mrf.mxu0
      %v9800 = vpop.f32.mrf.mxu0
      %v9801 = vadd.f32 0.0, %v9800
      %v9802 = vpop.f32.mrf.mxu0
      %9803 = vmatprep.mubr.bf16.mxu0 0
      %9804 = vmatmul.mubr.bf16.gmra.mxu0 %v9632
      %v9805 = vpop.f32.mrf.mxu0
      %v9806 = vadd.f32 0.0, %v9805
      %v9807 = vpop.f32.mrf.mxu0
      %v9808 = vpop.f32.mrf.mxu0
      %v9809 = vadd.f32 0.0, %v9808
      %v9810 = vpop.f32.mrf.mxu0
      %9811 = vmatprep.mubr.bf16.mxu0 0
      %9812 = vmatmul.mubr.bf16.gmra.mxu0 %v9633
      %v9813 = vpop.f32.mrf.mxu0
      %v9814 = vadd.f32 0.0, %v9813
      %v9815 = vpop.f32.mrf.mxu0
      %v9816 = vpop.f32.mrf.mxu0
      %v9817 = vadd.f32 0.0, %v9816
      %v9818 = vpop.f32.mrf.mxu0
      %9819 = vmatprep.mubr.bf16.mxu0 0
      %9820 = vmatmul.mubr.bf16.gmra.mxu0 %v9634
      %v9821 = vpop.f32.mrf.mxu0
      %v9822 = vadd.f32 0.0, %v9821
      %v9823 = vpop.f32.mrf.mxu0
      %v9824 = vpop.f32.mrf.mxu0
      %v9825 = vadd.f32 0.0, %v9824
      %v9826 = vpop.f32.mrf.mxu0
      %9827 = vmatprep.mubr.bf16.mxu0 0
      %9828 = vmatmul.mubr.bf16.gmra.mxu0 %v9635
      %v9829 = vpop.f32.mrf.mxu0
      %v9830 = vadd.f32 0.0, %v9829
      %v9831 = vpop.f32.mrf.mxu0
      %v9832 = vpop.f32.mrf.mxu0
      %v9833 = vadd.f32 0.0, %v9832
      %v9834 = vpop.f32.mrf.mxu0
      %9835 = vmatprep.mubr.bf16.mxu0 0
      %9836 = vmatmul.mubr.bf16.gmra.mxu0 %v9636
      %v9837 = vpop.f32.mrf.mxu0
      %v9838 = vadd.f32 0.0, %v9837
      %v9839 = vpop.f32.mrf.mxu0
      %v9840 = vpop.f32.mrf.mxu0
      %v9841 = vadd.f32 0.0, %v9840
      %v9842 = vpop.f32.mrf.mxu0
      %9843 = vmatprep.mubr.bf16.mxu0 0
      %9844 = vmatmul.mubr.bf16.gmra.mxu0 %v9637
      %v9845 = vpop.f32.mrf.mxu0
      %v9846 = vadd.f32 0.0, %v9845
      %v9847 = vpop.f32.mrf.mxu0
      %v9848 = vpop.f32.mrf.mxu0
      %v9849 = vadd.f32 0.0, %v9848
      %v9850 = vpop.f32.mrf.mxu0
      %9851 = vmatprep.mubr.bf16.mxu0 0
      %9852 = vmatmul.mubr.bf16.gmra.mxu0 %v9638
      %v9853 = vpop.f32.mrf.mxu0
      %v9854 = vadd.f32 0.0, %v9853
      %v9855 = vpop.f32.mrf.mxu0
      %v9856 = vpop.f32.mrf.mxu0
      %v9857 = vadd.f32 0.0, %v9856
      %v9858 = vpop.f32.mrf.mxu0
      %9859 = vmatprep.mubr.bf16.mxu0 0
      %9860 = vmatmul.mubr.bf16.gmra.mxu0 %v9639
      %v9861 = vpop.f32.mrf.mxu0
      %v9862 = vadd.f32 0.0, %v9861
      %v9863 = vpop.f32.mrf.mxu0
      %v9864 = vpop.f32.mrf.mxu0
      %v9865 = vadd.f32 0.0, %v9864
      %v9866 = vpop.f32.mrf.mxu0
      %9867 = vmatprep.mubr.bf16.mxu0 0
      %9868 = vmatmul.mubr.bf16.gmra.mxu0 %v9640
      %v9869 = vpop.f32.mrf.mxu0
      %v9870 = vadd.f32 0.0, %v9869
      %v9871 = vpop.f32.mrf.mxu0
      %v9872 = vpop.f32.mrf.mxu0
      %v9873 = vadd.f32 0.0, %v9872
      %v9874 = vpop.f32.mrf.mxu0
      %9875 = vmatprep.mubr.bf16.mxu0 0
      %9876 = vmatmul.mubr.bf16.gmra.mxu0 %v9641
      %v9877 = vpop.f32.mrf.mxu0
      %v9878 = vadd.f32 0.0, %v9877
      %v9879 = vpop.f32.mrf.mxu0
      %v9880 = vpop.f32.mrf.mxu0
      %v9881 = vadd.f32 0.0, %v9880
      %v9882 = vpop.f32.mrf.mxu0
      %9883 = vdwg.mxu0
      %v9884 = vadd.f32 %v9552, %v9742
      %v9885 = vadd.f32 %v9553, %v9745
      %v9886 = vadd.f32 %v9554, %v9750
      %v9887 = vadd.f32 %v9555, %v9753
      %v9888 = vadd.f32 %v9556, %v9758
      %v9889 = vadd.f32 %v9557, %v9761
      %v9890 = vadd.f32 %v9558, %v9766
      %v9891 = vadd.f32 %v9559, %v9769
      %v9892 = vadd.f32 %v9560, %v9774
      %v9893 = vadd.f32 %v9561, %v9777
      %v9894 = vadd.f32 %v9562, %v9782
      %v9895 = vadd.f32 %v9563, %v9785
      %v9896 = vadd.f32 %v9564, %v9790
      %v9897 = vadd.f32 %v9565, %v9793
      %v9898 = vadd.f32 %v9566, %v9798
      %v9899 = vadd.f32 %v9567, %v9801
      %v9900 = vadd.f32 %v9568, %v9806
      %v9901 = vadd.f32 %v9569, %v9809
      %v9902 = vadd.f32 %v9570, %v9814
      %v9903 = vadd.f32 %v9571, %v9817
      %v9904 = vadd.f32 %v9572, %v9822
      %v9905 = vadd.f32 %v9573, %v9825
      %v9906 = vadd.f32 %v9574, %v9830
      %v9907 = vadd.f32 %v9575, %v9833
      %v9908 = vadd.f32 %v9576, %v9838
      %v9909 = vadd.f32 %v9577, %v9841
      %v9910 = vadd.f32 %v9578, %v9846
      %v9911 = vadd.f32 %v9579, %v9849
      %v9912 = vadd.f32 %v9580, %v9854
      %v9913 = vadd.f32 %v9581, %v9857
      %v9914 = vadd.f32 %v9582, %v9862
      %v9915 = vadd.f32 %v9583, %v9865
      %v9916 = vadd.f32 %v9584, %v9870
      %v9917 = vadd.f32 %v9585, %v9873
      %v9918 = vadd.f32 %v9586, %v9878
      %v9919 = vadd.f32 %v9587, %v9881
      %v9920 = vld [vmem:[%s429 + $0x13] sm:$0xff]
      %v9921 = vld [vmem:[%s429 + $0x1b] sm:$0xff]
      %v9922 = vld [vmem:[%s429 + $0x23] sm:$0xff]
      %v9923 = vld [vmem:[%s429 + $0x2b] sm:$0xff]
      %v9924 = vld [vmem:[%s429 + $0x33] sm:$0xff]
      %v9925 = vld [vmem:[%s429 + $0x3b] sm:$0xff]
      %v9926 = vld [vmem:[%s429 + $0x43] sm:$0xff]
      %v9927 = vld [vmem:[%s429 + $0x4b] sm:$0xff]
      %v9928 = vld [vmem:[%s429 + $0x53] sm:$0xff]
      %v9929 = vld [vmem:[%s429 + $0x5b] sm:$0xff]
      %v9930 = vld [vmem:[%s429 + $0x63] sm:$0xff]
      %v9931 = vld [vmem:[%s429 + $0x6b] sm:$0xff]
      %v9932 = vld [vmem:[%s429 + $0x73] sm:$0xff]
      %v9933 = vld [vmem:[%s429 + $0x7b] sm:$0xff]
      %v9934 = vld [vmem:[%s429 + $0x83] sm:$0xff]
      %v9935 = vld [vmem:[%s429 + $0x8b] sm:$0xff]
      %v9936 = vld [vmem:[%s429 + $0x93] sm:$0xff]
      %v9937 = vld [vmem:[%s429 + $0x9b] sm:$0xff]
      %v9938 = vld [vmem:[%s429 + $0xa3] sm:$0xff]
      %v9939 = vld [vmem:[%s429 + $0xab] sm:$0xff]
      %v9940 = vld [vmem:[%s429 + $0xb3] sm:$0xff]
      %v9941 = vld [vmem:[%s429 + $0xbb] sm:$0xff]
      %v9942 = vld [vmem:[%s429 + $0xc3] sm:$0xff]
      %v9943 = vld [vmem:[%s429 + $0xcb] sm:$0xff]
      %v9944 = vld [vmem:[%s429 + $0xd3] sm:$0xff]
      %v9945 = vld [vmem:[%s429 + $0xdb] sm:$0xff]
      %v9946 = vld [vmem:[%s429 + $0xe3] sm:$0xff]
      %v9947 = vld [vmem:[%s429 + $0xeb] sm:$0xff]
      %v9948 = vld [vmem:[%s429 + $0xf3] sm:$0xff]
      %v9949 = vld [vmem:[%s429 + $0xfb] sm:$0xff]
      %v9950 = vld [vmem:[%s429 + $0x103] sm:$0xff]
      %v9951 = vld [vmem:[%s429 + $0x10b] sm:$0xff]
      %v9952 = vld [vmem:[%s429 + $0x113] sm:$0xff]
      %v9953 = vld [vmem:[%s429 + $0x11b] sm:$0xff]
      %v9954 = vld [vmem:[%s429 + $0x123] sm:$0xff]
      %v9955 = vld [vmem:[%s429 + $0x12b] sm:$0x3f]
      %v9956 = vpack.c.bf16 %v9921, %v9920
      %v9957 = vpack.c.bf16 %v9923, %v9922
      %v9958 = vpack.c.bf16 %v9925, %v9924
      %v9959 = vpack.c.bf16 %v9927, %v9926
      %v9960 = vpack.c.bf16 %v9929, %v9928
      %v9961 = vpack.c.bf16 %v9931, %v9930
      %v9962 = vpack.c.bf16 %v9933, %v9932
      %v9963 = vpack.c.bf16 %v9935, %v9934
      %v9964 = vpack.c.bf16 %v9937, %v9936
      %v9965 = vpack.c.bf16 %v9939, %v9938
      %v9966 = vpack.c.bf16 %v9941, %v9940
      %v9967 = vpack.c.bf16 %v9943, %v9942
      %v9968 = vpack.c.bf16 %v9945, %v9944
      %v9969 = vpack.c.bf16 %v9947, %v9946
      %v9970 = vpack.c.bf16 %v9949, %v9948
      %v9971 = vpack.c.bf16 %v9951, %v9950
      %v9972 = vpack.c.bf16 %v9953, %v9952
      %v9973 = vpack.c.bf16 %v9955, %v9954
      %s9974 = scalar_lea.vmem %s9, 256
      %v9975 = vld [vmem:[%s9974] sm:$0xf]
      %v9976 = vld [vmem:[%s9974 + $0x4] sm:$0xf]
      %v9977 = vld [vmem:[%s9974 + $0x8] sm:$0xf]
      %v9978 = vld [vmem:[%s9974 + $0xc] sm:$0xf]
      %v9979 = vld [vmem:[%s9974 + $0x10] sm:$0xf]
      %v9980 = vld [vmem:[%s9974 + $0x14] sm:$0xf]
      %v9981 = vld [vmem:[%s9974 + $0x18] sm:$0xf]
      %v9982 = vld [vmem:[%s9974 + $0x1c] sm:$0xf]
      %v9983 = vld [vmem:[%s9974 + $0x20] sm:$0xf]
      %v9984 = vld [vmem:[%s9974 + $0x24] sm:$0xf]
      %v9985 = vld [vmem:[%s9974 + $0x28] sm:$0xf]
      %v9986 = vld [vmem:[%s9974 + $0x2c] sm:$0xf]
      %v9987 = vld [vmem:[%s9974 + $0x30] sm:$0xf]
      %v9988 = vld [vmem:[%s9974 + $0x34] sm:$0xf]
      %v9989 = vld [vmem:[%s9974 + $0x38] sm:$0xf]
      %v9990 = vld [vmem:[%s9974 + $0x3c] sm:$0xf]
      %v10007 = vunpack.c.l.b16 %v9975
      %v10008 = vunpack.c.l.b16 %v9976
      %v10009 = vunpack.c.l.b16 %v9977
      %v10010 = vunpack.c.l.b16 %v9978
      %v10011 = vunpack.c.l.b16 %v9979
      %v10012 = vunpack.c.l.b16 %v9980
      %v10013 = vunpack.c.l.b16 %v9981
      %v10014 = vunpack.c.l.b16 %v9982
      %v10015 = vunpack.c.l.b16 %v9983
      %v10016 = vunpack.c.l.b16 %v9984
      %v10017 = vunpack.c.l.b16 %v9985
      %v10018 = vunpack.c.l.b16 %v9986
      %v10019 = vunpack.c.l.b16 %v9987
      %v10020 = vunpack.c.l.b16 %v9988
      %v10021 = vunpack.c.l.b16 %v9989
      %v10022 = vunpack.c.l.b16 %v9990
      %v10023 = vpack.c.b16 %v10008, %v10007
      %v10024 = vpack.c.b16 %v10010, %v10009
      %v10025 = vpack.c.b16 %v10012, %v10011
      %v10026 = vpack.c.b16 %v10014, %v10013
      %v10027 = vpack.c.b16 %v10016, %v10015
      %v10028 = vpack.c.b16 %v10018, %v10017
      %v10029 = vpack.c.b16 %v10020, %v10019
      %v10030 = vpack.c.b16 %v10022, %v10021
      %10039 = vmatprep.subr.bf16.mxu0 0
      %10040 = vmatpush1.bf16.msra.mxu0 %v10030
      %10041 = vmatprep.subr.bf16.mxu0 0
      %10042 = vmatpush1.bf16.msra.mxu0 %v10029
      %10043 = vmatprep.subr.bf16.mxu0 0
      %10044 = vmatpush1.bf16.msra.mxu0 %v10028
      %10045 = vmatprep.subr.bf16.mxu0 0
      %10046 = vmatpush1.bf16.msra.mxu0 %v10027
      %10047 = vmatprep.subr.bf16.mxu0 0
      %10048 = vmatpush1.bf16.msra.mxu0 %v10026
      %10049 = vmatprep.subr.bf16.mxu0 0
      %10050 = vmatpush1.bf16.msra.mxu0 %v10025
      %10051 = vmatprep.subr.bf16.mxu0 0
      %10052 = vmatpush1.bf16.msra.mxu0 %v10024
      %10053 = vmatprep.subr.bf16.mxu0 0
      %10054 = vmatpush1.bf16.msra.mxu0 %v10023
      %10055 = vmatprep.subr.bf16.mxu0 0
      %10056 = vmatpush2.bf16.msra.mxu0 0
      %10057 = vmatprep.subr.bf16.mxu0 0
      %10058 = vmatpush2.bf16.msra.mxu0 0
      %10059 = vmatprep.subr.bf16.mxu0 0
      %10060 = vmatpush2.bf16.msra.mxu0 0
      %10061 = vmatprep.subr.bf16.mxu0 0
      %10062 = vmatpush2.bf16.msra.mxu0 0
      %10063 = vmatprep.subr.bf16.mxu0 0
      %10064 = vmatpush2.bf16.msra.mxu0 0
      %10065 = vmatprep.subr.bf16.mxu0 0
      %10066 = vmatpush2.bf16.msra.mxu0 0
      %10067 = vmatprep.subr.bf16.mxu0 0
      %10068 = vmatpush2.bf16.msra.mxu0 0
      %10069 = vmatprep.subr.bf16.mxu0 0
      %10070 = vmatpush2.bf16.msra.mxu0 0
      %10071 = vmatprep.mubr.bf16.mxu0 0
      %10072 = vmatmul.mubr.bf16.gmra.mxu0 %v9956
      %v10073 = vpop.f32.mrf.mxu0
      %v10074 = vadd.f32 0.0, %v10073
      %v10075 = vpop.f32.mrf.mxu0
      %v10076 = vpop.f32.mrf.mxu0
      %v10077 = vadd.f32 0.0, %v10076
      %v10078 = vpop.f32.mrf.mxu0
      %10079 = vmatprep.mubr.bf16.mxu0 0
      %10080 = vmatmul.mubr.bf16.gmra.mxu0 %v9957
      %v10081 = vpop.f32.mrf.mxu0
      %v10082 = vadd.f32 0.0, %v10081
      %v10083 = vpop.f32.mrf.mxu0
      %v10084 = vpop.f32.mrf.mxu0
      %v10085 = vadd.f32 0.0, %v10084
      %v10086 = vpop.f32.mrf.mxu0
      %10087 = vmatprep.mubr.bf16.mxu0 0
      %10088 = vmatmul.mubr.bf16.gmra.mxu0 %v9958
      %v10089 = vpop.f32.mrf.mxu0
      %v10090 = vadd.f32 0.0, %v10089
      %v10091 = vpop.f32.mrf.mxu0
      %v10092 = vpop.f32.mrf.mxu0
      %v10093 = vadd.f32 0.0, %v10092
      %v10094 = vpop.f32.mrf.mxu0
      %10095 = vmatprep.mubr.bf16.mxu0 0
      %10096 = vmatmul.mubr.bf16.gmra.mxu0 %v9959
      %v10097 = vpop.f32.mrf.mxu0
      %v10098 = vadd.f32 0.0, %v10097
      %v10099 = vpop.f32.mrf.mxu0
      %v10100 = vpop.f32.mrf.mxu0
      %v10101 = vadd.f32 0.0, %v10100
      %v10102 = vpop.f32.mrf.mxu0
      %10103 = vmatprep.mubr.bf16.mxu0 0
      %10104 = vmatmul.mubr.bf16.gmra.mxu0 %v9960
      %v10105 = vpop.f32.mrf.mxu0
      %v10106 = vadd.f32 0.0, %v10105
      %v10107 = vpop.f32.mrf.mxu0
      %v10108 = vpop.f32.mrf.mxu0
      %v10109 = vadd.f32 0.0, %v10108
      %v10110 = vpop.f32.mrf.mxu0
      %10111 = vmatprep.mubr.bf16.mxu0 0
      %10112 = vmatmul.mubr.bf16.gmra.mxu0 %v9961
      %v10113 = vpop.f32.mrf.mxu0
      %v10114 = vadd.f32 0.0, %v10113
      %v10115 = vpop.f32.mrf.mxu0
      %v10116 = vpop.f32.mrf.mxu0
      %v10117 = vadd.f32 0.0, %v10116
      %v10118 = vpop.f32.mrf.mxu0
      %10119 = vmatprep.mubr.bf16.mxu0 0
      %10120 = vmatmul.mubr.bf16.gmra.mxu0 %v9962
      %v10121 = vpop.f32.mrf.mxu0
      %v10122 = vadd.f32 0.0, %v10121
      %v10123 = vpop.f32.mrf.mxu0
      %v10124 = vpop.f32.mrf.mxu0
      %v10125 = vadd.f32 0.0, %v10124
      %v10126 = vpop.f32.mrf.mxu0
      %10127 = vmatprep.mubr.bf16.mxu0 0
      %10128 = vmatmul.mubr.bf16.gmra.mxu0 %v9963
      %v10129 = vpop.f32.mrf.mxu0
      %v10130 = vadd.f32 0.0, %v10129
      %v10131 = vpop.f32.mrf.mxu0
      %v10132 = vpop.f32.mrf.mxu0
      %v10133 = vadd.f32 0.0, %v10132
      %v10134 = vpop.f32.mrf.mxu0
      %10135 = vmatprep.mubr.bf16.mxu0 0
      %10136 = vmatmul.mubr.bf16.gmra.mxu0 %v9964
      %v10137 = vpop.f32.mrf.mxu0
      %v10138 = vadd.f32 0.0, %v10137
      %v10139 = vpop.f32.mrf.mxu0
      %v10140 = vpop.f32.mrf.mxu0
      %v10141 = vadd.f32 0.0, %v10140
      %v10142 = vpop.f32.mrf.mxu0
      %10143 = vmatprep.mubr.bf16.mxu0 0
      %10144 = vmatmul.mubr.bf16.gmra.mxu0 %v9965
      %v10145 = vpop.f32.mrf.mxu0
      %v10146 = vadd.f32 0.0, %v10145
      %v10147 = vpop.f32.mrf.mxu0
      %v10148 = vpop.f32.mrf.mxu0
      %v10149 = vadd.f32 0.0, %v10148
      %v10150 = vpop.f32.mrf.mxu0
      %10151 = vmatprep.mubr.bf16.mxu0 0
      %10152 = vmatmul.mubr.bf16.gmra.mxu0 %v9966
      %v10153 = vpop.f32.mrf.mxu0
      %v10154 = vadd.f32 0.0, %v10153
      %v10155 = vpop.f32.mrf.mxu0
      %v10156 = vpop.f32.mrf.mxu0
      %v10157 = vadd.f32 0.0, %v10156
      %v10158 = vpop.f32.mrf.mxu0
      %10159 = vmatprep.mubr.bf16.mxu0 0
      %10160 = vmatmul.mubr.bf16.gmra.mxu0 %v9967
      %v10161 = vpop.f32.mrf.mxu0
      %v10162 = vadd.f32 0.0, %v10161
      %v10163 = vpop.f32.mrf.mxu0
      %v10164 = vpop.f32.mrf.mxu0
      %v10165 = vadd.f32 0.0, %v10164
      %v10166 = vpop.f32.mrf.mxu0
      %10167 = vmatprep.mubr.bf16.mxu0 0
      %10168 = vmatmul.mubr.bf16.gmra.mxu0 %v9968
      %v10169 = vpop.f32.mrf.mxu0
      %v10170 = vadd.f32 0.0, %v10169
      %v10171 = vpop.f32.mrf.mxu0
      %v10172 = vpop.f32.mrf.mxu0
      %v10173 = vadd.f32 0.0, %v10172
      %v10174 = vpop.f32.mrf.mxu0
      %10175 = vmatprep.mubr.bf16.mxu0 0
      %10176 = vmatmul.mubr.bf16.gmra.mxu0 %v9969
      %v10177 = vpop.f32.mrf.mxu0
      %v10178 = vadd.f32 0.0, %v10177
      %v10179 = vpop.f32.mrf.mxu0
      %v10180 = vpop.f32.mrf.mxu0
      %v10181 = vadd.f32 0.0, %v10180
      %v10182 = vpop.f32.mrf.mxu0
      %10183 = vmatprep.mubr.bf16.mxu0 0
      %10184 = vmatmul.mubr.bf16.gmra.mxu0 %v9970
      %v10185 = vpop.f32.mrf.mxu0
      %v10186 = vadd.f32 0.0, %v10185
      %v10187 = vpop.f32.mrf.mxu0
      %v10188 = vpop.f32.mrf.mxu0
      %v10189 = vadd.f32 0.0, %v10188
      %v10190 = vpop.f32.mrf.mxu0
      %10191 = vmatprep.mubr.bf16.mxu0 0
      %10192 = vmatmul.mubr.bf16.gmra.mxu0 %v9971
      %v10193 = vpop.f32.mrf.mxu0
      %v10194 = vadd.f32 0.0, %v10193
      %v10195 = vpop.f32.mrf.mxu0
      %v10196 = vpop.f32.mrf.mxu0
      %v10197 = vadd.f32 0.0, %v10196
      %v10198 = vpop.f32.mrf.mxu0
      %10199 = vmatprep.mubr.bf16.mxu0 0
      %10200 = vmatmul.mubr.bf16.gmra.mxu0 %v9972
      %v10201 = vpop.f32.mrf.mxu0
      %v10202 = vadd.f32 0.0, %v10201
      %v10203 = vpop.f32.mrf.mxu0
      %v10204 = vpop.f32.mrf.mxu0
      %v10205 = vadd.f32 0.0, %v10204
      %v10206 = vpop.f32.mrf.mxu0
      %10207 = vmatprep.mubr.bf16.mxu0 0
      %10208 = vmatmul.mubr.bf16.gmra.mxu0 %v9973
      %v10209 = vpop.f32.mrf.mxu0
      %v10210 = vadd.f32 0.0, %v10209
      %v10211 = vpop.f32.mrf.mxu0
      %v10212 = vpop.f32.mrf.mxu0
      %v10213 = vadd.f32 0.0, %v10212
      %v10214 = vpop.f32.mrf.mxu0
      %10215 = vdwg.mxu0
      %v10216 = vadd.f32 %v9884, %v10074
      %v10217 = vadd.f32 %v9885, %v10077
      %v10218 = vadd.f32 %v9886, %v10082
      %v10219 = vadd.f32 %v9887, %v10085
      %v10220 = vadd.f32 %v9888, %v10090
      %v10221 = vadd.f32 %v9889, %v10093
      %v10222 = vadd.f32 %v9890, %v10098
      %v10223 = vadd.f32 %v9891, %v10101
      %v10224 = vadd.f32 %v9892, %v10106
      %v10225 = vadd.f32 %v9893, %v10109
      %v10226 = vadd.f32 %v9894, %v10114
      %v10227 = vadd.f32 %v9895, %v10117
      %v10228 = vadd.f32 %v9896, %v10122
      %v10229 = vadd.f32 %v9897, %v10125
      %v10230 = vadd.f32 %v9898, %v10130
      %v10231 = vadd.f32 %v9899, %v10133
      %v10232 = vadd.f32 %v9900, %v10138
      %v10233 = vadd.f32 %v9901, %v10141
      %v10234 = vadd.f32 %v9902, %v10146
      %v10235 = vadd.f32 %v9903, %v10149
      %v10236 = vadd.f32 %v9904, %v10154
      %v10237 = vadd.f32 %v9905, %v10157
      %v10238 = vadd.f32 %v9906, %v10162
      %v10239 = vadd.f32 %v9907, %v10165
      %v10240 = vadd.f32 %v9908, %v10170
      %v10241 = vadd.f32 %v9909, %v10173
      %v10242 = vadd.f32 %v9910, %v10178
      %v10243 = vadd.f32 %v9911, %v10181
      %v10244 = vadd.f32 %v9912, %v10186
      %v10245 = vadd.f32 %v9913, %v10189
      %v10246 = vadd.f32 %v9914, %v10194
      %v10247 = vadd.f32 %v9915, %v10197
      %v10248 = vadd.f32 %v9916, %v10202
      %v10249 = vadd.f32 %v9917, %v10205
      %v10250 = vadd.f32 %v9918, %v10210
      %v10251 = vadd.f32 %v9919, %v10213
      %v10252 = vld [vmem:[%s429 + $0x14] sm:$0xff]
      %v10253 = vld [vmem:[%s429 + $0x1c] sm:$0xff]
      %v10254 = vld [vmem:[%s429 + $0x24] sm:$0xff]
      %v10255 = vld [vmem:[%s429 + $0x2c] sm:$0xff]
      %v10256 = vld [vmem:[%s429 + $0x34] sm:$0xff]
      %v10257 = vld [vmem:[%s429 + $0x3c] sm:$0xff]
      %v10258 = vld [vmem:[%s429 + $0x44] sm:$0xff]
      %v10259 = vld [vmem:[%s429 + $0x4c] sm:$0xff]
      %v10260 = vld [vmem:[%s429 + $0x54] sm:$0xff]
      %v10261 = vld [vmem:[%s429 + $0x5c] sm:$0xff]
      %v10262 = vld [vmem:[%s429 + $0x64] sm:$0xff]
      %v10263 = vld [vmem:[%s429 + $0x6c] sm:$0xff]
      %v10264 = vld [vmem:[%s429 + $0x74] sm:$0xff]
      %v10265 = vld [vmem:[%s429 + $0x7c] sm:$0xff]
      %v10266 = vld [vmem:[%s429 + $0x84] sm:$0xff]
      %v10267 = vld [vmem:[%s429 + $0x8c] sm:$0xff]
      %v10268 = vld [vmem:[%s429 + $0x94] sm:$0xff]
      %v10269 = vld [vmem:[%s429 + $0x9c] sm:$0xff]
      %v10270 = vld [vmem:[%s429 + $0xa4] sm:$0xff]
      %v10271 = vld [vmem:[%s429 + $0xac] sm:$0xff]
      %v10272 = vld [vmem:[%s429 + $0xb4] sm:$0xff]
      %v10273 = vld [vmem:[%s429 + $0xbc] sm:$0xff]
      %v10274 = vld [vmem:[%s429 + $0xc4] sm:$0xff]
      %v10275 = vld [vmem:[%s429 + $0xcc] sm:$0xff]
      %v10276 = vld [vmem:[%s429 + $0xd4] sm:$0xff]
      %v10277 = vld [vmem:[%s429 + $0xdc] sm:$0xff]
      %v10278 = vld [vmem:[%s429 + $0xe4] sm:$0xff]
      %v10279 = vld [vmem:[%s429 + $0xec] sm:$0xff]
      %v10280 = vld [vmem:[%s429 + $0xf4] sm:$0xff]
      %v10281 = vld [vmem:[%s429 + $0xfc] sm:$0xff]
      %v10282 = vld [vmem:[%s429 + $0x104] sm:$0xff]
      %v10283 = vld [vmem:[%s429 + $0x10c] sm:$0xff]
      %v10284 = vld [vmem:[%s429 + $0x114] sm:$0xff]
      %v10285 = vld [vmem:[%s429 + $0x11c] sm:$0xff]
      %v10286 = vld [vmem:[%s429 + $0x124] sm:$0xff]
      %v10287 = vld [vmem:[%s429 + $0x12c] sm:$0x3f]
      %v10288 = vpack.c.bf16 %v10253, %v10252
      %v10289 = vpack.c.bf16 %v10255, %v10254
      %v10290 = vpack.c.bf16 %v10257, %v10256
      %v10291 = vpack.c.bf16 %v10259, %v10258
      %v10292 = vpack.c.bf16 %v10261, %v10260
      %v10293 = vpack.c.bf16 %v10263, %v10262
      %v10294 = vpack.c.bf16 %v10265, %v10264
      %v10295 = vpack.c.bf16 %v10267, %v10266
      %v10296 = vpack.c.bf16 %v10269, %v10268
      %v10297 = vpack.c.bf16 %v10271, %v10270
      %v10298 = vpack.c.bf16 %v10273, %v10272
      %v10299 = vpack.c.bf16 %v10275, %v10274
      %v10300 = vpack.c.bf16 %v10277, %v10276
      %v10301 = vpack.c.bf16 %v10279, %v10278
      %v10302 = vpack.c.bf16 %v10281, %v10280
      %v10303 = vpack.c.bf16 %v10283, %v10282
      %v10304 = vpack.c.bf16 %v10285, %v10284
      %v10305 = vpack.c.bf16 %v10287, %v10286
      %s10306 = scalar_lea.vmem %s9, 320
      %v10307 = vld [vmem:[%s10306] sm:$0xf]
      %v10308 = vld [vmem:[%s10306 + $0x4] sm:$0xf]
      %v10309 = vld [vmem:[%s10306 + $0x8] sm:$0xf]
      %v10310 = vld [vmem:[%s10306 + $0xc] sm:$0xf]
      %v10311 = vld [vmem:[%s10306 + $0x10] sm:$0xf]
      %v10312 = vld [vmem:[%s10306 + $0x14] sm:$0xf]
      %v10313 = vld [vmem:[%s10306 + $0x18] sm:$0xf]
      %v10314 = vld [vmem:[%s10306 + $0x1c] sm:$0xf]
      %v10315 = vld [vmem:[%s10306 + $0x20] sm:$0xf]
      %v10316 = vld [vmem:[%s10306 + $0x24] sm:$0xf]
      %v10317 = vld [vmem:[%s10306 + $0x28] sm:$0xf]
      %v10318 = vld [vmem:[%s10306 + $0x2c] sm:$0xf]
      %v10319 = vld [vmem:[%s10306 + $0x30] sm:$0xf]
      %v10320 = vld [vmem:[%s10306 + $0x34] sm:$0xf]
      %v10321 = vld [vmem:[%s10306 + $0x38] sm:$0xf]
      %v10322 = vld [vmem:[%s10306 + $0x3c] sm:$0xf]
      %v10339 = vunpack.c.l.b16 %v10307
      %v10340 = vunpack.c.l.b16 %v10308
      %v10341 = vunpack.c.l.b16 %v10309
      %v10342 = vunpack.c.l.b16 %v10310
      %v10343 = vunpack.c.l.b16 %v10311
      %v10344 = vunpack.c.l.b16 %v10312
      %v10345 = vunpack.c.l.b16 %v10313
      %v10346 = vunpack.c.l.b16 %v10314
      %v10347 = vunpack.c.l.b16 %v10315
      %v10348 = vunpack.c.l.b16 %v10316
      %v10349 = vunpack.c.l.b16 %v10317
      %v10350 = vunpack.c.l.b16 %v10318
      %v10351 = vunpack.c.l.b16 %v10319
      %v10352 = vunpack.c.l.b16 %v10320
      %v10353 = vunpack.c.l.b16 %v10321
      %v10354 = vunpack.c.l.b16 %v10322
      %v10355 = vpack.c.b16 %v10340, %v10339
      %v10356 = vpack.c.b16 %v10342, %v10341
      %v10357 = vpack.c.b16 %v10344, %v10343
      %v10358 = vpack.c.b16 %v10346, %v10345
      %v10359 = vpack.c.b16 %v10348, %v10347
      %v10360 = vpack.c.b16 %v10350, %v10349
      %v10361 = vpack.c.b16 %v10352, %v10351
      %v10362 = vpack.c.b16 %v10354, %v10353
      %10371 = vmatprep.subr.bf16.mxu0 0
      %10372 = vmatpush1.bf16.msra.mxu0 %v10362
      %10373 = vmatprep.subr.bf16.mxu0 0
      %10374 = vmatpush1.bf16.msra.mxu0 %v10361
      %10375 = vmatprep.subr.bf16.mxu0 0
      %10376 = vmatpush1.bf16.msra.mxu0 %v10360
      %10377 = vmatprep.subr.bf16.mxu0 0
      %10378 = vmatpush1.bf16.msra.mxu0 %v10359
      %10379 = vmatprep.subr.bf16.mxu0 0
      %10380 = vmatpush1.bf16.msra.mxu0 %v10358
      %10381 = vmatprep.subr.bf16.mxu0 0
      %10382 = vmatpush1.bf16.msra.mxu0 %v10357
      %10383 = vmatprep.subr.bf16.mxu0 0
      %10384 = vmatpush1.bf16.msra.mxu0 %v10356
      %10385 = vmatprep.subr.bf16.mxu0 0
      %10386 = vmatpush1.bf16.msra.mxu0 %v10355
      %10387 = vmatprep.subr.bf16.mxu0 0
      %10388 = vmatpush2.bf16.msra.mxu0 0
      %10389 = vmatprep.subr.bf16.mxu0 0
      %10390 = vmatpush2.bf16.msra.mxu0 0
      %10391 = vmatprep.subr.bf16.mxu0 0
      %10392 = vmatpush2.bf16.msra.mxu0 0
      %10393 = vmatprep.subr.bf16.mxu0 0
      %10394 = vmatpush2.bf16.msra.mxu0 0
      %10395 = vmatprep.subr.bf16.mxu0 0
      %10396 = vmatpush2.bf16.msra.mxu0 0
      %10397 = vmatprep.subr.bf16.mxu0 0
      %10398 = vmatpush2.bf16.msra.mxu0 0
      %10399 = vmatprep.subr.bf16.mxu0 0
      %10400 = vmatpush2.bf16.msra.mxu0 0
      %10401 = vmatprep.subr.bf16.mxu0 0
      %10402 = vmatpush2.bf16.msra.mxu0 0
      %10403 = vmatprep.mubr.bf16.mxu0 0
      %10404 = vmatmul.mubr.bf16.gmra.mxu0 %v10288
      %v10405 = vpop.f32.mrf.mxu0
      %v10406 = vadd.f32 0.0, %v10405
      %v10407 = vpop.f32.mrf.mxu0
      %v10408 = vpop.f32.mrf.mxu0
      %v10409 = vadd.f32 0.0, %v10408
      %v10410 = vpop.f32.mrf.mxu0
      %10411 = vmatprep.mubr.bf16.mxu0 0
      %10412 = vmatmul.mubr.bf16.gmra.mxu0 %v10289
      %v10413 = vpop.f32.mrf.mxu0
      %v10414 = vadd.f32 0.0, %v10413
      %v10415 = vpop.f32.mrf.mxu0
      %v10416 = vpop.f32.mrf.mxu0
      %v10417 = vadd.f32 0.0, %v10416
      %v10418 = vpop.f32.mrf.mxu0
      %10419 = vmatprep.mubr.bf16.mxu0 0
      %10420 = vmatmul.mubr.bf16.gmra.mxu0 %v10290
      %v10421 = vpop.f32.mrf.mxu0
      %v10422 = vadd.f32 0.0, %v10421
      %v10423 = vpop.f32.mrf.mxu0
      %v10424 = vpop.f32.mrf.mxu0
      %v10425 = vadd.f32 0.0, %v10424
      %v10426 = vpop.f32.mrf.mxu0
      %10427 = vmatprep.mubr.bf16.mxu0 0
      %10428 = vmatmul.mubr.bf16.gmra.mxu0 %v10291
      %v10429 = vpop.f32.mrf.mxu0
      %v10430 = vadd.f32 0.0, %v10429
      %v10431 = vpop.f32.mrf.mxu0
      %v10432 = vpop.f32.mrf.mxu0
      %v10433 = vadd.f32 0.0, %v10432
      %v10434 = vpop.f32.mrf.mxu0
      %10435 = vmatprep.mubr.bf16.mxu0 0
      %10436 = vmatmul.mubr.bf16.gmra.mxu0 %v10292
      %v10437 = vpop.f32.mrf.mxu0
      %v10438 = vadd.f32 0.0, %v10437
      %v10439 = vpop.f32.mrf.mxu0
      %v10440 = vpop.f32.mrf.mxu0
      %v10441 = vadd.f32 0.0, %v10440
      %v10442 = vpop.f32.mrf.mxu0
      %10443 = vmatprep.mubr.bf16.mxu0 0
      %10444 = vmatmul.mubr.bf16.gmra.mxu0 %v10293
      %v10445 = vpop.f32.mrf.mxu0
      %v10446 = vadd.f32 0.0, %v10445
      %v10447 = vpop.f32.mrf.mxu0
      %v10448 = vpop.f32.mrf.mxu0
      %v10449 = vadd.f32 0.0, %v10448
      %v10450 = vpop.f32.mrf.mxu0
      %10451 = vmatprep.mubr.bf16.mxu0 0
      %10452 = vmatmul.mubr.bf16.gmra.mxu0 %v10294
      %v10453 = vpop.f32.mrf.mxu0
      %v10454 = vadd.f32 0.0, %v10453
      %v10455 = vpop.f32.mrf.mxu0
      %v10456 = vpop.f32.mrf.mxu0
      %v10457 = vadd.f32 0.0, %v10456
      %v10458 = vpop.f32.mrf.mxu0
      %10459 = vmatprep.mubr.bf16.mxu0 0
      %10460 = vmatmul.mubr.bf16.gmra.mxu0 %v10295
      %v10461 = vpop.f32.mrf.mxu0
      %v10462 = vadd.f32 0.0, %v10461
      %v10463 = vpop.f32.mrf.mxu0
      %v10464 = vpop.f32.mrf.mxu0
      %v10465 = vadd.f32 0.0, %v10464
      %v10466 = vpop.f32.mrf.mxu0
      %10467 = vmatprep.mubr.bf16.mxu0 0
      %10468 = vmatmul.mubr.bf16.gmra.mxu0 %v10296
      %v10469 = vpop.f32.mrf.mxu0
      %v10470 = vadd.f32 0.0, %v10469
      %v10471 = vpop.f32.mrf.mxu0
      %v10472 = vpop.f32.mrf.mxu0
      %v10473 = vadd.f32 0.0, %v10472
      %v10474 = vpop.f32.mrf.mxu0
      %10475 = vmatprep.mubr.bf16.mxu0 0
      %10476 = vmatmul.mubr.bf16.gmra.mxu0 %v10297
      %v10477 = vpop.f32.mrf.mxu0
      %v10478 = vadd.f32 0.0, %v10477
      %v10479 = vpop.f32.mrf.mxu0
      %v10480 = vpop.f32.mrf.mxu0
      %v10481 = vadd.f32 0.0, %v10480
      %v10482 = vpop.f32.mrf.mxu0
      %10483 = vmatprep.mubr.bf16.mxu0 0
      %10484 = vmatmul.mubr.bf16.gmra.mxu0 %v10298
      %v10485 = vpop.f32.mrf.mxu0
      %v10486 = vadd.f32 0.0, %v10485
      %v10487 = vpop.f32.mrf.mxu0
      %v10488 = vpop.f32.mrf.mxu0
      %v10489 = vadd.f32 0.0, %v10488
      %v10490 = vpop.f32.mrf.mxu0
      %10491 = vmatprep.mubr.bf16.mxu0 0
      %10492 = vmatmul.mubr.bf16.gmra.mxu0 %v10299
      %v10493 = vpop.f32.mrf.mxu0
      %v10494 = vadd.f32 0.0, %v10493
      %v10495 = vpop.f32.mrf.mxu0
      %v10496 = vpop.f32.mrf.mxu0
      %v10497 = vadd.f32 0.0, %v10496
      %v10498 = vpop.f32.mrf.mxu0
      %10499 = vmatprep.mubr.bf16.mxu0 0
      %10500 = vmatmul.mubr.bf16.gmra.mxu0 %v10300
      %v10501 = vpop.f32.mrf.mxu0
      %v10502 = vadd.f32 0.0, %v10501
      %v10503 = vpop.f32.mrf.mxu0
      %v10504 = vpop.f32.mrf.mxu0
      %v10505 = vadd.f32 0.0, %v10504
      %v10506 = vpop.f32.mrf.mxu0
      %10507 = vmatprep.mubr.bf16.mxu0 0
      %10508 = vmatmul.mubr.bf16.gmra.mxu0 %v10301
      %v10509 = vpop.f32.mrf.mxu0
      %v10510 = vadd.f32 0.0, %v10509
      %v10511 = vpop.f32.mrf.mxu0
      %v10512 = vpop.f32.mrf.mxu0
      %v10513 = vadd.f32 0.0, %v10512
      %v10514 = vpop.f32.mrf.mxu0
      %10515 = vmatprep.mubr.bf16.mxu0 0
      %10516 = vmatmul.mubr.bf16.gmra.mxu0 %v10302
      %v10517 = vpop.f32.mrf.mxu0
      %v10518 = vadd.f32 0.0, %v10517
      %v10519 = vpop.f32.mrf.mxu0
      %v10520 = vpop.f32.mrf.mxu0
      %v10521 = vadd.f32 0.0, %v10520
      %v10522 = vpop.f32.mrf.mxu0
      %10523 = vmatprep.mubr.bf16.mxu0 0
      %10524 = vmatmul.mubr.bf16.gmra.mxu0 %v10303
      %v10525 = vpop.f32.mrf.mxu0
      %v10526 = vadd.f32 0.0, %v10525
      %v10527 = vpop.f32.mrf.mxu0
      %v10528 = vpop.f32.mrf.mxu0
      %v10529 = vadd.f32 0.0, %v10528
      %v10530 = vpop.f32.mrf.mxu0
      %10531 = vmatprep.mubr.bf16.mxu0 0
      %10532 = vmatmul.mubr.bf16.gmra.mxu0 %v10304
      %v10533 = vpop.f32.mrf.mxu0
      %v10534 = vadd.f32 0.0, %v10533
      %v10535 = vpop.f32.mrf.mxu0
      %v10536 = vpop.f32.mrf.mxu0
      %v10537 = vadd.f32 0.0, %v10536
      %v10538 = vpop.f32.mrf.mxu0
      %10539 = vmatprep.mubr.bf16.mxu0 0
      %10540 = vmatmul.mubr.bf16.gmra.mxu0 %v10305
      %v10541 = vpop.f32.mrf.mxu0
      %v10542 = vadd.f32 0.0, %v10541
      %v10543 = vpop.f32.mrf.mxu0
      %v10544 = vpop.f32.mrf.mxu0
      %v10545 = vadd.f32 0.0, %v10544
      %v10546 = vpop.f32.mrf.mxu0
      %10547 = vdwg.mxu0
      %v10548 = vadd.f32 %v10216, %v10406
      %v10549 = vadd.f32 %v10217, %v10409
      %v10550 = vadd.f32 %v10218, %v10414
      %v10551 = vadd.f32 %v10219, %v10417
      %v10552 = vadd.f32 %v10220, %v10422
      %v10553 = vadd.f32 %v10221, %v10425
      %v10554 = vadd.f32 %v10222, %v10430
      %v10555 = vadd.f32 %v10223, %v10433
      %v10556 = vadd.f32 %v10224, %v10438
      %v10557 = vadd.f32 %v10225, %v10441
      %v10558 = vadd.f32 %v10226, %v10446
      %v10559 = vadd.f32 %v10227, %v10449
      %v10560 = vadd.f32 %v10228, %v10454
      %v10561 = vadd.f32 %v10229, %v10457
      %v10562 = vadd.f32 %v10230, %v10462
      %v10563 = vadd.f32 %v10231, %v10465
      %v10564 = vadd.f32 %v10232, %v10470
      %v10565 = vadd.f32 %v10233, %v10473
      %v10566 = vadd.f32 %v10234, %v10478
      %v10567 = vadd.f32 %v10235, %v10481
      %v10568 = vadd.f32 %v10236, %v10486
      %v10569 = vadd.f32 %v10237, %v10489
      %v10570 = vadd.f32 %v10238, %v10494
      %v10571 = vadd.f32 %v10239, %v10497
      %v10572 = vadd.f32 %v10240, %v10502
      %v10573 = vadd.f32 %v10241, %v10505
      %v10574 = vadd.f32 %v10242, %v10510
      %v10575 = vadd.f32 %v10243, %v10513
      %v10576 = vadd.f32 %v10244, %v10518
      %v10577 = vadd.f32 %v10245, %v10521
      %v10578 = vadd.f32 %v10246, %v10526
      %v10579 = vadd.f32 %v10247, %v10529
      %v10580 = vadd.f32 %v10248, %v10534
      %v10581 = vadd.f32 %v10249, %v10537
      %v10582 = vadd.f32 %v10250, %v10542
      %v10583 = vadd.f32 %v10251, %v10545
      %v10584 = vld [vmem:[%s429 + $0x24] sm:$0xff]
      %v10585 = vld [vmem:[%s429 + $0x2c] sm:$0xff]
      %v10586 = vld [vmem:[%s429 + $0x34] sm:$0xff]
      %v10587 = vld [vmem:[%s429 + $0x3c] sm:$0xff]
      %v10588 = vld [vmem:[%s429 + $0x44] sm:$0xff]
      %v10589 = vld [vmem:[%s429 + $0x4c] sm:$0xff]
      %v10590 = vld [vmem:[%s429 + $0x54] sm:$0xff]
      %v10591 = vld [vmem:[%s429 + $0x5c] sm:$0xff]
      %v10592 = vld [vmem:[%s429 + $0x64] sm:$0xff]
      %v10593 = vld [vmem:[%s429 + $0x6c] sm:$0xff]
      %v10594 = vld [vmem:[%s429 + $0x74] sm:$0xff]
      %v10595 = vld [vmem:[%s429 + $0x7c] sm:$0xff]
      %v10596 = vld [vmem:[%s429 + $0x84] sm:$0xff]
      %v10597 = vld [vmem:[%s429 + $0x8c] sm:$0xff]
      %v10598 = vld [vmem:[%s429 + $0x94] sm:$0xff]
      %v10599 = vld [vmem:[%s429 + $0x9c] sm:$0xff]
      %v10600 = vld [vmem:[%s429 + $0xa4] sm:$0xff]
      %v10601 = vld [vmem:[%s429 + $0xac] sm:$0xff]
      %v10602 = vld [vmem:[%s429 + $0xb4] sm:$0xff]
      %v10603 = vld [vmem:[%s429 + $0xbc] sm:$0xff]
      %v10604 = vld [vmem:[%s429 + $0xc4] sm:$0xff]
      %v10605 = vld [vmem:[%s429 + $0xcc] sm:$0xff]
      %v10606 = vld [vmem:[%s429 + $0xd4] sm:$0xff]
      %v10607 = vld [vmem:[%s429 + $0xdc] sm:$0xff]
      %v10608 = vld [vmem:[%s429 + $0xe4] sm:$0xff]
      %v10609 = vld [vmem:[%s429 + $0xec] sm:$0xff]
      %v10610 = vld [vmem:[%s429 + $0xf4] sm:$0xff]
      %v10611 = vld [vmem:[%s429 + $0xfc] sm:$0xff]
      %v10612 = vld [vmem:[%s429 + $0x104] sm:$0xff]
      %v10613 = vld [vmem:[%s429 + $0x10c] sm:$0xff]
      %v10614 = vld [vmem:[%s429 + $0x114] sm:$0xff]
      %v10615 = vld [vmem:[%s429 + $0x11c] sm:$0xff]
      %v10616 = vld [vmem:[%s429 + $0x124] sm:$0xff]
      %v10617 = vld [vmem:[%s429 + $0x12c] sm:$0xff]
      %v10618 = vld [vmem:[%s429 + $0x134] sm:$0xff]
      %v10619 = vld [vmem:[%s429 + $0x13c] sm:$0x3f]
      %v10620 = vpack.c.bf16 %v10585, %v10584
      %v10621 = vpack.c.bf16 %v10587, %v10586
      %v10622 = vpack.c.bf16 %v10589, %v10588
      %v10623 = vpack.c.bf16 %v10591, %v10590
      %v10624 = vpack.c.bf16 %v10593, %v10592
      %v10625 = vpack.c.bf16 %v10595, %v10594
      %v10626 = vpack.c.bf16 %v10597, %v10596
      %v10627 = vpack.c.bf16 %v10599, %v10598
      %v10628 = vpack.c.bf16 %v10601, %v10600
      %v10629 = vpack.c.bf16 %v10603, %v10602
      %v10630 = vpack.c.bf16 %v10605, %v10604
      %v10631 = vpack.c.bf16 %v10607, %v10606
      %v10632 = vpack.c.bf16 %v10609, %v10608
      %v10633 = vpack.c.bf16 %v10611, %v10610
      %v10634 = vpack.c.bf16 %v10613, %v10612
      %v10635 = vpack.c.bf16 %v10615, %v10614
      %v10636 = vpack.c.bf16 %v10617, %v10616
      %v10637 = vpack.c.bf16 %v10619, %v10618
      %s10638 = scalar_lea.vmem %s9, 384
      %v10639 = vld [vmem:[%s10638] sm:$0xf]
      %v10640 = vld [vmem:[%s10638 + $0x4] sm:$0xf]
      %v10641 = vld [vmem:[%s10638 + $0x8] sm:$0xf]
      %v10642 = vld [vmem:[%s10638 + $0xc] sm:$0xf]
      %v10643 = vld [vmem:[%s10638 + $0x10] sm:$0xf]
      %v10644 = vld [vmem:[%s10638 + $0x14] sm:$0xf]
      %v10645 = vld [vmem:[%s10638 + $0x18] sm:$0xf]
      %v10646 = vld [vmem:[%s10638 + $0x1c] sm:$0xf]
      %v10647 = vld [vmem:[%s10638 + $0x20] sm:$0xf]
      %v10648 = vld [vmem:[%s10638 + $0x24] sm:$0xf]
      %v10649 = vld [vmem:[%s10638 + $0x28] sm:$0xf]
      %v10650 = vld [vmem:[%s10638 + $0x2c] sm:$0xf]
      %v10651 = vld [vmem:[%s10638 + $0x30] sm:$0xf]
      %v10652 = vld [vmem:[%s10638 + $0x34] sm:$0xf]
      %v10653 = vld [vmem:[%s10638 + $0x38] sm:$0xf]
      %v10654 = vld [vmem:[%s10638 + $0x3c] sm:$0xf]
      %v10671 = vunpack.c.l.b16 %v10639
      %v10672 = vunpack.c.l.b16 %v10640
      %v10673 = vunpack.c.l.b16 %v10641
      %v10674 = vunpack.c.l.b16 %v10642
      %v10675 = vunpack.c.l.b16 %v10643
      %v10676 = vunpack.c.l.b16 %v10644
      %v10677 = vunpack.c.l.b16 %v10645
      %v10678 = vunpack.c.l.b16 %v10646
      %v10679 = vunpack.c.l.b16 %v10647
      %v10680 = vunpack.c.l.b16 %v10648
      %v10681 = vunpack.c.l.b16 %v10649
      %v10682 = vunpack.c.l.b16 %v10650
      %v10683 = vunpack.c.l.b16 %v10651
      %v10684 = vunpack.c.l.b16 %v10652
      %v10685 = vunpack.c.l.b16 %v10653
      %v10686 = vunpack.c.l.b16 %v10654
      %v10687 = vpack.c.b16 %v10672, %v10671
      %v10688 = vpack.c.b16 %v10674, %v10673
      %v10689 = vpack.c.b16 %v10676, %v10675
      %v10690 = vpack.c.b16 %v10678, %v10677
      %v10691 = vpack.c.b16 %v10680, %v10679
      %v10692 = vpack.c.b16 %v10682, %v10681
      %v10693 = vpack.c.b16 %v10684, %v10683
      %v10694 = vpack.c.b16 %v10686, %v10685
      %10703 = vmatprep.subr.bf16.mxu0 0
      %10704 = vmatpush1.bf16.msra.mxu0 %v10694
      %10705 = vmatprep.subr.bf16.mxu0 0
      %10706 = vmatpush1.bf16.msra.mxu0 %v10693
      %10707 = vmatprep.subr.bf16.mxu0 0
      %10708 = vmatpush1.bf16.msra.mxu0 %v10692
      %10709 = vmatprep.subr.bf16.mxu0 0
      %10710 = vmatpush1.bf16.msra.mxu0 %v10691
      %10711 = vmatprep.subr.bf16.mxu0 0
      %10712 = vmatpush1.bf16.msra.mxu0 %v10690
      %10713 = vmatprep.subr.bf16.mxu0 0
      %10714 = vmatpush1.bf16.msra.mxu0 %v10689
      %10715 = vmatprep.subr.bf16.mxu0 0
      %10716 = vmatpush1.bf16.msra.mxu0 %v10688
      %10717 = vmatprep.subr.bf16.mxu0 0
      %10718 = vmatpush1.bf16.msra.mxu0 %v10687
      %10719 = vmatprep.subr.bf16.mxu0 0
      %10720 = vmatpush2.bf16.msra.mxu0 0
      %10721 = vmatprep.subr.bf16.mxu0 0
      %10722 = vmatpush2.bf16.msra.mxu0 0
      %10723 = vmatprep.subr.bf16.mxu0 0
      %10724 = vmatpush2.bf16.msra.mxu0 0
      %10725 = vmatprep.subr.bf16.mxu0 0
      %10726 = vmatpush2.bf16.msra.mxu0 0
      %10727 = vmatprep.subr.bf16.mxu0 0
      %10728 = vmatpush2.bf16.msra.mxu0 0
      %10729 = vmatprep.subr.bf16.mxu0 0
      %10730 = vmatpush2.bf16.msra.mxu0 0
      %10731 = vmatprep.subr.bf16.mxu0 0
      %10732 = vmatpush2.bf16.msra.mxu0 0
      %10733 = vmatprep.subr.bf16.mxu0 0
      %10734 = vmatpush2.bf16.msra.mxu0 0
      %10735 = vmatprep.mubr.bf16.mxu0 0
      %10736 = vmatmul.mubr.bf16.gmra.mxu0 %v10620
      %v10737 = vpop.f32.mrf.mxu0
      %v10738 = vadd.f32 0.0, %v10737
      %v10739 = vpop.f32.mrf.mxu0
      %v10740 = vpop.f32.mrf.mxu0
      %v10741 = vadd.f32 0.0, %v10740
      %v10742 = vpop.f32.mrf.mxu0
      %10743 = vmatprep.mubr.bf16.mxu0 0
      %10744 = vmatmul.mubr.bf16.gmra.mxu0 %v10621
      %v10745 = vpop.f32.mrf.mxu0
      %v10746 = vadd.f32 0.0, %v10745
      %v10747 = vpop.f32.mrf.mxu0
      %v10748 = vpop.f32.mrf.mxu0
      %v10749 = vadd.f32 0.0, %v10748
      %v10750 = vpop.f32.mrf.mxu0
      %10751 = vmatprep.mubr.bf16.mxu0 0
      %10752 = vmatmul.mubr.bf16.gmra.mxu0 %v10622
      %v10753 = vpop.f32.mrf.mxu0
      %v10754 = vadd.f32 0.0, %v10753
      %v10755 = vpop.f32.mrf.mxu0
      %v10756 = vpop.f32.mrf.mxu0
      %v10757 = vadd.f32 0.0, %v10756
      %v10758 = vpop.f32.mrf.mxu0
      %10759 = vmatprep.mubr.bf16.mxu0 0
      %10760 = vmatmul.mubr.bf16.gmra.mxu0 %v10623
      %v10761 = vpop.f32.mrf.mxu0
      %v10762 = vadd.f32 0.0, %v10761
      %v10763 = vpop.f32.mrf.mxu0
      %v10764 = vpop.f32.mrf.mxu0
      %v10765 = vadd.f32 0.0, %v10764
      %v10766 = vpop.f32.mrf.mxu0
      %10767 = vmatprep.mubr.bf16.mxu0 0
      %10768 = vmatmul.mubr.bf16.gmra.mxu0 %v10624
      %v10769 = vpop.f32.mrf.mxu0
      %v10770 = vadd.f32 0.0, %v10769
      %v10771 = vpop.f32.mrf.mxu0
      %v10772 = vpop.f32.mrf.mxu0
      %v10773 = vadd.f32 0.0, %v10772
      %v10774 = vpop.f32.mrf.mxu0
      %10775 = vmatprep.mubr.bf16.mxu0 0
      %10776 = vmatmul.mubr.bf16.gmra.mxu0 %v10625
      %v10777 = vpop.f32.mrf.mxu0
      %v10778 = vadd.f32 0.0, %v10777
      %v10779 = vpop.f32.mrf.mxu0
      %v10780 = vpop.f32.mrf.mxu0
      %v10781 = vadd.f32 0.0, %v10780
      %v10782 = vpop.f32.mrf.mxu0
      %10783 = vmatprep.mubr.bf16.mxu0 0
      %10784 = vmatmul.mubr.bf16.gmra.mxu0 %v10626
      %v10785 = vpop.f32.mrf.mxu0
      %v10786 = vadd.f32 0.0, %v10785
      %v10787 = vpop.f32.mrf.mxu0
      %v10788 = vpop.f32.mrf.mxu0
      %v10789 = vadd.f32 0.0, %v10788
      %v10790 = vpop.f32.mrf.mxu0
      %10791 = vmatprep.mubr.bf16.mxu0 0
      %10792 = vmatmul.mubr.bf16.gmra.mxu0 %v10627
      %v10793 = vpop.f32.mrf.mxu0
      %v10794 = vadd.f32 0.0, %v10793
      %v10795 = vpop.f32.mrf.mxu0
      %v10796 = vpop.f32.mrf.mxu0
      %v10797 = vadd.f32 0.0, %v10796
      %v10798 = vpop.f32.mrf.mxu0
      %10799 = vmatprep.mubr.bf16.mxu0 0
      %10800 = vmatmul.mubr.bf16.gmra.mxu0 %v10628
      %v10801 = vpop.f32.mrf.mxu0
      %v10802 = vadd.f32 0.0, %v10801
      %v10803 = vpop.f32.mrf.mxu0
      %v10804 = vpop.f32.mrf.mxu0
      %v10805 = vadd.f32 0.0, %v10804
      %v10806 = vpop.f32.mrf.mxu0
      %10807 = vmatprep.mubr.bf16.mxu0 0
      %10808 = vmatmul.mubr.bf16.gmra.mxu0 %v10629
      %v10809 = vpop.f32.mrf.mxu0
      %v10810 = vadd.f32 0.0, %v10809
      %v10811 = vpop.f32.mrf.mxu0
      %v10812 = vpop.f32.mrf.mxu0
      %v10813 = vadd.f32 0.0, %v10812
      %v10814 = vpop.f32.mrf.mxu0
      %10815 = vmatprep.mubr.bf16.mxu0 0
      %10816 = vmatmul.mubr.bf16.gmra.mxu0 %v10630
      %v10817 = vpop.f32.mrf.mxu0
      %v10818 = vadd.f32 0.0, %v10817
      %v10819 = vpop.f32.mrf.mxu0
      %v10820 = vpop.f32.mrf.mxu0
      %v10821 = vadd.f32 0.0, %v10820
      %v10822 = vpop.f32.mrf.mxu0
      %10823 = vmatprep.mubr.bf16.mxu0 0
      %10824 = vmatmul.mubr.bf16.gmra.mxu0 %v10631
      %v10825 = vpop.f32.mrf.mxu0
      %v10826 = vadd.f32 0.0, %v10825
      %v10827 = vpop.f32.mrf.mxu0
      %v10828 = vpop.f32.mrf.mxu0
      %v10829 = vadd.f32 0.0, %v10828
      %v10830 = vpop.f32.mrf.mxu0
      %10831 = vmatprep.mubr.bf16.mxu0 0
      %10832 = vmatmul.mubr.bf16.gmra.mxu0 %v10632
      %v10833 = vpop.f32.mrf.mxu0
      %v10834 = vadd.f32 0.0, %v10833
      %v10835 = vpop.f32.mrf.mxu0
      %v10836 = vpop.f32.mrf.mxu0
      %v10837 = vadd.f32 0.0, %v10836
      %v10838 = vpop.f32.mrf.mxu0
      %10839 = vmatprep.mubr.bf16.mxu0 0
      %10840 = vmatmul.mubr.bf16.gmra.mxu0 %v10633
      %v10841 = vpop.f32.mrf.mxu0
      %v10842 = vadd.f32 0.0, %v10841
      %v10843 = vpop.f32.mrf.mxu0
      %v10844 = vpop.f32.mrf.mxu0
      %v10845 = vadd.f32 0.0, %v10844
      %v10846 = vpop.f32.mrf.mxu0
      %10847 = vmatprep.mubr.bf16.mxu0 0
      %10848 = vmatmul.mubr.bf16.gmra.mxu0 %v10634
      %v10849 = vpop.f32.mrf.mxu0
      %v10850 = vadd.f32 0.0, %v10849
      %v10851 = vpop.f32.mrf.mxu0
      %v10852 = vpop.f32.mrf.mxu0
      %v10853 = vadd.f32 0.0, %v10852
      %v10854 = vpop.f32.mrf.mxu0
      %10855 = vmatprep.mubr.bf16.mxu0 0
      %10856 = vmatmul.mubr.bf16.gmra.mxu0 %v10635
      %v10857 = vpop.f32.mrf.mxu0
      %v10858 = vadd.f32 0.0, %v10857
      %v10859 = vpop.f32.mrf.mxu0
      %v10860 = vpop.f32.mrf.mxu0
      %v10861 = vadd.f32 0.0, %v10860
      %v10862 = vpop.f32.mrf.mxu0
      %10863 = vmatprep.mubr.bf16.mxu0 0
      %10864 = vmatmul.mubr.bf16.gmra.mxu0 %v10636
      %v10865 = vpop.f32.mrf.mxu0
      %v10866 = vadd.f32 0.0, %v10865
      %v10867 = vpop.f32.mrf.mxu0
      %v10868 = vpop.f32.mrf.mxu0
      %v10869 = vadd.f32 0.0, %v10868
      %v10870 = vpop.f32.mrf.mxu0
      %10871 = vmatprep.mubr.bf16.mxu0 0
      %10872 = vmatmul.mubr.bf16.gmra.mxu0 %v10637
      %v10873 = vpop.f32.mrf.mxu0
      %v10874 = vadd.f32 0.0, %v10873
      %v10875 = vpop.f32.mrf.mxu0
      %v10876 = vpop.f32.mrf.mxu0
      %v10877 = vadd.f32 0.0, %v10876
      %v10878 = vpop.f32.mrf.mxu0
      %10879 = vdwg.mxu0
      %v10880 = vadd.f32 %v10548, %v10738
      %v10881 = vadd.f32 %v10549, %v10741
      %v10882 = vadd.f32 %v10550, %v10746
      %v10883 = vadd.f32 %v10551, %v10749
      %v10884 = vadd.f32 %v10552, %v10754
      %v10885 = vadd.f32 %v10553, %v10757
      %v10886 = vadd.f32 %v10554, %v10762
      %v10887 = vadd.f32 %v10555, %v10765
      %v10888 = vadd.f32 %v10556, %v10770
      %v10889 = vadd.f32 %v10557, %v10773
      %v10890 = vadd.f32 %v10558, %v10778
      %v10891 = vadd.f32 %v10559, %v10781
      %v10892 = vadd.f32 %v10560, %v10786
      %v10893 = vadd.f32 %v10561, %v10789
      %v10894 = vadd.f32 %v10562, %v10794
      %v10895 = vadd.f32 %v10563, %v10797
      %v10896 = vadd.f32 %v10564, %v10802
      %v10897 = vadd.f32 %v10565, %v10805
      %v10898 = vadd.f32 %v10566, %v10810
      %v10899 = vadd.f32 %v10567, %v10813
      %v10900 = vadd.f32 %v10568, %v10818
      %v10901 = vadd.f32 %v10569, %v10821
      %v10902 = vadd.f32 %v10570, %v10826
      %v10903 = vadd.f32 %v10571, %v10829
      %v10904 = vadd.f32 %v10572, %v10834
      %v10905 = vadd.f32 %v10573, %v10837
      %v10906 = vadd.f32 %v10574, %v10842
      %v10907 = vadd.f32 %v10575, %v10845
      %v10908 = vadd.f32 %v10576, %v10850
      %v10909 = vadd.f32 %v10577, %v10853
      %v10910 = vadd.f32 %v10578, %v10858
      %v10911 = vadd.f32 %v10579, %v10861
      %v10912 = vadd.f32 %v10580, %v10866
      %v10913 = vadd.f32 %v10581, %v10869
      %v10914 = vadd.f32 %v10582, %v10874
      %v10915 = vadd.f32 %v10583, %v10877
      %v10916 = vld [vmem:[%s429 + $0x25] sm:$0xff]
      %v10917 = vld [vmem:[%s429 + $0x2d] sm:$0xff]
      %v10918 = vld [vmem:[%s429 + $0x35] sm:$0xff]
      %v10919 = vld [vmem:[%s429 + $0x3d] sm:$0xff]
      %v10920 = vld [vmem:[%s429 + $0x45] sm:$0xff]
      %v10921 = vld [vmem:[%s429 + $0x4d] sm:$0xff]
      %v10922 = vld [vmem:[%s429 + $0x55] sm:$0xff]
      %v10923 = vld [vmem:[%s429 + $0x5d] sm:$0xff]
      %v10924 = vld [vmem:[%s429 + $0x65] sm:$0xff]
      %v10925 = vld [vmem:[%s429 + $0x6d] sm:$0xff]
      %v10926 = vld [vmem:[%s429 + $0x75] sm:$0xff]
      %v10927 = vld [vmem:[%s429 + $0x7d] sm:$0xff]
      %v10928 = vld [vmem:[%s429 + $0x85] sm:$0xff]
      %v10929 = vld [vmem:[%s429 + $0x8d] sm:$0xff]
      %v10930 = vld [vmem:[%s429 + $0x95] sm:$0xff]
      %v10931 = vld [vmem:[%s429 + $0x9d] sm:$0xff]
      %v10932 = vld [vmem:[%s429 + $0xa5] sm:$0xff]
      %v10933 = vld [vmem:[%s429 + $0xad] sm:$0xff]
      %v10934 = vld [vmem:[%s429 + $0xb5] sm:$0xff]
      %v10935 = vld [vmem:[%s429 + $0xbd] sm:$0xff]
      %v10936 = vld [vmem:[%s429 + $0xc5] sm:$0xff]
      %v10937 = vld [vmem:[%s429 + $0xcd] sm:$0xff]
      %v10938 = vld [vmem:[%s429 + $0xd5] sm:$0xff]
      %v10939 = vld [vmem:[%s429 + $0xdd] sm:$0xff]
      %v10940 = vld [vmem:[%s429 + $0xe5] sm:$0xff]
      %v10941 = vld [vmem:[%s429 + $0xed] sm:$0xff]
      %v10942 = vld [vmem:[%s429 + $0xf5] sm:$0xff]
      %v10943 = vld [vmem:[%s429 + $0xfd] sm:$0xff]
      %v10944 = vld [vmem:[%s429 + $0x105] sm:$0xff]
      %v10945 = vld [vmem:[%s429 + $0x10d] sm:$0xff]
      %v10946 = vld [vmem:[%s429 + $0x115] sm:$0xff]
      %v10947 = vld [vmem:[%s429 + $0x11d] sm:$0xff]
      %v10948 = vld [vmem:[%s429 + $0x125] sm:$0xff]
      %v10949 = vld [vmem:[%s429 + $0x12d] sm:$0xff]
      %v10950 = vld [vmem:[%s429 + $0x135] sm:$0xff]
      %v10951 = vld [vmem:[%s429 + $0x13d] sm:$0x3f]
      %v10952 = vpack.c.bf16 %v10917, %v10916
      %v10953 = vpack.c.bf16 %v10919, %v10918
      %v10954 = vpack.c.bf16 %v10921, %v10920
      %v10955 = vpack.c.bf16 %v10923, %v10922
      %v10956 = vpack.c.bf16 %v10925, %v10924
      %v10957 = vpack.c.bf16 %v10927, %v10926
      %v10958 = vpack.c.bf16 %v10929, %v10928
      %v10959 = vpack.c.bf16 %v10931, %v10930
      %v10960 = vpack.c.bf16 %v10933, %v10932
      %v10961 = vpack.c.bf16 %v10935, %v10934
      %v10962 = vpack.c.bf16 %v10937, %v10936
      %v10963 = vpack.c.bf16 %v10939, %v10938
      %v10964 = vpack.c.bf16 %v10941, %v10940
      %v10965 = vpack.c.bf16 %v10943, %v10942
      %v10966 = vpack.c.bf16 %v10945, %v10944
      %v10967 = vpack.c.bf16 %v10947, %v10946
      %v10968 = vpack.c.bf16 %v10949, %v10948
      %v10969 = vpack.c.bf16 %v10951, %v10950
      %s10970 = scalar_lea.vmem %s9, 448
      %v10971 = vld [vmem:[%s10970] sm:$0xf]
      %v10972 = vld [vmem:[%s10970 + $0x4] sm:$0xf]
      %v10973 = vld [vmem:[%s10970 + $0x8] sm:$0xf]
      %v10974 = vld [vmem:[%s10970 + $0xc] sm:$0xf]
      %v10975 = vld [vmem:[%s10970 + $0x10] sm:$0xf]
      %v10976 = vld [vmem:[%s10970 + $0x14] sm:$0xf]
      %v10977 = vld [vmem:[%s10970 + $0x18] sm:$0xf]
      %v10978 = vld [vmem:[%s10970 + $0x1c] sm:$0xf]
      %v10979 = vld [vmem:[%s10970 + $0x20] sm:$0xf]
      %v10980 = vld [vmem:[%s10970 + $0x24] sm:$0xf]
      %v10981 = vld [vmem:[%s10970 + $0x28] sm:$0xf]
      %v10982 = vld [vmem:[%s10970 + $0x2c] sm:$0xf]
      %v10983 = vld [vmem:[%s10970 + $0x30] sm:$0xf]
      %v10984 = vld [vmem:[%s10970 + $0x34] sm:$0xf]
      %v10985 = vld [vmem:[%s10970 + $0x38] sm:$0xf]
      %v10986 = vld [vmem:[%s10970 + $0x3c] sm:$0xf]
      %v11003 = vunpack.c.l.b16 %v10971
      %v11004 = vunpack.c.l.b16 %v10972
      %v11005 = vunpack.c.l.b16 %v10973
      %v11006 = vunpack.c.l.b16 %v10974
      %v11007 = vunpack.c.l.b16 %v10975
      %v11008 = vunpack.c.l.b16 %v10976
      %v11009 = vunpack.c.l.b16 %v10977
      %v11010 = vunpack.c.l.b16 %v10978
      %v11011 = vunpack.c.l.b16 %v10979
      %v11012 = vunpack.c.l.b16 %v10980
      %v11013 = vunpack.c.l.b16 %v10981
      %v11014 = vunpack.c.l.b16 %v10982
      %v11015 = vunpack.c.l.b16 %v10983
      %v11016 = vunpack.c.l.b16 %v10984
      %v11017 = vunpack.c.l.b16 %v10985
      %v11018 = vunpack.c.l.b16 %v10986
      %v11019 = vpack.c.b16 %v11004, %v11003
      %v11020 = vpack.c.b16 %v11006, %v11005
      %v11021 = vpack.c.b16 %v11008, %v11007
      %v11022 = vpack.c.b16 %v11010, %v11009
      %v11023 = vpack.c.b16 %v11012, %v11011
      %v11024 = vpack.c.b16 %v11014, %v11013
      %v11025 = vpack.c.b16 %v11016, %v11015
      %v11026 = vpack.c.b16 %v11018, %v11017
      %11035 = vmatprep.subr.bf16.mxu0 0
      %11036 = vmatpush1.bf16.msra.mxu0 %v11026
      %11037 = vmatprep.subr.bf16.mxu0 0
      %11038 = vmatpush1.bf16.msra.mxu0 %v11025
      %11039 = vmatprep.subr.bf16.mxu0 0
      %11040 = vmatpush1.bf16.msra.mxu0 %v11024
      %11041 = vmatprep.subr.bf16.mxu0 0
      %11042 = vmatpush1.bf16.msra.mxu0 %v11023
      %11043 = vmatprep.subr.bf16.mxu0 0
      %11044 = vmatpush1.bf16.msra.mxu0 %v11022
      %11045 = vmatprep.subr.bf16.mxu0 0
      %11046 = vmatpush1.bf16.msra.mxu0 %v11021
      %11047 = vmatprep.subr.bf16.mxu0 0
      %11048 = vmatpush1.bf16.msra.mxu0 %v11020
      %11049 = vmatprep.subr.bf16.mxu0 0
      %11050 = vmatpush1.bf16.msra.mxu0 %v11019
      %11051 = vmatprep.subr.bf16.mxu0 0
      %11052 = vmatpush2.bf16.msra.mxu0 0
      %11053 = vmatprep.subr.bf16.mxu0 0
      %11054 = vmatpush2.bf16.msra.mxu0 0
      %11055 = vmatprep.subr.bf16.mxu0 0
      %11056 = vmatpush2.bf16.msra.mxu0 0
      %11057 = vmatprep.subr.bf16.mxu0 0
      %11058 = vmatpush2.bf16.msra.mxu0 0
      %11059 = vmatprep.subr.bf16.mxu0 0
      %11060 = vmatpush2.bf16.msra.mxu0 0
      %11061 = vmatprep.subr.bf16.mxu0 0
      %11062 = vmatpush2.bf16.msra.mxu0 0
      %11063 = vmatprep.subr.bf16.mxu0 0
      %11064 = vmatpush2.bf16.msra.mxu0 0
      %11065 = vmatprep.subr.bf16.mxu0 0
      %11066 = vmatpush2.bf16.msra.mxu0 0
      %11067 = vmatprep.mubr.bf16.mxu0 0
      %11068 = vmatmul.mubr.bf16.gmra.mxu0 %v10952
      %v11069 = vpop.f32.mrf.mxu0
      %v11070 = vadd.f32 0.0, %v11069
      %v11071 = vpop.f32.mrf.mxu0
      %v11072 = vpop.f32.mrf.mxu0
      %v11073 = vadd.f32 0.0, %v11072
      %v11074 = vpop.f32.mrf.mxu0
      %11075 = vmatprep.mubr.bf16.mxu0 0
      %11076 = vmatmul.mubr.bf16.gmra.mxu0 %v10953
      %v11077 = vpop.f32.mrf.mxu0
      %v11078 = vadd.f32 0.0, %v11077
      %v11079 = vpop.f32.mrf.mxu0
      %v11080 = vpop.f32.mrf.mxu0
      %v11081 = vadd.f32 0.0, %v11080
      %v11082 = vpop.f32.mrf.mxu0
      %11083 = vmatprep.mubr.bf16.mxu0 0
      %11084 = vmatmul.mubr.bf16.gmra.mxu0 %v10954
      %v11085 = vpop.f32.mrf.mxu0
      %v11086 = vadd.f32 0.0, %v11085
      %v11087 = vpop.f32.mrf.mxu0
      %v11088 = vpop.f32.mrf.mxu0
      %v11089 = vadd.f32 0.0, %v11088
      %v11090 = vpop.f32.mrf.mxu0
      %11091 = vmatprep.mubr.bf16.mxu0 0
      %11092 = vmatmul.mubr.bf16.gmra.mxu0 %v10955
      %v11093 = vpop.f32.mrf.mxu0
      %v11094 = vadd.f32 0.0, %v11093
      %v11095 = vpop.f32.mrf.mxu0
      %v11096 = vpop.f32.mrf.mxu0
      %v11097 = vadd.f32 0.0, %v11096
      %v11098 = vpop.f32.mrf.mxu0
      %11099 = vmatprep.mubr.bf16.mxu0 0
      %11100 = vmatmul.mubr.bf16.gmra.mxu0 %v10956
      %v11101 = vpop.f32.mrf.mxu0
      %v11102 = vadd.f32 0.0, %v11101
      %v11103 = vpop.f32.mrf.mxu0
      %v11104 = vpop.f32.mrf.mxu0
      %v11105 = vadd.f32 0.0, %v11104
      %v11106 = vpop.f32.mrf.mxu0
      %11107 = vmatprep.mubr.bf16.mxu0 0
      %11108 = vmatmul.mubr.bf16.gmra.mxu0 %v10957
      %v11109 = vpop.f32.mrf.mxu0
      %v11110 = vadd.f32 0.0, %v11109
      %v11111 = vpop.f32.mrf.mxu0
      %v11112 = vpop.f32.mrf.mxu0
      %v11113 = vadd.f32 0.0, %v11112
      %v11114 = vpop.f32.mrf.mxu0
      %11115 = vmatprep.mubr.bf16.mxu0 0
      %11116 = vmatmul.mubr.bf16.gmra.mxu0 %v10958
      %v11117 = vpop.f32.mrf.mxu0
      %v11118 = vadd.f32 0.0, %v11117
      %v11119 = vpop.f32.mrf.mxu0
      %v11120 = vpop.f32.mrf.mxu0
      %v11121 = vadd.f32 0.0, %v11120
      %v11122 = vpop.f32.mrf.mxu0
      %11123 = vmatprep.mubr.bf16.mxu0 0
      %11124 = vmatmul.mubr.bf16.gmra.mxu0 %v10959
      %v11125 = vpop.f32.mrf.mxu0
      %v11126 = vadd.f32 0.0, %v11125
      %v11127 = vpop.f32.mrf.mxu0
      %v11128 = vpop.f32.mrf.mxu0
      %v11129 = vadd.f32 0.0, %v11128
      %v11130 = vpop.f32.mrf.mxu0
      %11131 = vmatprep.mubr.bf16.mxu0 0
      %11132 = vmatmul.mubr.bf16.gmra.mxu0 %v10960
      %v11133 = vpop.f32.mrf.mxu0
      %v11134 = vadd.f32 0.0, %v11133
      %v11135 = vpop.f32.mrf.mxu0
      %v11136 = vpop.f32.mrf.mxu0
      %v11137 = vadd.f32 0.0, %v11136
      %v11138 = vpop.f32.mrf.mxu0
      %11139 = vmatprep.mubr.bf16.mxu0 0
      %11140 = vmatmul.mubr.bf16.gmra.mxu0 %v10961
      %v11141 = vpop.f32.mrf.mxu0
      %v11142 = vadd.f32 0.0, %v11141
      %v11143 = vpop.f32.mrf.mxu0
      %v11144 = vpop.f32.mrf.mxu0
      %v11145 = vadd.f32 0.0, %v11144
      %v11146 = vpop.f32.mrf.mxu0
      %11147 = vmatprep.mubr.bf16.mxu0 0
      %11148 = vmatmul.mubr.bf16.gmra.mxu0 %v10962
      %v11149 = vpop.f32.mrf.mxu0
      %v11150 = vadd.f32 0.0, %v11149
      %v11151 = vpop.f32.mrf.mxu0
      %v11152 = vpop.f32.mrf.mxu0
      %v11153 = vadd.f32 0.0, %v11152
      %v11154 = vpop.f32.mrf.mxu0
      %11155 = vmatprep.mubr.bf16.mxu0 0
      %11156 = vmatmul.mubr.bf16.gmra.mxu0 %v10963
      %v11157 = vpop.f32.mrf.mxu0
      %v11158 = vadd.f32 0.0, %v11157
      %v11159 = vpop.f32.mrf.mxu0
      %v11160 = vpop.f32.mrf.mxu0
      %v11161 = vadd.f32 0.0, %v11160
      %v11162 = vpop.f32.mrf.mxu0
      %11163 = vmatprep.mubr.bf16.mxu0 0
      %11164 = vmatmul.mubr.bf16.gmra.mxu0 %v10964
      %v11165 = vpop.f32.mrf.mxu0
      %v11166 = vadd.f32 0.0, %v11165
      %v11167 = vpop.f32.mrf.mxu0
      %v11168 = vpop.f32.mrf.mxu0
      %v11169 = vadd.f32 0.0, %v11168
      %v11170 = vpop.f32.mrf.mxu0
      %11171 = vmatprep.mubr.bf16.mxu0 0
      %11172 = vmatmul.mubr.bf16.gmra.mxu0 %v10965
      %v11173 = vpop.f32.mrf.mxu0
      %v11174 = vadd.f32 0.0, %v11173
      %v11175 = vpop.f32.mrf.mxu0
      %v11176 = vpop.f32.mrf.mxu0
      %v11177 = vadd.f32 0.0, %v11176
      %v11178 = vpop.f32.mrf.mxu0
      %11179 = vmatprep.mubr.bf16.mxu0 0
      %11180 = vmatmul.mubr.bf16.gmra.mxu0 %v10966
      %v11181 = vpop.f32.mrf.mxu0
      %v11182 = vadd.f32 0.0, %v11181
      %v11183 = vpop.f32.mrf.mxu0
      %v11184 = vpop.f32.mrf.mxu0
      %v11185 = vadd.f32 0.0, %v11184
      %v11186 = vpop.f32.mrf.mxu0
      %11187 = vmatprep.mubr.bf16.mxu0 0
      %11188 = vmatmul.mubr.bf16.gmra.mxu0 %v10967
      %v11189 = vpop.f32.mrf.mxu0
      %v11190 = vadd.f32 0.0, %v11189
      %v11191 = vpop.f32.mrf.mxu0
      %v11192 = vpop.f32.mrf.mxu0
      %v11193 = vadd.f32 0.0, %v11192
      %v11194 = vpop.f32.mrf.mxu0
      %11195 = vmatprep.mubr.bf16.mxu0 0
      %11196 = vmatmul.mubr.bf16.gmra.mxu0 %v10968
      %v11197 = vpop.f32.mrf.mxu0
      %v11198 = vadd.f32 0.0, %v11197
      %v11199 = vpop.f32.mrf.mxu0
      %v11200 = vpop.f32.mrf.mxu0
      %v11201 = vadd.f32 0.0, %v11200
      %v11202 = vpop.f32.mrf.mxu0
      %11203 = vmatprep.mubr.bf16.mxu0 0
      %11204 = vmatmul.mubr.bf16.gmra.mxu0 %v10969
      %v11205 = vpop.f32.mrf.mxu0
      %v11206 = vadd.f32 0.0, %v11205
      %v11207 = vpop.f32.mrf.mxu0
      %v11208 = vpop.f32.mrf.mxu0
      %v11209 = vadd.f32 0.0, %v11208
      %v11210 = vpop.f32.mrf.mxu0
      %11211 = vdwg.mxu0
      %v11212 = vadd.f32 %v10880, %v11070
      %v11213 = vadd.f32 %v10881, %v11073
      %v11214 = vadd.f32 %v10882, %v11078
      %v11215 = vadd.f32 %v10883, %v11081
      %v11216 = vadd.f32 %v10884, %v11086
      %v11217 = vadd.f32 %v10885, %v11089
      %v11218 = vadd.f32 %v10886, %v11094
      %v11219 = vadd.f32 %v10887, %v11097
      %v11220 = vadd.f32 %v10888, %v11102
      %v11221 = vadd.f32 %v10889, %v11105
      %v11222 = vadd.f32 %v10890, %v11110
      %v11223 = vadd.f32 %v10891, %v11113
      %v11224 = vadd.f32 %v10892, %v11118
      %v11225 = vadd.f32 %v10893, %v11121
      %v11226 = vadd.f32 %v10894, %v11126
      %v11227 = vadd.f32 %v10895, %v11129
      %v11228 = vadd.f32 %v10896, %v11134
      %v11229 = vadd.f32 %v10897, %v11137
      %v11230 = vadd.f32 %v10898, %v11142
      %v11231 = vadd.f32 %v10899, %v11145
      %v11232 = vadd.f32 %v10900, %v11150
      %v11233 = vadd.f32 %v10901, %v11153
      %v11234 = vadd.f32 %v10902, %v11158
      %v11235 = vadd.f32 %v10903, %v11161
      %v11236 = vadd.f32 %v10904, %v11166
      %v11237 = vadd.f32 %v10905, %v11169
      %v11238 = vadd.f32 %v10906, %v11174
      %v11239 = vadd.f32 %v10907, %v11177
      %v11240 = vadd.f32 %v10908, %v11182
      %v11241 = vadd.f32 %v10909, %v11185
      %v11242 = vadd.f32 %v10910, %v11190
      %v11243 = vadd.f32 %v10911, %v11193
      %v11244 = vadd.f32 %v10912, %v11198
      %v11245 = vadd.f32 %v10913, %v11201
      %v11246 = vadd.f32 %v10914, %v11206
      %v11247 = vadd.f32 %v10915, %v11209
      %v11248 = vld [vmem:[%s429 + $0x26] sm:$0xff]
      %v11249 = vld [vmem:[%s429 + $0x2e] sm:$0xff]
      %v11250 = vld [vmem:[%s429 + $0x36] sm:$0xff]
      %v11251 = vld [vmem:[%s429 + $0x3e] sm:$0xff]
      %v11252 = vld [vmem:[%s429 + $0x46] sm:$0xff]
      %v11253 = vld [vmem:[%s429 + $0x4e] sm:$0xff]
      %v11254 = vld [vmem:[%s429 + $0x56] sm:$0xff]
      %v11255 = vld [vmem:[%s429 + $0x5e] sm:$0xff]
      %v11256 = vld [vmem:[%s429 + $0x66] sm:$0xff]
      %v11257 = vld [vmem:[%s429 + $0x6e] sm:$0xff]
      %v11258 = vld [vmem:[%s429 + $0x76] sm:$0xff]
      %v11259 = vld [vmem:[%s429 + $0x7e] sm:$0xff]
      %v11260 = vld [vmem:[%s429 + $0x86] sm:$0xff]
      %v11261 = vld [vmem:[%s429 + $0x8e] sm:$0xff]
      %v11262 = vld [vmem:[%s429 + $0x96] sm:$0xff]
      %v11263 = vld [vmem:[%s429 + $0x9e] sm:$0xff]
      %v11264 = vld [vmem:[%s429 + $0xa6] sm:$0xff]
      %v11265 = vld [vmem:[%s429 + $0xae] sm:$0xff]
      %v11266 = vld [vmem:[%s429 + $0xb6] sm:$0xff]
      %v11267 = vld [vmem:[%s429 + $0xbe] sm:$0xff]
      %v11268 = vld [vmem:[%s429 + $0xc6] sm:$0xff]
      %v11269 = vld [vmem:[%s429 + $0xce] sm:$0xff]
      %v11270 = vld [vmem:[%s429 + $0xd6] sm:$0xff]
      %v11271 = vld [vmem:[%s429 + $0xde] sm:$0xff]
      %v11272 = vld [vmem:[%s429 + $0xe6] sm:$0xff]
      %v11273 = vld [vmem:[%s429 + $0xee] sm:$0xff]
      %v11274 = vld [vmem:[%s429 + $0xf6] sm:$0xff]
      %v11275 = vld [vmem:[%s429 + $0xfe] sm:$0xff]
      %v11276 = vld [vmem:[%s429 + $0x106] sm:$0xff]
      %v11277 = vld [vmem:[%s429 + $0x10e] sm:$0xff]
      %v11278 = vld [vmem:[%s429 + $0x116] sm:$0xff]
      %v11279 = vld [vmem:[%s429 + $0x11e] sm:$0xff]
      %v11280 = vld [vmem:[%s429 + $0x126] sm:$0xff]
      %v11281 = vld [vmem:[%s429 + $0x12e] sm:$0xff]
      %v11282 = vld [vmem:[%s429 + $0x136] sm:$0xff]
      %v11283 = vld [vmem:[%s429 + $0x13e] sm:$0x3f]
      %v11284 = vpack.c.bf16 %v11249, %v11248
      %v11285 = vpack.c.bf16 %v11251, %v11250
      %v11286 = vpack.c.bf16 %v11253, %v11252
      %v11287 = vpack.c.bf16 %v11255, %v11254
      %v11288 = vpack.c.bf16 %v11257, %v11256
      %v11289 = vpack.c.bf16 %v11259, %v11258
      %v11290 = vpack.c.bf16 %v11261, %v11260
      %v11291 = vpack.c.bf16 %v11263, %v11262
      %v11292 = vpack.c.bf16 %v11265, %v11264
      %v11293 = vpack.c.bf16 %v11267, %v11266
      %v11294 = vpack.c.bf16 %v11269, %v11268
      %v11295 = vpack.c.bf16 %v11271, %v11270
      %v11296 = vpack.c.bf16 %v11273, %v11272
      %v11297 = vpack.c.bf16 %v11275, %v11274
      %v11298 = vpack.c.bf16 %v11277, %v11276
      %v11299 = vpack.c.bf16 %v11279, %v11278
      %v11300 = vpack.c.bf16 %v11281, %v11280
      %v11301 = vpack.c.bf16 %v11283, %v11282
      %s11302 = scalar_lea.vmem %s9, 512
      %v11303 = vld [vmem:[%s11302] sm:$0xf]
      %v11304 = vld [vmem:[%s11302 + $0x4] sm:$0xf]
      %v11305 = vld [vmem:[%s11302 + $0x8] sm:$0xf]
      %v11306 = vld [vmem:[%s11302 + $0xc] sm:$0xf]
      %v11307 = vld [vmem:[%s11302 + $0x10] sm:$0xf]
      %v11308 = vld [vmem:[%s11302 + $0x14] sm:$0xf]
      %v11309 = vld [vmem:[%s11302 + $0x18] sm:$0xf]
      %v11310 = vld [vmem:[%s11302 + $0x1c] sm:$0xf]
      %v11311 = vld [vmem:[%s11302 + $0x20] sm:$0xf]
      %v11312 = vld [vmem:[%s11302 + $0x24] sm:$0xf]
      %v11313 = vld [vmem:[%s11302 + $0x28] sm:$0xf]
      %v11314 = vld [vmem:[%s11302 + $0x2c] sm:$0xf]
      %v11315 = vld [vmem:[%s11302 + $0x30] sm:$0xf]
      %v11316 = vld [vmem:[%s11302 + $0x34] sm:$0xf]
      %v11317 = vld [vmem:[%s11302 + $0x38] sm:$0xf]
      %v11318 = vld [vmem:[%s11302 + $0x3c] sm:$0xf]
      %v11335 = vunpack.c.l.b16 %v11303
      %v11336 = vunpack.c.l.b16 %v11304
      %v11337 = vunpack.c.l.b16 %v11305
      %v11338 = vunpack.c.l.b16 %v11306
      %v11339 = vunpack.c.l.b16 %v11307
      %v11340 = vunpack.c.l.b16 %v11308
      %v11341 = vunpack.c.l.b16 %v11309
      %v11342 = vunpack.c.l.b16 %v11310
      %v11343 = vunpack.c.l.b16 %v11311
      %v11344 = vunpack.c.l.b16 %v11312
      %v11345 = vunpack.c.l.b16 %v11313
      %v11346 = vunpack.c.l.b16 %v11314
      %v11347 = vunpack.c.l.b16 %v11315
      %v11348 = vunpack.c.l.b16 %v11316
      %v11349 = vunpack.c.l.b16 %v11317
      %v11350 = vunpack.c.l.b16 %v11318
      %v11351 = vpack.c.b16 %v11336, %v11335
      %v11352 = vpack.c.b16 %v11338, %v11337
      %v11353 = vpack.c.b16 %v11340, %v11339
      %v11354 = vpack.c.b16 %v11342, %v11341
      %v11355 = vpack.c.b16 %v11344, %v11343
      %v11356 = vpack.c.b16 %v11346, %v11345
      %v11357 = vpack.c.b16 %v11348, %v11347
      %v11358 = vpack.c.b16 %v11350, %v11349
      %11367 = vmatprep.subr.bf16.mxu0 0
      %11368 = vmatpush1.bf16.msra.mxu0 %v11358
      %11369 = vmatprep.subr.bf16.mxu0 0
      %11370 = vmatpush1.bf16.msra.mxu0 %v11357
      %11371 = vmatprep.subr.bf16.mxu0 0
      %11372 = vmatpush1.bf16.msra.mxu0 %v11356
      %11373 = vmatprep.subr.bf16.mxu0 0
      %11374 = vmatpush1.bf16.msra.mxu0 %v11355
      %11375 = vmatprep.subr.bf16.mxu0 0
      %11376 = vmatpush1.bf16.msra.mxu0 %v11354
      %11377 = vmatprep.subr.bf16.mxu0 0
      %11378 = vmatpush1.bf16.msra.mxu0 %v11353
      %11379 = vmatprep.subr.bf16.mxu0 0
      %11380 = vmatpush1.bf16.msra.mxu0 %v11352
      %11381 = vmatprep.subr.bf16.mxu0 0
      %11382 = vmatpush1.bf16.msra.mxu0 %v11351
      %11383 = vmatprep.subr.bf16.mxu0 0
      %11384 = vmatpush2.bf16.msra.mxu0 0
      %11385 = vmatprep.subr.bf16.mxu0 0
      %11386 = vmatpush2.bf16.msra.mxu0 0
      %11387 = vmatprep.subr.bf16.mxu0 0
      %11388 = vmatpush2.bf16.msra.mxu0 0
      %11389 = vmatprep.subr.bf16.mxu0 0
      %11390 = vmatpush2.bf16.msra.mxu0 0
      %11391 = vmatprep.subr.bf16.mxu0 0
      %11392 = vmatpush2.bf16.msra.mxu0 0
      %11393 = vmatprep.subr.bf16.mxu0 0
      %11394 = vmatpush2.bf16.msra.mxu0 0
      %11395 = vmatprep.subr.bf16.mxu0 0
      %11396 = vmatpush2.bf16.msra.mxu0 0
      %11397 = vmatprep.subr.bf16.mxu0 0
      %11398 = vmatpush2.bf16.msra.mxu0 0
      %11399 = vmatprep.mubr.bf16.mxu0 0
      %11400 = vmatmul.mubr.bf16.gmra.mxu0 %v11284
      %v11401 = vpop.f32.mrf.mxu0
      %v11402 = vadd.f32 0.0, %v11401
      %v11403 = vpop.f32.mrf.mxu0
      %v11404 = vpop.f32.mrf.mxu0
      %v11405 = vadd.f32 0.0, %v11404
      %v11406 = vpop.f32.mrf.mxu0
      %11407 = vmatprep.mubr.bf16.mxu0 0
      %11408 = vmatmul.mubr.bf16.gmra.mxu0 %v11285
      %v11409 = vpop.f32.mrf.mxu0
      %v11410 = vadd.f32 0.0, %v11409
      %v11411 = vpop.f32.mrf.mxu0
      %v11412 = vpop.f32.mrf.mxu0
      %v11413 = vadd.f32 0.0, %v11412
      %v11414 = vpop.f32.mrf.mxu0
      %11415 = vmatprep.mubr.bf16.mxu0 0
      %11416 = vmatmul.mubr.bf16.gmra.mxu0 %v11286
      %v11417 = vpop.f32.mrf.mxu0
      %v11418 = vadd.f32 0.0, %v11417
      %v11419 = vpop.f32.mrf.mxu0
      %v11420 = vpop.f32.mrf.mxu0
      %v11421 = vadd.f32 0.0, %v11420
      %v11422 = vpop.f32.mrf.mxu0
      %11423 = vmatprep.mubr.bf16.mxu0 0
      %11424 = vmatmul.mubr.bf16.gmra.mxu0 %v11287
      %v11425 = vpop.f32.mrf.mxu0
      %v11426 = vadd.f32 0.0, %v11425
      %v11427 = vpop.f32.mrf.mxu0
      %v11428 = vpop.f32.mrf.mxu0
      %v11429 = vadd.f32 0.0, %v11428
      %v11430 = vpop.f32.mrf.mxu0
      %11431 = vmatprep.mubr.bf16.mxu0 0
      %11432 = vmatmul.mubr.bf16.gmra.mxu0 %v11288
      %v11433 = vpop.f32.mrf.mxu0
      %v11434 = vadd.f32 0.0, %v11433
      %v11435 = vpop.f32.mrf.mxu0
      %v11436 = vpop.f32.mrf.mxu0
      %v11437 = vadd.f32 0.0, %v11436
      %v11438 = vpop.f32.mrf.mxu0
      %11439 = vmatprep.mubr.bf16.mxu0 0
      %11440 = vmatmul.mubr.bf16.gmra.mxu0 %v11289
      %v11441 = vpop.f32.mrf.mxu0
      %v11442 = vadd.f32 0.0, %v11441
      %v11443 = vpop.f32.mrf.mxu0
      %v11444 = vpop.f32.mrf.mxu0
      %v11445 = vadd.f32 0.0, %v11444
      %v11446 = vpop.f32.mrf.mxu0
      %11447 = vmatprep.mubr.bf16.mxu0 0
      %11448 = vmatmul.mubr.bf16.gmra.mxu0 %v11290
      %v11449 = vpop.f32.mrf.mxu0
      %v11450 = vadd.f32 0.0, %v11449
      %v11451 = vpop.f32.mrf.mxu0
      %v11452 = vpop.f32.mrf.mxu0
      %v11453 = vadd.f32 0.0, %v11452
      %v11454 = vpop.f32.mrf.mxu0
      %11455 = vmatprep.mubr.bf16.mxu0 0
      %11456 = vmatmul.mubr.bf16.gmra.mxu0 %v11291
      %v11457 = vpop.f32.mrf.mxu0
      %v11458 = vadd.f32 0.0, %v11457
      %v11459 = vpop.f32.mrf.mxu0
      %v11460 = vpop.f32.mrf.mxu0
      %v11461 = vadd.f32 0.0, %v11460
      %v11462 = vpop.f32.mrf.mxu0
      %11463 = vmatprep.mubr.bf16.mxu0 0
      %11464 = vmatmul.mubr.bf16.gmra.mxu0 %v11292
      %v11465 = vpop.f32.mrf.mxu0
      %v11466 = vadd.f32 0.0, %v11465
      %v11467 = vpop.f32.mrf.mxu0
      %v11468 = vpop.f32.mrf.mxu0
      %v11469 = vadd.f32 0.0, %v11468
      %v11470 = vpop.f32.mrf.mxu0
      %11471 = vmatprep.mubr.bf16.mxu0 0
      %11472 = vmatmul.mubr.bf16.gmra.mxu0 %v11293
      %v11473 = vpop.f32.mrf.mxu0
      %v11474 = vadd.f32 0.0, %v11473
      %v11475 = vpop.f32.mrf.mxu0
      %v11476 = vpop.f32.mrf.mxu0
      %v11477 = vadd.f32 0.0, %v11476
      %v11478 = vpop.f32.mrf.mxu0
      %11479 = vmatprep.mubr.bf16.mxu0 0
      %11480 = vmatmul.mubr.bf16.gmra.mxu0 %v11294
      %v11481 = vpop.f32.mrf.mxu0
      %v11482 = vadd.f32 0.0, %v11481
      %v11483 = vpop.f32.mrf.mxu0
      %v11484 = vpop.f32.mrf.mxu0
      %v11485 = vadd.f32 0.0, %v11484
      %v11486 = vpop.f32.mrf.mxu0
      %11487 = vmatprep.mubr.bf16.mxu0 0
      %11488 = vmatmul.mubr.bf16.gmra.mxu0 %v11295
      %v11489 = vpop.f32.mrf.mxu0
      %v11490 = vadd.f32 0.0, %v11489
      %v11491 = vpop.f32.mrf.mxu0
      %v11492 = vpop.f32.mrf.mxu0
      %v11493 = vadd.f32 0.0, %v11492
      %v11494 = vpop.f32.mrf.mxu0
      %11495 = vmatprep.mubr.bf16.mxu0 0
      %11496 = vmatmul.mubr.bf16.gmra.mxu0 %v11296
      %v11497 = vpop.f32.mrf.mxu0
      %v11498 = vadd.f32 0.0, %v11497
      %v11499 = vpop.f32.mrf.mxu0
      %v11500 = vpop.f32.mrf.mxu0
      %v11501 = vadd.f32 0.0, %v11500
      %v11502 = vpop.f32.mrf.mxu0
      %11503 = vmatprep.mubr.bf16.mxu0 0
      %11504 = vmatmul.mubr.bf16.gmra.mxu0 %v11297
      %v11505 = vpop.f32.mrf.mxu0
      %v11506 = vadd.f32 0.0, %v11505
      %v11507 = vpop.f32.mrf.mxu0
      %v11508 = vpop.f32.mrf.mxu0
      %v11509 = vadd.f32 0.0, %v11508
      %v11510 = vpop.f32.mrf.mxu0
      %11511 = vmatprep.mubr.bf16.mxu0 0
      %11512 = vmatmul.mubr.bf16.gmra.mxu0 %v11298
      %v11513 = vpop.f32.mrf.mxu0
      %v11514 = vadd.f32 0.0, %v11513
      %v11515 = vpop.f32.mrf.mxu0
      %v11516 = vpop.f32.mrf.mxu0
      %v11517 = vadd.f32 0.0, %v11516
      %v11518 = vpop.f32.mrf.mxu0
      %11519 = vmatprep.mubr.bf16.mxu0 0
      %11520 = vmatmul.mubr.bf16.gmra.mxu0 %v11299
      %v11521 = vpop.f32.mrf.mxu0
      %v11522 = vadd.f32 0.0, %v11521
      %v11523 = vpop.f32.mrf.mxu0
      %v11524 = vpop.f32.mrf.mxu0
      %v11525 = vadd.f32 0.0, %v11524
      %v11526 = vpop.f32.mrf.mxu0
      %11527 = vmatprep.mubr.bf16.mxu0 0
      %11528 = vmatmul.mubr.bf16.gmra.mxu0 %v11300
      %v11529 = vpop.f32.mrf.mxu0
      %v11530 = vadd.f32 0.0, %v11529
      %v11531 = vpop.f32.mrf.mxu0
      %v11532 = vpop.f32.mrf.mxu0
      %v11533 = vadd.f32 0.0, %v11532
      %v11534 = vpop.f32.mrf.mxu0
      %11535 = vmatprep.mubr.bf16.mxu0 0
      %11536 = vmatmul.mubr.bf16.gmra.mxu0 %v11301
      %v11537 = vpop.f32.mrf.mxu0
      %v11538 = vadd.f32 0.0, %v11537
      %v11539 = vpop.f32.mrf.mxu0
      %v11540 = vpop.f32.mrf.mxu0
      %v11541 = vadd.f32 0.0, %v11540
      %v11542 = vpop.f32.mrf.mxu0
      %11543 = vdwg.mxu0
      %v11544 = vadd.f32 %v11212, %v11402
      %v11545 = vadd.f32 %v11213, %v11405
      %v11546 = vadd.f32 %v11214, %v11410
      %v11547 = vadd.f32 %v11215, %v11413
      %v11548 = vadd.f32 %v11216, %v11418
      %v11549 = vadd.f32 %v11217, %v11421
      %v11550 = vadd.f32 %v11218, %v11426
      %v11551 = vadd.f32 %v11219, %v11429
      %v11552 = vadd.f32 %v11220, %v11434
      %v11553 = vadd.f32 %v11221, %v11437
      %v11554 = vadd.f32 %v11222, %v11442
      %v11555 = vadd.f32 %v11223, %v11445
      %v11556 = vadd.f32 %v11224, %v11450
      %v11557 = vadd.f32 %v11225, %v11453
      %v11558 = vadd.f32 %v11226, %v11458
      %v11559 = vadd.f32 %v11227, %v11461
      %v11560 = vadd.f32 %v11228, %v11466
      %v11561 = vadd.f32 %v11229, %v11469
      %v11562 = vadd.f32 %v11230, %v11474
      %v11563 = vadd.f32 %v11231, %v11477
      %v11564 = vadd.f32 %v11232, %v11482
      %v11565 = vadd.f32 %v11233, %v11485
      %v11566 = vadd.f32 %v11234, %v11490
      %v11567 = vadd.f32 %v11235, %v11493
      %v11568 = vadd.f32 %v11236, %v11498
      %v11569 = vadd.f32 %v11237, %v11501
      %v11570 = vadd.f32 %v11238, %v11506
      %v11571 = vadd.f32 %v11239, %v11509
      %v11572 = vadd.f32 %v11240, %v11514
      %v11573 = vadd.f32 %v11241, %v11517
      %v11574 = vadd.f32 %v11242, %v11522
      %v11575 = vadd.f32 %v11243, %v11525
      %v11576 = vadd.f32 %v11244, %v11530
      %v11577 = vadd.f32 %v11245, %v11533
      %v11578 = vadd.f32 %v11246, %v11538
      %v11579 = vadd.f32 %v11247, %v11541
      %v11580 = vld [vmem:[%s10] sm:$0x1]
      %v11582 = vlaneseq
      %v11583 = vshrl.u32 %v11582, 7
      %v11584 = vsub.s32 0, %v11583
      %v11585 = vrot.slane %v11580, %v11584
      %v11587 = vadd.f32 %v11544, %v11585
      %v11588 = vadd.f32 %v11545, %v11585
      %v11589 = vadd.f32 %v11546, %v11585
      %v11590 = vadd.f32 %v11547, %v11585
      %v11591 = vadd.f32 %v11548, %v11585
      %v11592 = vadd.f32 %v11549, %v11585
      %v11593 = vadd.f32 %v11550, %v11585
      %v11594 = vadd.f32 %v11551, %v11585
      %v11595 = vadd.f32 %v11552, %v11585
      %v11596 = vadd.f32 %v11553, %v11585
      %v11597 = vadd.f32 %v11554, %v11585
      %v11598 = vadd.f32 %v11555, %v11585
      %v11599 = vadd.f32 %v11556, %v11585
      %v11600 = vadd.f32 %v11557, %v11585
      %v11601 = vadd.f32 %v11558, %v11585
      %v11602 = vadd.f32 %v11559, %v11585
      %v11603 = vadd.f32 %v11560, %v11585
      %v11604 = vadd.f32 %v11561, %v11585
      %v11605 = vadd.f32 %v11562, %v11585
      %v11606 = vadd.f32 %v11563, %v11585
      %v11607 = vadd.f32 %v11564, %v11585
      %v11608 = vadd.f32 %v11565, %v11585
      %v11609 = vadd.f32 %v11566, %v11585
      %v11610 = vadd.f32 %v11567, %v11585
      %v11611 = vadd.f32 %v11568, %v11585
      %v11612 = vadd.f32 %v11569, %v11585
      %v11613 = vadd.f32 %v11570, %v11585
      %v11614 = vadd.f32 %v11571, %v11585
      %v11615 = vadd.f32 %v11572, %v11585
      %v11616 = vadd.f32 %v11573, %v11585
      %v11617 = vadd.f32 %v11574, %v11585
      %v11618 = vadd.f32 %v11575, %v11585
      %v11619 = vadd.f32 %v11576, %v11585
      %v11620 = vadd.f32 %v11577, %v11585
      %v11621 = vadd.f32 %v11578, %v11585
      %v11622 = vadd.f32 %v11579, %v11585
      %v11624 = vsel %vm553, %v11622, 0
      %11626 = vmatprep.subr.mxu0 0.0
      %11627 = vmatpush1.msra.mxu0 %v11602
      %11628 = vmatprep.subr.mxu0 0.0
      %11629 = vmatpush1.msra.mxu0 %v11601
      %11630 = vmatprep.subr.mxu0 0.0
      %11631 = vmatpush1.msra.mxu0 %v11600
      %11632 = vmatprep.subr.mxu0 0.0
      %11633 = vmatpush1.msra.mxu0 %v11599
      %11634 = vmatprep.subr.mxu0 0.0
      %11635 = vmatpush1.msra.mxu0 %v11598
      %11636 = vmatprep.subr.mxu0 0.0
      %11637 = vmatpush1.msra.mxu0 %v11597
      %11638 = vmatprep.subr.mxu0 0.0
      %11639 = vmatpush1.msra.mxu0 %v11596
      %11640 = vmatprep.subr.mxu0 0.0
      %11641 = vmatpush1.msra.mxu0 %v11595
      %11642 = vmatprep.subr.mxu0 0.0
      %11643 = vmatpush1.msra.mxu0 %v11594
      %11644 = vmatprep.subr.mxu0 0.0
      %11645 = vmatpush1.msra.mxu0 %v11593
      %11646 = vmatprep.subr.mxu0 0.0
      %11647 = vmatpush1.msra.mxu0 %v11592
      %11648 = vmatprep.subr.mxu0 0.0
      %11649 = vmatpush1.msra.mxu0 %v11591
      %11650 = vmatprep.subr.mxu0 0.0
      %11651 = vmatpush1.msra.mxu0 %v11590
      %11652 = vmatprep.subr.mxu0 0.0
      %11653 = vmatpush1.msra.mxu0 %v11589
      %11654 = vmatprep.subr.mxu0 0.0
      %11655 = vmatpush1.msra.mxu0 %v11588
      %11656 = vmatprep.subr.mxu0 0.0
      %11657 = vmatpush1.msra.mxu0 %v11587
      %11658 = vmatprep.subr.mxu0 0.0
      %11659 = vmatpush2.msra.mxu0 %v11618
      %11660 = vmatprep.subr.mxu0 0.0
      %11661 = vmatpush2.msra.mxu0 %v11617
      %11662 = vmatprep.subr.mxu0 0.0
      %11663 = vmatpush2.msra.mxu0 %v11616
      %11664 = vmatprep.subr.mxu0 0.0
      %11665 = vmatpush2.msra.mxu0 %v11615
      %11666 = vmatprep.subr.mxu0 0.0
      %11667 = vmatpush2.msra.mxu0 %v11614
      %11668 = vmatprep.subr.mxu0 0.0
      %11669 = vmatpush2.msra.mxu0 %v11613
      %11670 = vmatprep.subr.mxu0 0.0
      %11671 = vmatpush2.msra.mxu0 %v11612
      %11672 = vmatprep.subr.mxu0 0.0
      %11673 = vmatpush2.msra.mxu0 %v11611
      %11674 = vmatprep.subr.mxu0 0.0
      %11675 = vmatpush2.msra.mxu0 %v11610
      %11676 = vmatprep.subr.mxu0 0.0
      %11677 = vmatpush2.msra.mxu0 %v11609
      %11678 = vmatprep.subr.mxu0 0.0
      %11679 = vmatpush2.msra.mxu0 %v11608
      %11680 = vmatprep.subr.mxu0 0.0
      %11681 = vmatpush2.msra.mxu0 %v11607
      %11682 = vmatprep.subr.mxu0 0.0
      %11683 = vmatpush2.msra.mxu0 %v11606
      %11684 = vmatprep.subr.mxu0 0.0
      %11685 = vmatpush2.msra.mxu0 %v11605
      %11686 = vmatprep.subr.mxu0 0.0
      %11687 = vmatpush2.msra.mxu0 %v11604
      %11688 = vmatprep.subr.mxu0 0.0
      %11689 = vmatpush2.msra.mxu0 %v11603
      %11690 = vmatprep.mubr.f32.mxu0 %v469
      %11691 = vmatmul.mubr.f32.gmra.mxu0 %v468
      %v11692 = vpop.f32.mrf.mxu0
      %v11693 = vadd.f32 %v831, %v11692
      %v11694 = vpop.f32.mrf.mxu0
      %11695 = vmatprep.mubr.f32.mxu0 %v472
      %11696 = vmatmul.mubr.f32.gmra.mxu0 %v471
      %v11697 = vpop.f32.mrf.mxu0
      %v11698 = vadd.f32 %v834, %v11697
      %v11699 = vpop.f32.mrf.mxu0
      %11700 = vmatprep.mubr.f32.mxu0 %v475
      %11701 = vmatmul.mubr.f32.gmra.mxu0 %v474
      %v11702 = vpop.f32.mrf.mxu0
      %v11703 = vadd.f32 %v839, %v11702
      %v11704 = vpop.f32.mrf.mxu0
      %11705 = vmatprep.mubr.f32.mxu0 %v478
      %11706 = vmatmul.mubr.f32.gmra.mxu0 %v477
      %v11707 = vpop.f32.mrf.mxu0
      %v11708 = vadd.f32 %v842, %v11707
      %v11709 = vpop.f32.mrf.mxu0
      %11710 = vmatprep.mubr.f32.mxu0 %v481
      %11711 = vmatmul.mubr.f32.gmra.mxu0 %v480
      %v11712 = vpop.f32.mrf.mxu0
      %v11713 = vadd.f32 %v847, %v11712
      %v11714 = vpop.f32.mrf.mxu0
      %11715 = vmatprep.mubr.f32.mxu0 %v484
      %11716 = vmatmul.mubr.f32.gmra.mxu0 %v483
      %v11717 = vpop.f32.mrf.mxu0
      %v11718 = vadd.f32 %v850, %v11717
      %v11719 = vpop.f32.mrf.mxu0
      %11720 = vmatprep.mubr.f32.mxu0 %v487
      %11721 = vmatmul.mubr.f32.gmra.mxu0 %v486
      %v11722 = vpop.f32.mrf.mxu0
      %v11723 = vadd.f32 %v855, %v11722
      %v11724 = vpop.f32.mrf.mxu0
      %11725 = vmatprep.mubr.f32.mxu0 %v490
      %11726 = vmatmul.mubr.f32.gmra.mxu0 %v489
      %v11727 = vpop.f32.mrf.mxu0
      %v11728 = vadd.f32 %v858, %v11727
      %v11729 = vpop.f32.mrf.mxu0
      %11730 = vdwg.mxu0
      %11731 = vmatprep.subr.mxu0 0.0
      %11732 = vmatpush1.msra.mxu0 0.0
      %11733 = vmatprep.subr.mxu0 0.0
      %11734 = vmatpush1.msra.mxu0 0.0
      %11735 = vmatprep.subr.mxu0 0.0
      %11736 = vmatpush1.msra.mxu0 0.0
      %11737 = vmatprep.subr.mxu0 0.0
      %11738 = vmatpush1.msra.mxu0 0.0
      %11739 = vmatprep.subr.mxu0 0.0
      %11740 = vmatpush1.msra.mxu0 0.0
      %11741 = vmatprep.subr.mxu0 0.0
      %11742 = vmatpush1.msra.mxu0 0.0
      %11743 = vmatprep.subr.mxu0 0.0
      %11744 = vmatpush1.msra.mxu0 0.0
      %11745 = vmatprep.subr.mxu0 0.0
      %11746 = vmatpush1.msra.mxu0 0.0
      %11747 = vmatprep.subr.mxu0 0.0
      %11748 = vmatpush1.msra.mxu0 0.0
      %11749 = vmatprep.subr.mxu0 0.0
      %11750 = vmatpush1.msra.mxu0 0.0
      %11751 = vmatprep.subr.mxu0 0.0
      %11752 = vmatpush1.msra.mxu0 0.0
      %11753 = vmatprep.subr.mxu0 0.0
      %11754 = vmatpush1.msra.mxu0 0.0
      %11755 = vmatprep.subr.mxu0 0.0
      %11756 = vmatpush1.msra.mxu0 %v11624
      %11757 = vmatprep.subr.mxu0 0.0
      %11758 = vmatpush1.msra.mxu0 %v11621
      %11759 = vmatprep.subr.mxu0 0.0
      %11760 = vmatpush1.msra.mxu0 %v11620
      %11761 = vmatprep.subr.mxu0 0.0
      %11762 = vmatpush1.msra.mxu0 %v11619
      %11763 = vmatprep.subr.mxu0 0.0
      %11764 = vmatpush2.msra.mxu0 0.0
      %11765 = vmatprep.subr.mxu0 0.0
      %11766 = vmatpush2.msra.mxu0 0.0
      %11767 = vmatprep.subr.mxu0 0.0
      %11768 = vmatpush2.msra.mxu0 0.0
      %11769 = vmatprep.subr.mxu0 0.0
      %11770 = vmatpush2.msra.mxu0 0.0
      %11771 = vmatprep.subr.mxu0 0.0
      %11772 = vmatpush2.msra.mxu0 0.0
      %11773 = vmatprep.subr.mxu0 0.0
      %11774 = vmatpush2.msra.mxu0 0.0
      %11775 = vmatprep.subr.mxu0 0.0
      %11776 = vmatpush2.msra.mxu0 0.0
      %11777 = vmatprep.subr.mxu0 0.0
      %11778 = vmatpush2.msra.mxu0 0.0
      %11779 = vmatprep.subr.mxu0 0.0
      %11780 = vmatpush2.msra.mxu0 0.0
      %11781 = vmatprep.subr.mxu0 0.0
      %11782 = vmatpush2.msra.mxu0 0.0
      %11783 = vmatprep.subr.mxu0 0.0
      %11784 = vmatpush2.msra.mxu0 0.0
      %11785 = vmatprep.subr.mxu0 0.0
      %11786 = vmatpush2.msra.mxu0 0.0
      %11787 = vmatprep.subr.mxu0 0.0
      %11788 = vmatpush2.msra.mxu0 0.0
      %11789 = vmatprep.subr.mxu0 0.0
      %11790 = vmatpush2.msra.mxu0 0.0
      %11791 = vmatprep.subr.mxu0 0.0
      %11792 = vmatpush2.msra.mxu0 0.0
      %11793 = vmatprep.subr.mxu0 0.0
      %11794 = vmatpush2.msra.mxu0 0.0
      %11795 = vmatprep.mubr.f32.mxu0 0.0
      %11796 = vmatmul.mubr.f32.gmra.mxu0 %v530
      %v11797 = vpop.f32.mrf.mxu0
      %v11798 = vadd.f32 %v11693, %v11797
      %v11799 = vpop.f32.mrf.mxu0
      %11800 = vmatprep.mubr.f32.mxu0 0.0
      %11801 = vmatmul.mubr.f32.gmra.mxu0 %v533
      %v11802 = vpop.f32.mrf.mxu0
      %v11803 = vadd.f32 %v11698, %v11802
      %v11804 = vpop.f32.mrf.mxu0
      %11805 = vmatprep.mubr.f32.mxu0 0.0
      %11806 = vmatmul.mubr.f32.gmra.mxu0 %v536
      %v11807 = vpop.f32.mrf.mxu0
      %v11808 = vadd.f32 %v11703, %v11807
      %v11809 = vpop.f32.mrf.mxu0
      %11810 = vmatprep.mubr.f32.mxu0 0.0
      %11811 = vmatmul.mubr.f32.gmra.mxu0 %v539
      %v11812 = vpop.f32.mrf.mxu0
      %v11813 = vadd.f32 %v11708, %v11812
      %v11814 = vpop.f32.mrf.mxu0
      %11815 = vmatprep.mubr.f32.mxu0 0.0
      %11816 = vmatmul.mubr.f32.gmra.mxu0 %v542
      %v11817 = vpop.f32.mrf.mxu0
      %v11818 = vadd.f32 %v11713, %v11817
      %v11819 = vpop.f32.mrf.mxu0
      %11820 = vmatprep.mubr.f32.mxu0 0.0
      %11821 = vmatmul.mubr.f32.gmra.mxu0 %v545
      %v11822 = vpop.f32.mrf.mxu0
      %v11823 = vadd.f32 %v11718, %v11822
      %v11824 = vpop.f32.mrf.mxu0
      %11825 = vmatprep.mubr.f32.mxu0 0.0
      %11826 = vmatmul.mubr.f32.gmra.mxu0 %v548
      %v11827 = vpop.f32.mrf.mxu0
      %v11828 = vadd.f32 %v11723, %v11827
      %v11829 = vpop.f32.mrf.mxu0
      %11830 = vmatprep.mubr.f32.mxu0 0.0
      %11831 = vmatmul.mubr.f32.gmra.mxu0 %v551
      %v11832 = vpop.f32.mrf.mxu0
      %v11833 = vadd.f32 %v11728, %v11832
      %v11834 = vpop.f32.mrf.mxu0
      %11835 = vdwg.mxu0
      %11836 = vst [vmem:[%s423] sm:$0xff] %v11798
      %11837 = vst [vmem:[%s423 + $0x8] sm:$0xff] %v11803
      %11838 = vst [vmem:[%s423 + $0x10] sm:$0xff] %v11808
      %11839 = vst [vmem:[%s423 + $0x18] sm:$0xff] %v11813
      %11840 = vst [vmem:[%s423 + $0x20] sm:$0xff] %v11818
      %11841 = vst [vmem:[%s423 + $0x28] sm:$0xff] %v11823
      %11842 = vst [vmem:[%s423 + $0x30] sm:$0xff] %v11828
      %11843 = vst [vmem:[%s423 + $0x38] sm:$0xff] %v11833
      %s11844 = smul.u32 8, %s24
      %p11845 = scmp.lt.s32.totalorder %s11844, 15
      %s11846 = scalar_select %p11845, %s11844, 15
      %s11847 = smul.addr %s11846, 8
      %s11848 = scalar_lea.vmem %s11, %s11847
      %s11849 = smul.u32 41, %s24
      %p11850 = scmp.lt.s32.totalorder %s11849, 81
      %s11851 = scalar_select %p11850, %s11849, 81
      %s11852 = smul.addr %s11851, 8
      %s11853 = scalar_lea.vmem %s12, %s11852
      // Predicated region
      $region65: #{down_block_forward.1} parent=63 // pred_check
        %p11854 = pneg %p278
      $region66: #{down_block_forward.1} parent=63 // pred_check_branch
        %11856 = sbr.rel (%p11854) target = $region68
      $region67: #{down_block_forward.1} parent=63 // pred_region
        %s11857 = smul.u32 8, %s24
      $region68: #{down_block_forward.1} parent=63 // pred_fallthru
        _
      // Predicated region
      $region69: #{down_block_forward.1} parent=63 // pred_check
        %p11858 = pneg %p304
      $region70: #{down_block_forward.1} parent=63 // pred_check_branch
        %11860 = sbr.rel (%p11858) target = $region72
      $region71: #{down_block_forward.1} parent=63 // pred_region
        %s11861 = smul.u32 41, %s24
      $region72: #{down_block_forward.1} parent=63 // pred_fallthru
        _
    $region64: #{down_block_forward.1} parent=5 // pred_fallthru
      _
    %p11862 = scmp.le.s32.totalorder 2, %s19
    // Predicated region
    $region73: #{down_block_forward.1} parent=5 // pred_check
      %p11863 = pneg %p11862
    $region74: #{down_block_forward.1} parent=5 // pred_check_branch
      %11865 = sbr.rel (%p11863) target = $region76
    $region75: #{down_block_forward.1} parent=5 // pred_region
      %s11866 = ssub.s32 %s19, 2
      // Predicated region
      $region77: #{down_block_forward.1} parent=75 // pred_check
        %p11867 = pneg %p284
      $region78: #{down_block_forward.1} parent=75 // pred_check_branch
        %11869 = sbr.rel (%p11867) target = $region80
      $region79: #{down_block_forward.1} parent=75 // pred_region
        %s11870 = smul.u32 8, %s25
        %p11871 = scmp.lt.s32.totalorder %s11870, 15
        %s11872 = scalar_select %p11871, %s11870, 15
        %s11873 = smul.addr %s11872, 8
        %s11874 = scalar_lea.vmem %s11, %s11873
      $region80: #{down_block_forward.1} parent=75 // pred_fallthru
        _
      // Predicated region
      $region81: #{down_block_forward.1} parent=75 // pred_check
        %p11875 = pneg %p310
      $region82: #{down_block_forward.1} parent=75 // pred_check_branch
        %11877 = sbr.rel (%p11875) target = $region84
      $region83: #{down_block_forward.1} parent=75 // pred_region
        %s11878 = smul.u32 41, %s25
        %p11879 = scmp.lt.s32.totalorder %s11878, 81
        %s11880 = scalar_select %p11879, %s11878, 81
        %s11881 = smul.addr %s11880, 8
        %s11882 = scalar_lea.vmem %s12, %s11881
      $region84: #{down_block_forward.1} parent=75 // pred_fallthru
        _
    $region76: #{down_block_forward.1} parent=5 // pred_fallthru
      _
  $region6: #{down_block_forward.1} parent=0 // loop_footer
    %s23 = sadd.s32 1, %s19
  $region7: #{down_block_forward.1} parent=0 // loop_footer_branch
    %18 = sbr.rel target = $region3
  $region8: #{down_block_forward.1} parent=0 // loop_exit
    _

</llo_original>
